<compile_context>
chip_gen: v5e
topology: v5e:2x2
jax: 0.10.0
libtpu: 0.0.40
codegen_flags: <defaults>
</compile_context>

<pallas_src>
import math
import functools

import jax
import jax.numpy as jnp
from jax.experimental import pallas as pl
from jax.experimental.pallas import tpu as pltpu


def _lstm_block_kernel(*refs, hidden, t_blk, chunk, batch, n_in):
    """One (batch_block, time_block): relu(linearIn) -> LSTM -> linearOut."""
    x_refs = refs[:n_in]
    w_in_refs = refs[n_in:2 * n_in]
    (b_in_ref, w_ih_ref, w_hh_ref, b_g_ref, w_out_ref, b_out_ref,
     out_ref, h_scr, c_scr, pg_scr, hs_scr) = refs[2 * n_in:]

    H = hidden
    B = batch
    rows = chunk * B
    n_chunks = t_blk // chunk

    @pl.when(pl.program_id(1) == 0)
    def _():
        h_scr[...] = jnp.zeros_like(h_scr)
        c_scr[...] = jnp.zeros_like(c_scr)

    h = h_scr[...]
    c = c_scr[...]

    for ci in range(n_chunks):            # small static chunk loop
        t0 = ci * chunk

        # ---- hoisted input path for this chunk: bf16 MXU, f32 accumulate ----
        # x0 = relu(sum_i x_i @ W_in_i + b_in)   (the sum folds the feature concat)
        z = b_in_ref[...]                                    # (1, H) f32
        for x_ref, w_ref in zip(x_refs, w_in_refs):
            xf = x_ref[pl.ds(t0, chunk)].reshape(rows, x_ref.shape[-1])
            z = z + jnp.dot(xf, w_ref[...],
                            preferred_element_type=jnp.float32)
        x0 = jnp.maximum(z, 0.0).astype(jnp.bfloat16)        # (rows, H)
        # input contribution to all gates for the chunk + fused (b_ih + b_hh)
        pg = (jnp.dot(x0, w_ih_ref[...],
                      preferred_element_type=jnp.float32)
              + b_g_ref[...])                                # (rows, 4H) f32
        pg_scr[...] = pg.reshape(chunk, B, 4 * H)

        # ---- serial recurrence: only h @ W_hh + elementwise per step ----
        def step(t, carry):
            h, c = carry
            gates = pg_scr[t] + jnp.dot(h.astype(jnp.bfloat16), w_hh_ref[...],
                                        preferred_element_type=jnp.float32)
            # gate blocks permuted to [i, f, o, g] at prep time:
            # one contiguous sigmoid (3H lanes) + one tanh (H lanes) per step.
            sig = jax.nn.sigmoid(gates[:, 0:3 * H])
            g = jnp.tanh(gates[:, 3 * H:4 * H])
            i, f, o = sig[:, 0:H], sig[:, H:2 * H], sig[:, 2 * H:3 * H]
            c_new = f * c + i * g
            h_new = o * jnp.tanh(c_new)
            hs_scr[t] = h_new.astype(jnp.bfloat16)
            return (h_new, c_new)

        h, c = jax.lax.fori_loop(0, chunk, step, (h, c),
                                 unroll=min(8, chunk))

        # ---- hoisted linearOut for the chunk: one lane-dense store ----
        hs = hs_scr[...].reshape(rows, H)
        out = (jnp.dot(hs, w_out_ref[...],
                       preferred_element_type=jnp.float32)
               + b_out_ref[...])
        out_ref[pl.ds(t0, chunk)] = out.reshape(
            chunk, B, out_ref.shape[-1]).astype(out_ref.dtype)

    h_scr[...] = h
    c_scr[...] = c


def _round_up(v, m):
    return ((v + m - 1) // m) * m


def _prep_params(params, nx_list):
    """Transpose / zero-pad / permute / fuse parameters; weights in bf16."""
    H = params["w_hh"].shape[1]
    ny = params["w_out"].shape[0]
    Hp = _round_up(H, 128)
    nyp = _round_up(ny, 128)
    perm = jnp.array((0, 1, 3, 2))        # [i, f, g, o] -> [i, f, o, g]

    # linearIn: split columns per input stream, transpose to (nx_i, H), pad.
    w_in_full = params["w_in"]                        # (H, sum(nx_list))
    w_in_blocks = []
    off = 0
    for nxi in nx_list:
        nxp = _round_up(nxi, 128)
        blk = w_in_full[:, off:off + nxi].T           # (nx_i, H)
        w_in_blocks.append(
            jnp.pad(blk, ((0, nxp - nxi), (0, Hp - H))).astype(jnp.bfloat16))
        off += nxi
    b_in = jnp.pad(params["b_in"], (0, Hp - H)).reshape(1, Hp).astype(jnp.float32)

    # LSTM gate weights: transpose to (in, 4H), permute gate blocks to
    # [i, f, o, g], zero-pad each block so gate slices sit on 128-lane
    # boundaries and padded lanes stay exactly zero.
    def gate_pad(w):                                  # (4H, H) -> (Hp, 4*Hp)
        wt = w.T.reshape(H, 4, H)[:, perm, :]
        wt = jnp.pad(wt, ((0, Hp - H), (0, 0), (0, Hp - H)))
        return wt.reshape(Hp, 4 * Hp).astype(jnp.bfloat16)

    w_ih = gate_pad(params["w_ih"])
    w_hh = gate_pad(params["w_hh"])
    b_g = (params["b_ih"] + params["b_hh"]).reshape(4, H)[perm, :]   # fused bias
    b_g = jnp.pad(b_g, ((0, 0), (0, Hp - H))).reshape(1, 4 * Hp).astype(jnp.float32)

    w_out = jnp.pad(params["w_out"].T,
                    ((0, Hp - H), (0, nyp - ny))).astype(jnp.bfloat16)
    b_out = jnp.pad(params["b_out"], (0, nyp - ny)).reshape(1, nyp).astype(jnp.float32)

    return dict(w_in_blocks=w_in_blocks, b_in=b_in, w_ih=w_ih, w_hh=w_hh,
                b_g=b_g, w_out=w_out, b_out=b_out, Hp=Hp, nyp=nyp)


def run_lstm_model(xs, params, t_blk=None, chunk=None, b_blk=None):
    """Pallas implementation of CudnnLstmModel.forward (eval mode).

    xs: list of time-major (T, B, nx_i) inputs whose features are concatenated
        conceptually (the concat is folded into split linearIn weight blocks).
    Returns (T, B, ny) in float32.
    """
    T, B = xs[0].shape[0], xs[0].shape[1]
    nx_list = [int(x.shape[-1]) for x in xs]
    ny = params["w_out"].shape[0]

    prep = _prep_params(params, nx_list)
    Hp, nyp = prep["Hp"], prep["nyp"]

    Bp = _round_up(B, 8)
    if b_blk is None:
        b_blk = Bp        # v7x: pass b_blk = Bp // 2 to spread batch over 2 TCs
    b_blk = _round_up(min(b_blk, Bp), 8)
    Bp = _round_up(Bp, b_blk)

    if t_blk is None:
        t_blk = min(_round_up(T, 8), 64)      # time-block per grid step
    if chunk is None:
        chunk = 16                            # hoisted-matmul sub-chunk
    chunk = max(1, min(chunk, t_blk))
    if t_blk % chunk:
        t_blk = _round_up(t_blk, chunk)
    Tp = _round_up(T, t_blk)

    xs_p = []
    for x, nxi in zip(xs, nx_list):
        nxp = _round_up(nxi, 128)
        xs_p.append(jnp.pad(x.astype(jnp.float32),
                            ((0, Tp - T), (0, Bp - B), (0, nxp - nxi)))
                    .astype(jnp.bfloat16))

    n_in = len(xs)
    kernel = functools.partial(_lstm_block_kernel, hidden=Hp, t_blk=t_blk,
                               chunk=chunk, batch=b_blk, n_in=n_in)

    def const_spec(a):
        nd = a.ndim
        return pl.BlockSpec(a.shape, lambda bb, tb, _nd=nd: (0,) * _nd)

    in_specs = (
        [pl.BlockSpec((t_blk, b_blk, xp.shape[-1]), lambda bb, tb: (tb, bb, 0))
         for xp in xs_p]
        + [const_spec(w) for w in prep["w_in_blocks"]]
        + [const_spec(prep["b_in"]), const_spec(prep["w_ih"]),
           const_spec(prep["w_hh"]), const_spec(prep["b_g"]),
           const_spec(prep["w_out"]), const_spec(prep["b_out"])])

    # Explicit scoped-VMEM limit from the (chunked) tile budget, with headroom.
    bytes_in = sum(2 * t_blk * b_blk * xp.shape[-1] * 2 for xp in xs_p)
    bytes_out = 2 * t_blk * b_blk * nyp * 4
    bytes_w = (2 * (sum(int(w.size) for w in prep["w_in_blocks"])
                    + int(prep["w_ih"].size) + int(prep["w_hh"].size)
                    + int(prep["w_out"].size)) * 2
               + 2 * (int(prep["b_in"].size) + int(prep["b_g"].size)
                      + int(prep["b_out"].size)) * 4)
    bytes_scr = (2 * b_blk * Hp * 4              # h, c carries (f32)
                 + chunk * b_blk * 4 * Hp * 4    # chunk pre-gate buffer (f32)
                 + chunk * b_blk * Hp * 2)       # chunk h history (bf16)
    vmem_limit = int(max(32 << 20,
                         min(64 << 20,
                             2 * (bytes_in + bytes_out + bytes_w + bytes_scr)
                             + (8 << 20))))

    out = pl.pallas_call(
        kernel,
        out_shape=jax.ShapeDtypeStruct((Tp, Bp, nyp), jnp.float32),
        grid=(Bp // b_blk, Tp // t_blk),
        in_specs=in_specs,
        out_specs=pl.BlockSpec((t_blk, b_blk, nyp), lambda bb, tb: (tb, bb, 0)),
        scratch_shapes=[
            pltpu.VMEM((b_blk, Hp), jnp.float32),              # h carry
            pltpu.VMEM((b_blk, Hp), jnp.float32),              # c carry
            pltpu.VMEM((chunk, b_blk, 4 * Hp), jnp.float32),   # chunk pre-gates
            pltpu.VMEM((chunk, b_blk, Hp), jnp.bfloat16),      # chunk h history
        ],
        compiler_params=pltpu.CompilerParams(
            dimension_semantics=("parallel", "arbitrary"),
            vmem_limit_bytes=vmem_limit),
    )(*xs_p, *prep["w_in_blocks"], prep["b_in"], prep["w_ih"], prep["w_hh"],
      prep["b_g"], prep["w_out"], prep["b_out"])

    return out[:T, :B, :ny]


def init_lstm_model_params(key, nx, ny, hidden):
    """Deterministic init matching shapes of CudnnLstmModel parameters."""
    keys = jax.random.split(key, 8)

    def u(k, shape, bound):
        return jax.random.uniform(k, shape, jnp.float32, -bound, bound)

    k_in = 1.0 / math.sqrt(nx)
    k_h = 1.0 / math.sqrt(hidden)
    return dict(
        w_in=u(keys[0], (hidden, nx), k_in),       # linearIn.weight
        b_in=u(keys[1], (hidden,), k_in),          # linearIn.bias
        w_ih=u(keys[2], (4 * hidden, hidden), k_h),
        w_hh=u(keys[3], (4 * hidden, hidden), k_h),
        b_ih=u(keys[4], (4 * hidden,), k_h),
        b_hh=u(keys[5], (4 * hidden,), k_h),
        w_out=u(keys[6], (ny, hidden), k_h),       # linearOut.weight
        b_out=u(keys[7], (ny,), k_h),              # linearOut.bias
    )


def cudnn_lstm_model_inv_forward(xh, xt, params_inv, params_main,
                                 t_blk=None, chunk=None, b_blk=None):
    """CudnnLstmModelInv.forward: param = lstm_inv(xh); out = lstm([xt, param])."""
    param = run_lstm_model([xh], params_inv,
                           t_blk=t_blk, chunk=chunk, b_blk=b_blk)    # (T, B, nx2)
    # torch.cat((xt, param), -1) folded into split linearIn weight blocks.
    out_lstm = run_lstm_model([xt, param], params_main,
                              t_blk=t_blk, chunk=chunk, b_blk=b_blk)  # (T, B, ny)
    return out_lstm, param


# ----------------------- pure-JAX reference (for checking) -----------------------
def _ref_lstm_model(x, p):
    H = p["w_hh"].shape[1]
    x0 = jax.nn.relu(jnp.einsum("tbi,hi->tbh", x, p["w_in"]) + p["b_in"])

    def step(carry, xt):
        h, c = carry
        gates = xt @ p["w_ih"].T + p["b_ih"] + h @ p["w_hh"].T + p["b_hh"]
        i, f, g, o = jnp.split(gates, 4, axis=-1)
        c = jax.nn.sigmoid(f) * c + jax.nn.sigmoid(i) * jnp.tanh(g)
        h = jax.nn.sigmoid(o) * jnp.tanh(c)
        return (h, c), h

    B = x.shape[1]
    h0 = jnp.zeros((B, H), jnp.float32)
    c0 = jnp.zeros((B, H), jnp.float32)
    _, hs = jax.lax.scan(step, (h0, c0), x0)
    return hs @ p["w_out"].T + p["b_out"]


def _ref_inv(xh, xt, p_inv, p_main):
    param = _ref_lstm_model(xh, p_inv)
    x1 = jnp.concatenate([xt, param], axis=-1)
    return _ref_lstm_model(x1, p_main), param


if __name__ == "__main__":
    # Small shapes consistent with the module:
    #   nx = (nx0, nx1, nx2), ny, hidden_size (inv model uses hidden_size // 4).
    # T=16 with t_blk=8, chunk=4 exercises cross-block h/c carry, the chunked
    # pre-gate/linearOut path and the in-chunk recurrence.
    T, B = 16, 2
    nx = (4, 5, 3)
    ny = 2
    hidden_size = 32

    key = jax.random.PRNGKey(0)
    k_xh, k_xt, k_pinv, k_pmain = jax.random.split(key, 4)

    xh = jax.random.normal(k_xh, (T, B, nx[0]), jnp.float32)
    xt = jax.random.normal(k_xt, (T, B, nx[1]), jnp.float32)

    params_inv = init_lstm_model_params(k_pinv, nx[0], nx[2], hidden_size // 4)
    params_main = init_lstm_model_params(k_pmain, nx[1] + nx[2], ny, hidden_size)

    fwd = jax.jit(cudnn_lstm_model_inv_forward,
                  static_argnames=("t_blk", "chunk", "b_blk"))
    out_lstm, param = fwd(xh, xt, params_inv, params_main, t_blk=8, chunk=4)
    out_lstm = jax.block_until_ready(out_lstm)
    param = jax.block_until_ready(param)

    # correctness check against pure-f32 JAX reference (bf16 MXU -> looser tol)
    ref_out, ref_param = _ref_inv(xh, xt, params_inv, params_main)
    assert out_lstm.shape == (T, B, ny)
    assert param.shape == (T, B, nx[2])
    assert jnp.allclose(param, ref_param, atol=2e-2, rtol=2e-2), \
        float(jnp.max(jnp.abs(param - ref_param)))
    assert jnp.allclose(out_lstm, ref_out, atol=2e-2, rtol=2e-2), \
        float(jnp.max(jnp.abs(out_lstm - ref_out)))

    print("KERNEL_OK")
</pallas_src>

<mosaic_0001>
module attributes {stable_mosaic.version = 11 : i64} {
  func.func @_lstm_block_kernel(%arg0: i32, %arg1: i32, %arg2: memref<8x8x128xbf16, #tpu.memory_space<vmem>>, %arg3: memref<128x128xbf16, #tpu.memory_space<vmem>>, %arg4: memref<1x128xf32, #tpu.memory_space<vmem>>, %arg5: memref<128x512xbf16, #tpu.memory_space<vmem>>, %arg6: memref<128x512xbf16, #tpu.memory_space<vmem>>, %arg7: memref<1x512xf32, #tpu.memory_space<vmem>>, %arg8: memref<128x128xbf16, #tpu.memory_space<vmem>>, %arg9: memref<1x128xf32, #tpu.memory_space<vmem>>, %arg10: memref<8x8x128xf32, #tpu.memory_space<vmem>>, %arg11: memref<8x128xf32, #tpu.memory_space<vmem>>, %arg12: memref<8x128xf32, #tpu.memory_space<vmem>>, %arg13: memref<4x8x512xf32, #tpu.memory_space<vmem>>, %arg14: memref<4x8x128xbf16, #tpu.memory_space<vmem>>) attributes {dimension_semantics = [#tpu.dimension_semantics<parallel>, #tpu.dimension_semantics<arbitrary>], iteration_bounds = array<i64: 1, 2>, scalar_prefetch = 0 : i64, scratch_operands = 4 : i64, tpu.core_type = #tpu.core_type<tc>, window_params = [{transform_indices = @transform_0, window_bounds = array<i64: 8, 8, 128>}, {pipeline_mode = #tpu.pipeline_mode<synchronous>, transform_indices = @transform_1, window_bounds = array<i64: 128, 128>}, {pipeline_mode = #tpu.pipeline_mode<synchronous>, transform_indices = @transform_2, window_bounds = array<i64: 1, 128>}, {pipeline_mode = #tpu.pipeline_mode<synchronous>, transform_indices = @transform_3, window_bounds = array<i64: 128, 512>}, {pipeline_mode = #tpu.pipeline_mode<synchronous>, transform_indices = @transform_4, window_bounds = array<i64: 128, 512>}, {pipeline_mode = #tpu.pipeline_mode<synchronous>, transform_indices = @transform_5, window_bounds = array<i64: 1, 512>}, {pipeline_mode = #tpu.pipeline_mode<synchronous>, transform_indices = @transform_6, window_bounds = array<i64: 128, 128>}, {pipeline_mode = #tpu.pipeline_mode<synchronous>, transform_indices = @transform_7, window_bounds = array<i64: 1, 128>}, {transform_indices = @transform_8, window_bounds = array<i64: 8, 8, 128>}]} {
    %c0_i32 = arith.constant 0 : i32
    %0 = arith.cmpi eq, %arg1, %c0_i32 : i32
    %1 = arith.extui %0 : i1 to i32
    %c0_i32_0 = arith.constant 0 : i32
    %2 = arith.cmpi ne, %1, %c0_i32_0 : i32
    scf.if %2 {
      %cst_132 = arith.constant 0.000000e+00 : f32
      %283 = vector.broadcast %cst_132 : f32 to vector<8x128xf32>
      %c0_133 = arith.constant 0 : index
      %c0_134 = arith.constant 0 : index
      %284 = vector.load %arg11[%c0_133, %c0_134] : memref<8x128xf32, #tpu.memory_space<vmem>>, vector<8x128xf32>
      tpu.vector_store %arg11[%c0_133, %c0_134], %283 {strides = array<i32>} : memref<8x128xf32, #tpu.memory_space<vmem>>, vector<8x128xf32>,
      %cst_135 = arith.constant 0.000000e+00 : f32
      %285 = vector.broadcast %cst_135 : f32 to vector<8x128xf32>
      %c0_136 = arith.constant 0 : index
      %c0_137 = arith.constant 0 : index
      %286 = vector.load %arg12[%c0_136, %c0_137] : memref<8x128xf32, #tpu.memory_space<vmem>>, vector<8x128xf32>
      tpu.vector_store %arg12[%c0_136, %c0_137], %285 {strides = array<i32>} : memref<8x128xf32, #tpu.memory_space<vmem>>, vector<8x128xf32>,
    } else {
    }
    %c0 = arith.constant 0 : index
    %c0_1 = arith.constant 0 : index
    %3 = vector.load %arg11[%c0, %c0_1] : memref<8x128xf32, #tpu.memory_space<vmem>>, vector<8x128xf32>
    %c0_2 = arith.constant 0 : index
    %c0_3 = arith.constant 0 : index
    %4 = vector.load %arg12[%c0_2, %c0_3] : memref<8x128xf32, #tpu.memory_space<vmem>>, vector<8x128xf32>
    %c0_4 = arith.constant 0 : index
    %c0_5 = arith.constant 0 : index
    %5 = vector.load %arg4[%c0_4, %c0_5] : memref<1x128xf32, #tpu.memory_space<vmem>>, vector<1x128xf32>
    %c0_6 = arith.constant 0 : index
    %c0_7 = arith.constant 0 : index
    %c0_8 = arith.constant 0 : index
    %6 = vector.load %arg2[%c0_6, %c0_7, %c0_8] : memref<8x8x128xbf16, #tpu.memory_space<vmem>>, vector<4x8x128xbf16>
    %7 = vector.shape_cast %6 : vector<4x8x128xbf16> to vector<32x128xbf16>
    %c0_9 = arith.constant 0 : index
    %c0_10 = arith.constant 0 : index
    %8 = vector.load %arg3[%c0_9, %c0_10] : memref<128x128xbf16, #tpu.memory_space<vmem>>, vector<128x128xbf16>
    %cst = arith.constant dense<0.000000e+00> : vector<32x128xf32>
    %9 = tpu.matmul %7, %8, %cst {dimension_numbers = #tpu.dot_dimension_numbers<[1], [0], [0], [1], [0, 0, 1, 1], [], []>} : vector<32x128xbf16>, vector<128x128xbf16>, vector<32x128xf32> -> vector<32x128xf32>
    %10 = vector.broadcast %5 : vector<1x128xf32> to vector<32x128xf32>
    %11 = arith.addf %10, %9 : vector<32x128xf32>
    %cst_11 = arith.constant 0.000000e+00 : f32
    %12 = vector.broadcast %cst_11 : f32 to vector<32x128xf32>
    %13 = arith.maximumf %11, %12 : vector<32x128xf32>
    %14 = arith.truncf %13 : vector<32x128xf32> to vector<32x128xbf16>
    %c0_12 = arith.constant 0 : index
    %c0_13 = arith.constant 0 : index
    %15 = vector.load %arg5[%c0_12, %c0_13] : memref<128x512xbf16, #tpu.memory_space<vmem>>, vector<128x512xbf16>
    %cst_14 = arith.constant dense<0.000000e+00> : vector<32x512xf32>
    %16 = tpu.matmul %14, %15, %cst_14 {dimension_numbers = #tpu.dot_dimension_numbers<[1], [0], [0], [1], [0, 0, 1, 1], [], []>} : vector<32x128xbf16>, vector<128x512xbf16>, vector<32x512xf32> -> vector<32x512xf32>
    %c0_15 = arith.constant 0 : index
    %c0_16 = arith.constant 0 : index
    %17 = vector.load %arg7[%c0_15, %c0_16] : memref<1x512xf32, #tpu.memory_space<vmem>>, vector<1x512xf32>
    %18 = vector.broadcast %17 : vector<1x512xf32> to vector<32x512xf32>
    %19 = arith.addf %16, %18 : vector<32x512xf32>
    %20 = vector.shape_cast %19 : vector<32x512xf32> to vector<4x8x512xf32>
    %c0_17 = arith.constant 0 : index
    %c0_18 = arith.constant 0 : index
    %c0_19 = arith.constant 0 : index
    %21 = vector.load %arg13[%c0_17, %c0_18, %c0_19] : memref<4x8x512xf32, #tpu.memory_space<vmem>>, vector<4x8x512xf32>
    tpu.vector_store %arg13[%c0_17, %c0_18, %c0_19], %20 {strides = array<i32>} : memref<4x8x512xf32, #tpu.memory_space<vmem>>, vector<4x8x512xf32>,
    %c0_i32_20 = arith.constant 0 : i32
    %22 = arith.index_cast %c0_i32_20 : i32 to index
    %c0_21 = arith.constant 0 : index
    %c0_22 = arith.constant 0 : index
    %23 = vector.load %arg13[%22, %c0_21, %c0_22] : memref<4x8x512xf32, #tpu.memory_space<vmem>>, vector<1x8x512xf32>
    %24 = vector.shape_cast %23 : vector<1x8x512xf32> to vector<8x512xf32>
    %25 = arith.truncf %3 : vector<8x128xf32> to vector<8x128xbf16>
    %c0_23 = arith.constant 0 : index
    %c0_24 = arith.constant 0 : index
    %26 = vector.load %arg6[%c0_23, %c0_24] : memref<128x512xbf16, #tpu.memory_space<vmem>>, vector<128x512xbf16>
    %cst_25 = arith.constant dense<0.000000e+00> : vector<8x512xf32>
    %27 = tpu.matmul %25, %26, %cst_25 {dimension_numbers = #tpu.dot_dimension_numbers<[1], [0], [0], [1], [0, 0, 1, 1], [], []>} : vector<8x128xbf16>, vector<128x512xbf16>, vector<8x512xf32> -> vector<8x512xf32>
    %28 = arith.addf %24, %27 : vector<8x512xf32>
    %29 = vector.extract_strided_slice %28 {offsets = [0, 0], sizes = [8, 384], strides = [1, 1]} : vector<8x512xf32> to vector<8x384xf32>
    %30 = arith.negf %29 : vector<8x384xf32>
    %31 = math.exp %30 : vector<8x384xf32>
    %cst_26 = arith.constant 1.000000e+00 : f32
    %32 = vector.broadcast %cst_26 : f32 to vector<8x384xf32>
    %33 = arith.addf %32, %31 : vector<8x384xf32>
    %34 = arith.divf %32, %33 : vector<8x384xf32>
    %35 = vector.extract_strided_slice %28 {offsets = [0, 384], sizes = [8, 128], strides = [1, 1]} : vector<8x512xf32> to vector<8x128xf32>
    %36 = math.tanh %35 : vector<8x128xf32>
    %37 = vector.extract_strided_slice %34 {offsets = [0, 0], sizes = [8, 128], strides = [1, 1]} : vector<8x384xf32> to vector<8x128xf32>
    %38 = vector.extract_strided_slice %34 {offsets = [0, 128], sizes = [8, 128], strides = [1, 1]} : vector<8x384xf32> to vector<8x128xf32>
    %39 = vector.extract_strided_slice %34 {offsets = [0, 256], sizes = [8, 128], strides = [1, 1]} : vector<8x384xf32> to vector<8x128xf32>
    %40 = arith.mulf %38, %4 : vector<8x128xf32>
    %41 = arith.mulf %37, %36 : vector<8x128xf32>
    %42 = arith.addf %40, %41 : vector<8x128xf32>
    %43 = math.tanh %42 : vector<8x128xf32>
    %44 = arith.mulf %39, %43 : vector<8x128xf32>
    %45 = arith.truncf %44 : vector<8x128xf32> to vector<8x128xbf16>
    %46 = arith.index_cast %c0_i32_20 : i32 to index
    %c0_27 = arith.constant 0 : index
    %c0_28 = arith.constant 0 : index
    %47 = vector.load %arg14[%46, %c0_27, %c0_28] : memref<4x8x128xbf16, #tpu.memory_space<vmem>>, vector<1x8x128xbf16>
    %48 = vector.shape_cast %47 : vector<1x8x128xbf16> to vector<8x128xbf16>
    %49 = vector.shape_cast %45 : vector<8x128xbf16> to vector<1x8x128xbf16>
    tpu.vector_store %arg14[%46, %c0_27, %c0_28], %49 {strides = array<i32>} : memref<4x8x128xbf16, #tpu.memory_space<vmem>>, vector<1x8x128xbf16>,
    %c1_i32 = arith.constant 1 : i32
    %50 = arith.index_cast %c1_i32 : i32 to index
    %c0_29 = arith.constant 0 : index
    %c0_30 = arith.constant 0 : index
    %51 = vector.load %arg13[%50, %c0_29, %c0_30] : memref<4x8x512xf32, #tpu.memory_space<vmem>>, vector<1x8x512xf32>
    %52 = vector.shape_cast %51 : vector<1x8x512xf32> to vector<8x512xf32>
    %53 = arith.truncf %44 : vector<8x128xf32> to vector<8x128xbf16>
    %c0_31 = arith.constant 0 : index
    %c0_32 = arith.constant 0 : index
    %54 = vector.load %arg6[%c0_31, %c0_32] : memref<128x512xbf16, #tpu.memory_space<vmem>>, vector<128x512xbf16>
    %cst_33 = arith.constant dense<0.000000e+00> : vector<8x512xf32>
    %55 = tpu.matmul %53, %54, %cst_33 {dimension_numbers = #tpu.dot_dimension_numbers<[1], [0], [0], [1], [0, 0, 1, 1], [], []>} : vector<8x128xbf16>, vector<128x512xbf16>, vector<8x512xf32> -> vector<8x512xf32>
    %56 = arith.addf %52, %55 : vector<8x512xf32>
    %57 = vector.extract_strided_slice %56 {offsets = [0, 0], sizes = [8, 384], strides = [1, 1]} : vector<8x512xf32> to vector<8x384xf32>
    %58 = arith.negf %57 : vector<8x384xf32>
    %59 = math.exp %58 : vector<8x384xf32>
    %cst_34 = arith.constant 1.000000e+00 : f32
    %60 = vector.broadcast %cst_34 : f32 to vector<8x384xf32>
    %61 = arith.addf %60, %59 : vector<8x384xf32>
    %62 = arith.divf %60, %61 : vector<8x384xf32>
    %63 = vector.extract_strided_slice %56 {offsets = [0, 384], sizes = [8, 128], strides = [1, 1]} : vector<8x512xf32> to vector<8x128xf32>
    %64 = math.tanh %63 : vector<8x128xf32>
    %65 = vector.extract_strided_slice %62 {offsets = [0, 0], sizes = [8, 128], strides = [1, 1]} : vector<8x384xf32> to vector<8x128xf32>
    %66 = vector.extract_strided_slice %62 {offsets = [0, 128], sizes = [8, 128], strides = [1, 1]} : vector<8x384xf32> to vector<8x128xf32>
    %67 = vector.extract_strided_slice %62 {offsets = [0, 256], sizes = [8, 128], strides = [1, 1]} : vector<8x384xf32> to vector<8x128xf32>
    %68 = arith.mulf %66, %42 : vector<8x128xf32>
    %69 = arith.mulf %65, %64 : vector<8x128xf32>
    %70 = arith.addf %68, %69 : vector<8x128xf32>
    %71 = math.tanh %70 : vector<8x128xf32>
    %72 = arith.mulf %67, %71 : vector<8x128xf32>
    %73 = arith.truncf %72 : vector<8x128xf32> to vector<8x128xbf16>
    %74 = arith.index_cast %c1_i32 : i32 to index
    %c0_35 = arith.constant 0 : index
    %c0_36 = arith.constant 0 : index
    %75 = vector.load %arg14[%74, %c0_35, %c0_36] : memref<4x8x128xbf16, #tpu.memory_space<vmem>>, vector<1x8x128xbf16>
    %76 = vector.shape_cast %75 : vector<1x8x128xbf16> to vector<8x128xbf16>
    %77 = vector.shape_cast %73 : vector<8x128xbf16> to vector<1x8x128xbf16>
    tpu.vector_store %arg14[%74, %c0_35, %c0_36], %77 {strides = array<i32>} : memref<4x8x128xbf16, #tpu.memory_space<vmem>>, vector<1x8x128xbf16>,
    %c2_i32 = arith.constant 2 : i32
    %78 = arith.index_cast %c2_i32 : i32 to index
    %c0_37 = arith.constant 0 : index
    %c0_38 = arith.constant 0 : index
    %79 = vector.load %arg13[%78, %c0_37, %c0_38] : memref<4x8x512xf32, #tpu.memory_space<vmem>>, vector<1x8x512xf32>
    %80 = vector.shape_cast %79 : vector<1x8x512xf32> to vector<8x512xf32>
    %81 = arith.truncf %72 : vector<8x128xf32> to vector<8x128xbf16>
    %c0_39 = arith.constant 0 : index
    %c0_40 = arith.constant 0 : index
    %82 = vector.load %arg6[%c0_39, %c0_40] : memref<128x512xbf16, #tpu.memory_space<vmem>>, vector<128x512xbf16>
    %cst_41 = arith.constant dense<0.000000e+00> : vector<8x512xf32>
    %83 = tpu.matmul %81, %82, %cst_41 {dimension_numbers = #tpu.dot_dimension_numbers<[1], [0], [0], [1], [0, 0, 1, 1], [], []>} : vector<8x128xbf16>, vector<128x512xbf16>, vector<8x512xf32> -> vector<8x512xf32>
    %84 = arith.addf %80, %83 : vector<8x512xf32>
    %85 = vector.extract_strided_slice %84 {offsets = [0, 0], sizes = [8, 384], strides = [1, 1]} : vector<8x512xf32> to vector<8x384xf32>
    %86 = arith.negf %85 : vector<8x384xf32>
    %87 = math.exp %86 : vector<8x384xf32>
    %cst_42 = arith.constant 1.000000e+00 : f32
    %88 = vector.broadcast %cst_42 : f32 to vector<8x384xf32>
    %89 = arith.addf %88, %87 : vector<8x384xf32>
    %90 = arith.divf %88, %89 : vector<8x384xf32>
    %91 = vector.extract_strided_slice %84 {offsets = [0, 384], sizes = [8, 128], strides = [1, 1]} : vector<8x512xf32> to vector<8x128xf32>
    %92 = math.tanh %91 : vector<8x128xf32>
    %93 = vector.extract_strided_slice %90 {offsets = [0, 0], sizes = [8, 128], strides = [1, 1]} : vector<8x384xf32> to vector<8x128xf32>
    %94 = vector.extract_strided_slice %90 {offsets = [0, 128], sizes = [8, 128], strides = [1, 1]} : vector<8x384xf32> to vector<8x128xf32>
    %95 = vector.extract_strided_slice %90 {offsets = [0, 256], sizes = [8, 128], strides = [1, 1]} : vector<8x384xf32> to vector<8x128xf32>
    %96 = arith.mulf %94, %70 : vector<8x128xf32>
    %97 = arith.mulf %93, %92 : vector<8x128xf32>
    %98 = arith.addf %96, %97 : vector<8x128xf32>
    %99 = math.tanh %98 : vector<8x128xf32>
    %100 = arith.mulf %95, %99 : vector<8x128xf32>
    %101 = arith.truncf %100 : vector<8x128xf32> to vector<8x128xbf16>
    %102 = arith.index_cast %c2_i32 : i32 to index
    %c0_43 = arith.constant 0 : index
    %c0_44 = arith.constant 0 : index
    %103 = vector.load %arg14[%102, %c0_43, %c0_44] : memref<4x8x128xbf16, #tpu.memory_space<vmem>>, vector<1x8x128xbf16>
    %104 = vector.shape_cast %103 : vector<1x8x128xbf16> to vector<8x128xbf16>
    %105 = vector.shape_cast %101 : vector<8x128xbf16> to vector<1x8x128xbf16>
    tpu.vector_store %arg14[%102, %c0_43, %c0_44], %105 {strides = array<i32>} : memref<4x8x128xbf16, #tpu.memory_space<vmem>>, vector<1x8x128xbf16>,
    %c3_i32 = arith.constant 3 : i32
    %106 = arith.index_cast %c3_i32 : i32 to index
    %c0_45 = arith.constant 0 : index
    %c0_46 = arith.constant 0 : index
    %107 = vector.load %arg13[%106, %c0_45, %c0_46] : memref<4x8x512xf32, #tpu.memory_space<vmem>>, vector<1x8x512xf32>
    %108 = vector.shape_cast %107 : vector<1x8x512xf32> to vector<8x512xf32>
    %109 = arith.truncf %100 : vector<8x128xf32> to vector<8x128xbf16>
    %c0_47 = arith.constant 0 : index
    %c0_48 = arith.constant 0 : index
    %110 = vector.load %arg6[%c0_47, %c0_48] : memref<128x512xbf16, #tpu.memory_space<vmem>>, vector<128x512xbf16>
    %cst_49 = arith.constant dense<0.000000e+00> : vector<8x512xf32>
    %111 = tpu.matmul %109, %110, %cst_49 {dimension_numbers = #tpu.dot_dimension_numbers<[1], [0], [0], [1], [0, 0, 1, 1], [], []>} : vector<8x128xbf16>, vector<128x512xbf16>, vector<8x512xf32> -> vector<8x512xf32>
    %112 = arith.addf %108, %111 : vector<8x512xf32>
    %113 = vector.extract_strided_slice %112 {offsets = [0, 0], sizes = [8, 384], strides = [1, 1]} : vector<8x512xf32> to vector<8x384xf32>
    %114 = arith.negf %113 : vector<8x384xf32>
    %115 = math.exp %114 : vector<8x384xf32>
    %cst_50 = arith.constant 1.000000e+00 : f32
    %116 = vector.broadcast %cst_50 : f32 to vector<8x384xf32>
    %117 = arith.addf %116, %115 : vector<8x384xf32>
    %118 = arith.divf %116, %117 : vector<8x384xf32>
    %119 = vector.extract_strided_slice %112 {offsets = [0, 384], sizes = [8, 128], strides = [1, 1]} : vector<8x512xf32> to vector<8x128xf32>
    %120 = math.tanh %119 : vector<8x128xf32>
    %121 = vector.extract_strided_slice %118 {offsets = [0, 0], sizes = [8, 128], strides = [1, 1]} : vector<8x384xf32> to vector<8x128xf32>
    %122 = vector.extract_strided_slice %118 {offsets = [0, 128], sizes = [8, 128], strides = [1, 1]} : vector<8x384xf32> to vector<8x128xf32>
    %123 = vector.extract_strided_slice %118 {offsets = [0, 256], sizes = [8, 128], strides = [1, 1]} : vector<8x384xf32> to vector<8x128xf32>
    %124 = arith.mulf %122, %98 : vector<8x128xf32>
    %125 = arith.mulf %121, %120 : vector<8x128xf32>
    %126 = arith.addf %124, %125 : vector<8x128xf32>
    %127 = math.tanh %126 : vector<8x128xf32>
    %128 = arith.mulf %123, %127 : vector<8x128xf32>
    %129 = arith.truncf %128 : vector<8x128xf32> to vector<8x128xbf16>
    %130 = arith.index_cast %c3_i32 : i32 to index
    %c0_51 = arith.constant 0 : index
    %c0_52 = arith.constant 0 : index
    %131 = vector.load %arg14[%130, %c0_51, %c0_52] : memref<4x8x128xbf16, #tpu.memory_space<vmem>>, vector<1x8x128xbf16>
    %132 = vector.shape_cast %131 : vector<1x8x128xbf16> to vector<8x128xbf16>
    %133 = vector.shape_cast %129 : vector<8x128xbf16> to vector<1x8x128xbf16>
    tpu.vector_store %arg14[%130, %c0_51, %c0_52], %133 {strides = array<i32>} : memref<4x8x128xbf16, #tpu.memory_space<vmem>>, vector<1x8x128xbf16>,
    %c4_i32 = arith.constant 4 : i32
    %c0_53 = arith.constant 0 : index
    %c0_54 = arith.constant 0 : index
    %c0_55 = arith.constant 0 : index
    %134 = vector.load %arg14[%c0_53, %c0_54, %c0_55] : memref<4x8x128xbf16, #tpu.memory_space<vmem>>, vector<4x8x128xbf16>
    %135 = vector.shape_cast %134 : vector<4x8x128xbf16> to vector<32x128xbf16>
    %c0_56 = arith.constant 0 : index
    %c0_57 = arith.constant 0 : index
    %136 = vector.load %arg8[%c0_56, %c0_57] : memref<128x128xbf16, #tpu.memory_space<vmem>>, vector<128x128xbf16>
    %cst_58 = arith.constant dense<0.000000e+00> : vector<32x128xf32>
    %137 = tpu.matmul %135, %136, %cst_58 {dimension_numbers = #tpu.dot_dimension_numbers<[1], [0], [0], [1], [0, 0, 1, 1], [], []>} : vector<32x128xbf16>, vector<128x128xbf16>, vector<32x128xf32> -> vector<32x128xf32>
    %c0_59 = arith.constant 0 : index
    %c0_60 = arith.constant 0 : index
    %138 = vector.load %arg9[%c0_59, %c0_60] : memref<1x128xf32, #tpu.memory_space<vmem>>, vector<1x128xf32>
    %139 = vector.broadcast %138 : vector<1x128xf32> to vector<32x128xf32>
    %140 = arith.addf %137, %139 : vector<32x128xf32>
    %141 = vector.shape_cast %140 : vector<32x128xf32> to vector<4x8x128xf32>
    %c0_61 = arith.constant 0 : index
    %c0_62 = arith.constant 0 : index
    %c0_63 = arith.constant 0 : index
    %142 = vector.load %arg10[%c0_61, %c0_62, %c0_63] : memref<8x8x128xf32, #tpu.memory_space<vmem>>, vector<4x8x128xf32>
    tpu.vector_store %arg10[%c0_61, %c0_62, %c0_63], %141 {strides = array<i32>} : memref<8x8x128xf32, #tpu.memory_space<vmem>>, vector<4x8x128xf32>,
    %c0_64 = arith.constant 0 : index
    %c0_65 = arith.constant 0 : index
    %143 = vector.load %arg4[%c0_64, %c0_65] : memref<1x128xf32, #tpu.memory_space<vmem>>, vector<1x128xf32>
    %c4 = arith.constant 4 : index
    %c0_66 = arith.constant 0 : index
    %c0_67 = arith.constant 0 : index
    %144 = vector.load %arg2[%c4, %c0_66, %c0_67] : memref<8x8x128xbf16, #tpu.memory_space<vmem>>, vector<4x8x128xbf16>
    %145 = vector.shape_cast %144 : vector<4x8x128xbf16> to vector<32x128xbf16>
    %c0_68 = arith.constant 0 : index
    %c0_69 = arith.constant 0 : index
    %146 = vector.load %arg3[%c0_68, %c0_69] : memref<128x128xbf16, #tpu.memory_space<vmem>>, vector<128x128xbf16>
    %cst_70 = arith.constant dense<0.000000e+00> : vector<32x128xf32>
    %147 = tpu.matmul %145, %146, %cst_70 {dimension_numbers = #tpu.dot_dimension_numbers<[1], [0], [0], [1], [0, 0, 1, 1], [], []>} : vector<32x128xbf16>, vector<128x128xbf16>, vector<32x128xf32> -> vector<32x128xf32>
    %148 = vector.broadcast %143 : vector<1x128xf32> to vector<32x128xf32>
    %149 = arith.addf %148, %147 : vector<32x128xf32>
    %cst_71 = arith.constant 0.000000e+00 : f32
    %150 = vector.broadcast %cst_71 : f32 to vector<32x128xf32>
    %151 = arith.maximumf %149, %150 : vector<32x128xf32>
    %152 = arith.truncf %151 : vector<32x128xf32> to vector<32x128xbf16>
    %c0_72 = arith.constant 0 : index
    %c0_73 = arith.constant 0 : index
    %153 = vector.load %arg5[%c0_72, %c0_73] : memref<128x512xbf16, #tpu.memory_space<vmem>>, vector<128x512xbf16>
    %cst_74 = arith.constant dense<0.000000e+00> : vector<32x512xf32>
    %154 = tpu.matmul %152, %153, %cst_74 {dimension_numbers = #tpu.dot_dimension_numbers<[1], [0], [0], [1], [0, 0, 1, 1], [], []>} : vector<32x128xbf16>, vector<128x512xbf16>, vector<32x512xf32> -> vector<32x512xf32>
    %c0_75 = arith.constant 0 : index
    %c0_76 = arith.constant 0 : index
    %155 = vector.load %arg7[%c0_75, %c0_76] : memref<1x512xf32, #tpu.memory_space<vmem>>, vector<1x512xf32>
    %156 = vector.broadcast %155 : vector<1x512xf32> to vector<32x512xf32>
    %157 = arith.addf %154, %156 : vector<32x512xf32>
    %158 = vector.shape_cast %157 : vector<32x512xf32> to vector<4x8x512xf32>
    %c0_77 = arith.constant 0 : index
    %c0_78 = arith.constant 0 : index
    %c0_79 = arith.constant 0 : index
    %159 = vector.load %arg13[%c0_77, %c0_78, %c0_79] : memref<4x8x512xf32, #tpu.memory_space<vmem>>, vector<4x8x512xf32>
    tpu.vector_store %arg13[%c0_77, %c0_78, %c0_79], %158 {strides = array<i32>} : memref<4x8x512xf32, #tpu.memory_space<vmem>>, vector<4x8x512xf32>,
    %c0_i32_80 = arith.constant 0 : i32
    %160 = arith.index_cast %c0_i32_80 : i32 to index
    %c0_81 = arith.constant 0 : index
    %c0_82 = arith.constant 0 : index
    %161 = vector.load %arg13[%160, %c0_81, %c0_82] : memref<4x8x512xf32, #tpu.memory_space<vmem>>, vector<1x8x512xf32>
    %162 = vector.shape_cast %161 : vector<1x8x512xf32> to vector<8x512xf32>
    %163 = arith.truncf %128 : vector<8x128xf32> to vector<8x128xbf16>
    %c0_83 = arith.constant 0 : index
    %c0_84 = arith.constant 0 : index
    %164 = vector.load %arg6[%c0_83, %c0_84] : memref<128x512xbf16, #tpu.memory_space<vmem>>, vector<128x512xbf16>
    %cst_85 = arith.constant dense<0.000000e+00> : vector<8x512xf32>
    %165 = tpu.matmul %163, %164, %cst_85 {dimension_numbers = #tpu.dot_dimension_numbers<[1], [0], [0], [1], [0, 0, 1, 1], [], []>} : vector<8x128xbf16>, vector<128x512xbf16>, vector<8x512xf32> -> vector<8x512xf32>
    %166 = arith.addf %162, %165 : vector<8x512xf32>
    %167 = vector.extract_strided_slice %166 {offsets = [0, 0], sizes = [8, 384], strides = [1, 1]} : vector<8x512xf32> to vector<8x384xf32>
    %168 = arith.negf %167 : vector<8x384xf32>
    %169 = math.exp %168 : vector<8x384xf32>
    %cst_86 = arith.constant 1.000000e+00 : f32
    %170 = vector.broadcast %cst_86 : f32 to vector<8x384xf32>
    %171 = arith.addf %170, %169 : vector<8x384xf32>
    %172 = arith.divf %170, %171 : vector<8x384xf32>
    %173 = vector.extract_strided_slice %166 {offsets = [0, 384], sizes = [8, 128], strides = [1, 1]} : vector<8x512xf32> to vector<8x128xf32>
    %174 = math.tanh %173 : vector<8x128xf32>
    %175 = vector.extract_strided_slice %172 {offsets = [0, 0], sizes = [8, 128], strides = [1, 1]} : vector<8x384xf32> to vector<8x128xf32>
    %176 = vector.extract_strided_slice %172 {offsets = [0, 128], sizes = [8, 128], strides = [1, 1]} : vector<8x384xf32> to vector<8x128xf32>
    %177 = vector.extract_strided_slice %172 {offsets = [0, 256], sizes = [8, 128], strides = [1, 1]} : vector<8x384xf32> to vector<8x128xf32>
    %178 = arith.mulf %176, %126 : vector<8x128xf32>
    %179 = arith.mulf %175, %174 : vector<8x128xf32>
    %180 = arith.addf %178, %179 : vector<8x128xf32>
    %181 = math.tanh %180 : vector<8x128xf32>
    %182 = arith.mulf %177, %181 : vector<8x128xf32>
    %183 = arith.truncf %182 : vector<8x128xf32> to vector<8x128xbf16>
    %184 = arith.index_cast %c0_i32_80 : i32 to index
    %c0_87 = arith.constant 0 : index
    %c0_88 = arith.constant 0 : index
    %185 = vector.load %arg14[%184, %c0_87, %c0_88] : memref<4x8x128xbf16, #tpu.memory_space<vmem>>, vector<1x8x128xbf16>
    %186 = vector.shape_cast %185 : vector<1x8x128xbf16> to vector<8x128xbf16>
    %187 = vector.shape_cast %183 : vector<8x128xbf16> to vector<1x8x128xbf16>
    tpu.vector_store %arg14[%184, %c0_87, %c0_88], %187 {strides = array<i32>} : memref<4x8x128xbf16, #tpu.memory_space<vmem>>, vector<1x8x128xbf16>,
    %c1_i32_89 = arith.constant 1 : i32
    %188 = arith.index_cast %c1_i32_89 : i32 to index
    %c0_90 = arith.constant 0 : index
    %c0_91 = arith.constant 0 : index
    %189 = vector.load %arg13[%188, %c0_90, %c0_91] : memref<4x8x512xf32, #tpu.memory_space<vmem>>, vector<1x8x512xf32>
    %190 = vector.shape_cast %189 : vector<1x8x512xf32> to vector<8x512xf32>
    %191 = arith.truncf %182 : vector<8x128xf32> to vector<8x128xbf16>
    %c0_92 = arith.constant 0 : index
    %c0_93 = arith.constant 0 : index
    %192 = vector.load %arg6[%c0_92, %c0_93] : memref<128x512xbf16, #tpu.memory_space<vmem>>, vector<128x512xbf16>
    %cst_94 = arith.constant dense<0.000000e+00> : vector<8x512xf32>
    %193 = tpu.matmul %191, %192, %cst_94 {dimension_numbers = #tpu.dot_dimension_numbers<[1], [0], [0], [1], [0, 0, 1, 1], [], []>} : vector<8x128xbf16>, vector<128x512xbf16>, vector<8x512xf32> -> vector<8x512xf32>
    %194 = arith.addf %190, %193 : vector<8x512xf32>
    %195 = vector.extract_strided_slice %194 {offsets = [0, 0], sizes = [8, 384], strides = [1, 1]} : vector<8x512xf32> to vector<8x384xf32>
    %196 = arith.negf %195 : vector<8x384xf32>
    %197 = math.exp %196 : vector<8x384xf32>
    %cst_95 = arith.constant 1.000000e+00 : f32
    %198 = vector.broadcast %cst_95 : f32 to vector<8x384xf32>
    %199 = arith.addf %198, %197 : vector<8x384xf32>
    %200 = arith.divf %198, %199 : vector<8x384xf32>
    %201 = vector.extract_strided_slice %194 {offsets = [0, 384], sizes = [8, 128], strides = [1, 1]} : vector<8x512xf32> to vector<8x128xf32>
    %202 = math.tanh %201 : vector<8x128xf32>
    %203 = vector.extract_strided_slice %200 {offsets = [0, 0], sizes = [8, 128], strides = [1, 1]} : vector<8x384xf32> to vector<8x128xf32>
    %204 = vector.extract_strided_slice %200 {offsets = [0, 128], sizes = [8, 128], strides = [1, 1]} : vector<8x384xf32> to vector<8x128xf32>
    %205 = vector.extract_strided_slice %200 {offsets = [0, 256], sizes = [8, 128], strides = [1, 1]} : vector<8x384xf32> to vector<8x128xf32>
    %206 = arith.mulf %204, %180 : vector<8x128xf32>
    %207 = arith.mulf %203, %202 : vector<8x128xf32>
    %208 = arith.addf %206, %207 : vector<8x128xf32>
    %209 = math.tanh %208 : vector<8x128xf32>
    %210 = arith.mulf %205, %209 : vector<8x128xf32>
    %211 = arith.truncf %210 : vector<8x128xf32> to vector<8x128xbf16>
    %212 = arith.index_cast %c1_i32_89 : i32 to index
    %c0_96 = arith.constant 0 : index
    %c0_97 = arith.constant 0 : index
    %213 = vector.load %arg14[%212, %c0_96, %c0_97] : memref<4x8x128xbf16, #tpu.memory_space<vmem>>, vector<1x8x128xbf16>
    %214 = vector.shape_cast %213 : vector<1x8x128xbf16> to vector<8x128xbf16>
    %215 = vector.shape_cast %211 : vector<8x128xbf16> to vector<1x8x128xbf16>
    tpu.vector_store %arg14[%212, %c0_96, %c0_97], %215 {strides = array<i32>} : memref<4x8x128xbf16, #tpu.memory_space<vmem>>, vector<1x8x128xbf16>,
    %c2_i32_98 = arith.constant 2 : i32
    %216 = arith.index_cast %c2_i32_98 : i32 to index
    %c0_99 = arith.constant 0 : index
    %c0_100 = arith.constant 0 : index
    %217 = vector.load %arg13[%216, %c0_99, %c0_100] : memref<4x8x512xf32, #tpu.memory_space<vmem>>, vector<1x8x512xf32>
    %218 = vector.shape_cast %217 : vector<1x8x512xf32> to vector<8x512xf32>
    %219 = arith.truncf %210 : vector<8x128xf32> to vector<8x128xbf16>
    %c0_101 = arith.constant 0 : index
    %c0_102 = arith.constant 0 : index
    %220 = vector.load %arg6[%c0_101, %c0_102] : memref<128x512xbf16, #tpu.memory_space<vmem>>, vector<128x512xbf16>
    %cst_103 = arith.constant dense<0.000000e+00> : vector<8x512xf32>
    %221 = tpu.matmul %219, %220, %cst_103 {dimension_numbers = #tpu.dot_dimension_numbers<[1], [0], [0], [1], [0, 0, 1, 1], [], []>} : vector<8x128xbf16>, vector<128x512xbf16>, vector<8x512xf32> -> vector<8x512xf32>
    %222 = arith.addf %218, %221 : vector<8x512xf32>
    %223 = vector.extract_strided_slice %222 {offsets = [0, 0], sizes = [8, 384], strides = [1, 1]} : vector<8x512xf32> to vector<8x384xf32>
    %224 = arith.negf %223 : vector<8x384xf32>
    %225 = math.exp %224 : vector<8x384xf32>
    %cst_104 = arith.constant 1.000000e+00 : f32
    %226 = vector.broadcast %cst_104 : f32 to vector<8x384xf32>
    %227 = arith.addf %226, %225 : vector<8x384xf32>
    %228 = arith.divf %226, %227 : vector<8x384xf32>
    %229 = vector.extract_strided_slice %222 {offsets = [0, 384], sizes = [8, 128], strides = [1, 1]} : vector<8x512xf32> to vector<8x128xf32>
    %230 = math.tanh %229 : vector<8x128xf32>
    %231 = vector.extract_strided_slice %228 {offsets = [0, 0], sizes = [8, 128], strides = [1, 1]} : vector<8x384xf32> to vector<8x128xf32>
    %232 = vector.extract_strided_slice %228 {offsets = [0, 128], sizes = [8, 128], strides = [1, 1]} : vector<8x384xf32> to vector<8x128xf32>
    %233 = vector.extract_strided_slice %228 {offsets = [0, 256], sizes = [8, 128], strides = [1, 1]} : vector<8x384xf32> to vector<8x128xf32>
    %234 = arith.mulf %232, %208 : vector<8x128xf32>
    %235 = arith.mulf %231, %230 : vector<8x128xf32>
    %236 = arith.addf %234, %235 : vector<8x128xf32>
    %237 = math.tanh %236 : vector<8x128xf32>
    %238 = arith.mulf %233, %237 : vector<8x128xf32>
    %239 = arith.truncf %238 : vector<8x128xf32> to vector<8x128xbf16>
    %240 = arith.index_cast %c2_i32_98 : i32 to index
    %c0_105 = arith.constant 0 : index
    %c0_106 = arith.constant 0 : index
    %241 = vector.load %arg14[%240, %c0_105, %c0_106] : memref<4x8x128xbf16, #tpu.memory_space<vmem>>, vector<1x8x128xbf16>
    %242 = vector.shape_cast %241 : vector<1x8x128xbf16> to vector<8x128xbf16>
    %243 = vector.shape_cast %239 : vector<8x128xbf16> to vector<1x8x128xbf16>
    tpu.vector_store %arg14[%240, %c0_105, %c0_106], %243 {strides = array<i32>} : memref<4x8x128xbf16, #tpu.memory_space<vmem>>, vector<1x8x128xbf16>,
    %c3_i32_107 = arith.constant 3 : i32
    %244 = arith.index_cast %c3_i32_107 : i32 to index
    %c0_108 = arith.constant 0 : index
    %c0_109 = arith.constant 0 : index
    %245 = vector.load %arg13[%244, %c0_108, %c0_109] : memref<4x8x512xf32, #tpu.memory_space<vmem>>, vector<1x8x512xf32>
    %246 = vector.shape_cast %245 : vector<1x8x512xf32> to vector<8x512xf32>
    %247 = arith.truncf %238 : vector<8x128xf32> to vector<8x128xbf16>
    %c0_110 = arith.constant 0 : index
    %c0_111 = arith.constant 0 : index
    %248 = vector.load %arg6[%c0_110, %c0_111] : memref<128x512xbf16, #tpu.memory_space<vmem>>, vector<128x512xbf16>
    %cst_112 = arith.constant dense<0.000000e+00> : vector<8x512xf32>
    %249 = tpu.matmul %247, %248, %cst_112 {dimension_numbers = #tpu.dot_dimension_numbers<[1], [0], [0], [1], [0, 0, 1, 1], [], []>} : vector<8x128xbf16>, vector<128x512xbf16>, vector<8x512xf32> -> vector<8x512xf32>
    %250 = arith.addf %246, %249 : vector<8x512xf32>
    %251 = vector.extract_strided_slice %250 {offsets = [0, 0], sizes = [8, 384], strides = [1, 1]} : vector<8x512xf32> to vector<8x384xf32>
    %252 = arith.negf %251 : vector<8x384xf32>
    %253 = math.exp %252 : vector<8x384xf32>
    %cst_113 = arith.constant 1.000000e+00 : f32
    %254 = vector.broadcast %cst_113 : f32 to vector<8x384xf32>
    %255 = arith.addf %254, %253 : vector<8x384xf32>
    %256 = arith.divf %254, %255 : vector<8x384xf32>
    %257 = vector.extract_strided_slice %250 {offsets = [0, 384], sizes = [8, 128], strides = [1, 1]} : vector<8x512xf32> to vector<8x128xf32>
    %258 = math.tanh %257 : vector<8x128xf32>
    %259 = vector.extract_strided_slice %256 {offsets = [0, 0], sizes = [8, 128], strides = [1, 1]} : vector<8x384xf32> to vector<8x128xf32>
    %260 = vector.extract_strided_slice %256 {offsets = [0, 128], sizes = [8, 128], strides = [1, 1]} : vector<8x384xf32> to vector<8x128xf32>
    %261 = vector.extract_strided_slice %256 {offsets = [0, 256], sizes = [8, 128], strides = [1, 1]} : vector<8x384xf32> to vector<8x128xf32>
    %262 = arith.mulf %260, %236 : vector<8x128xf32>
    %263 = arith.mulf %259, %258 : vector<8x128xf32>
    %264 = arith.addf %262, %263 : vector<8x128xf32>
    %265 = math.tanh %264 : vector<8x128xf32>
    %266 = arith.mulf %261, %265 : vector<8x128xf32>
    %267 = arith.truncf %266 : vector<8x128xf32> to vector<8x128xbf16>
    %268 = arith.index_cast %c3_i32_107 : i32 to index
    %c0_114 = arith.constant 0 : index
    %c0_115 = arith.constant 0 : index
    %269 = vector.load %arg14[%268, %c0_114, %c0_115] : memref<4x8x128xbf16, #tpu.memory_space<vmem>>, vector<1x8x128xbf16>
    %270 = vector.shape_cast %269 : vector<1x8x128xbf16> to vector<8x128xbf16>
    %271 = vector.shape_cast %267 : vector<8x128xbf16> to vector<1x8x128xbf16>
    tpu.vector_store %arg14[%268, %c0_114, %c0_115], %271 {strides = array<i32>} : memref<4x8x128xbf16, #tpu.memory_space<vmem>>, vector<1x8x128xbf16>,
    %c4_i32_116 = arith.constant 4 : i32
    %c0_117 = arith.constant 0 : index
    %c0_118 = arith.constant 0 : index
    %c0_119 = arith.constant 0 : index
    %272 = vector.load %arg14[%c0_117, %c0_118, %c0_119] : memref<4x8x128xbf16, #tpu.memory_space<vmem>>, vector<4x8x128xbf16>
    %273 = vector.shape_cast %272 : vector<4x8x128xbf16> to vector<32x128xbf16>
    %c0_120 = arith.constant 0 : index
    %c0_121 = arith.constant 0 : index
    %274 = vector.load %arg8[%c0_120, %c0_121] : memref<128x128xbf16, #tpu.memory_space<vmem>>, vector<128x128xbf16>
    %cst_122 = arith.constant dense<0.000000e+00> : vector<32x128xf32>
    %275 = tpu.matmul %273, %274, %cst_122 {dimension_numbers = #tpu.dot_dimension_numbers<[1], [0], [0], [1], [0, 0, 1, 1], [], []>} : vector<32x128xbf16>, vector<128x128xbf16>, vector<32x128xf32> -> vector<32x128xf32>
    %c0_123 = arith.constant 0 : index
    %c0_124 = arith.constant 0 : index
    %276 = vector.load %arg9[%c0_123, %c0_124] : memref<1x128xf32, #tpu.memory_space<vmem>>, vector<1x128xf32>
    %277 = vector.broadcast %276 : vector<1x128xf32> to vector<32x128xf32>
    %278 = arith.addf %275, %277 : vector<32x128xf32>
    %279 = vector.shape_cast %278 : vector<32x128xf32> to vector<4x8x128xf32>
    %c4_125 = arith.constant 4 : index
    %c0_126 = arith.constant 0 : index
    %c0_127 = arith.constant 0 : index
    %280 = vector.load %arg10[%c4_125, %c0_126, %c0_127] : memref<8x8x128xf32, #tpu.memory_space<vmem>>, vector<4x8x128xf32>
    tpu.vector_store %arg10[%c4_125, %c0_126, %c0_127], %279 {strides = array<i32>} : memref<8x8x128xf32, #tpu.memory_space<vmem>>, vector<4x8x128xf32>,
    %c0_128 = arith.constant 0 : index
    %c0_129 = arith.constant 0 : index
    %281 = vector.load %arg11[%c0_128, %c0_129] : memref<8x128xf32, #tpu.memory_space<vmem>>, vector<8x128xf32>
    tpu.vector_store %arg11[%c0_128, %c0_129], %266 {strides = array<i32>} : memref<8x128xf32, #tpu.memory_space<vmem>>, vector<8x128xf32>,
    %c0_130 = arith.constant 0 : index
    %c0_131 = arith.constant 0 : index
    %282 = vector.load %arg12[%c0_130, %c0_131] : memref<8x128xf32, #tpu.memory_space<vmem>>, vector<8x128xf32>
    tpu.vector_store %arg12[%c0_130, %c0_131], %264 {strides = array<i32>} : memref<8x128xf32, #tpu.memory_space<vmem>>, vector<8x128xf32>,
    return
  }
  func.func @transform_0(%arg0: i32, %arg1: i32) -> (i32, i32, i32) {
    %c0_i32 = arith.constant 0 : i32
    %c0_i32_0 = arith.constant 0 : i32
    return %arg1, %arg0, %c0_i32 : i32, i32, i32
  }
  func.func @transform_1(%arg0: i32, %arg1: i32) -> (i32, i32) {
    %c0_i32 = arith.constant 0 : i32
    %c0_i32_0 = arith.constant 0 : i32
    %c0_i32_1 = arith.constant 0 : i32
    return %c0_i32, %c0_i32_0 : i32, i32
  }
  func.func @transform_2(%arg0: i32, %arg1: i32) -> (i32, i32) {
    %c0_i32 = arith.constant 0 : i32
    %c0_i32_0 = arith.constant 0 : i32
    %c0_i32_1 = arith.constant 0 : i32
    return %c0_i32, %c0_i32_0 : i32, i32
  }
  func.func @transform_3(%arg0: i32, %arg1: i32) -> (i32, i32) {
    %c0_i32 = arith.constant 0 : i32
    %c0_i32_0 = arith.constant 0 : i32
    %c0_i32_1 = arith.constant 0 : i32
    return %c0_i32, %c0_i32_0 : i32, i32
  }
  func.func @transform_4(%arg0: i32, %arg1: i32) -> (i32, i32) {
    %c0_i32 = arith.constant 0 : i32
    %c0_i32_0 = arith.constant 0 : i32
    %c0_i32_1 = arith.constant 0 : i32
    return %c0_i32, %c0_i32_0 : i32, i32
  }
  func.func @transform_5(%arg0: i32, %arg1: i32) -> (i32, i32) {
    %c0_i32 = arith.constant 0 : i32
    %c0_i32_0 = arith.constant 0 : i32
    %c0_i32_1 = arith.constant 0 : i32
    return %c0_i32, %c0_i32_0 : i32, i32
  }
  func.func @transform_6(%arg0: i32, %arg1: i32) -> (i32, i32) {
    %c0_i32 = arith.constant 0 : i32
    %c0_i32_0 = arith.constant 0 : i32
    %c0_i32_1 = arith.constant 0 : i32
    return %c0_i32, %c0_i32_0 : i32, i32
  }
  func.func @transform_7(%arg0: i32, %arg1: i32) -> (i32, i32) {
    %c0_i32 = arith.constant 0 : i32
    %c0_i32_0 = arith.constant 0 : i32
    %c0_i32_1 = arith.constant 0 : i32
    return %c0_i32, %c0_i32_0 : i32, i32
  }
  func.func @transform_8(%arg0: i32, %arg1: i32) -> (i32, i32, i32) {
    %c0_i32 = arith.constant 0 : i32
    %c0_i32_0 = arith.constant 0 : i32
    return %arg1, %arg0, %c0_i32 : i32, i32, i32
  }
}

module attributes {stable_mosaic.version = 11 : i64} {
  func.func @_lstm_block_kernel(%arg0: i32, %arg1: i32, %arg2: memref<8x8x128xbf16, #tpu.memory_space<vmem>>, %arg3: memref<8x8x128xbf16, #tpu.memory_space<vmem>>, %arg4: memref<128x128xbf16, #tpu.memory_space<vmem>>, %arg5: memref<128x128xbf16, #tpu.memory_space<vmem>>, %arg6: memref<1x128xf32, #tpu.memory_space<vmem>>, %arg7: memref<128x512xbf16, #tpu.memory_space<vmem>>, %arg8: memref<128x512xbf16, #tpu.memory_space<vmem>>, %arg9: memref<1x512xf32, #tpu.memory_space<vmem>>, %arg10: memref<128x128xbf16, #tpu.memory_space<vmem>>, %arg11: memref<1x128xf32, #tpu.memory_space<vmem>>, %arg12: memref<8x8x128xf32, #tpu.memory_space<vmem>>, %arg13: memref<8x128xf32, #tpu.memory_space<vmem>>, %arg14: memref<8x128xf32, #tpu.memory_space<vmem>>, %arg15: memref<4x8x512xf32, #tpu.memory_space<vmem>>, %arg16: memref<4x8x128xbf16, #tpu.memory_space<vmem>>) attributes {dimension_semantics = [#tpu.dimension_semantics<parallel>, #tpu.dimension_semantics<arbitrary>], iteration_bounds = array<i64: 1, 2>, scalar_prefetch = 0 : i64, scratch_operands = 4 : i64, tpu.core_type = #tpu.core_type<tc>, window_params = [{transform_indices = @transform_0, window_bounds = array<i64: 8, 8, 128>}, {transform_indices = @transform_1, window_bounds = array<i64: 8, 8, 128>}, {pipeline_mode = #tpu.pipeline_mode<synchronous>, transform_indices = @transform_2, window_bounds = array<i64: 128, 128>}, {pipeline_mode = #tpu.pipeline_mode<synchronous>, transform_indices = @transform_3, window_bounds = array<i64: 128, 128>}, {pipeline_mode = #tpu.pipeline_mode<synchronous>, transform_indices = @transform_4, window_bounds = array<i64: 1, 128>}, {pipeline_mode = #tpu.pipeline_mode<synchronous>, transform_indices = @transform_5, window_bounds = array<i64: 128, 512>}, {pipeline_mode = #tpu.pipeline_mode<synchronous>, transform_indices = @transform_6, window_bounds = array<i64: 128, 512>}, {pipeline_mode = #tpu.pipeline_mode<synchronous>, transform_indices = @transform_7, window_bounds = array<i64: 1, 512>}, {pipeline_mode = #tpu.pipeline_mode<synchronous>, transform_indices = @transform_8, window_bounds = array<i64: 128, 128>}, {pipeline_mode = #tpu.pipeline_mode<synchronous>, transform_indices = @transform_9, window_bounds = array<i64: 1, 128>}, {transform_indices = @transform_10, window_bounds = array<i64: 8, 8, 128>}]} {
    %c0_i32 = arith.constant 0 : i32
    %0 = arith.cmpi eq, %arg1, %c0_i32 : i32
    %1 = arith.extui %0 : i1 to i32
    %c0_i32_0 = arith.constant 0 : i32
    %2 = arith.cmpi ne, %1, %c0_i32_0 : i32
    scf.if %2 {
      %cst_144 = arith.constant 0.000000e+00 : f32
      %293 = vector.broadcast %cst_144 : f32 to vector<8x128xf32>
      %c0_145 = arith.constant 0 : index
      %c0_146 = arith.constant 0 : index
      %294 = vector.load %arg13[%c0_145, %c0_146] : memref<8x128xf32, #tpu.memory_space<vmem>>, vector<8x128xf32>
      tpu.vector_store %arg13[%c0_145, %c0_146], %293 {strides = array<i32>} : memref<8x128xf32, #tpu.memory_space<vmem>>, vector<8x128xf32>,
      %cst_147 = arith.constant 0.000000e+00 : f32
      %295 = vector.broadcast %cst_147 : f32 to vector<8x128xf32>
      %c0_148 = arith.constant 0 : index
      %c0_149 = arith.constant 0 : index
      %296 = vector.load %arg14[%c0_148, %c0_149] : memref<8x128xf32, #tpu.memory_space<vmem>>, vector<8x128xf32>
      tpu.vector_store %arg14[%c0_148, %c0_149], %295 {strides = array<i32>} : memref<8x128xf32, #tpu.memory_space<vmem>>, vector<8x128xf32>,
    } else {
    }
    %c0 = arith.constant 0 : index
    %c0_1 = arith.constant 0 : index
    %3 = vector.load %arg13[%c0, %c0_1] : memref<8x128xf32, #tpu.memory_space<vmem>>, vector<8x128xf32>
    %c0_2 = arith.constant 0 : index
    %c0_3 = arith.constant 0 : index
    %4 = vector.load %arg14[%c0_2, %c0_3] : memref<8x128xf32, #tpu.memory_space<vmem>>, vector<8x128xf32>
    %c0_4 = arith.constant 0 : index
    %c0_5 = arith.constant 0 : index
    %5 = vector.load %arg6[%c0_4, %c0_5] : memref<1x128xf32, #tpu.memory_space<vmem>>, vector<1x128xf32>
    %c0_6 = arith.constant 0 : index
    %c0_7 = arith.constant 0 : index
    %c0_8 = arith.constant 0 : index
    %6 = vector.load %arg2[%c0_6, %c0_7, %c0_8] : memref<8x8x128xbf16, #tpu.memory_space<vmem>>, vector<4x8x128xbf16>
    %7 = vector.shape_cast %6 : vector<4x8x128xbf16> to vector<32x128xbf16>
    %c0_9 = arith.constant 0 : index
    %c0_10 = arith.constant 0 : index
    %8 = vector.load %arg4[%c0_9, %c0_10] : memref<128x128xbf16, #tpu.memory_space<vmem>>, vector<128x128xbf16>
    %cst = arith.constant dense<0.000000e+00> : vector<32x128xf32>
    %9 = tpu.matmul %7, %8, %cst {dimension_numbers = #tpu.dot_dimension_numbers<[1], [0], [0], [1], [0, 0, 1, 1], [], []>} : vector<32x128xbf16>, vector<128x128xbf16>, vector<32x128xf32> -> vector<32x128xf32>
    %10 = vector.broadcast %5 : vector<1x128xf32> to vector<32x128xf32>
    %11 = arith.addf %10, %9 : vector<32x128xf32>
    %c0_11 = arith.constant 0 : index
    %c0_12 = arith.constant 0 : index
    %c0_13 = arith.constant 0 : index
    %12 = vector.load %arg3[%c0_11, %c0_12, %c0_13] : memref<8x8x128xbf16, #tpu.memory_space<vmem>>, vector<4x8x128xbf16>
    %13 = vector.shape_cast %12 : vector<4x8x128xbf16> to vector<32x128xbf16>
    %c0_14 = arith.constant 0 : index
    %c0_15 = arith.constant 0 : index
    %14 = vector.load %arg5[%c0_14, %c0_15] : memref<128x128xbf16, #tpu.memory_space<vmem>>, vector<128x128xbf16>
    %cst_16 = arith.constant dense<0.000000e+00> : vector<32x128xf32>
    %15 = tpu.matmul %13, %14, %cst_16 {dimension_numbers = #tpu.dot_dimension_numbers<[1], [0], [0], [1], [0, 0, 1, 1], [], []>} : vector<32x128xbf16>, vector<128x128xbf16>, vector<32x128xf32> -> vector<32x128xf32>
    %16 = arith.addf %11, %15 : vector<32x128xf32>
    %cst_17 = arith.constant 0.000000e+00 : f32
    %17 = vector.broadcast %cst_17 : f32 to vector<32x128xf32>
    %18 = arith.maximumf %16, %17 : vector<32x128xf32>
    %19 = arith.truncf %18 : vector<32x128xf32> to vector<32x128xbf16>
    %c0_18 = arith.constant 0 : index
    %c0_19 = arith.constant 0 : index
    %20 = vector.load %arg7[%c0_18, %c0_19] : memref<128x512xbf16, #tpu.memory_space<vmem>>, vector<128x512xbf16>
    %cst_20 = arith.constant dense<0.000000e+00> : vector<32x512xf32>
    %21 = tpu.matmul %19, %20, %cst_20 {dimension_numbers = #tpu.dot_dimension_numbers<[1], [0], [0], [1], [0, 0, 1, 1], [], []>} : vector<32x128xbf16>, vector<128x512xbf16>, vector<32x512xf32> -> vector<32x512xf32>
    %c0_21 = arith.constant 0 : index
    %c0_22 = arith.constant 0 : index
    %22 = vector.load %arg9[%c0_21, %c0_22] : memref<1x512xf32, #tpu.memory_space<vmem>>, vector<1x512xf32>
    %23 = vector.broadcast %22 : vector<1x512xf32> to vector<32x512xf32>
    %24 = arith.addf %21, %23 : vector<32x512xf32>
    %25 = vector.shape_cast %24 : vector<32x512xf32> to vector<4x8x512xf32>
    %c0_23 = arith.constant 0 : index
    %c0_24 = arith.constant 0 : index
    %c0_25 = arith.constant 0 : index
    %26 = vector.load %arg15[%c0_23, %c0_24, %c0_25] : memref<4x8x512xf32, #tpu.memory_space<vmem>>, vector<4x8x512xf32>
    tpu.vector_store %arg15[%c0_23, %c0_24, %c0_25], %25 {strides = array<i32>} : memref<4x8x512xf32, #tpu.memory_space<vmem>>, vector<4x8x512xf32>,
    %c0_i32_26 = arith.constant 0 : i32
    %27 = arith.index_cast %c0_i32_26 : i32 to index
    %c0_27 = arith.constant 0 : index
    %c0_28 = arith.constant 0 : index
    %28 = vector.load %arg15[%27, %c0_27, %c0_28] : memref<4x8x512xf32, #tpu.memory_space<vmem>>, vector<1x8x512xf32>
    %29 = vector.shape_cast %28 : vector<1x8x512xf32> to vector<8x512xf32>
    %30 = arith.truncf %3 : vector<8x128xf32> to vector<8x128xbf16>
    %c0_29 = arith.constant 0 : index
    %c0_30 = arith.constant 0 : index
    %31 = vector.load %arg8[%c0_29, %c0_30] : memref<128x512xbf16, #tpu.memory_space<vmem>>, vector<128x512xbf16>
    %cst_31 = arith.constant dense<0.000000e+00> : vector<8x512xf32>
    %32 = tpu.matmul %30, %31, %cst_31 {dimension_numbers = #tpu.dot_dimension_numbers<[1], [0], [0], [1], [0, 0, 1, 1], [], []>} : vector<8x128xbf16>, vector<128x512xbf16>, vector<8x512xf32> -> vector<8x512xf32>
    %33 = arith.addf %29, %32 : vector<8x512xf32>
    %34 = vector.extract_strided_slice %33 {offsets = [0, 0], sizes = [8, 384], strides = [1, 1]} : vector<8x512xf32> to vector<8x384xf32>
    %35 = arith.negf %34 : vector<8x384xf32>
    %36 = math.exp %35 : vector<8x384xf32>
    %cst_32 = arith.constant 1.000000e+00 : f32
    %37 = vector.broadcast %cst_32 : f32 to vector<8x384xf32>
    %38 = arith.addf %37, %36 : vector<8x384xf32>
    %39 = arith.divf %37, %38 : vector<8x384xf32>
    %40 = vector.extract_strided_slice %33 {offsets = [0, 384], sizes = [8, 128], strides = [1, 1]} : vector<8x512xf32> to vector<8x128xf32>
    %41 = math.tanh %40 : vector<8x128xf32>
    %42 = vector.extract_strided_slice %39 {offsets = [0, 0], sizes = [8, 128], strides = [1, 1]} : vector<8x384xf32> to vector<8x128xf32>
    %43 = vector.extract_strided_slice %39 {offsets = [0, 128], sizes = [8, 128], strides = [1, 1]} : vector<8x384xf32> to vector<8x128xf32>
    %44 = vector.extract_strided_slice %39 {offsets = [0, 256], sizes = [8, 128], strides = [1, 1]} : vector<8x384xf32> to vector<8x128xf32>
    %45 = arith.mulf %43, %4 : vector<8x128xf32>
    %46 = arith.mulf %42, %41 : vector<8x128xf32>
    %47 = arith.addf %45, %46 : vector<8x128xf32>
    %48 = math.tanh %47 : vector<8x128xf32>
    %49 = arith.mulf %44, %48 : vector<8x128xf32>
    %50 = arith.truncf %49 : vector<8x128xf32> to vector<8x128xbf16>
    %51 = arith.index_cast %c0_i32_26 : i32 to index
    %c0_33 = arith.constant 0 : index
    %c0_34 = arith.constant 0 : index
    %52 = vector.load %arg16[%51, %c0_33, %c0_34] : memref<4x8x128xbf16, #tpu.memory_space<vmem>>, vector<1x8x128xbf16>
    %53 = vector.shape_cast %52 : vector<1x8x128xbf16> to vector<8x128xbf16>
    %54 = vector.shape_cast %50 : vector<8x128xbf16> to vector<1x8x128xbf16>
    tpu.vector_store %arg16[%51, %c0_33, %c0_34], %54 {strides = array<i32>} : memref<4x8x128xbf16, #tpu.memory_space<vmem>>, vector<1x8x128xbf16>,
    %c1_i32 = arith.constant 1 : i32
    %55 = arith.index_cast %c1_i32 : i32 to index
    %c0_35 = arith.constant 0 : index
    %c0_36 = arith.constant 0 : index
    %56 = vector.load %arg15[%55, %c0_35, %c0_36] : memref<4x8x512xf32, #tpu.memory_space<vmem>>, vector<1x8x512xf32>
    %57 = vector.shape_cast %56 : vector<1x8x512xf32> to vector<8x512xf32>
    %58 = arith.truncf %49 : vector<8x128xf32> to vector<8x128xbf16>
    %c0_37 = arith.constant 0 : index
    %c0_38 = arith.constant 0 : index
    %59 = vector.load %arg8[%c0_37, %c0_38] : memref<128x512xbf16, #tpu.memory_space<vmem>>, vector<128x512xbf16>
    %cst_39 = arith.constant dense<0.000000e+00> : vector<8x512xf32>
    %60 = tpu.matmul %58, %59, %cst_39 {dimension_numbers = #tpu.dot_dimension_numbers<[1], [0], [0], [1], [0, 0, 1, 1], [], []>} : vector<8x128xbf16>, vector<128x512xbf16>, vector<8x512xf32> -> vector<8x512xf32>
    %61 = arith.addf %57, %60 : vector<8x512xf32>
    %62 = vector.extract_strided_slice %61 {offsets = [0, 0], sizes = [8, 384], strides = [1, 1]} : vector<8x512xf32> to vector<8x384xf32>
    %63 = arith.negf %62 : vector<8x384xf32>
    %64 = math.exp %63 : vector<8x384xf32>
    %cst_40 = arith.constant 1.000000e+00 : f32
    %65 = vector.broadcast %cst_40 : f32 to vector<8x384xf32>
    %66 = arith.addf %65, %64 : vector<8x384xf32>
    %67 = arith.divf %65, %66 : vector<8x384xf32>
    %68 = vector.extract_strided_slice %61 {offsets = [0, 384], sizes = [8, 128], strides = [1, 1]} : vector<8x512xf32> to vector<8x128xf32>
    %69 = math.tanh %68 : vector<8x128xf32>
    %70 = vector.extract_strided_slice %67 {offsets = [0, 0], sizes = [8, 128], strides = [1, 1]} : vector<8x384xf32> to vector<8x128xf32>
    %71 = vector.extract_strided_slice %67 {offsets = [0, 128], sizes = [8, 128], strides = [1, 1]} : vector<8x384xf32> to vector<8x128xf32>
    %72 = vector.extract_strided_slice %67 {offsets = [0, 256], sizes = [8, 128], strides = [1, 1]} : vector<8x384xf32> to vector<8x128xf32>
    %73 = arith.mulf %71, %47 : vector<8x128xf32>
    %74 = arith.mulf %70, %69 : vector<8x128xf32>
    %75 = arith.addf %73, %74 : vector<8x128xf32>
    %76 = math.tanh %75 : vector<8x128xf32>
    %77 = arith.mulf %72, %76 : vector<8x128xf32>
    %78 = arith.truncf %77 : vector<8x128xf32> to vector<8x128xbf16>
    %79 = arith.index_cast %c1_i32 : i32 to index
    %c0_41 = arith.constant 0 : index
    %c0_42 = arith.constant 0 : index
    %80 = vector.load %arg16[%79, %c0_41, %c0_42] : memref<4x8x128xbf16, #tpu.memory_space<vmem>>, vector<1x8x128xbf16>
    %81 = vector.shape_cast %80 : vector<1x8x128xbf16> to vector<8x128xbf16>
    %82 = vector.shape_cast %78 : vector<8x128xbf16> to vector<1x8x128xbf16>
    tpu.vector_store %arg16[%79, %c0_41, %c0_42], %82 {strides = array<i32>} : memref<4x8x128xbf16, #tpu.memory_space<vmem>>, vector<1x8x128xbf16>,
    %c2_i32 = arith.constant 2 : i32
    %83 = arith.index_cast %c2_i32 : i32 to index
    %c0_43 = arith.constant 0 : index
    %c0_44 = arith.constant 0 : index
    %84 = vector.load %arg15[%83, %c0_43, %c0_44] : memref<4x8x512xf32, #tpu.memory_space<vmem>>, vector<1x8x512xf32>
    %85 = vector.shape_cast %84 : vector<1x8x512xf32> to vector<8x512xf32>
    %86 = arith.truncf %77 : vector<8x128xf32> to vector<8x128xbf16>
    %c0_45 = arith.constant 0 : index
    %c0_46 = arith.constant 0 : index
    %87 = vector.load %arg8[%c0_45, %c0_46] : memref<128x512xbf16, #tpu.memory_space<vmem>>, vector<128x512xbf16>
    %cst_47 = arith.constant dense<0.000000e+00> : vector<8x512xf32>
    %88 = tpu.matmul %86, %87, %cst_47 {dimension_numbers = #tpu.dot_dimension_numbers<[1], [0], [0], [1], [0, 0, 1, 1], [], []>} : vector<8x128xbf16>, vector<128x512xbf16>, vector<8x512xf32> -> vector<8x512xf32>
    %89 = arith.addf %85, %88 : vector<8x512xf32>
    %90 = vector.extract_strided_slice %89 {offsets = [0, 0], sizes = [8, 384], strides = [1, 1]} : vector<8x512xf32> to vector<8x384xf32>
    %91 = arith.negf %90 : vector<8x384xf32>
    %92 = math.exp %91 : vector<8x384xf32>
    %cst_48 = arith.constant 1.000000e+00 : f32
    %93 = vector.broadcast %cst_48 : f32 to vector<8x384xf32>
    %94 = arith.addf %93, %92 : vector<8x384xf32>
    %95 = arith.divf %93, %94 : vector<8x384xf32>
    %96 = vector.extract_strided_slice %89 {offsets = [0, 384], sizes = [8, 128], strides = [1, 1]} : vector<8x512xf32> to vector<8x128xf32>
    %97 = math.tanh %96 : vector<8x128xf32>
    %98 = vector.extract_strided_slice %95 {offsets = [0, 0], sizes = [8, 128], strides = [1, 1]} : vector<8x384xf32> to vector<8x128xf32>
    %99 = vector.extract_strided_slice %95 {offsets = [0, 128], sizes = [8, 128], strides = [1, 1]} : vector<8x384xf32> to vector<8x128xf32>
    %100 = vector.extract_strided_slice %95 {offsets = [0, 256], sizes = [8, 128], strides = [1, 1]} : vector<8x384xf32> to vector<8x128xf32>
    %101 = arith.mulf %99, %75 : vector<8x128xf32>
    %102 = arith.mulf %98, %97 : vector<8x128xf32>
    %103 = arith.addf %101, %102 : vector<8x128xf32>
    %104 = math.tanh %103 : vector<8x128xf32>
    %105 = arith.mulf %100, %104 : vector<8x128xf32>
    %106 = arith.truncf %105 : vector<8x128xf32> to vector<8x128xbf16>
    %107 = arith.index_cast %c2_i32 : i32 to index
    %c0_49 = arith.constant 0 : index
    %c0_50 = arith.constant 0 : index
    %108 = vector.load %arg16[%107, %c0_49, %c0_50] : memref<4x8x128xbf16, #tpu.memory_space<vmem>>, vector<1x8x128xbf16>
    %109 = vector.shape_cast %108 : vector<1x8x128xbf16> to vector<8x128xbf16>
    %110 = vector.shape_cast %106 : vector<8x128xbf16> to vector<1x8x128xbf16>
    tpu.vector_store %arg16[%107, %c0_49, %c0_50], %110 {strides = array<i32>} : memref<4x8x128xbf16, #tpu.memory_space<vmem>>, vector<1x8x128xbf16>,
    %c3_i32 = arith.constant 3 : i32
    %111 = arith.index_cast %c3_i32 : i32 to index
    %c0_51 = arith.constant 0 : index
    %c0_52 = arith.constant 0 : index
    %112 = vector.load %arg15[%111, %c0_51, %c0_52] : memref<4x8x512xf32, #tpu.memory_space<vmem>>, vector<1x8x512xf32>
    %113 = vector.shape_cast %112 : vector<1x8x512xf32> to vector<8x512xf32>
    %114 = arith.truncf %105 : vector<8x128xf32> to vector<8x128xbf16>
    %c0_53 = arith.constant 0 : index
    %c0_54 = arith.constant 0 : index
    %115 = vector.load %arg8[%c0_53, %c0_54] : memref<128x512xbf16, #tpu.memory_space<vmem>>, vector<128x512xbf16>
    %cst_55 = arith.constant dense<0.000000e+00> : vector<8x512xf32>
    %116 = tpu.matmul %114, %115, %cst_55 {dimension_numbers = #tpu.dot_dimension_numbers<[1], [0], [0], [1], [0, 0, 1, 1], [], []>} : vector<8x128xbf16>, vector<128x512xbf16>, vector<8x512xf32> -> vector<8x512xf32>
    %117 = arith.addf %113, %116 : vector<8x512xf32>
    %118 = vector.extract_strided_slice %117 {offsets = [0, 0], sizes = [8, 384], strides = [1, 1]} : vector<8x512xf32> to vector<8x384xf32>
    %119 = arith.negf %118 : vector<8x384xf32>
    %120 = math.exp %119 : vector<8x384xf32>
    %cst_56 = arith.constant 1.000000e+00 : f32
    %121 = vector.broadcast %cst_56 : f32 to vector<8x384xf32>
    %122 = arith.addf %121, %120 : vector<8x384xf32>
    %123 = arith.divf %121, %122 : vector<8x384xf32>
    %124 = vector.extract_strided_slice %117 {offsets = [0, 384], sizes = [8, 128], strides = [1, 1]} : vector<8x512xf32> to vector<8x128xf32>
    %125 = math.tanh %124 : vector<8x128xf32>
    %126 = vector.extract_strided_slice %123 {offsets = [0, 0], sizes = [8, 128], strides = [1, 1]} : vector<8x384xf32> to vector<8x128xf32>
    %127 = vector.extract_strided_slice %123 {offsets = [0, 128], sizes = [8, 128], strides = [1, 1]} : vector<8x384xf32> to vector<8x128xf32>
    %128 = vector.extract_strided_slice %123 {offsets = [0, 256], sizes = [8, 128], strides = [1, 1]} : vector<8x384xf32> to vector<8x128xf32>
    %129 = arith.mulf %127, %103 : vector<8x128xf32>
    %130 = arith.mulf %126, %125 : vector<8x128xf32>
    %131 = arith.addf %129, %130 : vector<8x128xf32>
    %132 = math.tanh %131 : vector<8x128xf32>
    %133 = arith.mulf %128, %132 : vector<8x128xf32>
    %134 = arith.truncf %133 : vector<8x128xf32> to vector<8x128xbf16>
    %135 = arith.index_cast %c3_i32 : i32 to index
    %c0_57 = arith.constant 0 : index
    %c0_58 = arith.constant 0 : index
    %136 = vector.load %arg16[%135, %c0_57, %c0_58] : memref<4x8x128xbf16, #tpu.memory_space<vmem>>, vector<1x8x128xbf16>
    %137 = vector.shape_cast %136 : vector<1x8x128xbf16> to vector<8x128xbf16>
    %138 = vector.shape_cast %134 : vector<8x128xbf16> to vector<1x8x128xbf16>
    tpu.vector_store %arg16[%135, %c0_57, %c0_58], %138 {strides = array<i32>} : memref<4x8x128xbf16, #tpu.memory_space<vmem>>, vector<1x8x128xbf16>,
    %c4_i32 = arith.constant 4 : i32
    %c0_59 = arith.constant 0 : index
    %c0_60 = arith.constant 0 : index
    %c0_61 = arith.constant 0 : index
    %139 = vector.load %arg16[%c0_59, %c0_60, %c0_61] : memref<4x8x128xbf16, #tpu.memory_space<vmem>>, vector<4x8x128xbf16>
    %140 = vector.shape_cast %139 : vector<4x8x128xbf16> to vector<32x128xbf16>
    %c0_62 = arith.constant 0 : index
    %c0_63 = arith.constant 0 : index
    %141 = vector.load %arg10[%c0_62, %c0_63] : memref<128x128xbf16, #tpu.memory_space<vmem>>, vector<128x128xbf16>
    %cst_64 = arith.constant dense<0.000000e+00> : vector<32x128xf32>
    %142 = tpu.matmul %140, %141, %cst_64 {dimension_numbers = #tpu.dot_dimension_numbers<[1], [0], [0], [1], [0, 0, 1, 1], [], []>} : vector<32x128xbf16>, vector<128x128xbf16>, vector<32x128xf32> -> vector<32x128xf32>
    %c0_65 = arith.constant 0 : index
    %c0_66 = arith.constant 0 : index
    %143 = vector.load %arg11[%c0_65, %c0_66] : memref<1x128xf32, #tpu.memory_space<vmem>>, vector<1x128xf32>
    %144 = vector.broadcast %143 : vector<1x128xf32> to vector<32x128xf32>
    %145 = arith.addf %142, %144 : vector<32x128xf32>
    %146 = vector.shape_cast %145 : vector<32x128xf32> to vector<4x8x128xf32>
    %c0_67 = arith.constant 0 : index
    %c0_68 = arith.constant 0 : index
    %c0_69 = arith.constant 0 : index
    %147 = vector.load %arg12[%c0_67, %c0_68, %c0_69] : memref<8x8x128xf32, #tpu.memory_space<vmem>>, vector<4x8x128xf32>
    tpu.vector_store %arg12[%c0_67, %c0_68, %c0_69], %146 {strides = array<i32>} : memref<8x8x128xf32, #tpu.memory_space<vmem>>, vector<4x8x128xf32>,
    %c0_70 = arith.constant 0 : index
    %c0_71 = arith.constant 0 : index
    %148 = vector.load %arg6[%c0_70, %c0_71] : memref<1x128xf32, #tpu.memory_space<vmem>>, vector<1x128xf32>
    %c4 = arith.constant 4 : index
    %c0_72 = arith.constant 0 : index
    %c0_73 = arith.constant 0 : index
    %149 = vector.load %arg2[%c4, %c0_72, %c0_73] : memref<8x8x128xbf16, #tpu.memory_space<vmem>>, vector<4x8x128xbf16>
    %150 = vector.shape_cast %149 : vector<4x8x128xbf16> to vector<32x128xbf16>
    %c0_74 = arith.constant 0 : index
    %c0_75 = arith.constant 0 : index
    %151 = vector.load %arg4[%c0_74, %c0_75] : memref<128x128xbf16, #tpu.memory_space<vmem>>, vector<128x128xbf16>
    %cst_76 = arith.constant dense<0.000000e+00> : vector<32x128xf32>
    %152 = tpu.matmul %150, %151, %cst_76 {dimension_numbers = #tpu.dot_dimension_numbers<[1], [0], [0], [1], [0, 0, 1, 1], [], []>} : vector<32x128xbf16>, vector<128x128xbf16>, vector<32x128xf32> -> vector<32x128xf32>
    %153 = vector.broadcast %148 : vector<1x128xf32> to vector<32x128xf32>
    %154 = arith.addf %153, %152 : vector<32x128xf32>
    %c4_77 = arith.constant 4 : index
    %c0_78 = arith.constant 0 : index
    %c0_79 = arith.constant 0 : index
    %155 = vector.load %arg3[%c4_77, %c0_78, %c0_79] : memref<8x8x128xbf16, #tpu.memory_space<vmem>>, vector<4x8x128xbf16>
    %156 = vector.shape_cast %155 : vector<4x8x128xbf16> to vector<32x128xbf16>
    %c0_80 = arith.constant 0 : index
    %c0_81 = arith.constant 0 : index
    %157 = vector.load %arg5[%c0_80, %c0_81] : memref<128x128xbf16, #tpu.memory_space<vmem>>, vector<128x128xbf16>
    %cst_82 = arith.constant dense<0.000000e+00> : vector<32x128xf32>
    %158 = tpu.matmul %156, %157, %cst_82 {dimension_numbers = #tpu.dot_dimension_numbers<[1], [0], [0], [1], [0, 0, 1, 1], [], []>} : vector<32x128xbf16>, vector<128x128xbf16>, vector<32x128xf32> -> vector<32x128xf32>
    %159 = arith.addf %154, %158 : vector<32x128xf32>
    %cst_83 = arith.constant 0.000000e+00 : f32
    %160 = vector.broadcast %cst_83 : f32 to vector<32x128xf32>
    %161 = arith.maximumf %159, %160 : vector<32x128xf32>
    %162 = arith.truncf %161 : vector<32x128xf32> to vector<32x128xbf16>
    %c0_84 = arith.constant 0 : index
    %c0_85 = arith.constant 0 : index
    %163 = vector.load %arg7[%c0_84, %c0_85] : memref<128x512xbf16, #tpu.memory_space<vmem>>, vector<128x512xbf16>
    %cst_86 = arith.constant dense<0.000000e+00> : vector<32x512xf32>
    %164 = tpu.matmul %162, %163, %cst_86 {dimension_numbers = #tpu.dot_dimension_numbers<[1], [0], [0], [1], [0, 0, 1, 1], [], []>} : vector<32x128xbf16>, vector<128x512xbf16>, vector<32x512xf32> -> vector<32x512xf32>
    %c0_87 = arith.constant 0 : index
    %c0_88 = arith.constant 0 : index
    %165 = vector.load %arg9[%c0_87, %c0_88] : memref<1x512xf32, #tpu.memory_space<vmem>>, vector<1x512xf32>
    %166 = vector.broadcast %165 : vector<1x512xf32> to vector<32x512xf32>
    %167 = arith.addf %164, %166 : vector<32x512xf32>
    %168 = vector.shape_cast %167 : vector<32x512xf32> to vector<4x8x512xf32>
    %c0_89 = arith.constant 0 : index
    %c0_90 = arith.constant 0 : index
    %c0_91 = arith.constant 0 : index
    %169 = vector.load %arg15[%c0_89, %c0_90, %c0_91] : memref<4x8x512xf32, #tpu.memory_space<vmem>>, vector<4x8x512xf32>
    tpu.vector_store %arg15[%c0_89, %c0_90, %c0_91], %168 {strides = array<i32>} : memref<4x8x512xf32, #tpu.memory_space<vmem>>, vector<4x8x512xf32>,
    %c0_i32_92 = arith.constant 0 : i32
    %170 = arith.index_cast %c0_i32_92 : i32 to index
    %c0_93 = arith.constant 0 : index
    %c0_94 = arith.constant 0 : index
    %171 = vector.load %arg15[%170, %c0_93, %c0_94] : memref<4x8x512xf32, #tpu.memory_space<vmem>>, vector<1x8x512xf32>
    %172 = vector.shape_cast %171 : vector<1x8x512xf32> to vector<8x512xf32>
    %173 = arith.truncf %133 : vector<8x128xf32> to vector<8x128xbf16>
    %c0_95 = arith.constant 0 : index
    %c0_96 = arith.constant 0 : index
    %174 = vector.load %arg8[%c0_95, %c0_96] : memref<128x512xbf16, #tpu.memory_space<vmem>>, vector<128x512xbf16>
    %cst_97 = arith.constant dense<0.000000e+00> : vector<8x512xf32>
    %175 = tpu.matmul %173, %174, %cst_97 {dimension_numbers = #tpu.dot_dimension_numbers<[1], [0], [0], [1], [0, 0, 1, 1], [], []>} : vector<8x128xbf16>, vector<128x512xbf16>, vector<8x512xf32> -> vector<8x512xf32>
    %176 = arith.addf %172, %175 : vector<8x512xf32>
    %177 = vector.extract_strided_slice %176 {offsets = [0, 0], sizes = [8, 384], strides = [1, 1]} : vector<8x512xf32> to vector<8x384xf32>
    %178 = arith.negf %177 : vector<8x384xf32>
    %179 = math.exp %178 : vector<8x384xf32>
    %cst_98 = arith.constant 1.000000e+00 : f32
    %180 = vector.broadcast %cst_98 : f32 to vector<8x384xf32>
    %181 = arith.addf %180, %179 : vector<8x384xf32>
    %182 = arith.divf %180, %181 : vector<8x384xf32>
    %183 = vector.extract_strided_slice %176 {offsets = [0, 384], sizes = [8, 128], strides = [1, 1]} : vector<8x512xf32> to vector<8x128xf32>
    %184 = math.tanh %183 : vector<8x128xf32>
    %185 = vector.extract_strided_slice %182 {offsets = [0, 0], sizes = [8, 128], strides = [1, 1]} : vector<8x384xf32> to vector<8x128xf32>
    %186 = vector.extract_strided_slice %182 {offsets = [0, 128], sizes = [8, 128], strides = [1, 1]} : vector<8x384xf32> to vector<8x128xf32>
    %187 = vector.extract_strided_slice %182 {offsets = [0, 256], sizes = [8, 128], strides = [1, 1]} : vector<8x384xf32> to vector<8x128xf32>
    %188 = arith.mulf %186, %131 : vector<8x128xf32>
    %189 = arith.mulf %185, %184 : vector<8x128xf32>
    %190 = arith.addf %188, %189 : vector<8x128xf32>
    %191 = math.tanh %190 : vector<8x128xf32>
    %192 = arith.mulf %187, %191 : vector<8x128xf32>
    %193 = arith.truncf %192 : vector<8x128xf32> to vector<8x128xbf16>
    %194 = arith.index_cast %c0_i32_92 : i32 to index
    %c0_99 = arith.constant 0 : index
    %c0_100 = arith.constant 0 : index
    %195 = vector.load %arg16[%194, %c0_99, %c0_100] : memref<4x8x128xbf16, #tpu.memory_space<vmem>>, vector<1x8x128xbf16>
    %196 = vector.shape_cast %195 : vector<1x8x128xbf16> to vector<8x128xbf16>
    %197 = vector.shape_cast %193 : vector<8x128xbf16> to vector<1x8x128xbf16>
    tpu.vector_store %arg16[%194, %c0_99, %c0_100], %197 {strides = array<i32>} : memref<4x8x128xbf16, #tpu.memory_space<vmem>>, vector<1x8x128xbf16>,
    %c1_i32_101 = arith.constant 1 : i32
    %198 = arith.index_cast %c1_i32_101 : i32 to index
    %c0_102 = arith.constant 0 : index
    %c0_103 = arith.constant 0 : index
    %199 = vector.load %arg15[%198, %c0_102, %c0_103] : memref<4x8x512xf32, #tpu.memory_space<vmem>>, vector<1x8x512xf32>
    %200 = vector.shape_cast %199 : vector<1x8x512xf32> to vector<8x512xf32>
    %201 = arith.truncf %192 : vector<8x128xf32> to vector<8x128xbf16>
    %c0_104 = arith.constant 0 : index
    %c0_105 = arith.constant 0 : index
    %202 = vector.load %arg8[%c0_104, %c0_105] : memref<128x512xbf16, #tpu.memory_space<vmem>>, vector<128x512xbf16>
    %cst_106 = arith.constant dense<0.000000e+00> : vector<8x512xf32>
    %203 = tpu.matmul %201, %202, %cst_106 {dimension_numbers = #tpu.dot_dimension_numbers<[1], [0], [0], [1], [0, 0, 1, 1], [], []>} : vector<8x128xbf16>, vector<128x512xbf16>, vector<8x512xf32> -> vector<8x512xf32>
    %204 = arith.addf %200, %203 : vector<8x512xf32>
    %205 = vector.extract_strided_slice %204 {offsets = [0, 0], sizes = [8, 384], strides = [1, 1]} : vector<8x512xf32> to vector<8x384xf32>
    %206 = arith.negf %205 : vector<8x384xf32>
    %207 = math.exp %206 : vector<8x384xf32>
    %cst_107 = arith.constant 1.000000e+00 : f32
    %208 = vector.broadcast %cst_107 : f32 to vector<8x384xf32>
    %209 = arith.addf %208, %207 : vector<8x384xf32>
    %210 = arith.divf %208, %209 : vector<8x384xf32>
    %211 = vector.extract_strided_slice %204 {offsets = [0, 384], sizes = [8, 128], strides = [1, 1]} : vector<8x512xf32> to vector<8x128xf32>
    %212 = math.tanh %211 : vector<8x128xf32>
    %213 = vector.extract_strided_slice %210 {offsets = [0, 0], sizes = [8, 128], strides = [1, 1]} : vector<8x384xf32> to vector<8x128xf32>
    %214 = vector.extract_strided_slice %210 {offsets = [0, 128], sizes = [8, 128], strides = [1, 1]} : vector<8x384xf32> to vector<8x128xf32>
    %215 = vector.extract_strided_slice %210 {offsets = [0, 256], sizes = [8, 128], strides = [1, 1]} : vector<8x384xf32> to vector<8x128xf32>
    %216 = arith.mulf %214, %190 : vector<8x128xf32>
    %217 = arith.mulf %213, %212 : vector<8x128xf32>
    %218 = arith.addf %216, %217 : vector<8x128xf32>
    %219 = math.tanh %218 : vector<8x128xf32>
    %220 = arith.mulf %215, %219 : vector<8x128xf32>
    %221 = arith.truncf %220 : vector<8x128xf32> to vector<8x128xbf16>
    %222 = arith.index_cast %c1_i32_101 : i32 to index
    %c0_108 = arith.constant 0 : index
    %c0_109 = arith.constant 0 : index
    %223 = vector.load %arg16[%222, %c0_108, %c0_109] : memref<4x8x128xbf16, #tpu.memory_space<vmem>>, vector<1x8x128xbf16>
    %224 = vector.shape_cast %223 : vector<1x8x128xbf16> to vector<8x128xbf16>
    %225 = vector.shape_cast %221 : vector<8x128xbf16> to vector<1x8x128xbf16>
    tpu.vector_store %arg16[%222, %c0_108, %c0_109], %225 {strides = array<i32>} : memref<4x8x128xbf16, #tpu.memory_space<vmem>>, vector<1x8x128xbf16>,
    %c2_i32_110 = arith.constant 2 : i32
    %226 = arith.index_cast %c2_i32_110 : i32 to index
    %c0_111 = arith.constant 0 : index
    %c0_112 = arith.constant 0 : index
    %227 = vector.load %arg15[%226, %c0_111, %c0_112] : memref<4x8x512xf32, #tpu.memory_space<vmem>>, vector<1x8x512xf32>
    %228 = vector.shape_cast %227 : vector<1x8x512xf32> to vector<8x512xf32>
    %229 = arith.truncf %220 : vector<8x128xf32> to vector<8x128xbf16>
    %c0_113 = arith.constant 0 : index
    %c0_114 = arith.constant 0 : index
    %230 = vector.load %arg8[%c0_113, %c0_114] : memref<128x512xbf16, #tpu.memory_space<vmem>>, vector<128x512xbf16>
    %cst_115 = arith.constant dense<0.000000e+00> : vector<8x512xf32>
    %231 = tpu.matmul %229, %230, %cst_115 {dimension_numbers = #tpu.dot_dimension_numbers<[1], [0], [0], [1], [0, 0, 1, 1], [], []>} : vector<8x128xbf16>, vector<128x512xbf16>, vector<8x512xf32> -> vector<8x512xf32>
    %232 = arith.addf %228, %231 : vector<8x512xf32>
    %233 = vector.extract_strided_slice %232 {offsets = [0, 0], sizes = [8, 384], strides = [1, 1]} : vector<8x512xf32> to vector<8x384xf32>
    %234 = arith.negf %233 : vector<8x384xf32>
    %235 = math.exp %234 : vector<8x384xf32>
    %cst_116 = arith.constant 1.000000e+00 : f32
    %236 = vector.broadcast %cst_116 : f32 to vector<8x384xf32>
    %237 = arith.addf %236, %235 : vector<8x384xf32>
    %238 = arith.divf %236, %237 : vector<8x384xf32>
    %239 = vector.extract_strided_slice %232 {offsets = [0, 384], sizes = [8, 128], strides = [1, 1]} : vector<8x512xf32> to vector<8x128xf32>
    %240 = math.tanh %239 : vector<8x128xf32>
    %241 = vector.extract_strided_slice %238 {offsets = [0, 0], sizes = [8, 128], strides = [1, 1]} : vector<8x384xf32> to vector<8x128xf32>
    %242 = vector.extract_strided_slice %238 {offsets = [0, 128], sizes = [8, 128], strides = [1, 1]} : vector<8x384xf32> to vector<8x128xf32>
    %243 = vector.extract_strided_slice %238 {offsets = [0, 256], sizes = [8, 128], strides = [1, 1]} : vector<8x384xf32> to vector<8x128xf32>
    %244 = arith.mulf %242, %218 : vector<8x128xf32>
    %245 = arith.mulf %241, %240 : vector<8x128xf32>
    %246 = arith.addf %244, %245 : vector<8x128xf32>
    %247 = math.tanh %246 : vector<8x128xf32>
    %248 = arith.mulf %243, %247 : vector<8x128xf32>
    %249 = arith.truncf %248 : vector<8x128xf32> to vector<8x128xbf16>
    %250 = arith.index_cast %c2_i32_110 : i32 to index
    %c0_117 = arith.constant 0 : index
    %c0_118 = arith.constant 0 : index
    %251 = vector.load %arg16[%250, %c0_117, %c0_118] : memref<4x8x128xbf16, #tpu.memory_space<vmem>>, vector<1x8x128xbf16>
    %252 = vector.shape_cast %251 : vector<1x8x128xbf16> to vector<8x128xbf16>
    %253 = vector.shape_cast %249 : vector<8x128xbf16> to vector<1x8x128xbf16>
    tpu.vector_store %arg16[%250, %c0_117, %c0_118], %253 {strides = array<i32>} : memref<4x8x128xbf16, #tpu.memory_space<vmem>>, vector<1x8x128xbf16>,
    %c3_i32_119 = arith.constant 3 : i32
    %254 = arith.index_cast %c3_i32_119 : i32 to index
    %c0_120 = arith.constant 0 : index
    %c0_121 = arith.constant 0 : index
    %255 = vector.load %arg15[%254, %c0_120, %c0_121] : memref<4x8x512xf32, #tpu.memory_space<vmem>>, vector<1x8x512xf32>
    %256 = vector.shape_cast %255 : vector<1x8x512xf32> to vector<8x512xf32>
    %257 = arith.truncf %248 : vector<8x128xf32> to vector<8x128xbf16>
    %c0_122 = arith.constant 0 : index
    %c0_123 = arith.constant 0 : index
    %258 = vector.load %arg8[%c0_122, %c0_123] : memref<128x512xbf16, #tpu.memory_space<vmem>>, vector<128x512xbf16>
    %cst_124 = arith.constant dense<0.000000e+00> : vector<8x512xf32>
    %259 = tpu.matmul %257, %258, %cst_124 {dimension_numbers = #tpu.dot_dimension_numbers<[1], [0], [0], [1], [0, 0, 1, 1], [], []>} : vector<8x128xbf16>, vector<128x512xbf16>, vector<8x512xf32> -> vector<8x512xf32>
    %260 = arith.addf %256, %259 : vector<8x512xf32>
    %261 = vector.extract_strided_slice %260 {offsets = [0, 0], sizes = [8, 384], strides = [1, 1]} : vector<8x512xf32> to vector<8x384xf32>
    %262 = arith.negf %261 : vector<8x384xf32>
    %263 = math.exp %262 : vector<8x384xf32>
    %cst_125 = arith.constant 1.000000e+00 : f32
    %264 = vector.broadcast %cst_125 : f32 to vector<8x384xf32>
    %265 = arith.addf %264, %263 : vector<8x384xf32>
    %266 = arith.divf %264, %265 : vector<8x384xf32>
    %267 = vector.extract_strided_slice %260 {offsets = [0, 384], sizes = [8, 128], strides = [1, 1]} : vector<8x512xf32> to vector<8x128xf32>
    %268 = math.tanh %267 : vector<8x128xf32>
    %269 = vector.extract_strided_slice %266 {offsets = [0, 0], sizes = [8, 128], strides = [1, 1]} : vector<8x384xf32> to vector<8x128xf32>
    %270 = vector.extract_strided_slice %266 {offsets = [0, 128], sizes = [8, 128], strides = [1, 1]} : vector<8x384xf32> to vector<8x128xf32>
    %271 = vector.extract_strided_slice %266 {offsets = [0, 256], sizes = [8, 128], strides = [1, 1]} : vector<8x384xf32> to vector<8x128xf32>
    %272 = arith.mulf %270, %246 : vector<8x128xf32>
    %273 = arith.mulf %269, %268 : vector<8x128xf32>
    %274 = arith.addf %272, %273 : vector<8x128xf32>
    %275 = math.tanh %274 : vector<8x128xf32>
    %276 = arith.mulf %271, %275 : vector<8x128xf32>
    %277 = arith.truncf %276 : vector<8x128xf32> to vector<8x128xbf16>
    %278 = arith.index_cast %c3_i32_119 : i32 to index
    %c0_126 = arith.constant 0 : index
    %c0_127 = arith.constant 0 : index
    %279 = vector.load %arg16[%278, %c0_126, %c0_127] : memref<4x8x128xbf16, #tpu.memory_space<vmem>>, vector<1x8x128xbf16>
    %280 = vector.shape_cast %279 : vector<1x8x128xbf16> to vector<8x128xbf16>
    %281 = vector.shape_cast %277 : vector<8x128xbf16> to vector<1x8x128xbf16>
    tpu.vector_store %arg16[%278, %c0_126, %c0_127], %281 {strides = array<i32>} : memref<4x8x128xbf16, #tpu.memory_space<vmem>>, vector<1x8x128xbf16>,
    %c4_i32_128 = arith.constant 4 : i32
    %c0_129 = arith.constant 0 : index
    %c0_130 = arith.constant 0 : index
    %c0_131 = arith.constant 0 : index
    %282 = vector.load %arg16[%c0_129, %c0_130, %c0_131] : memref<4x8x128xbf16, #tpu.memory_space<vmem>>, vector<4x8x128xbf16>
    %283 = vector.shape_cast %282 : vector<4x8x128xbf16> to vector<32x128xbf16>
    %c0_132 = arith.constant 0 : index
    %c0_133 = arith.constant 0 : index
    %284 = vector.load %arg10[%c0_132, %c0_133] : memref<128x128xbf16, #tpu.memory_space<vmem>>, vector<128x128xbf16>
    %cst_134 = arith.constant dense<0.000000e+00> : vector<32x128xf32>
    %285 = tpu.matmul %283, %284, %cst_134 {dimension_numbers = #tpu.dot_dimension_numbers<[1], [0], [0], [1], [0, 0, 1, 1], [], []>} : vector<32x128xbf16>, vector<128x128xbf16>, vector<32x128xf32> -> vector<32x128xf32>
    %c0_135 = arith.constant 0 : index
    %c0_136 = arith.constant 0 : index
    %286 = vector.load %arg11[%c0_135, %c0_136] : memref<1x128xf32, #tpu.memory_space<vmem>>, vector<1x128xf32>
    %287 = vector.broadcast %286 : vector<1x128xf32> to vector<32x128xf32>
    %288 = arith.addf %285, %287 : vector<32x128xf32>
    %289 = vector.shape_cast %288 : vector<32x128xf32> to vector<4x8x128xf32>
    %c4_137 = arith.constant 4 : index
    %c0_138 = arith.constant 0 : index
    %c0_139 = arith.constant 0 : index
    %290 = vector.load %arg12[%c4_137, %c0_138, %c0_139] : memref<8x8x128xf32, #tpu.memory_space<vmem>>, vector<4x8x128xf32>
    tpu.vector_store %arg12[%c4_137, %c0_138, %c0_139], %289 {strides = array<i32>} : memref<8x8x128xf32, #tpu.memory_space<vmem>>, vector<4x8x128xf32>,
    %c0_140 = arith.constant 0 : index
    %c0_141 = arith.constant 0 : index
    %291 = vector.load %arg13[%c0_140, %c0_141] : memref<8x128xf32, #tpu.memory_space<vmem>>, vector<8x128xf32>
    tpu.vector_store %arg13[%c0_140, %c0_141], %276 {strides = array<i32>} : memref<8x128xf32, #tpu.memory_space<vmem>>, vector<8x128xf32>,
    %c0_142 = arith.constant 0 : index
    %c0_143 = arith.constant 0 : index
    %292 = vector.load %arg14[%c0_142, %c0_143] : memref<8x128xf32, #tpu.memory_space<vmem>>, vector<8x128xf32>
    tpu.vector_store %arg14[%c0_142, %c0_143], %274 {strides = array<i32>} : memref<8x128xf32, #tpu.memory_space<vmem>>, vector<8x128xf32>,
    return
  }
  func.func @transform_0(%arg0: i32, %arg1: i32) -> (i32, i32, i32) {
    %c0_i32 = arith.constant 0 : i32
    %c0_i32_0 = arith.constant 0 : i32
    return %arg1, %arg0, %c0_i32 : i32, i32, i32
  }
  func.func @transform_1(%arg0: i32, %arg1: i32) -> (i32, i32, i32) {
    %c0_i32 = arith.constant 0 : i32
    %c0_i32_0 = arith.constant 0 : i32
    return %arg1, %arg0, %c0_i32 : i32, i32, i32
  }
  func.func @transform_2(%arg0: i32, %arg1: i32) -> (i32, i32) {
    %c0_i32 = arith.constant 0 : i32
    %c0_i32_0 = arith.constant 0 : i32
    %c0_i32_1 = arith.constant 0 : i32
    return %c0_i32, %c0_i32_0 : i32, i32
  }
  func.func @transform_3(%arg0: i32, %arg1: i32) -> (i32, i32) {
    %c0_i32 = arith.constant 0 : i32
    %c0_i32_0 = arith.constant 0 : i32
    %c0_i32_1 = arith.constant 0 : i32
    return %c0_i32, %c0_i32_0 : i32, i32
  }
  func.func @transform_4(%arg0: i32, %arg1: i32) -> (i32, i32) {
    %c0_i32 = arith.constant 0 : i32
    %c0_i32_0 = arith.constant 0 : i32
    %c0_i32_1 = arith.constant 0 : i32
    return %c0_i32, %c0_i32_0 : i32, i32
  }
  func.func @transform_5(%arg0: i32, %arg1: i32) -> (i32, i32) {
    %c0_i32 = arith.constant 0 : i32
    %c0_i32_0 = arith.constant 0 : i32
    %c0_i32_1 = arith.constant 0 : i32
    return %c0_i32, %c0_i32_0 : i32, i32
  }
  func.func @transform_6(%arg0: i32, %arg1: i32) -> (i32, i32) {
    %c0_i32 = arith.constant 0 : i32
    %c0_i32_0 = arith.constant 0 : i32
    %c0_i32_1 = arith.constant 0 : i32
    return %c0_i32, %c0_i32_0 : i32, i32
  }
  func.func @transform_7(%arg0: i32, %arg1: i32) -> (i32, i32) {
    %c0_i32 = arith.constant 0 : i32
    %c0_i32_0 = arith.constant 0 : i32
    %c0_i32_1 = arith.constant 0 : i32
    return %c0_i32, %c0_i32_0 : i32, i32
  }
  func.func @transform_8(%arg0: i32, %arg1: i32) -> (i32, i32) {
    %c0_i32 = arith.constant 0 : i32
    %c0_i32_0 = arith.constant 0 : i32
    %c0_i32_1 = arith.constant 0 : i32
    return %c0_i32, %c0_i32_0 : i32, i32
  }
  func.func @transform_9(%arg0: i32, %arg1: i32) -> (i32, i32) {
    %c0_i32 = arith.constant 0 : i32
    %c0_i32_0 = arith.constant 0 : i32
    %c0_i32_1 = arith.constant 0 : i32
    return %c0_i32, %c0_i32_0 : i32, i32
  }
  func.func @transform_10(%arg0: i32, %arg1: i32) -> (i32, i32, i32) {
    %c0_i32 = arith.constant 0 : i32
    %c0_i32_0 = arith.constant 0 : i32
    return %arg1, %arg0, %c0_i32 : i32, i32, i32
  }
}

</mosaic_0001>

<llo_original>
// kernel: cudnn_lstm_model_inv_forward.2
$region0: #{cudnn_lstm_model_inv_forward.2}
  #allocation0 [shape = 'u32[]', space=smem, size = 0x4, offset = 0x4, fixed_abs, tag = 'smem constant byte address 0x4 - core index']
  #allocation1 [shape = 'u32[72,128]{1,0:T(1,128)}', space=vmem, size = 0x9000, scoped, tag = 'internal scratch']
  #allocation2 [shape = 'f32[8,128]{1,0:T(8,128)}', space=vmem, size = 0x1000, scoped, tag = 'scratch operand']
  #allocation3 [shape = 'f32[8,128]{1,0:T(8,128)}', space=vmem, size = 0x1000, scoped, tag = 'scratch operand']
  #allocation4 [shape = 'f32[4,8,512]{2,1,0:T(8,128)}', space=vmem, size = 0x10000, scoped, tag = 'scratch operand']
  #allocation5 [shape = 'bf16[4,8,128]{2,1,0:T(8,128)(2,1)}', space=vmem, size = 0x2000, scoped, tag = 'scratch operand']
  %s0 = inlined_call_operand.vmem [shape: bf16[16,8,128], index: 0, kind: input, shape index: {}]
  %s1 = inlined_call_operand.vmem [shape: bf16[128,128], index: 1, kind: input, shape index: {}]
  %s2 = inlined_call_operand.vmem [shape: f32[1,128], index: 2, kind: input, shape index: {}]
  %s3 = inlined_call_operand.vmem [shape: bf16[128,512], index: 3, kind: input, shape index: {}]
  %s4 = inlined_call_operand.vmem [shape: bf16[128,512], index: 4, kind: input, shape index: {}]
  %s5 = inlined_call_operand.vmem [shape: f32[1,512], index: 5, kind: input, shape index: {}]
  %s6 = inlined_call_operand.vmem [shape: bf16[128,128], index: 6, kind: input, shape index: {}]
  %s7 = inlined_call_operand.vmem [shape: f32[1,128], index: 7, kind: input, shape index: {}]
  %s8 = inlined_call_operand.vmem [shape: f32[16,8,128], index: 8, kind: output, shape index: {}]
  %s9 = sld [smem:[#allocation0]]
  $region69: #{cudnn_lstm_model_inv_forward.2} parent=0
    _
  %s11 = ssub.s32 1, %s9
  %s12 = scalar_select 0, %s11, %s9
  loop: start=0, step=1, limit=4
  $region2: #{cudnn_lstm_model_inv_forward.2} parent=0 // loop_pre_header
    _
  $region3: #{cudnn_lstm_model_inv_forward.2} parent=0 // loop_header
    %s14 = sphi 0, %s18
    %p15 = scmp.ge.s32.totalorder %s14, 4
    %s21 = sphi 0, %s33
    %s22 = sphi 0, %s29
    %s23 = sphi 0, %s21
    %s24 = sphi 0, %s22
    %s25 = sphi 0, %s23
    %s26 = sphi 0, %s24
    %s38 = sphi 0, %s40
    %s41 = sphi 0, %s38
    %s42 = sphi 0, %s41
    %s58 = sphi 0, %s42
    %s62 = sphi 0, %s62
    %s64 = sphi 0, %s62
    %s65 = sphi 0, %s64
    %s79 = sphi 0, %s65
    %s83 = sphi 0, %s83
    %s85 = sphi 0, %s83
    %s86 = sphi 0, %s85
    %s100 = sphi 0, %s86
    %s104 = sphi 0, %s104
    %s106 = sphi 0, %s104
    %s107 = sphi 0, %s106
    %s121 = sphi 0, %s107
    %s125 = sphi 0, %s125
    %s127 = sphi 0, %s125
    %s128 = sphi 0, %s127
    %s142 = sphi 0, %s128
    %s146 = sphi 0, %s146
    %s148 = sphi 0, %s146
    %s149 = sphi 0, %s148
    %s163 = sphi 0, %s149
    %s167 = sphi 0, %s167
    %s169 = sphi 0, %s167
    %s170 = sphi 0, %s169
    %s184 = sphi 0, %s170
    %s188 = sphi 0, %s188
    %s190 = sphi 0, %s188
    %s191 = sphi 0, %s190
    %s205 = sphi 0, %s191
    %s213 = sphi 0, %s215
    %s216 = sphi 0, %s213
    %s217 = sphi 0, %s216
    %s233 = sphi 0, %s217
  $region4: #{cudnn_lstm_model_inv_forward.2} parent=0 // loop_header_branch
    %17 = sbr.rel (%p15) target = $region8
  $region5: #{cudnn_lstm_model_inv_forward.2} parent=0 // loop_body
    %s19 = ssub.s32 %s14, 1
    %s20 = ssub.s32 %s14, 2
    %s27 = sadd.s32 1, %s22
    %p28 = scmp.ge.s32.totalorder %s27, 2
    %s29 = scalar_select %p28, 0, %s27
    %s30 = sadd.s32 1, %s21
    %s31 = scalar_select %p28, %s30, %s21
    %p32 = scmp.ge.s32.totalorder %s31, 1
    %s33 = scalar_select %p32, 0, %s31
    %s34 = ssub.s32 %s22, %s29
    %s35 = ssub.s32 %s21, %s33
    %s36 = sor.u32 %s34, %s35
    %p37 = scmp.eq.s32.totalorder %s36, 0
    %s39 = sadd.s32 %s38, 1
    %s40 = scalar_select %p37, %s38, %s39
    %p43 = pneg %p37
    %p44 = scmp.eq.s32.totalorder %s14, 1
    %p45 = por %p43, %p44
    %p46 = scmp.ne.s32.totalorder %s38, %s41
    %p47 = scmp.eq.s32.totalorder %s14, 0
    %p48 = por %p46, %p47
    %p49 = scmp.ne.s32.totalorder %s38, %s41
    %p50 = scmp.eq.s32.totalorder %s19, 1
    %p51 = por %p49, %p50
    %p52 = scmp.ne.s32.totalorder %s41, %s42
    %p53 = scmp.eq.s32.totalorder %s19, 0
    %p54 = por %p52, %p53
    %p55 = scmp.ne.s32.totalorder %s41, %s42
    %p56 = scmp.eq.s32.totalorder %s20, 1
    %p57 = por %p55, %p56
    %p59 = scmp.ne.s32.totalorder %s42, %s58
    %p60 = scmp.eq.s32.totalorder %s20, 0
    %p61 = por %p59, %p60
    %s63 = sadd.s32 %s62, 1
    %p66 = scmp.eq.s32.totalorder %s14, 1
    %p67 = scmp.ne.s32.totalorder %s62, %s64
    %p68 = scmp.eq.s32.totalorder %s14, 0
    %p69 = por %p67, %p68
    %p70 = scmp.ne.s32.totalorder %s62, %s64
    %p71 = scmp.eq.s32.totalorder %s19, 1
    %p72 = por %p70, %p71
    %p73 = scmp.ne.s32.totalorder %s64, %s65
    %p74 = scmp.eq.s32.totalorder %s19, 0
    %p75 = por %p73, %p74
    %p76 = scmp.ne.s32.totalorder %s64, %s65
    %p77 = scmp.eq.s32.totalorder %s20, 1
    %p78 = por %p76, %p77
    %p80 = scmp.ne.s32.totalorder %s65, %s79
    %p81 = scmp.eq.s32.totalorder %s20, 0
    %p82 = por %p80, %p81
    %s84 = sadd.s32 %s83, 1
    %p87 = scmp.eq.s32.totalorder %s14, 1
    %p88 = scmp.ne.s32.totalorder %s83, %s85
    %p89 = scmp.eq.s32.totalorder %s14, 0
    %p90 = por %p88, %p89
    %p91 = scmp.ne.s32.totalorder %s83, %s85
    %p92 = scmp.eq.s32.totalorder %s19, 1
    %p93 = por %p91, %p92
    %p94 = scmp.ne.s32.totalorder %s85, %s86
    %p95 = scmp.eq.s32.totalorder %s19, 0
    %p96 = por %p94, %p95
    %p97 = scmp.ne.s32.totalorder %s85, %s86
    %p98 = scmp.eq.s32.totalorder %s20, 1
    %p99 = por %p97, %p98
    %p101 = scmp.ne.s32.totalorder %s86, %s100
    %p102 = scmp.eq.s32.totalorder %s20, 0
    %p103 = por %p101, %p102
    %s105 = sadd.s32 %s104, 1
    %p108 = scmp.eq.s32.totalorder %s14, 1
    %p109 = scmp.ne.s32.totalorder %s104, %s106
    %p110 = scmp.eq.s32.totalorder %s14, 0
    %p111 = por %p109, %p110
    %p112 = scmp.ne.s32.totalorder %s104, %s106
    %p113 = scmp.eq.s32.totalorder %s19, 1
    %p114 = por %p112, %p113
    %p115 = scmp.ne.s32.totalorder %s106, %s107
    %p116 = scmp.eq.s32.totalorder %s19, 0
    %p117 = por %p115, %p116
    %p118 = scmp.ne.s32.totalorder %s106, %s107
    %p119 = scmp.eq.s32.totalorder %s20, 1
    %p120 = por %p118, %p119
    %p122 = scmp.ne.s32.totalorder %s107, %s121
    %p123 = scmp.eq.s32.totalorder %s20, 0
    %p124 = por %p122, %p123
    %s126 = sadd.s32 %s125, 1
    %p129 = scmp.eq.s32.totalorder %s14, 1
    %p130 = scmp.ne.s32.totalorder %s125, %s127
    %p131 = scmp.eq.s32.totalorder %s14, 0
    %p132 = por %p130, %p131
    %p133 = scmp.ne.s32.totalorder %s125, %s127
    %p134 = scmp.eq.s32.totalorder %s19, 1
    %p135 = por %p133, %p134
    %p136 = scmp.ne.s32.totalorder %s127, %s128
    %p137 = scmp.eq.s32.totalorder %s19, 0
    %p138 = por %p136, %p137
    %p139 = scmp.ne.s32.totalorder %s127, %s128
    %p140 = scmp.eq.s32.totalorder %s20, 1
    %p141 = por %p139, %p140
    %p143 = scmp.ne.s32.totalorder %s128, %s142
    %p144 = scmp.eq.s32.totalorder %s20, 0
    %p145 = por %p143, %p144
    %s147 = sadd.s32 %s146, 1
    %p150 = scmp.eq.s32.totalorder %s14, 1
    %p151 = scmp.ne.s32.totalorder %s146, %s148
    %p152 = scmp.eq.s32.totalorder %s14, 0
    %p153 = por %p151, %p152
    %p154 = scmp.ne.s32.totalorder %s146, %s148
    %p155 = scmp.eq.s32.totalorder %s19, 1
    %p156 = por %p154, %p155
    %p157 = scmp.ne.s32.totalorder %s148, %s149
    %p158 = scmp.eq.s32.totalorder %s19, 0
    %p159 = por %p157, %p158
    %p160 = scmp.ne.s32.totalorder %s148, %s149
    %p161 = scmp.eq.s32.totalorder %s20, 1
    %p162 = por %p160, %p161
    %p164 = scmp.ne.s32.totalorder %s149, %s163
    %p165 = scmp.eq.s32.totalorder %s20, 0
    %p166 = por %p164, %p165
    %s168 = sadd.s32 %s167, 1
    %p171 = scmp.eq.s32.totalorder %s14, 1
    %p172 = scmp.ne.s32.totalorder %s167, %s169
    %p173 = scmp.eq.s32.totalorder %s14, 0
    %p174 = por %p172, %p173
    %p175 = scmp.ne.s32.totalorder %s167, %s169
    %p176 = scmp.eq.s32.totalorder %s19, 1
    %p177 = por %p175, %p176
    %p178 = scmp.ne.s32.totalorder %s169, %s170
    %p179 = scmp.eq.s32.totalorder %s19, 0
    %p180 = por %p178, %p179
    %p181 = scmp.ne.s32.totalorder %s169, %s170
    %p182 = scmp.eq.s32.totalorder %s20, 1
    %p183 = por %p181, %p182
    %p185 = scmp.ne.s32.totalorder %s170, %s184
    %p186 = scmp.eq.s32.totalorder %s20, 0
    %p187 = por %p185, %p186
    %s189 = sadd.s32 %s188, 1
    %p192 = scmp.eq.s32.totalorder %s14, 1
    %p193 = scmp.ne.s32.totalorder %s188, %s190
    %p194 = scmp.eq.s32.totalorder %s14, 0
    %p195 = por %p193, %p194
    %p196 = scmp.ne.s32.totalorder %s188, %s190
    %p197 = scmp.eq.s32.totalorder %s19, 1
    %p198 = por %p196, %p197
    %p199 = scmp.ne.s32.totalorder %s190, %s191
    %p200 = scmp.eq.s32.totalorder %s19, 0
    %p201 = por %p199, %p200
    %p202 = scmp.ne.s32.totalorder %s190, %s191
    %p203 = scmp.eq.s32.totalorder %s20, 1
    %p204 = por %p202, %p203
    %p206 = scmp.ne.s32.totalorder %s191, %s205
    %p207 = scmp.eq.s32.totalorder %s20, 0
    %p208 = por %p206, %p207
    %s209 = ssub.s32 %s22, %s29
    %s210 = ssub.s32 %s21, %s33
    %s211 = sor.u32 %s209, %s210
    %p212 = scmp.eq.s32.totalorder %s211, 0
    %s214 = sadd.s32 %s213, 1
    %s215 = scalar_select %p212, %s213, %s214
    %p218 = pneg %p212
    %p219 = scmp.eq.s32.totalorder %s14, 1
    %p220 = por %p218, %p219
    %p221 = scmp.ne.s32.totalorder %s213, %s216
    %p222 = scmp.eq.s32.totalorder %s14, 0
    %p223 = por %p221, %p222
    %p224 = scmp.ne.s32.totalorder %s213, %s216
    %p225 = scmp.eq.s32.totalorder %s19, 1
    %p226 = por %p224, %p225
    %p227 = scmp.ne.s32.totalorder %s216, %s217
    %p228 = scmp.eq.s32.totalorder %s19, 0
    %p229 = por %p227, %p228
    %p230 = scmp.ne.s32.totalorder %s216, %s217
    %p231 = scmp.eq.s32.totalorder %s20, 1
    %p232 = por %p230, %p231
    %p234 = scmp.ne.s32.totalorder %s217, %s233
    %p235 = scmp.eq.s32.totalorder %s20, 0
    %p236 = por %p234, %p235
    %p237 = scmp.le.s32.totalorder 1, %s14
    %p238 = scmp.lt.s32.totalorder %s14, 3
    %p239 = pnand %p237, %p238
    %p240 = pneg %p239
    // Predicated region
    $region9: #{cudnn_lstm_model_inv_forward.2} parent=5 // pred_check
      _
    $region10: #{cudnn_lstm_model_inv_forward.2} parent=5 // pred_check_branch
      %242 = sbr.rel (%p239) target = $region12
    $region11: #{cudnn_lstm_model_inv_forward.2} parent=5 // pred_region
      %s243 = ssub.s32 %s14, 1
      // Predicated region
      $region13: #{cudnn_lstm_model_inv_forward.2} parent=11 // pred_check
        %p244 = pneg %p75
      $region14: #{cudnn_lstm_model_inv_forward.2} parent=11 // pred_check_branch
        %246 = sbr.rel (%p244) target = $region16
      $region15: #{cudnn_lstm_model_inv_forward.2} parent=11 // pred_region
        _
      $region16: #{cudnn_lstm_model_inv_forward.2} parent=11 // pred_fallthru
        _
      // Predicated region
      $region17: #{cudnn_lstm_model_inv_forward.2} parent=11 // pred_check
        %p247 = pneg %p96
      $region18: #{cudnn_lstm_model_inv_forward.2} parent=11 // pred_check_branch
        %249 = sbr.rel (%p247) target = $region20
      $region19: #{cudnn_lstm_model_inv_forward.2} parent=11 // pred_region
        _
      $region20: #{cudnn_lstm_model_inv_forward.2} parent=11 // pred_fallthru
        _
      // Predicated region
      $region21: #{cudnn_lstm_model_inv_forward.2} parent=11 // pred_check
        %p250 = pneg %p117
      $region22: #{cudnn_lstm_model_inv_forward.2} parent=11 // pred_check_branch
        %252 = sbr.rel (%p250) target = $region24
      $region23: #{cudnn_lstm_model_inv_forward.2} parent=11 // pred_region
        _
      $region24: #{cudnn_lstm_model_inv_forward.2} parent=11 // pred_fallthru
        _
      // Predicated region
      $region25: #{cudnn_lstm_model_inv_forward.2} parent=11 // pred_check
        %p253 = pneg %p138
      $region26: #{cudnn_lstm_model_inv_forward.2} parent=11 // pred_check_branch
        %255 = sbr.rel (%p253) target = $region28
      $region27: #{cudnn_lstm_model_inv_forward.2} parent=11 // pred_region
        _
      $region28: #{cudnn_lstm_model_inv_forward.2} parent=11 // pred_fallthru
        _
      // Predicated region
      $region29: #{cudnn_lstm_model_inv_forward.2} parent=11 // pred_check
        %p256 = pneg %p159
      $region30: #{cudnn_lstm_model_inv_forward.2} parent=11 // pred_check_branch
        %258 = sbr.rel (%p256) target = $region32
      $region31: #{cudnn_lstm_model_inv_forward.2} parent=11 // pred_region
        _
      $region32: #{cudnn_lstm_model_inv_forward.2} parent=11 // pred_fallthru
        _
      // Predicated region
      $region33: #{cudnn_lstm_model_inv_forward.2} parent=11 // pred_check
        %p259 = pneg %p180
      $region34: #{cudnn_lstm_model_inv_forward.2} parent=11 // pred_check_branch
        %261 = sbr.rel (%p259) target = $region36
      $region35: #{cudnn_lstm_model_inv_forward.2} parent=11 // pred_region
        _
      $region36: #{cudnn_lstm_model_inv_forward.2} parent=11 // pred_fallthru
        _
      // Predicated region
      $region37: #{cudnn_lstm_model_inv_forward.2} parent=11 // pred_check
        %p262 = pneg %p201
      $region38: #{cudnn_lstm_model_inv_forward.2} parent=11 // pred_check_branch
        %264 = sbr.rel (%p262) target = $region40
      $region39: #{cudnn_lstm_model_inv_forward.2} parent=11 // pred_region
        _
      $region40: #{cudnn_lstm_model_inv_forward.2} parent=11 // pred_fallthru
        _
    $region12: #{cudnn_lstm_model_inv_forward.2} parent=5 // pred_fallthru
      _
    %p265 = scmp.lt.s32.totalorder %s14, 2
    // Predicated region
    $region41: #{cudnn_lstm_model_inv_forward.2} parent=5 // pred_check
      %p266 = pneg %p265
    $region42: #{cudnn_lstm_model_inv_forward.2} parent=5 // pred_check_branch
      %268 = sbr.rel (%p266) target = $region44
    $region43: #{cudnn_lstm_model_inv_forward.2} parent=5 // pred_region
      // Predicated region
      $region45: #{cudnn_lstm_model_inv_forward.2} parent=43 // pred_check
        %p269 = pneg %p48
      $region46: #{cudnn_lstm_model_inv_forward.2} parent=43 // pred_check_branch
        %271 = sbr.rel (%p269) target = $region48
      $region47: #{cudnn_lstm_model_inv_forward.2} parent=43 // pred_region
        %s272 = smul.u32 8, %s22
        %p273 = scmp.lt.s32.totalorder %s272, 15
        %s274 = scalar_select %p273, %s272, 15
        %p275 = scmp.lt.s32.totalorder %s21, 0
        %s276 = scalar_select %p275, %s21, 0
        %s277 = sadd.s32 %s276, %s274
        %s278 = smul.addr %s277, 4
        %s279 = scalar_lea.vmem %s0, %s278
        %s280 = smul.u32 8, %s22
      $region48: #{cudnn_lstm_model_inv_forward.2} parent=43 // pred_fallthru
        _
    $region44: #{cudnn_lstm_model_inv_forward.2} parent=5 // pred_fallthru
      _
    %p281 = scmp.le.s32.totalorder 1, %s14
    %p282 = scmp.lt.s32.totalorder %s14, 3
    %p283 = pnand %p281, %p282
    %p284 = pneg %p283
    // Predicated region
    $region49: #{cudnn_lstm_model_inv_forward.2} parent=5 // pred_check
      _
    $region50: #{cudnn_lstm_model_inv_forward.2} parent=5 // pred_check_branch
      %286 = sbr.rel (%p283) target = $region52
    $region51: #{cudnn_lstm_model_inv_forward.2} parent=5 // pred_region
      %s287 = ssub.s32 %s14, 1
      %s288 = smul.u32 8, %s24
      %p289 = scmp.lt.s32.totalorder %s288, 15
      %s290 = scalar_select %p289, %s288, 15
      %p291 = scmp.lt.s32.totalorder %s23, 0
      %s292 = scalar_select %p291, %s23, 0
      %s293 = sadd.s32 %s292, %s290
      %s294 = smul.addr %s293, 4
      %s295 = scalar_lea.vmem %s0, %s294
      %p296 = pneg %p54
      %p297 = pneg %p51
      %p298 = pneg %p75
      %p299 = pneg %p72
      %p300 = pneg %p96
      %p301 = pneg %p93
      %p302 = pneg %p117
      %p303 = pneg %p114
      %p304 = pneg %p138
      %p305 = pneg %p135
      %p306 = pneg %p159
      %p307 = pneg %p156
      %p308 = pneg %p180
      %p309 = pneg %p177
      %p310 = pneg %p201
      %p311 = pneg %p198
      %p312 = pneg %p229
      %p313 = pneg %p226
      %s314 = smul.u32 8, %s24
      %p315 = scmp.lt.s32.totalorder %s314, 15
      %s316 = scalar_select %p315, %s314, 15
      %p317 = scmp.lt.s32.totalorder %s23, 0
      %s318 = scalar_select %p317, %s23, 0
      %s319 = sadd.s32 %s318, %s316
      %s320 = smul.addr %s319, 8
      %s321 = scalar_lea.vmem %s8, %s320
      %s322 = smul.u32 8, %s24
      %p323 = scmp.lt.s32.totalorder %s322, 15
      %s324 = scalar_select %p323, %s322, 15
      %p325 = scmp.lt.s32.totalorder %s23, 0
      %s326 = scalar_select %p325, %s23, 0
      %s327 = sadd.s32 %s326, %s324
      %s328 = smul.addr %s327, 4
      %s329 = scalar_lea.vmem %s0, %s328
      %s330 = smul.u32 8, %s24
      %s331 = smul.u32 8, %s24
      %p332 = scmp.lt.s32.totalorder %s331, 15
      %s333 = scalar_select %p332, %s331, 15
      %p334 = scmp.lt.s32.totalorder %s23, 0
      %s335 = scalar_select %p334, %s23, 0
      %s336 = sadd.s32 %s335, %s333
      %s337 = smul.addr %s336, 8
      %s338 = scalar_lea.vmem %s8, %s337
      %s339 = smul.u32 8, %s24
      %p340 = scmp.eq.s32.totalorder %s24, 0
      // Predicated region
      $region53: #{cudnn_lstm_model_inv_forward.2} parent=51 // pred_check
        %p341 = pneg %p340
      $region54: #{cudnn_lstm_model_inv_forward.2} parent=51 // pred_check_branch
        %343 = sbr.rel (%p341) target = $region56
      $region55: #{cudnn_lstm_model_inv_forward.2} parent=51 // pred_region
        %344 = vst [vmem:[#allocation2] sm:$0xff] 0.0
        %345 = vst [vmem:[#allocation3] sm:$0xff] 0.0
      $region56: #{cudnn_lstm_model_inv_forward.2} parent=51 // pred_fallthru
        _
      %v346 = vld [vmem:[#allocation2] sm:$0xff]
      %v347 = vld [vmem:[#allocation3] sm:$0xff]
      %v348 = vld [vmem:[%s2] sm:$0x1]
      %v349 = vld [vmem:[%s329] sm:$0xf]
      %v350 = vld [vmem:[%s329 + $0x4] sm:$0xf]
      %v351 = vld [vmem:[%s329 + $0x8] sm:$0xf]
      %v352 = vld [vmem:[%s329 + $0xc] sm:$0xf]
      %v353 = vld [vmem:[%s1] sm:$0xf]
      %v354 = vld [vmem:[%s1 + $0x4] sm:$0xf]
      %v355 = vld [vmem:[%s1 + $0x8] sm:$0xf]
      %v356 = vld [vmem:[%s1 + $0xc] sm:$0xf]
      %v357 = vld [vmem:[%s1 + $0x10] sm:$0xf]
      %v358 = vld [vmem:[%s1 + $0x14] sm:$0xf]
      %v359 = vld [vmem:[%s1 + $0x18] sm:$0xf]
      %v360 = vld [vmem:[%s1 + $0x1c] sm:$0xf]
      %v361 = vld [vmem:[%s1 + $0x20] sm:$0xf]
      %v362 = vld [vmem:[%s1 + $0x24] sm:$0xf]
      %v363 = vld [vmem:[%s1 + $0x28] sm:$0xf]
      %v364 = vld [vmem:[%s1 + $0x2c] sm:$0xf]
      %v365 = vld [vmem:[%s1 + $0x30] sm:$0xf]
      %v366 = vld [vmem:[%s1 + $0x34] sm:$0xf]
      %v367 = vld [vmem:[%s1 + $0x38] sm:$0xf]
      %v368 = vld [vmem:[%s1 + $0x3c] sm:$0xf]
      %v373 = vunpack.c.l.b16 %v349
      %v374 = vunpack.c.l.b16 %v350
      %v375 = vunpack.c.l.b16 %v351
      %v376 = vunpack.c.l.b16 %v352
      %v377 = vpack.c.b16 %v374, %v373
      %v378 = vpack.c.b16 %v376, %v375
      %v397 = vunpack.c.l.b16 %v353
      %v398 = vunpack.c.l.b16 %v354
      %v399 = vunpack.c.l.b16 %v355
      %v400 = vunpack.c.l.b16 %v356
      %v401 = vunpack.c.l.b16 %v357
      %v402 = vunpack.c.l.b16 %v358
      %v403 = vunpack.c.l.b16 %v359
      %v404 = vunpack.c.l.b16 %v360
      %v405 = vunpack.c.l.b16 %v361
      %v406 = vunpack.c.l.b16 %v362
      %v407 = vunpack.c.l.b16 %v363
      %v408 = vunpack.c.l.b16 %v364
      %v409 = vunpack.c.l.b16 %v365
      %v410 = vunpack.c.l.b16 %v366
      %v411 = vunpack.c.l.b16 %v367
      %v412 = vunpack.c.l.b16 %v368
      %v413 = vpack.c.b16 %v398, %v397
      %v414 = vpack.c.b16 %v400, %v399
      %v415 = vpack.c.b16 %v402, %v401
      %v416 = vpack.c.b16 %v404, %v403
      %v417 = vpack.c.b16 %v406, %v405
      %v418 = vpack.c.b16 %v408, %v407
      %v419 = vpack.c.b16 %v410, %v409
      %v420 = vpack.c.b16 %v412, %v411
      %429 = vmatpush.bf16.msra.mxu0 %v420
      %430 = vmatpush.bf16.msra.mxu0 %v419
      %431 = vmatpush.bf16.msra.mxu0 %v418
      %432 = vmatpush.bf16.msra.mxu0 %v417
      %433 = vmatpush.bf16.msra.mxu0 %v416
      %434 = vmatpush.bf16.msra.mxu0 %v415
      %435 = vmatpush.bf16.msra.mxu0 %v414
      %436 = vmatpush.bf16.msra.mxu0 %v413
      %437 = vmatmul.bf16.gmra.mxu0 %v377
      %v438 = vpop.f32.mrf.mxu0
      %v439 = vadd.f32 0.0, %v438
      %v440 = vpop.f32.mrf.mxu0
      %v441 = vadd.f32 0.0, %v440
      %442 = vmatmul.bf16.gmra.mxu0 %v378
      %v443 = vpop.f32.mrf.mxu0
      %v444 = vadd.f32 0.0, %v443
      %v445 = vpop.f32.mrf.mxu0
      %v446 = vadd.f32 0.0, %v445
      %447 = vdwg.mxu0
      %v449 = vperm.slane %v348, 0
      %v451 = vadd.f32 %v449, %v439
      %v452 = vadd.f32 %v449, %v441
      %v453 = vadd.f32 %v449, %v444
      %v454 = vadd.f32 %v449, %v446
      %v455 = vmax.f32 %v451, 0.0
      %v456 = vmax.f32 %v452, 0.0
      %v457 = vmax.f32 %v453, 0.0
      %v458 = vmax.f32 %v454, 0.0
      %v459 = vpack.c.bf16 %v456, %v455
      %v460 = vpack.c.bf16 %v458, %v457
      %v461 = vld [vmem:[%s3] sm:$0xff]
      %v462 = vld [vmem:[%s3 + $0x8] sm:$0xff]
      %v463 = vld [vmem:[%s3 + $0x10] sm:$0xff]
      %v464 = vld [vmem:[%s3 + $0x18] sm:$0xff]
      %v465 = vld [vmem:[%s3 + $0x20] sm:$0xff]
      %v466 = vld [vmem:[%s3 + $0x28] sm:$0xff]
      %v467 = vld [vmem:[%s3 + $0x30] sm:$0xff]
      %v468 = vld [vmem:[%s3 + $0x38] sm:$0xff]
      %v469 = vld [vmem:[%s3 + $0x40] sm:$0xff]
      %v470 = vld [vmem:[%s3 + $0x48] sm:$0xff]
      %v471 = vld [vmem:[%s3 + $0x50] sm:$0xff]
      %v472 = vld [vmem:[%s3 + $0x58] sm:$0xff]
      %v473 = vld [vmem:[%s3 + $0x60] sm:$0xff]
      %v474 = vld [vmem:[%s3 + $0x68] sm:$0xff]
      %v475 = vld [vmem:[%s3 + $0x70] sm:$0xff]
      %v476 = vld [vmem:[%s3 + $0x78] sm:$0xff]
      %v477 = vld [vmem:[%s3 + $0x80] sm:$0xff]
      %v478 = vld [vmem:[%s3 + $0x88] sm:$0xff]
      %v479 = vld [vmem:[%s3 + $0x90] sm:$0xff]
      %v480 = vld [vmem:[%s3 + $0x98] sm:$0xff]
      %v481 = vld [vmem:[%s3 + $0xa0] sm:$0xff]
      %v482 = vld [vmem:[%s3 + $0xa8] sm:$0xff]
      %v483 = vld [vmem:[%s3 + $0xb0] sm:$0xff]
      %v484 = vld [vmem:[%s3 + $0xb8] sm:$0xff]
      %v485 = vld [vmem:[%s3 + $0xc0] sm:$0xff]
      %v486 = vld [vmem:[%s3 + $0xc8] sm:$0xff]
      %v487 = vld [vmem:[%s3 + $0xd0] sm:$0xff]
      %v488 = vld [vmem:[%s3 + $0xd8] sm:$0xff]
      %v489 = vld [vmem:[%s3 + $0xe0] sm:$0xff]
      %v490 = vld [vmem:[%s3 + $0xe8] sm:$0xff]
      %v491 = vld [vmem:[%s3 + $0xf0] sm:$0xff]
      %v492 = vld [vmem:[%s3 + $0xf8] sm:$0xff]
      %v493 = vld [vmem:[%s5] sm:$0xf]
      %v495 = vperm.slane %v493, 0
      %v496 = vperm.slane %v493, 1
      %v497 = vperm.slane %v493, 2
      %v498 = vperm.slane %v493, 3
      %v535 = vunpack.c.l.b16 %v461
      %v536 = vunpack.c.h.b16 %v461
      %v537 = vunpack.c.l.b16 %v462
      %v538 = vunpack.c.h.b16 %v462
      %v539 = vunpack.c.l.b16 %v463
      %v540 = vunpack.c.h.b16 %v463
      %v541 = vunpack.c.l.b16 %v464
      %v542 = vunpack.c.h.b16 %v464
      %v543 = vunpack.c.l.b16 %v465
      %v544 = vunpack.c.h.b16 %v465
      %v545 = vunpack.c.l.b16 %v466
      %v546 = vunpack.c.h.b16 %v466
      %v547 = vunpack.c.l.b16 %v467
      %v548 = vunpack.c.h.b16 %v467
      %v549 = vunpack.c.l.b16 %v468
      %v550 = vunpack.c.h.b16 %v468
      %v551 = vunpack.c.l.b16 %v469
      %v552 = vunpack.c.h.b16 %v469
      %v553 = vunpack.c.l.b16 %v470
      %v554 = vunpack.c.h.b16 %v470
      %v555 = vunpack.c.l.b16 %v471
      %v556 = vunpack.c.h.b16 %v471
      %v557 = vunpack.c.l.b16 %v472
      %v558 = vunpack.c.h.b16 %v472
      %v559 = vunpack.c.l.b16 %v473
      %v560 = vunpack.c.h.b16 %v473
      %v561 = vunpack.c.l.b16 %v474
      %v562 = vunpack.c.h.b16 %v474
      %v563 = vunpack.c.l.b16 %v475
      %v564 = vunpack.c.h.b16 %v475
      %v565 = vunpack.c.l.b16 %v476
      %v566 = vunpack.c.h.b16 %v476
      %v567 = vunpack.c.l.b16 %v477
      %v568 = vunpack.c.h.b16 %v477
      %v569 = vunpack.c.l.b16 %v478
      %v570 = vunpack.c.h.b16 %v478
      %v571 = vunpack.c.l.b16 %v479
      %v572 = vunpack.c.h.b16 %v479
      %v573 = vunpack.c.l.b16 %v480
      %v574 = vunpack.c.h.b16 %v480
      %v575 = vunpack.c.l.b16 %v481
      %v576 = vunpack.c.h.b16 %v481
      %v577 = vunpack.c.l.b16 %v482
      %v578 = vunpack.c.h.b16 %v482
      %v579 = vunpack.c.l.b16 %v483
      %v580 = vunpack.c.h.b16 %v483
      %v581 = vunpack.c.l.b16 %v484
      %v582 = vunpack.c.h.b16 %v484
      %v583 = vunpack.c.l.b16 %v485
      %v584 = vunpack.c.h.b16 %v485
      %v585 = vunpack.c.l.b16 %v486
      %v586 = vunpack.c.h.b16 %v486
      %v587 = vunpack.c.l.b16 %v487
      %v588 = vunpack.c.h.b16 %v487
      %v589 = vunpack.c.l.b16 %v488
      %v590 = vunpack.c.h.b16 %v488
      %v591 = vunpack.c.l.b16 %v489
      %v592 = vunpack.c.h.b16 %v489
      %v593 = vunpack.c.l.b16 %v490
      %v594 = vunpack.c.h.b16 %v490
      %v595 = vunpack.c.l.b16 %v491
      %v596 = vunpack.c.h.b16 %v491
      %v597 = vunpack.c.l.b16 %v492
      %v598 = vunpack.c.h.b16 %v492
      %v599 = vpack.c.b16 %v539, %v535
      %v600 = vpack.c.b16 %v540, %v536
      %v601 = vpack.c.b16 %v541, %v537
      %v602 = vpack.c.b16 %v542, %v538
      %v603 = vpack.c.b16 %v547, %v543
      %v604 = vpack.c.b16 %v548, %v544
      %v605 = vpack.c.b16 %v549, %v545
      %v606 = vpack.c.b16 %v550, %v546
      %v607 = vpack.c.b16 %v555, %v551
      %v608 = vpack.c.b16 %v556, %v552
      %v609 = vpack.c.b16 %v557, %v553
      %v610 = vpack.c.b16 %v558, %v554
      %v611 = vpack.c.b16 %v563, %v559
      %v612 = vpack.c.b16 %v564, %v560
      %v613 = vpack.c.b16 %v565, %v561
      %v614 = vpack.c.b16 %v566, %v562
      %v615 = vpack.c.b16 %v571, %v567
      %v616 = vpack.c.b16 %v572, %v568
      %v617 = vpack.c.b16 %v573, %v569
      %v618 = vpack.c.b16 %v574, %v570
      %v619 = vpack.c.b16 %v579, %v575
      %v620 = vpack.c.b16 %v580, %v576
      %v621 = vpack.c.b16 %v581, %v577
      %v622 = vpack.c.b16 %v582, %v578
      %v623 = vpack.c.b16 %v587, %v583
      %v624 = vpack.c.b16 %v588, %v584
      %v625 = vpack.c.b16 %v589, %v585
      %v626 = vpack.c.b16 %v590, %v586
      %v627 = vpack.c.b16 %v595, %v591
      %v628 = vpack.c.b16 %v596, %v592
      %v629 = vpack.c.b16 %v597, %v593
      %v630 = vpack.c.b16 %v598, %v594
      %663 = vmatpush.bf16.msra.mxu0 %v627
      %664 = vmatpush.bf16.msra.mxu0 %v623
      %665 = vmatpush.bf16.msra.mxu0 %v619
      %666 = vmatpush.bf16.msra.mxu0 %v615
      %667 = vmatpush.bf16.msra.mxu0 %v611
      %668 = vmatpush.bf16.msra.mxu0 %v607
      %669 = vmatpush.bf16.msra.mxu0 %v603
      %670 = vmatpush.bf16.msra.mxu0 %v599
      %671 = vmatmul.bf16.gmra.mxu0 %v459
      %v672 = vpop.f32.mrf.mxu0
      %v673 = vadd.f32 %v495, %v672
      %v674 = vpop.f32.mrf.mxu0
      %v675 = vadd.f32 %v495, %v674
      %676 = vmatmul.bf16.gmra.mxu0 %v460
      %v677 = vpop.f32.mrf.mxu0
      %v678 = vadd.f32 %v495, %v677
      %v679 = vpop.f32.mrf.mxu0
      %v680 = vadd.f32 %v495, %v679
      %681 = vdwg.mxu0
      %682 = vmatpush.bf16.msra.mxu0 %v628
      %683 = vmatpush.bf16.msra.mxu0 %v624
      %684 = vmatpush.bf16.msra.mxu0 %v620
      %685 = vmatpush.bf16.msra.mxu0 %v616
      %686 = vmatpush.bf16.msra.mxu0 %v612
      %687 = vmatpush.bf16.msra.mxu0 %v608
      %688 = vmatpush.bf16.msra.mxu0 %v604
      %689 = vmatpush.bf16.msra.mxu0 %v600
      %690 = vmatmul.bf16.gmra.mxu0 %v459
      %v691 = vpop.f32.mrf.mxu0
      %v692 = vadd.f32 %v496, %v691
      %v693 = vpop.f32.mrf.mxu0
      %v694 = vadd.f32 %v496, %v693
      %695 = vmatmul.bf16.gmra.mxu0 %v460
      %v696 = vpop.f32.mrf.mxu0
      %v697 = vadd.f32 %v496, %v696
      %v698 = vpop.f32.mrf.mxu0
      %v699 = vadd.f32 %v496, %v698
      %700 = vdwg.mxu0
      %701 = vmatpush.bf16.msra.mxu0 %v629
      %702 = vmatpush.bf16.msra.mxu0 %v625
      %703 = vmatpush.bf16.msra.mxu0 %v621
      %704 = vmatpush.bf16.msra.mxu0 %v617
      %705 = vmatpush.bf16.msra.mxu0 %v613
      %706 = vmatpush.bf16.msra.mxu0 %v609
      %707 = vmatpush.bf16.msra.mxu0 %v605
      %708 = vmatpush.bf16.msra.mxu0 %v601
      %709 = vmatmul.bf16.gmra.mxu0 %v459
      %v710 = vpop.f32.mrf.mxu0
      %v711 = vadd.f32 %v497, %v710
      %v712 = vpop.f32.mrf.mxu0
      %v713 = vadd.f32 %v497, %v712
      %714 = vmatmul.bf16.gmra.mxu0 %v460
      %v715 = vpop.f32.mrf.mxu0
      %v716 = vadd.f32 %v497, %v715
      %v717 = vpop.f32.mrf.mxu0
      %v718 = vadd.f32 %v497, %v717
      %719 = vdwg.mxu0
      %720 = vmatpush.bf16.msra.mxu0 %v630
      %721 = vmatpush.bf16.msra.mxu0 %v626
      %722 = vmatpush.bf16.msra.mxu0 %v622
      %723 = vmatpush.bf16.msra.mxu0 %v618
      %724 = vmatpush.bf16.msra.mxu0 %v614
      %725 = vmatpush.bf16.msra.mxu0 %v610
      %726 = vmatpush.bf16.msra.mxu0 %v606
      %727 = vmatpush.bf16.msra.mxu0 %v602
      %728 = vmatmul.bf16.gmra.mxu0 %v459
      %v729 = vpop.f32.mrf.mxu0
      %v730 = vadd.f32 %v498, %v729
      %v731 = vpop.f32.mrf.mxu0
      %v732 = vadd.f32 %v498, %v731
      %733 = vmatmul.bf16.gmra.mxu0 %v460
      %v734 = vpop.f32.mrf.mxu0
      %v735 = vadd.f32 %v498, %v734
      %v736 = vpop.f32.mrf.mxu0
      %v737 = vadd.f32 %v498, %v736
      %738 = vdwg.mxu0
      %739 = vst [vmem:[#allocation4] sm:$0xff] %v673
      %740 = vst [vmem:[#allocation4 + $0x8] sm:$0xff] %v692
      %741 = vst [vmem:[#allocation4 + $0x10] sm:$0xff] %v711
      %742 = vst [vmem:[#allocation4 + $0x18] sm:$0xff] %v730
      %743 = vst [vmem:[#allocation4 + $0x20] sm:$0xff] %v675
      %744 = vst [vmem:[#allocation4 + $0x28] sm:$0xff] %v694
      %745 = vst [vmem:[#allocation4 + $0x30] sm:$0xff] %v713
      %746 = vst [vmem:[#allocation4 + $0x38] sm:$0xff] %v732
      %747 = vst [vmem:[#allocation4 + $0x40] sm:$0xff] %v678
      %748 = vst [vmem:[#allocation4 + $0x48] sm:$0xff] %v697
      %749 = vst [vmem:[#allocation4 + $0x50] sm:$0xff] %v716
      %750 = vst [vmem:[#allocation4 + $0x58] sm:$0xff] %v735
      %751 = vst [vmem:[#allocation4 + $0x60] sm:$0xff] %v680
      %752 = vst [vmem:[#allocation4 + $0x68] sm:$0xff] %v699
      %753 = vst [vmem:[#allocation4 + $0x70] sm:$0xff] %v718
      %754 = vst [vmem:[#allocation4 + $0x78] sm:$0xff] %v737
      %v755 = vld [vmem:[#allocation4] sm:$0xff]
      %v756 = vld [vmem:[#allocation4 + $0x8] sm:$0xff]
      %v757 = vld [vmem:[#allocation4 + $0x10] sm:$0xff]
      %v758 = vld [vmem:[#allocation4 + $0x18] sm:$0xff]
      %v759 = vpack.c.bf16 %v346, %v346
      %v760 = vld [vmem:[%s4] sm:$0xff]
      %v761 = vld [vmem:[%s4 + $0x8] sm:$0xff]
      %v762 = vld [vmem:[%s4 + $0x10] sm:$0xff]
      %v763 = vld [vmem:[%s4 + $0x18] sm:$0xff]
      %v764 = vld [vmem:[%s4 + $0x20] sm:$0xff]
      %v765 = vld [vmem:[%s4 + $0x28] sm:$0xff]
      %v766 = vld [vmem:[%s4 + $0x30] sm:$0xff]
      %v767 = vld [vmem:[%s4 + $0x38] sm:$0xff]
      %v768 = vld [vmem:[%s4 + $0x40] sm:$0xff]
      %v769 = vld [vmem:[%s4 + $0x48] sm:$0xff]
      %v770 = vld [vmem:[%s4 + $0x50] sm:$0xff]
      %v771 = vld [vmem:[%s4 + $0x58] sm:$0xff]
      %v772 = vld [vmem:[%s4 + $0x60] sm:$0xff]
      %v773 = vld [vmem:[%s4 + $0x68] sm:$0xff]
      %v774 = vld [vmem:[%s4 + $0x70] sm:$0xff]
      %v775 = vld [vmem:[%s4 + $0x78] sm:$0xff]
      %v776 = vld [vmem:[%s4 + $0x80] sm:$0xff]
      %v777 = vld [vmem:[%s4 + $0x88] sm:$0xff]
      %v778 = vld [vmem:[%s4 + $0x90] sm:$0xff]
      %v779 = vld [vmem:[%s4 + $0x98] sm:$0xff]
      %v780 = vld [vmem:[%s4 + $0xa0] sm:$0xff]
      %v781 = vld [vmem:[%s4 + $0xa8] sm:$0xff]
      %v782 = vld [vmem:[%s4 + $0xb0] sm:$0xff]
      %v783 = vld [vmem:[%s4 + $0xb8] sm:$0xff]
      %v784 = vld [vmem:[%s4 + $0xc0] sm:$0xff]
      %v785 = vld [vmem:[%s4 + $0xc8] sm:$0xff]
      %v786 = vld [vmem:[%s4 + $0xd0] sm:$0xff]
      %v787 = vld [vmem:[%s4 + $0xd8] sm:$0xff]
      %v788 = vld [vmem:[%s4 + $0xe0] sm:$0xff]
      %v789 = vld [vmem:[%s4 + $0xe8] sm:$0xff]
      %v790 = vld [vmem:[%s4 + $0xf0] sm:$0xff]
      %v791 = vld [vmem:[%s4 + $0xf8] sm:$0xff]
      %v824 = vunpack.c.l.b16 %v760
      %v825 = vunpack.c.h.b16 %v760
      %v826 = vunpack.c.l.b16 %v761
      %v827 = vunpack.c.h.b16 %v761
      %v828 = vunpack.c.l.b16 %v762
      %v829 = vunpack.c.h.b16 %v762
      %v830 = vunpack.c.l.b16 %v763
      %v831 = vunpack.c.h.b16 %v763
      %v832 = vunpack.c.l.b16 %v764
      %v833 = vunpack.c.h.b16 %v764
      %v834 = vunpack.c.l.b16 %v765
      %v835 = vunpack.c.h.b16 %v765
      %v836 = vunpack.c.l.b16 %v766
      %v837 = vunpack.c.h.b16 %v766
      %v838 = vunpack.c.l.b16 %v767
      %v839 = vunpack.c.h.b16 %v767
      %v840 = vunpack.c.l.b16 %v768
      %v841 = vunpack.c.h.b16 %v768
      %v842 = vunpack.c.l.b16 %v769
      %v843 = vunpack.c.h.b16 %v769
      %v844 = vunpack.c.l.b16 %v770
      %v845 = vunpack.c.h.b16 %v770
      %v846 = vunpack.c.l.b16 %v771
      %v847 = vunpack.c.h.b16 %v771
      %v848 = vunpack.c.l.b16 %v772
      %v849 = vunpack.c.h.b16 %v772
      %v850 = vunpack.c.l.b16 %v773
      %v851 = vunpack.c.h.b16 %v773
      %v852 = vunpack.c.l.b16 %v774
      %v853 = vunpack.c.h.b16 %v774
      %v854 = vunpack.c.l.b16 %v775
      %v855 = vunpack.c.h.b16 %v775
      %v856 = vunpack.c.l.b16 %v776
      %v857 = vunpack.c.h.b16 %v776
      %v858 = vunpack.c.l.b16 %v777
      %v859 = vunpack.c.h.b16 %v777
      %v860 = vunpack.c.l.b16 %v778
      %v861 = vunpack.c.h.b16 %v778
      %v862 = vunpack.c.l.b16 %v779
      %v863 = vunpack.c.h.b16 %v779
      %v864 = vunpack.c.l.b16 %v780
      %v865 = vunpack.c.h.b16 %v780
      %v866 = vunpack.c.l.b16 %v781
      %v867 = vunpack.c.h.b16 %v781
      %v868 = vunpack.c.l.b16 %v782
      %v869 = vunpack.c.h.b16 %v782
      %v870 = vunpack.c.l.b16 %v783
      %v871 = vunpack.c.h.b16 %v783
      %v872 = vunpack.c.l.b16 %v784
      %v873 = vunpack.c.h.b16 %v784
      %v874 = vunpack.c.l.b16 %v785
      %v875 = vunpack.c.h.b16 %v785
      %v876 = vunpack.c.l.b16 %v786
      %v877 = vunpack.c.h.b16 %v786
      %v878 = vunpack.c.l.b16 %v787
      %v879 = vunpack.c.h.b16 %v787
      %v880 = vunpack.c.l.b16 %v788
      %v881 = vunpack.c.h.b16 %v788
      %v882 = vunpack.c.l.b16 %v789
      %v883 = vunpack.c.h.b16 %v789
      %v884 = vunpack.c.l.b16 %v790
      %v885 = vunpack.c.h.b16 %v790
      %v886 = vunpack.c.l.b16 %v791
      %v887 = vunpack.c.h.b16 %v791
      %v888 = vpack.c.b16 %v828, %v824
      %v889 = vpack.c.b16 %v829, %v825
      %v890 = vpack.c.b16 %v830, %v826
      %v891 = vpack.c.b16 %v831, %v827
      %v892 = vpack.c.b16 %v836, %v832
      %v893 = vpack.c.b16 %v837, %v833
      %v894 = vpack.c.b16 %v838, %v834
      %v895 = vpack.c.b16 %v839, %v835
      %v896 = vpack.c.b16 %v844, %v840
      %v897 = vpack.c.b16 %v845, %v841
      %v898 = vpack.c.b16 %v846, %v842
      %v899 = vpack.c.b16 %v847, %v843
      %v900 = vpack.c.b16 %v852, %v848
      %v901 = vpack.c.b16 %v853, %v849
      %v902 = vpack.c.b16 %v854, %v850
      %v903 = vpack.c.b16 %v855, %v851
      %v904 = vpack.c.b16 %v860, %v856
      %v905 = vpack.c.b16 %v861, %v857
      %v906 = vpack.c.b16 %v862, %v858
      %v907 = vpack.c.b16 %v863, %v859
      %v908 = vpack.c.b16 %v868, %v864
      %v909 = vpack.c.b16 %v869, %v865
      %v910 = vpack.c.b16 %v870, %v866
      %v911 = vpack.c.b16 %v871, %v867
      %v912 = vpack.c.b16 %v876, %v872
      %v913 = vpack.c.b16 %v877, %v873
      %v914 = vpack.c.b16 %v878, %v874
      %v915 = vpack.c.b16 %v879, %v875
      %v916 = vpack.c.b16 %v884, %v880
      %v917 = vpack.c.b16 %v885, %v881
      %v918 = vpack.c.b16 %v886, %v882
      %v919 = vpack.c.b16 %v887, %v883
      %952 = vmatpush.bf16.msra.mxu0 %v916
      %953 = vmatpush.bf16.msra.mxu0 %v912
      %954 = vmatpush.bf16.msra.mxu0 %v908
      %955 = vmatpush.bf16.msra.mxu0 %v904
      %956 = vmatpush.bf16.msra.mxu0 %v900
      %957 = vmatpush.bf16.msra.mxu0 %v896
      %958 = vmatpush.bf16.msra.mxu0 %v892
      %959 = vmatpush.bf16.msra.mxu0 %v888
      %960 = vmatmul.bf16.gmra.mxu0 %v759
      %v961 = vpop.f32.mrf.mxu0
      %v962 = vadd.f32 0.0, %v961
      %v963 = vpop.f32.mrf.mxu0
      %964 = vdwg.mxu0
      %965 = vmatpush.bf16.msra.mxu0 %v917
      %966 = vmatpush.bf16.msra.mxu0 %v913
      %967 = vmatpush.bf16.msra.mxu0 %v909
      %968 = vmatpush.bf16.msra.mxu0 %v905
      %969 = vmatpush.bf16.msra.mxu0 %v901
      %970 = vmatpush.bf16.msra.mxu0 %v897
      %971 = vmatpush.bf16.msra.mxu0 %v893
      %972 = vmatpush.bf16.msra.mxu0 %v889
      %973 = vmatmul.bf16.gmra.mxu0 %v759
      %v974 = vpop.f32.mrf.mxu0
      %v975 = vadd.f32 0.0, %v974
      %v976 = vpop.f32.mrf.mxu0
      %977 = vdwg.mxu0
      %978 = vmatpush.bf16.msra.mxu0 %v918
      %979 = vmatpush.bf16.msra.mxu0 %v914
      %980 = vmatpush.bf16.msra.mxu0 %v910
      %981 = vmatpush.bf16.msra.mxu0 %v906
      %982 = vmatpush.bf16.msra.mxu0 %v902
      %983 = vmatpush.bf16.msra.mxu0 %v898
      %984 = vmatpush.bf16.msra.mxu0 %v894
      %985 = vmatpush.bf16.msra.mxu0 %v890
      %986 = vmatmul.bf16.gmra.mxu0 %v759
      %v987 = vpop.f32.mrf.mxu0
      %v988 = vadd.f32 0.0, %v987
      %v989 = vpop.f32.mrf.mxu0
      %990 = vdwg.mxu0
      %991 = vmatpush.bf16.msra.mxu0 %v919
      %992 = vmatpush.bf16.msra.mxu0 %v915
      %993 = vmatpush.bf16.msra.mxu0 %v911
      %994 = vmatpush.bf16.msra.mxu0 %v907
      %995 = vmatpush.bf16.msra.mxu0 %v903
      %996 = vmatpush.bf16.msra.mxu0 %v899
      %997 = vmatpush.bf16.msra.mxu0 %v895
      %998 = vmatpush.bf16.msra.mxu0 %v891
      %999 = vmatmul.bf16.gmra.mxu0 %v759
      %v1000 = vpop.f32.mrf.mxu0
      %v1001 = vadd.f32 0.0, %v1000
      %v1002 = vpop.f32.mrf.mxu0
      %1003 = vdwg.mxu0
      %v1004 = vadd.f32 %v755, %v962
      %v1005 = vadd.f32 %v756, %v975
      %v1006 = vadd.f32 %v757, %v988
      %v1007 = vadd.f32 %v758, %v1001
      %v1008 = vxor.u32 %v1004, 2147483648
      %v1009 = vxor.u32 %v1005, 2147483648
      %v1010 = vxor.u32 %v1006, 2147483648
      %v1011 = vmul.f32 %v1008, 1.442695
      %v1012 = vpow.pop %v1011
      %v1013 = vmul.f32 %v1009, 1.442695
      %v1014 = vpow.pop %v1013
      %v1015 = vmul.f32 %v1010, 1.442695
      %v1016 = vpow.pop %v1015
      %v1017 = vadd.f32 %v1012, 1.0
      %v1018 = vadd.f32 %v1014, 1.0
      %v1019 = vadd.f32 %v1016, 1.0
      %v1020 = vrcp.pop %v1017
      %v1021 = vmul.f32 %v1017, %v1020
      %v1022 = vsub.f32 1.0, %v1021
      %v1023 = vmul.f32 %v1020, %v1022
      %v1024 = vadd.f32 %v1020, %v1023
      %vm1025 = vweird.f32 %v1017
      %vm1026 = vweird.f32 %v1020
      %vm1027 = vmor %vm1025, %vm1026
      %v1028 = vsel %vm1027, %v1020, %v1024
      %v1029 = vand.u32 2147483647, %v1017
      %vm1030 = vcmp.eq.f32.partialorder %v1029, 8.507059e+37
      %v1031 = vand.u32 %v1017, 2147483648
      %v1032 = vor.u32 1.1754944e-38, %v1031
      %v1033 = vsel %vm1030, %v1032, %v1028
      %v1034 = vmul.f32 1.0, %v1033
      %v1035 = vrcp.pop %v1018
      %v1036 = vmul.f32 %v1018, %v1035
      %v1037 = vsub.f32 1.0, %v1036
      %v1038 = vmul.f32 %v1035, %v1037
      %v1039 = vadd.f32 %v1035, %v1038
      %vm1040 = vweird.f32 %v1018
      %vm1041 = vweird.f32 %v1035
      %vm1042 = vmor %vm1040, %vm1041
      %v1043 = vsel %vm1042, %v1035, %v1039
      %v1044 = vand.u32 2147483647, %v1018
      %vm1045 = vcmp.eq.f32.partialorder %v1044, 8.507059e+37
      %v1046 = vand.u32 %v1018, 2147483648
      %v1047 = vor.u32 1.1754944e-38, %v1046
      %v1048 = vsel %vm1045, %v1047, %v1043
      %v1049 = vmul.f32 1.0, %v1048
      %v1050 = vrcp.pop %v1019
      %v1051 = vmul.f32 %v1019, %v1050
      %v1052 = vsub.f32 1.0, %v1051
      %v1053 = vmul.f32 %v1050, %v1052
      %v1054 = vadd.f32 %v1050, %v1053
      %vm1055 = vweird.f32 %v1019
      %vm1056 = vweird.f32 %v1050
      %vm1057 = vmor %vm1055, %vm1056
      %v1058 = vsel %vm1057, %v1050, %v1054
      %v1059 = vand.u32 2147483647, %v1019
      %vm1060 = vcmp.eq.f32.partialorder %v1059, 8.507059e+37
      %v1061 = vand.u32 %v1019, 2147483648
      %v1062 = vor.u32 1.1754944e-38, %v1061
      %v1063 = vsel %vm1060, %v1062, %v1058
      %v1064 = vmul.f32 1.0, %v1063
      %v1065 = vtanh.pop %v1007
      %v1066 = vmul.f32 %v1049, %v347
      %v1067 = vmul.f32 %v1034, %v1065
      %v1068 = vadd.f32 %v1066, %v1067
      %v1069 = vtanh.pop %v1068
      %v1070 = vmul.f32 %v1064, %v1069
      %v1071 = vpack.c.bf16 %v1070, %v1070
      %1072 = vst [vmem:[#allocation5] sm:$0xf] %v1071
      %s1073 = scalar_lea.vmem [#allocation4], 32
      %v1074 = vld [vmem:[%s1073] sm:$0xff]
      %v1075 = vld [vmem:[%s1073 + $0x8] sm:$0xff]
      %v1076 = vld [vmem:[%s1073 + $0x10] sm:$0xff]
      %v1077 = vld [vmem:[%s1073 + $0x18] sm:$0xff]
      %v1078 = vld [vmem:[%s4] sm:$0xff]
      %v1079 = vld [vmem:[%s4 + $0x8] sm:$0xff]
      %v1080 = vld [vmem:[%s4 + $0x10] sm:$0xff]
      %v1081 = vld [vmem:[%s4 + $0x18] sm:$0xff]
      %v1082 = vld [vmem:[%s4 + $0x20] sm:$0xff]
      %v1083 = vld [vmem:[%s4 + $0x28] sm:$0xff]
      %v1084 = vld [vmem:[%s4 + $0x30] sm:$0xff]
      %v1085 = vld [vmem:[%s4 + $0x38] sm:$0xff]
      %v1086 = vld [vmem:[%s4 + $0x40] sm:$0xff]
      %v1087 = vld [vmem:[%s4 + $0x48] sm:$0xff]
      %v1088 = vld [vmem:[%s4 + $0x50] sm:$0xff]
      %v1089 = vld [vmem:[%s4 + $0x58] sm:$0xff]
      %v1090 = vld [vmem:[%s4 + $0x60] sm:$0xff]
      %v1091 = vld [vmem:[%s4 + $0x68] sm:$0xff]
      %v1092 = vld [vmem:[%s4 + $0x70] sm:$0xff]
      %v1093 = vld [vmem:[%s4 + $0x78] sm:$0xff]
      %v1094 = vld [vmem:[%s4 + $0x80] sm:$0xff]
      %v1095 = vld [vmem:[%s4 + $0x88] sm:$0xff]
      %v1096 = vld [vmem:[%s4 + $0x90] sm:$0xff]
      %v1097 = vld [vmem:[%s4 + $0x98] sm:$0xff]
      %v1098 = vld [vmem:[%s4 + $0xa0] sm:$0xff]
      %v1099 = vld [vmem:[%s4 + $0xa8] sm:$0xff]
      %v1100 = vld [vmem:[%s4 + $0xb0] sm:$0xff]
      %v1101 = vld [vmem:[%s4 + $0xb8] sm:$0xff]
      %v1102 = vld [vmem:[%s4 + $0xc0] sm:$0xff]
      %v1103 = vld [vmem:[%s4 + $0xc8] sm:$0xff]
      %v1104 = vld [vmem:[%s4 + $0xd0] sm:$0xff]
      %v1105 = vld [vmem:[%s4 + $0xd8] sm:$0xff]
      %v1106 = vld [vmem:[%s4 + $0xe0] sm:$0xff]
      %v1107 = vld [vmem:[%s4 + $0xe8] sm:$0xff]
      %v1108 = vld [vmem:[%s4 + $0xf0] sm:$0xff]
      %v1109 = vld [vmem:[%s4 + $0xf8] sm:$0xff]
      %v1142 = vunpack.c.l.b16 %v1078
      %v1143 = vunpack.c.h.b16 %v1078
      %v1144 = vunpack.c.l.b16 %v1079
      %v1145 = vunpack.c.h.b16 %v1079
      %v1146 = vunpack.c.l.b16 %v1080
      %v1147 = vunpack.c.h.b16 %v1080
      %v1148 = vunpack.c.l.b16 %v1081
      %v1149 = vunpack.c.h.b16 %v1081
      %v1150 = vunpack.c.l.b16 %v1082
      %v1151 = vunpack.c.h.b16 %v1082
      %v1152 = vunpack.c.l.b16 %v1083
      %v1153 = vunpack.c.h.b16 %v1083
      %v1154 = vunpack.c.l.b16 %v1084
      %v1155 = vunpack.c.h.b16 %v1084
      %v1156 = vunpack.c.l.b16 %v1085
      %v1157 = vunpack.c.h.b16 %v1085
      %v1158 = vunpack.c.l.b16 %v1086
      %v1159 = vunpack.c.h.b16 %v1086
      %v1160 = vunpack.c.l.b16 %v1087
      %v1161 = vunpack.c.h.b16 %v1087
      %v1162 = vunpack.c.l.b16 %v1088
      %v1163 = vunpack.c.h.b16 %v1088
      %v1164 = vunpack.c.l.b16 %v1089
      %v1165 = vunpack.c.h.b16 %v1089
      %v1166 = vunpack.c.l.b16 %v1090
      %v1167 = vunpack.c.h.b16 %v1090
      %v1168 = vunpack.c.l.b16 %v1091
      %v1169 = vunpack.c.h.b16 %v1091
      %v1170 = vunpack.c.l.b16 %v1092
      %v1171 = vunpack.c.h.b16 %v1092
      %v1172 = vunpack.c.l.b16 %v1093
      %v1173 = vunpack.c.h.b16 %v1093
      %v1174 = vunpack.c.l.b16 %v1094
      %v1175 = vunpack.c.h.b16 %v1094
      %v1176 = vunpack.c.l.b16 %v1095
      %v1177 = vunpack.c.h.b16 %v1095
      %v1178 = vunpack.c.l.b16 %v1096
      %v1179 = vunpack.c.h.b16 %v1096
      %v1180 = vunpack.c.l.b16 %v1097
      %v1181 = vunpack.c.h.b16 %v1097
      %v1182 = vunpack.c.l.b16 %v1098
      %v1183 = vunpack.c.h.b16 %v1098
      %v1184 = vunpack.c.l.b16 %v1099
      %v1185 = vunpack.c.h.b16 %v1099
      %v1186 = vunpack.c.l.b16 %v1100
      %v1187 = vunpack.c.h.b16 %v1100
      %v1188 = vunpack.c.l.b16 %v1101
      %v1189 = vunpack.c.h.b16 %v1101
      %v1190 = vunpack.c.l.b16 %v1102
      %v1191 = vunpack.c.h.b16 %v1102
      %v1192 = vunpack.c.l.b16 %v1103
      %v1193 = vunpack.c.h.b16 %v1103
      %v1194 = vunpack.c.l.b16 %v1104
      %v1195 = vunpack.c.h.b16 %v1104
      %v1196 = vunpack.c.l.b16 %v1105
      %v1197 = vunpack.c.h.b16 %v1105
      %v1198 = vunpack.c.l.b16 %v1106
      %v1199 = vunpack.c.h.b16 %v1106
      %v1200 = vunpack.c.l.b16 %v1107
      %v1201 = vunpack.c.h.b16 %v1107
      %v1202 = vunpack.c.l.b16 %v1108
      %v1203 = vunpack.c.h.b16 %v1108
      %v1204 = vunpack.c.l.b16 %v1109
      %v1205 = vunpack.c.h.b16 %v1109
      %v1206 = vpack.c.b16 %v1146, %v1142
      %v1207 = vpack.c.b16 %v1147, %v1143
      %v1208 = vpack.c.b16 %v1148, %v1144
      %v1209 = vpack.c.b16 %v1149, %v1145
      %v1210 = vpack.c.b16 %v1154, %v1150
      %v1211 = vpack.c.b16 %v1155, %v1151
      %v1212 = vpack.c.b16 %v1156, %v1152
      %v1213 = vpack.c.b16 %v1157, %v1153
      %v1214 = vpack.c.b16 %v1162, %v1158
      %v1215 = vpack.c.b16 %v1163, %v1159
      %v1216 = vpack.c.b16 %v1164, %v1160
      %v1217 = vpack.c.b16 %v1165, %v1161
      %v1218 = vpack.c.b16 %v1170, %v1166
      %v1219 = vpack.c.b16 %v1171, %v1167
      %v1220 = vpack.c.b16 %v1172, %v1168
      %v1221 = vpack.c.b16 %v1173, %v1169
      %v1222 = vpack.c.b16 %v1178, %v1174
      %v1223 = vpack.c.b16 %v1179, %v1175
      %v1224 = vpack.c.b16 %v1180, %v1176
      %v1225 = vpack.c.b16 %v1181, %v1177
      %v1226 = vpack.c.b16 %v1186, %v1182
      %v1227 = vpack.c.b16 %v1187, %v1183
      %v1228 = vpack.c.b16 %v1188, %v1184
      %v1229 = vpack.c.b16 %v1189, %v1185
      %v1230 = vpack.c.b16 %v1194, %v1190
      %v1231 = vpack.c.b16 %v1195, %v1191
      %v1232 = vpack.c.b16 %v1196, %v1192
      %v1233 = vpack.c.b16 %v1197, %v1193
      %v1234 = vpack.c.b16 %v1202, %v1198
      %v1235 = vpack.c.b16 %v1203, %v1199
      %v1236 = vpack.c.b16 %v1204, %v1200
      %v1237 = vpack.c.b16 %v1205, %v1201
      %1270 = vmatpush.bf16.msra.mxu0 %v1234
      %1271 = vmatpush.bf16.msra.mxu0 %v1230
      %1272 = vmatpush.bf16.msra.mxu0 %v1226
      %1273 = vmatpush.bf16.msra.mxu0 %v1222
      %1274 = vmatpush.bf16.msra.mxu0 %v1218
      %1275 = vmatpush.bf16.msra.mxu0 %v1214
      %1276 = vmatpush.bf16.msra.mxu0 %v1210
      %1277 = vmatpush.bf16.msra.mxu0 %v1206
      %1278 = vmatmul.bf16.gmra.mxu0 %v1071
      %v1279 = vpop.f32.mrf.mxu0
      %v1280 = vadd.f32 0.0, %v1279
      %v1281 = vpop.f32.mrf.mxu0
      %1282 = vdwg.mxu0
      %1283 = vmatpush.bf16.msra.mxu0 %v1235
      %1284 = vmatpush.bf16.msra.mxu0 %v1231
      %1285 = vmatpush.bf16.msra.mxu0 %v1227
      %1286 = vmatpush.bf16.msra.mxu0 %v1223
      %1287 = vmatpush.bf16.msra.mxu0 %v1219
      %1288 = vmatpush.bf16.msra.mxu0 %v1215
      %1289 = vmatpush.bf16.msra.mxu0 %v1211
      %1290 = vmatpush.bf16.msra.mxu0 %v1207
      %1291 = vmatmul.bf16.gmra.mxu0 %v1071
      %v1292 = vpop.f32.mrf.mxu0
      %v1293 = vadd.f32 0.0, %v1292
      %v1294 = vpop.f32.mrf.mxu0
      %1295 = vdwg.mxu0
      %1296 = vmatpush.bf16.msra.mxu0 %v1236
      %1297 = vmatpush.bf16.msra.mxu0 %v1232
      %1298 = vmatpush.bf16.msra.mxu0 %v1228
      %1299 = vmatpush.bf16.msra.mxu0 %v1224
      %1300 = vmatpush.bf16.msra.mxu0 %v1220
      %1301 = vmatpush.bf16.msra.mxu0 %v1216
      %1302 = vmatpush.bf16.msra.mxu0 %v1212
      %1303 = vmatpush.bf16.msra.mxu0 %v1208
      %1304 = vmatmul.bf16.gmra.mxu0 %v1071
      %v1305 = vpop.f32.mrf.mxu0
      %v1306 = vadd.f32 0.0, %v1305
      %v1307 = vpop.f32.mrf.mxu0
      %1308 = vdwg.mxu0
      %1309 = vmatpush.bf16.msra.mxu0 %v1237
      %1310 = vmatpush.bf16.msra.mxu0 %v1233
      %1311 = vmatpush.bf16.msra.mxu0 %v1229
      %1312 = vmatpush.bf16.msra.mxu0 %v1225
      %1313 = vmatpush.bf16.msra.mxu0 %v1221
      %1314 = vmatpush.bf16.msra.mxu0 %v1217
      %1315 = vmatpush.bf16.msra.mxu0 %v1213
      %1316 = vmatpush.bf16.msra.mxu0 %v1209
      %1317 = vmatmul.bf16.gmra.mxu0 %v1071
      %v1318 = vpop.f32.mrf.mxu0
      %v1319 = vadd.f32 0.0, %v1318
      %v1320 = vpop.f32.mrf.mxu0
      %1321 = vdwg.mxu0
      %v1322 = vadd.f32 %v1074, %v1280
      %v1323 = vadd.f32 %v1075, %v1293
      %v1324 = vadd.f32 %v1076, %v1306
      %v1325 = vadd.f32 %v1077, %v1319
      %v1326 = vxor.u32 %v1322, 2147483648
      %v1327 = vxor.u32 %v1323, 2147483648
      %v1328 = vxor.u32 %v1324, 2147483648
      %v1329 = vmul.f32 %v1326, 1.442695
      %v1330 = vpow.pop %v1329
      %v1331 = vmul.f32 %v1327, 1.442695
      %v1332 = vpow.pop %v1331
      %v1333 = vmul.f32 %v1328, 1.442695
      %v1334 = vpow.pop %v1333
      %v1335 = vadd.f32 %v1330, 1.0
      %v1336 = vadd.f32 %v1332, 1.0
      %v1337 = vadd.f32 %v1334, 1.0
      %v1338 = vrcp.pop %v1335
      %v1339 = vmul.f32 %v1335, %v1338
      %v1340 = vsub.f32 1.0, %v1339
      %v1341 = vmul.f32 %v1338, %v1340
      %v1342 = vadd.f32 %v1338, %v1341
      %vm1343 = vweird.f32 %v1335
      %vm1344 = vweird.f32 %v1338
      %vm1345 = vmor %vm1343, %vm1344
      %v1346 = vsel %vm1345, %v1338, %v1342
      %v1347 = vand.u32 2147483647, %v1335
      %vm1348 = vcmp.eq.f32.partialorder %v1347, 8.507059e+37
      %v1349 = vand.u32 %v1335, 2147483648
      %v1350 = vor.u32 1.1754944e-38, %v1349
      %v1351 = vsel %vm1348, %v1350, %v1346
      %v1352 = vmul.f32 1.0, %v1351
      %v1353 = vrcp.pop %v1336
      %v1354 = vmul.f32 %v1336, %v1353
      %v1355 = vsub.f32 1.0, %v1354
      %v1356 = vmul.f32 %v1353, %v1355
      %v1357 = vadd.f32 %v1353, %v1356
      %vm1358 = vweird.f32 %v1336
      %vm1359 = vweird.f32 %v1353
      %vm1360 = vmor %vm1358, %vm1359
      %v1361 = vsel %vm1360, %v1353, %v1357
      %v1362 = vand.u32 2147483647, %v1336
      %vm1363 = vcmp.eq.f32.partialorder %v1362, 8.507059e+37
      %v1364 = vand.u32 %v1336, 2147483648
      %v1365 = vor.u32 1.1754944e-38, %v1364
      %v1366 = vsel %vm1363, %v1365, %v1361
      %v1367 = vmul.f32 1.0, %v1366
      %v1368 = vrcp.pop %v1337
      %v1369 = vmul.f32 %v1337, %v1368
      %v1370 = vsub.f32 1.0, %v1369
      %v1371 = vmul.f32 %v1368, %v1370
      %v1372 = vadd.f32 %v1368, %v1371
      %vm1373 = vweird.f32 %v1337
      %vm1374 = vweird.f32 %v1368
      %vm1375 = vmor %vm1373, %vm1374
      %v1376 = vsel %vm1375, %v1368, %v1372
      %v1377 = vand.u32 2147483647, %v1337
      %vm1378 = vcmp.eq.f32.partialorder %v1377, 8.507059e+37
      %v1379 = vand.u32 %v1337, 2147483648
      %v1380 = vor.u32 1.1754944e-38, %v1379
      %v1381 = vsel %vm1378, %v1380, %v1376
      %v1382 = vmul.f32 1.0, %v1381
      %v1383 = vtanh.pop %v1325
      %v1384 = vmul.f32 %v1367, %v1068
      %v1385 = vmul.f32 %v1352, %v1383
      %v1386 = vadd.f32 %v1384, %v1385
      %v1387 = vtanh.pop %v1386
      %v1388 = vmul.f32 %v1382, %v1387
      %v1389 = vpack.c.bf16 %v1388, %v1388
      %s1390 = scalar_lea.vmem [#allocation5], 4
      %1391 = vst [vmem:[%s1390] sm:$0xf] %v1389
      %s1392 = scalar_lea.vmem [#allocation4], 64
      %v1393 = vld [vmem:[%s1392] sm:$0xff]
      %v1394 = vld [vmem:[%s1392 + $0x8] sm:$0xff]
      %v1395 = vld [vmem:[%s1392 + $0x10] sm:$0xff]
      %v1396 = vld [vmem:[%s1392 + $0x18] sm:$0xff]
      %v1397 = vld [vmem:[%s4] sm:$0xff]
      %v1398 = vld [vmem:[%s4 + $0x8] sm:$0xff]
      %v1399 = vld [vmem:[%s4 + $0x10] sm:$0xff]
      %v1400 = vld [vmem:[%s4 + $0x18] sm:$0xff]
      %v1401 = vld [vmem:[%s4 + $0x20] sm:$0xff]
      %v1402 = vld [vmem:[%s4 + $0x28] sm:$0xff]
      %v1403 = vld [vmem:[%s4 + $0x30] sm:$0xff]
      %v1404 = vld [vmem:[%s4 + $0x38] sm:$0xff]
      %v1405 = vld [vmem:[%s4 + $0x40] sm:$0xff]
      %v1406 = vld [vmem:[%s4 + $0x48] sm:$0xff]
      %v1407 = vld [vmem:[%s4 + $0x50] sm:$0xff]
      %v1408 = vld [vmem:[%s4 + $0x58] sm:$0xff]
      %v1409 = vld [vmem:[%s4 + $0x60] sm:$0xff]
      %v1410 = vld [vmem:[%s4 + $0x68] sm:$0xff]
      %v1411 = vld [vmem:[%s4 + $0x70] sm:$0xff]
      %v1412 = vld [vmem:[%s4 + $0x78] sm:$0xff]
      %v1413 = vld [vmem:[%s4 + $0x80] sm:$0xff]
      %v1414 = vld [vmem:[%s4 + $0x88] sm:$0xff]
      %v1415 = vld [vmem:[%s4 + $0x90] sm:$0xff]
      %v1416 = vld [vmem:[%s4 + $0x98] sm:$0xff]
      %v1417 = vld [vmem:[%s4 + $0xa0] sm:$0xff]
      %v1418 = vld [vmem:[%s4 + $0xa8] sm:$0xff]
      %v1419 = vld [vmem:[%s4 + $0xb0] sm:$0xff]
      %v1420 = vld [vmem:[%s4 + $0xb8] sm:$0xff]
      %v1421 = vld [vmem:[%s4 + $0xc0] sm:$0xff]
      %v1422 = vld [vmem:[%s4 + $0xc8] sm:$0xff]
      %v1423 = vld [vmem:[%s4 + $0xd0] sm:$0xff]
      %v1424 = vld [vmem:[%s4 + $0xd8] sm:$0xff]
      %v1425 = vld [vmem:[%s4 + $0xe0] sm:$0xff]
      %v1426 = vld [vmem:[%s4 + $0xe8] sm:$0xff]
      %v1427 = vld [vmem:[%s4 + $0xf0] sm:$0xff]
      %v1428 = vld [vmem:[%s4 + $0xf8] sm:$0xff]
      %v1461 = vunpack.c.l.b16 %v1397
      %v1462 = vunpack.c.h.b16 %v1397
      %v1463 = vunpack.c.l.b16 %v1398
      %v1464 = vunpack.c.h.b16 %v1398
      %v1465 = vunpack.c.l.b16 %v1399
      %v1466 = vunpack.c.h.b16 %v1399
      %v1467 = vunpack.c.l.b16 %v1400
      %v1468 = vunpack.c.h.b16 %v1400
      %v1469 = vunpack.c.l.b16 %v1401
      %v1470 = vunpack.c.h.b16 %v1401
      %v1471 = vunpack.c.l.b16 %v1402
      %v1472 = vunpack.c.h.b16 %v1402
      %v1473 = vunpack.c.l.b16 %v1403
      %v1474 = vunpack.c.h.b16 %v1403
      %v1475 = vunpack.c.l.b16 %v1404
      %v1476 = vunpack.c.h.b16 %v1404
      %v1477 = vunpack.c.l.b16 %v1405
      %v1478 = vunpack.c.h.b16 %v1405
      %v1479 = vunpack.c.l.b16 %v1406
      %v1480 = vunpack.c.h.b16 %v1406
      %v1481 = vunpack.c.l.b16 %v1407
      %v1482 = vunpack.c.h.b16 %v1407
      %v1483 = vunpack.c.l.b16 %v1408
      %v1484 = vunpack.c.h.b16 %v1408
      %v1485 = vunpack.c.l.b16 %v1409
      %v1486 = vunpack.c.h.b16 %v1409
      %v1487 = vunpack.c.l.b16 %v1410
      %v1488 = vunpack.c.h.b16 %v1410
      %v1489 = vunpack.c.l.b16 %v1411
      %v1490 = vunpack.c.h.b16 %v1411
      %v1491 = vunpack.c.l.b16 %v1412
      %v1492 = vunpack.c.h.b16 %v1412
      %v1493 = vunpack.c.l.b16 %v1413
      %v1494 = vunpack.c.h.b16 %v1413
      %v1495 = vunpack.c.l.b16 %v1414
      %v1496 = vunpack.c.h.b16 %v1414
      %v1497 = vunpack.c.l.b16 %v1415
      %v1498 = vunpack.c.h.b16 %v1415
      %v1499 = vunpack.c.l.b16 %v1416
      %v1500 = vunpack.c.h.b16 %v1416
      %v1501 = vunpack.c.l.b16 %v1417
      %v1502 = vunpack.c.h.b16 %v1417
      %v1503 = vunpack.c.l.b16 %v1418
      %v1504 = vunpack.c.h.b16 %v1418
      %v1505 = vunpack.c.l.b16 %v1419
      %v1506 = vunpack.c.h.b16 %v1419
      %v1507 = vunpack.c.l.b16 %v1420
      %v1508 = vunpack.c.h.b16 %v1420
      %v1509 = vunpack.c.l.b16 %v1421
      %v1510 = vunpack.c.h.b16 %v1421
      %v1511 = vunpack.c.l.b16 %v1422
      %v1512 = vunpack.c.h.b16 %v1422
      %v1513 = vunpack.c.l.b16 %v1423
      %v1514 = vunpack.c.h.b16 %v1423
      %v1515 = vunpack.c.l.b16 %v1424
      %v1516 = vunpack.c.h.b16 %v1424
      %v1517 = vunpack.c.l.b16 %v1425
      %v1518 = vunpack.c.h.b16 %v1425
      %v1519 = vunpack.c.l.b16 %v1426
      %v1520 = vunpack.c.h.b16 %v1426
      %v1521 = vunpack.c.l.b16 %v1427
      %v1522 = vunpack.c.h.b16 %v1427
      %v1523 = vunpack.c.l.b16 %v1428
      %v1524 = vunpack.c.h.b16 %v1428
      %v1525 = vpack.c.b16 %v1465, %v1461
      %v1526 = vpack.c.b16 %v1466, %v1462
      %v1527 = vpack.c.b16 %v1467, %v1463
      %v1528 = vpack.c.b16 %v1468, %v1464
      %v1529 = vpack.c.b16 %v1473, %v1469
      %v1530 = vpack.c.b16 %v1474, %v1470
      %v1531 = vpack.c.b16 %v1475, %v1471
      %v1532 = vpack.c.b16 %v1476, %v1472
      %v1533 = vpack.c.b16 %v1481, %v1477
      %v1534 = vpack.c.b16 %v1482, %v1478
      %v1535 = vpack.c.b16 %v1483, %v1479
      %v1536 = vpack.c.b16 %v1484, %v1480
      %v1537 = vpack.c.b16 %v1489, %v1485
      %v1538 = vpack.c.b16 %v1490, %v1486
      %v1539 = vpack.c.b16 %v1491, %v1487
      %v1540 = vpack.c.b16 %v1492, %v1488
      %v1541 = vpack.c.b16 %v1497, %v1493
      %v1542 = vpack.c.b16 %v1498, %v1494
      %v1543 = vpack.c.b16 %v1499, %v1495
      %v1544 = vpack.c.b16 %v1500, %v1496
      %v1545 = vpack.c.b16 %v1505, %v1501
      %v1546 = vpack.c.b16 %v1506, %v1502
      %v1547 = vpack.c.b16 %v1507, %v1503
      %v1548 = vpack.c.b16 %v1508, %v1504
      %v1549 = vpack.c.b16 %v1513, %v1509
      %v1550 = vpack.c.b16 %v1514, %v1510
      %v1551 = vpack.c.b16 %v1515, %v1511
      %v1552 = vpack.c.b16 %v1516, %v1512
      %v1553 = vpack.c.b16 %v1521, %v1517
      %v1554 = vpack.c.b16 %v1522, %v1518
      %v1555 = vpack.c.b16 %v1523, %v1519
      %v1556 = vpack.c.b16 %v1524, %v1520
      %1589 = vmatpush.bf16.msra.mxu0 %v1553
      %1590 = vmatpush.bf16.msra.mxu0 %v1549
      %1591 = vmatpush.bf16.msra.mxu0 %v1545
      %1592 = vmatpush.bf16.msra.mxu0 %v1541
      %1593 = vmatpush.bf16.msra.mxu0 %v1537
      %1594 = vmatpush.bf16.msra.mxu0 %v1533
      %1595 = vmatpush.bf16.msra.mxu0 %v1529
      %1596 = vmatpush.bf16.msra.mxu0 %v1525
      %1597 = vmatmul.bf16.gmra.mxu0 %v1389
      %v1598 = vpop.f32.mrf.mxu0
      %v1599 = vadd.f32 0.0, %v1598
      %v1600 = vpop.f32.mrf.mxu0
      %1601 = vdwg.mxu0
      %1602 = vmatpush.bf16.msra.mxu0 %v1554
      %1603 = vmatpush.bf16.msra.mxu0 %v1550
      %1604 = vmatpush.bf16.msra.mxu0 %v1546
      %1605 = vmatpush.bf16.msra.mxu0 %v1542
      %1606 = vmatpush.bf16.msra.mxu0 %v1538
      %1607 = vmatpush.bf16.msra.mxu0 %v1534
      %1608 = vmatpush.bf16.msra.mxu0 %v1530
      %1609 = vmatpush.bf16.msra.mxu0 %v1526
      %1610 = vmatmul.bf16.gmra.mxu0 %v1389
      %v1611 = vpop.f32.mrf.mxu0
      %v1612 = vadd.f32 0.0, %v1611
      %v1613 = vpop.f32.mrf.mxu0
      %1614 = vdwg.mxu0
      %1615 = vmatpush.bf16.msra.mxu0 %v1555
      %1616 = vmatpush.bf16.msra.mxu0 %v1551
      %1617 = vmatpush.bf16.msra.mxu0 %v1547
      %1618 = vmatpush.bf16.msra.mxu0 %v1543
      %1619 = vmatpush.bf16.msra.mxu0 %v1539
      %1620 = vmatpush.bf16.msra.mxu0 %v1535
      %1621 = vmatpush.bf16.msra.mxu0 %v1531
      %1622 = vmatpush.bf16.msra.mxu0 %v1527
      %1623 = vmatmul.bf16.gmra.mxu0 %v1389
      %v1624 = vpop.f32.mrf.mxu0
      %v1625 = vadd.f32 0.0, %v1624
      %v1626 = vpop.f32.mrf.mxu0
      %1627 = vdwg.mxu0
      %1628 = vmatpush.bf16.msra.mxu0 %v1556
      %1629 = vmatpush.bf16.msra.mxu0 %v1552
      %1630 = vmatpush.bf16.msra.mxu0 %v1548
      %1631 = vmatpush.bf16.msra.mxu0 %v1544
      %1632 = vmatpush.bf16.msra.mxu0 %v1540
      %1633 = vmatpush.bf16.msra.mxu0 %v1536
      %1634 = vmatpush.bf16.msra.mxu0 %v1532
      %1635 = vmatpush.bf16.msra.mxu0 %v1528
      %1636 = vmatmul.bf16.gmra.mxu0 %v1389
      %v1637 = vpop.f32.mrf.mxu0
      %v1638 = vadd.f32 0.0, %v1637
      %v1639 = vpop.f32.mrf.mxu0
      %1640 = vdwg.mxu0
      %v1641 = vadd.f32 %v1393, %v1599
      %v1642 = vadd.f32 %v1394, %v1612
      %v1643 = vadd.f32 %v1395, %v1625
      %v1644 = vadd.f32 %v1396, %v1638
      %v1645 = vxor.u32 %v1641, 2147483648
      %v1646 = vxor.u32 %v1642, 2147483648
      %v1647 = vxor.u32 %v1643, 2147483648
      %v1648 = vmul.f32 %v1645, 1.442695
      %v1649 = vpow.pop %v1648
      %v1650 = vmul.f32 %v1646, 1.442695
      %v1651 = vpow.pop %v1650
      %v1652 = vmul.f32 %v1647, 1.442695
      %v1653 = vpow.pop %v1652
      %v1654 = vadd.f32 %v1649, 1.0
      %v1655 = vadd.f32 %v1651, 1.0
      %v1656 = vadd.f32 %v1653, 1.0
      %v1657 = vrcp.pop %v1654
      %v1658 = vmul.f32 %v1654, %v1657
      %v1659 = vsub.f32 1.0, %v1658
      %v1660 = vmul.f32 %v1657, %v1659
      %v1661 = vadd.f32 %v1657, %v1660
      %vm1662 = vweird.f32 %v1654
      %vm1663 = vweird.f32 %v1657
      %vm1664 = vmor %vm1662, %vm1663
      %v1665 = vsel %vm1664, %v1657, %v1661
      %v1666 = vand.u32 2147483647, %v1654
      %vm1667 = vcmp.eq.f32.partialorder %v1666, 8.507059e+37
      %v1668 = vand.u32 %v1654, 2147483648
      %v1669 = vor.u32 1.1754944e-38, %v1668
      %v1670 = vsel %vm1667, %v1669, %v1665
      %v1671 = vmul.f32 1.0, %v1670
      %v1672 = vrcp.pop %v1655
      %v1673 = vmul.f32 %v1655, %v1672
      %v1674 = vsub.f32 1.0, %v1673
      %v1675 = vmul.f32 %v1672, %v1674
      %v1676 = vadd.f32 %v1672, %v1675
      %vm1677 = vweird.f32 %v1655
      %vm1678 = vweird.f32 %v1672
      %vm1679 = vmor %vm1677, %vm1678
      %v1680 = vsel %vm1679, %v1672, %v1676
      %v1681 = vand.u32 2147483647, %v1655
      %vm1682 = vcmp.eq.f32.partialorder %v1681, 8.507059e+37
      %v1683 = vand.u32 %v1655, 2147483648
      %v1684 = vor.u32 1.1754944e-38, %v1683
      %v1685 = vsel %vm1682, %v1684, %v1680
      %v1686 = vmul.f32 1.0, %v1685
      %v1687 = vrcp.pop %v1656
      %v1688 = vmul.f32 %v1656, %v1687
      %v1689 = vsub.f32 1.0, %v1688
      %v1690 = vmul.f32 %v1687, %v1689
      %v1691 = vadd.f32 %v1687, %v1690
      %vm1692 = vweird.f32 %v1656
      %vm1693 = vweird.f32 %v1687
      %vm1694 = vmor %vm1692, %vm1693
      %v1695 = vsel %vm1694, %v1687, %v1691
      %v1696 = vand.u32 2147483647, %v1656
      %vm1697 = vcmp.eq.f32.partialorder %v1696, 8.507059e+37
      %v1698 = vand.u32 %v1656, 2147483648
      %v1699 = vor.u32 1.1754944e-38, %v1698
      %v1700 = vsel %vm1697, %v1699, %v1695
      %v1701 = vmul.f32 1.0, %v1700
      %v1702 = vtanh.pop %v1644
      %v1703 = vmul.f32 %v1686, %v1386
      %v1704 = vmul.f32 %v1671, %v1702
      %v1705 = vadd.f32 %v1703, %v1704
      %v1706 = vtanh.pop %v1705
      %v1707 = vmul.f32 %v1701, %v1706
      %v1708 = vpack.c.bf16 %v1707, %v1707
      %s1709 = scalar_lea.vmem [#allocation5], 8
      %1710 = vst [vmem:[%s1709] sm:$0xf] %v1708
      %s1711 = scalar_lea.vmem [#allocation4], 96
      %v1712 = vld [vmem:[%s1711] sm:$0xff]
      %v1713 = vld [vmem:[%s1711 + $0x8] sm:$0xff]
      %v1714 = vld [vmem:[%s1711 + $0x10] sm:$0xff]
      %v1715 = vld [vmem:[%s1711 + $0x18] sm:$0xff]
      %v1716 = vld [vmem:[%s4] sm:$0xff]
      %v1717 = vld [vmem:[%s4 + $0x8] sm:$0xff]
      %v1718 = vld [vmem:[%s4 + $0x10] sm:$0xff]
      %v1719 = vld [vmem:[%s4 + $0x18] sm:$0xff]
      %v1720 = vld [vmem:[%s4 + $0x20] sm:$0xff]
      %v1721 = vld [vmem:[%s4 + $0x28] sm:$0xff]
      %v1722 = vld [vmem:[%s4 + $0x30] sm:$0xff]
      %v1723 = vld [vmem:[%s4 + $0x38] sm:$0xff]
      %v1724 = vld [vmem:[%s4 + $0x40] sm:$0xff]
      %v1725 = vld [vmem:[%s4 + $0x48] sm:$0xff]
      %v1726 = vld [vmem:[%s4 + $0x50] sm:$0xff]
      %v1727 = vld [vmem:[%s4 + $0x58] sm:$0xff]
      %v1728 = vld [vmem:[%s4 + $0x60] sm:$0xff]
      %v1729 = vld [vmem:[%s4 + $0x68] sm:$0xff]
      %v1730 = vld [vmem:[%s4 + $0x70] sm:$0xff]
      %v1731 = vld [vmem:[%s4 + $0x78] sm:$0xff]
      %v1732 = vld [vmem:[%s4 + $0x80] sm:$0xff]
      %v1733 = vld [vmem:[%s4 + $0x88] sm:$0xff]
      %v1734 = vld [vmem:[%s4 + $0x90] sm:$0xff]
      %v1735 = vld [vmem:[%s4 + $0x98] sm:$0xff]
      %v1736 = vld [vmem:[%s4 + $0xa0] sm:$0xff]
      %v1737 = vld [vmem:[%s4 + $0xa8] sm:$0xff]
      %v1738 = vld [vmem:[%s4 + $0xb0] sm:$0xff]
      %v1739 = vld [vmem:[%s4 + $0xb8] sm:$0xff]
      %v1740 = vld [vmem:[%s4 + $0xc0] sm:$0xff]
      %v1741 = vld [vmem:[%s4 + $0xc8] sm:$0xff]
      %v1742 = vld [vmem:[%s4 + $0xd0] sm:$0xff]
      %v1743 = vld [vmem:[%s4 + $0xd8] sm:$0xff]
      %v1744 = vld [vmem:[%s4 + $0xe0] sm:$0xff]
      %v1745 = vld [vmem:[%s4 + $0xe8] sm:$0xff]
      %v1746 = vld [vmem:[%s4 + $0xf0] sm:$0xff]
      %v1747 = vld [vmem:[%s4 + $0xf8] sm:$0xff]
      %v1780 = vunpack.c.l.b16 %v1716
      %v1781 = vunpack.c.h.b16 %v1716
      %v1782 = vunpack.c.l.b16 %v1717
      %v1783 = vunpack.c.h.b16 %v1717
      %v1784 = vunpack.c.l.b16 %v1718
      %v1785 = vunpack.c.h.b16 %v1718
      %v1786 = vunpack.c.l.b16 %v1719
      %v1787 = vunpack.c.h.b16 %v1719
      %v1788 = vunpack.c.l.b16 %v1720
      %v1789 = vunpack.c.h.b16 %v1720
      %v1790 = vunpack.c.l.b16 %v1721
      %v1791 = vunpack.c.h.b16 %v1721
      %v1792 = vunpack.c.l.b16 %v1722
      %v1793 = vunpack.c.h.b16 %v1722
      %v1794 = vunpack.c.l.b16 %v1723
      %v1795 = vunpack.c.h.b16 %v1723
      %v1796 = vunpack.c.l.b16 %v1724
      %v1797 = vunpack.c.h.b16 %v1724
      %v1798 = vunpack.c.l.b16 %v1725
      %v1799 = vunpack.c.h.b16 %v1725
      %v1800 = vunpack.c.l.b16 %v1726
      %v1801 = vunpack.c.h.b16 %v1726
      %v1802 = vunpack.c.l.b16 %v1727
      %v1803 = vunpack.c.h.b16 %v1727
      %v1804 = vunpack.c.l.b16 %v1728
      %v1805 = vunpack.c.h.b16 %v1728
      %v1806 = vunpack.c.l.b16 %v1729
      %v1807 = vunpack.c.h.b16 %v1729
      %v1808 = vunpack.c.l.b16 %v1730
      %v1809 = vunpack.c.h.b16 %v1730
      %v1810 = vunpack.c.l.b16 %v1731
      %v1811 = vunpack.c.h.b16 %v1731
      %v1812 = vunpack.c.l.b16 %v1732
      %v1813 = vunpack.c.h.b16 %v1732
      %v1814 = vunpack.c.l.b16 %v1733
      %v1815 = vunpack.c.h.b16 %v1733
      %v1816 = vunpack.c.l.b16 %v1734
      %v1817 = vunpack.c.h.b16 %v1734
      %v1818 = vunpack.c.l.b16 %v1735
      %v1819 = vunpack.c.h.b16 %v1735
      %v1820 = vunpack.c.l.b16 %v1736
      %v1821 = vunpack.c.h.b16 %v1736
      %v1822 = vunpack.c.l.b16 %v1737
      %v1823 = vunpack.c.h.b16 %v1737
      %v1824 = vunpack.c.l.b16 %v1738
      %v1825 = vunpack.c.h.b16 %v1738
      %v1826 = vunpack.c.l.b16 %v1739
      %v1827 = vunpack.c.h.b16 %v1739
      %v1828 = vunpack.c.l.b16 %v1740
      %v1829 = vunpack.c.h.b16 %v1740
      %v1830 = vunpack.c.l.b16 %v1741
      %v1831 = vunpack.c.h.b16 %v1741
      %v1832 = vunpack.c.l.b16 %v1742
      %v1833 = vunpack.c.h.b16 %v1742
      %v1834 = vunpack.c.l.b16 %v1743
      %v1835 = vunpack.c.h.b16 %v1743
      %v1836 = vunpack.c.l.b16 %v1744
      %v1837 = vunpack.c.h.b16 %v1744
      %v1838 = vunpack.c.l.b16 %v1745
      %v1839 = vunpack.c.h.b16 %v1745
      %v1840 = vunpack.c.l.b16 %v1746
      %v1841 = vunpack.c.h.b16 %v1746
      %v1842 = vunpack.c.l.b16 %v1747
      %v1843 = vunpack.c.h.b16 %v1747
      %v1844 = vpack.c.b16 %v1784, %v1780
      %v1845 = vpack.c.b16 %v1785, %v1781
      %v1846 = vpack.c.b16 %v1786, %v1782
      %v1847 = vpack.c.b16 %v1787, %v1783
      %v1848 = vpack.c.b16 %v1792, %v1788
      %v1849 = vpack.c.b16 %v1793, %v1789
      %v1850 = vpack.c.b16 %v1794, %v1790
      %v1851 = vpack.c.b16 %v1795, %v1791
      %v1852 = vpack.c.b16 %v1800, %v1796
      %v1853 = vpack.c.b16 %v1801, %v1797
      %v1854 = vpack.c.b16 %v1802, %v1798
      %v1855 = vpack.c.b16 %v1803, %v1799
      %v1856 = vpack.c.b16 %v1808, %v1804
      %v1857 = vpack.c.b16 %v1809, %v1805
      %v1858 = vpack.c.b16 %v1810, %v1806
      %v1859 = vpack.c.b16 %v1811, %v1807
      %v1860 = vpack.c.b16 %v1816, %v1812
      %v1861 = vpack.c.b16 %v1817, %v1813
      %v1862 = vpack.c.b16 %v1818, %v1814
      %v1863 = vpack.c.b16 %v1819, %v1815
      %v1864 = vpack.c.b16 %v1824, %v1820
      %v1865 = vpack.c.b16 %v1825, %v1821
      %v1866 = vpack.c.b16 %v1826, %v1822
      %v1867 = vpack.c.b16 %v1827, %v1823
      %v1868 = vpack.c.b16 %v1832, %v1828
      %v1869 = vpack.c.b16 %v1833, %v1829
      %v1870 = vpack.c.b16 %v1834, %v1830
      %v1871 = vpack.c.b16 %v1835, %v1831
      %v1872 = vpack.c.b16 %v1840, %v1836
      %v1873 = vpack.c.b16 %v1841, %v1837
      %v1874 = vpack.c.b16 %v1842, %v1838
      %v1875 = vpack.c.b16 %v1843, %v1839
      %1908 = vmatpush.bf16.msra.mxu0 %v1872
      %1909 = vmatpush.bf16.msra.mxu0 %v1868
      %1910 = vmatpush.bf16.msra.mxu0 %v1864
      %1911 = vmatpush.bf16.msra.mxu0 %v1860
      %1912 = vmatpush.bf16.msra.mxu0 %v1856
      %1913 = vmatpush.bf16.msra.mxu0 %v1852
      %1914 = vmatpush.bf16.msra.mxu0 %v1848
      %1915 = vmatpush.bf16.msra.mxu0 %v1844
      %1916 = vmatmul.bf16.gmra.mxu0 %v1708
      %v1917 = vpop.f32.mrf.mxu0
      %v1918 = vadd.f32 0.0, %v1917
      %v1919 = vpop.f32.mrf.mxu0
      %1920 = vdwg.mxu0
      %1921 = vmatpush.bf16.msra.mxu0 %v1873
      %1922 = vmatpush.bf16.msra.mxu0 %v1869
      %1923 = vmatpush.bf16.msra.mxu0 %v1865
      %1924 = vmatpush.bf16.msra.mxu0 %v1861
      %1925 = vmatpush.bf16.msra.mxu0 %v1857
      %1926 = vmatpush.bf16.msra.mxu0 %v1853
      %1927 = vmatpush.bf16.msra.mxu0 %v1849
      %1928 = vmatpush.bf16.msra.mxu0 %v1845
      %1929 = vmatmul.bf16.gmra.mxu0 %v1708
      %v1930 = vpop.f32.mrf.mxu0
      %v1931 = vadd.f32 0.0, %v1930
      %v1932 = vpop.f32.mrf.mxu0
      %1933 = vdwg.mxu0
      %1934 = vmatpush.bf16.msra.mxu0 %v1874
      %1935 = vmatpush.bf16.msra.mxu0 %v1870
      %1936 = vmatpush.bf16.msra.mxu0 %v1866
      %1937 = vmatpush.bf16.msra.mxu0 %v1862
      %1938 = vmatpush.bf16.msra.mxu0 %v1858
      %1939 = vmatpush.bf16.msra.mxu0 %v1854
      %1940 = vmatpush.bf16.msra.mxu0 %v1850
      %1941 = vmatpush.bf16.msra.mxu0 %v1846
      %1942 = vmatmul.bf16.gmra.mxu0 %v1708
      %v1943 = vpop.f32.mrf.mxu0
      %v1944 = vadd.f32 0.0, %v1943
      %v1945 = vpop.f32.mrf.mxu0
      %1946 = vdwg.mxu0
      %1947 = vmatpush.bf16.msra.mxu0 %v1875
      %1948 = vmatpush.bf16.msra.mxu0 %v1871
      %1949 = vmatpush.bf16.msra.mxu0 %v1867
      %1950 = vmatpush.bf16.msra.mxu0 %v1863
      %1951 = vmatpush.bf16.msra.mxu0 %v1859
      %1952 = vmatpush.bf16.msra.mxu0 %v1855
      %1953 = vmatpush.bf16.msra.mxu0 %v1851
      %1954 = vmatpush.bf16.msra.mxu0 %v1847
      %1955 = vmatmul.bf16.gmra.mxu0 %v1708
      %v1956 = vpop.f32.mrf.mxu0
      %v1957 = vadd.f32 0.0, %v1956
      %v1958 = vpop.f32.mrf.mxu0
      %1959 = vdwg.mxu0
      %v1960 = vadd.f32 %v1712, %v1918
      %v1961 = vadd.f32 %v1713, %v1931
      %v1962 = vadd.f32 %v1714, %v1944
      %v1963 = vadd.f32 %v1715, %v1957
      %v1964 = vxor.u32 %v1960, 2147483648
      %v1965 = vxor.u32 %v1961, 2147483648
      %v1966 = vxor.u32 %v1962, 2147483648
      %v1967 = vmul.f32 %v1964, 1.442695
      %v1968 = vpow.pop %v1967
      %v1969 = vmul.f32 %v1965, 1.442695
      %v1970 = vpow.pop %v1969
      %v1971 = vmul.f32 %v1966, 1.442695
      %v1972 = vpow.pop %v1971
      %v1973 = vadd.f32 %v1968, 1.0
      %v1974 = vadd.f32 %v1970, 1.0
      %v1975 = vadd.f32 %v1972, 1.0
      %v1976 = vrcp.pop %v1973
      %v1977 = vmul.f32 %v1973, %v1976
      %v1978 = vsub.f32 1.0, %v1977
      %v1979 = vmul.f32 %v1976, %v1978
      %v1980 = vadd.f32 %v1976, %v1979
      %vm1981 = vweird.f32 %v1973
      %vm1982 = vweird.f32 %v1976
      %vm1983 = vmor %vm1981, %vm1982
      %v1984 = vsel %vm1983, %v1976, %v1980
      %v1985 = vand.u32 2147483647, %v1973
      %vm1986 = vcmp.eq.f32.partialorder %v1985, 8.507059e+37
      %v1987 = vand.u32 %v1973, 2147483648
      %v1988 = vor.u32 1.1754944e-38, %v1987
      %v1989 = vsel %vm1986, %v1988, %v1984
      %v1990 = vmul.f32 1.0, %v1989
      %v1991 = vrcp.pop %v1974
      %v1992 = vmul.f32 %v1974, %v1991
      %v1993 = vsub.f32 1.0, %v1992
      %v1994 = vmul.f32 %v1991, %v1993
      %v1995 = vadd.f32 %v1991, %v1994
      %vm1996 = vweird.f32 %v1974
      %vm1997 = vweird.f32 %v1991
      %vm1998 = vmor %vm1996, %vm1997
      %v1999 = vsel %vm1998, %v1991, %v1995
      %v2000 = vand.u32 2147483647, %v1974
      %vm2001 = vcmp.eq.f32.partialorder %v2000, 8.507059e+37
      %v2002 = vand.u32 %v1974, 2147483648
      %v2003 = vor.u32 1.1754944e-38, %v2002
      %v2004 = vsel %vm2001, %v2003, %v1999
      %v2005 = vmul.f32 1.0, %v2004
      %v2006 = vrcp.pop %v1975
      %v2007 = vmul.f32 %v1975, %v2006
      %v2008 = vsub.f32 1.0, %v2007
      %v2009 = vmul.f32 %v2006, %v2008
      %v2010 = vadd.f32 %v2006, %v2009
      %vm2011 = vweird.f32 %v1975
      %vm2012 = vweird.f32 %v2006
      %vm2013 = vmor %vm2011, %vm2012
      %v2014 = vsel %vm2013, %v2006, %v2010
      %v2015 = vand.u32 2147483647, %v1975
      %vm2016 = vcmp.eq.f32.partialorder %v2015, 8.507059e+37
      %v2017 = vand.u32 %v1975, 2147483648
      %v2018 = vor.u32 1.1754944e-38, %v2017
      %v2019 = vsel %vm2016, %v2018, %v2014
      %v2020 = vmul.f32 1.0, %v2019
      %v2021 = vtanh.pop %v1963
      %v2022 = vmul.f32 %v2005, %v1705
      %v2023 = vmul.f32 %v1990, %v2021
      %v2024 = vadd.f32 %v2022, %v2023
      %v2025 = vtanh.pop %v2024
      %v2026 = vmul.f32 %v2020, %v2025
      %v2027 = vpack.c.bf16 %v2026, %v2026
      %s2028 = scalar_lea.vmem [#allocation5], 12
      %2029 = vst [vmem:[%s2028] sm:$0xf] %v2027
      %v2030 = vld [vmem:[#allocation5] sm:$0xf]
      %v2031 = vld [vmem:[#allocation5 + $0x4] sm:$0xf]
      %v2032 = vld [vmem:[#allocation5 + $0x8] sm:$0xf]
      %v2033 = vld [vmem:[#allocation5 + $0xc] sm:$0xf]
      %v2034 = vld [vmem:[%s6] sm:$0xf]
      %v2035 = vld [vmem:[%s6 + $0x4] sm:$0xf]
      %v2036 = vld [vmem:[%s6 + $0x8] sm:$0xf]
      %v2037 = vld [vmem:[%s6 + $0xc] sm:$0xf]
      %v2038 = vld [vmem:[%s6 + $0x10] sm:$0xf]
      %v2039 = vld [vmem:[%s6 + $0x14] sm:$0xf]
      %v2040 = vld [vmem:[%s6 + $0x18] sm:$0xf]
      %v2041 = vld [vmem:[%s6 + $0x1c] sm:$0xf]
      %v2042 = vld [vmem:[%s6 + $0x20] sm:$0xf]
      %v2043 = vld [vmem:[%s6 + $0x24] sm:$0xf]
      %v2044 = vld [vmem:[%s6 + $0x28] sm:$0xf]
      %v2045 = vld [vmem:[%s6 + $0x2c] sm:$0xf]
      %v2046 = vld [vmem:[%s6 + $0x30] sm:$0xf]
      %v2047 = vld [vmem:[%s6 + $0x34] sm:$0xf]
      %v2048 = vld [vmem:[%s6 + $0x38] sm:$0xf]
      %v2049 = vld [vmem:[%s6 + $0x3c] sm:$0xf]
      %v2050 = vld [vmem:[%s7] sm:$0x1]
      %v2052 = vperm.slane %v2050, 0
      %v2058 = vunpack.c.l.b16 %v2030
      %v2059 = vunpack.c.l.b16 %v2031
      %v2060 = vunpack.c.l.b16 %v2032
      %v2061 = vunpack.c.l.b16 %v2033
      %v2062 = vpack.c.b16 %v2059, %v2058
      %v2063 = vpack.c.b16 %v2061, %v2060
      %v2082 = vunpack.c.l.b16 %v2034
      %v2083 = vunpack.c.l.b16 %v2035
      %v2084 = vunpack.c.l.b16 %v2036
      %v2085 = vunpack.c.l.b16 %v2037
      %v2086 = vunpack.c.l.b16 %v2038
      %v2087 = vunpack.c.l.b16 %v2039
      %v2088 = vunpack.c.l.b16 %v2040
      %v2089 = vunpack.c.l.b16 %v2041
      %v2090 = vunpack.c.l.b16 %v2042
      %v2091 = vunpack.c.l.b16 %v2043
      %v2092 = vunpack.c.l.b16 %v2044
      %v2093 = vunpack.c.l.b16 %v2045
      %v2094 = vunpack.c.l.b16 %v2046
      %v2095 = vunpack.c.l.b16 %v2047
      %v2096 = vunpack.c.l.b16 %v2048
      %v2097 = vunpack.c.l.b16 %v2049
      %v2098 = vpack.c.b16 %v2083, %v2082
      %v2099 = vpack.c.b16 %v2085, %v2084
      %v2100 = vpack.c.b16 %v2087, %v2086
      %v2101 = vpack.c.b16 %v2089, %v2088
      %v2102 = vpack.c.b16 %v2091, %v2090
      %v2103 = vpack.c.b16 %v2093, %v2092
      %v2104 = vpack.c.b16 %v2095, %v2094
      %v2105 = vpack.c.b16 %v2097, %v2096
      %2114 = vmatpush.bf16.msra.mxu0 %v2105
      %2115 = vmatpush.bf16.msra.mxu0 %v2104
      %2116 = vmatpush.bf16.msra.mxu0 %v2103
      %2117 = vmatpush.bf16.msra.mxu0 %v2102
      %2118 = vmatpush.bf16.msra.mxu0 %v2101
      %2119 = vmatpush.bf16.msra.mxu0 %v2100
      %2120 = vmatpush.bf16.msra.mxu0 %v2099
      %2121 = vmatpush.bf16.msra.mxu0 %v2098
      %2122 = vmatmul.bf16.gmra.mxu0 %v2062
      %v2123 = vpop.f32.mrf.mxu0
      %v2124 = vadd.f32 %v2052, %v2123
      %v2125 = vpop.f32.mrf.mxu0
      %v2126 = vadd.f32 %v2052, %v2125
      %2127 = vmatmul.bf16.gmra.mxu0 %v2063
      %v2128 = vpop.f32.mrf.mxu0
      %v2129 = vadd.f32 %v2052, %v2128
      %v2130 = vpop.f32.mrf.mxu0
      %v2131 = vadd.f32 %v2052, %v2130
      %2132 = vdwg.mxu0
      %2133 = vst [vmem:[%s338] sm:$0xff] %v2124
      %2134 = vst [vmem:[%s338 + $0x8] sm:$0xff] %v2126
      %2135 = vst [vmem:[%s338 + $0x10] sm:$0xff] %v2129
      %2136 = vst [vmem:[%s338 + $0x18] sm:$0xff] %v2131
      %v2137 = vld [vmem:[%s2] sm:$0x1]
      %s2138 = scalar_lea.vmem %s329, 16
      %v2139 = vld [vmem:[%s2138] sm:$0xf]
      %v2140 = vld [vmem:[%s2138 + $0x4] sm:$0xf]
      %v2141 = vld [vmem:[%s2138 + $0x8] sm:$0xf]
      %v2142 = vld [vmem:[%s2138 + $0xc] sm:$0xf]
      %v2143 = vld [vmem:[%s1] sm:$0xf]
      %v2144 = vld [vmem:[%s1 + $0x4] sm:$0xf]
      %v2145 = vld [vmem:[%s1 + $0x8] sm:$0xf]
      %v2146 = vld [vmem:[%s1 + $0xc] sm:$0xf]
      %v2147 = vld [vmem:[%s1 + $0x10] sm:$0xf]
      %v2148 = vld [vmem:[%s1 + $0x14] sm:$0xf]
      %v2149 = vld [vmem:[%s1 + $0x18] sm:$0xf]
      %v2150 = vld [vmem:[%s1 + $0x1c] sm:$0xf]
      %v2151 = vld [vmem:[%s1 + $0x20] sm:$0xf]
      %v2152 = vld [vmem:[%s1 + $0x24] sm:$0xf]
      %v2153 = vld [vmem:[%s1 + $0x28] sm:$0xf]
      %v2154 = vld [vmem:[%s1 + $0x2c] sm:$0xf]
      %v2155 = vld [vmem:[%s1 + $0x30] sm:$0xf]
      %v2156 = vld [vmem:[%s1 + $0x34] sm:$0xf]
      %v2157 = vld [vmem:[%s1 + $0x38] sm:$0xf]
      %v2158 = vld [vmem:[%s1 + $0x3c] sm:$0xf]
      %v2163 = vunpack.c.l.b16 %v2139
      %v2164 = vunpack.c.l.b16 %v2140
      %v2165 = vunpack.c.l.b16 %v2141
      %v2166 = vunpack.c.l.b16 %v2142
      %v2167 = vpack.c.b16 %v2164, %v2163
      %v2168 = vpack.c.b16 %v2166, %v2165
      %v2187 = vunpack.c.l.b16 %v2143
      %v2188 = vunpack.c.l.b16 %v2144
      %v2189 = vunpack.c.l.b16 %v2145
      %v2190 = vunpack.c.l.b16 %v2146
      %v2191 = vunpack.c.l.b16 %v2147
      %v2192 = vunpack.c.l.b16 %v2148
      %v2193 = vunpack.c.l.b16 %v2149
      %v2194 = vunpack.c.l.b16 %v2150
      %v2195 = vunpack.c.l.b16 %v2151
      %v2196 = vunpack.c.l.b16 %v2152
      %v2197 = vunpack.c.l.b16 %v2153
      %v2198 = vunpack.c.l.b16 %v2154
      %v2199 = vunpack.c.l.b16 %v2155
      %v2200 = vunpack.c.l.b16 %v2156
      %v2201 = vunpack.c.l.b16 %v2157
      %v2202 = vunpack.c.l.b16 %v2158
      %v2203 = vpack.c.b16 %v2188, %v2187
      %v2204 = vpack.c.b16 %v2190, %v2189
      %v2205 = vpack.c.b16 %v2192, %v2191
      %v2206 = vpack.c.b16 %v2194, %v2193
      %v2207 = vpack.c.b16 %v2196, %v2195
      %v2208 = vpack.c.b16 %v2198, %v2197
      %v2209 = vpack.c.b16 %v2200, %v2199
      %v2210 = vpack.c.b16 %v2202, %v2201
      %2219 = vmatpush.bf16.msra.mxu0 %v2210
      %2220 = vmatpush.bf16.msra.mxu0 %v2209
      %2221 = vmatpush.bf16.msra.mxu0 %v2208
      %2222 = vmatpush.bf16.msra.mxu0 %v2207
      %2223 = vmatpush.bf16.msra.mxu0 %v2206
      %2224 = vmatpush.bf16.msra.mxu0 %v2205
      %2225 = vmatpush.bf16.msra.mxu0 %v2204
      %2226 = vmatpush.bf16.msra.mxu0 %v2203
      %2227 = vmatmul.bf16.gmra.mxu0 %v2167
      %v2228 = vpop.f32.mrf.mxu0
      %v2229 = vadd.f32 0.0, %v2228
      %v2230 = vpop.f32.mrf.mxu0
      %v2231 = vadd.f32 0.0, %v2230
      %2232 = vmatmul.bf16.gmra.mxu0 %v2168
      %v2233 = vpop.f32.mrf.mxu0
      %v2234 = vadd.f32 0.0, %v2233
      %v2235 = vpop.f32.mrf.mxu0
      %v2236 = vadd.f32 0.0, %v2235
      %2237 = vdwg.mxu0
      %v2239 = vperm.slane %v2137, 0
      %v2241 = vadd.f32 %v2239, %v2229
      %v2242 = vadd.f32 %v2239, %v2231
      %v2243 = vadd.f32 %v2239, %v2234
      %v2244 = vadd.f32 %v2239, %v2236
      %v2245 = vmax.f32 %v2241, 0.0
      %v2246 = vmax.f32 %v2242, 0.0
      %v2247 = vmax.f32 %v2243, 0.0
      %v2248 = vmax.f32 %v2244, 0.0
      %v2249 = vpack.c.bf16 %v2246, %v2245
      %v2250 = vpack.c.bf16 %v2248, %v2247
      %v2251 = vld [vmem:[%s3] sm:$0xff]
      %v2252 = vld [vmem:[%s3 + $0x8] sm:$0xff]
      %v2253 = vld [vmem:[%s3 + $0x10] sm:$0xff]
      %v2254 = vld [vmem:[%s3 + $0x18] sm:$0xff]
      %v2255 = vld [vmem:[%s3 + $0x20] sm:$0xff]
      %v2256 = vld [vmem:[%s3 + $0x28] sm:$0xff]
      %v2257 = vld [vmem:[%s3 + $0x30] sm:$0xff]
      %v2258 = vld [vmem:[%s3 + $0x38] sm:$0xff]
      %v2259 = vld [vmem:[%s3 + $0x40] sm:$0xff]
      %v2260 = vld [vmem:[%s3 + $0x48] sm:$0xff]
      %v2261 = vld [vmem:[%s3 + $0x50] sm:$0xff]
      %v2262 = vld [vmem:[%s3 + $0x58] sm:$0xff]
      %v2263 = vld [vmem:[%s3 + $0x60] sm:$0xff]
      %v2264 = vld [vmem:[%s3 + $0x68] sm:$0xff]
      %v2265 = vld [vmem:[%s3 + $0x70] sm:$0xff]
      %v2266 = vld [vmem:[%s3 + $0x78] sm:$0xff]
      %v2267 = vld [vmem:[%s3 + $0x80] sm:$0xff]
      %v2268 = vld [vmem:[%s3 + $0x88] sm:$0xff]
      %v2269 = vld [vmem:[%s3 + $0x90] sm:$0xff]
      %v2270 = vld [vmem:[%s3 + $0x98] sm:$0xff]
      %v2271 = vld [vmem:[%s3 + $0xa0] sm:$0xff]
      %v2272 = vld [vmem:[%s3 + $0xa8] sm:$0xff]
      %v2273 = vld [vmem:[%s3 + $0xb0] sm:$0xff]
      %v2274 = vld [vmem:[%s3 + $0xb8] sm:$0xff]
      %v2275 = vld [vmem:[%s3 + $0xc0] sm:$0xff]
      %v2276 = vld [vmem:[%s3 + $0xc8] sm:$0xff]
      %v2277 = vld [vmem:[%s3 + $0xd0] sm:$0xff]
      %v2278 = vld [vmem:[%s3 + $0xd8] sm:$0xff]
      %v2279 = vld [vmem:[%s3 + $0xe0] sm:$0xff]
      %v2280 = vld [vmem:[%s3 + $0xe8] sm:$0xff]
      %v2281 = vld [vmem:[%s3 + $0xf0] sm:$0xff]
      %v2282 = vld [vmem:[%s3 + $0xf8] sm:$0xff]
      %v2283 = vld [vmem:[%s5] sm:$0xf]
      %v2285 = vperm.slane %v2283, 0
      %v2286 = vperm.slane %v2283, 1
      %v2287 = vperm.slane %v2283, 2
      %v2288 = vperm.slane %v2283, 3
      %v2325 = vunpack.c.l.b16 %v2251
      %v2326 = vunpack.c.h.b16 %v2251
      %v2327 = vunpack.c.l.b16 %v2252
      %v2328 = vunpack.c.h.b16 %v2252
      %v2329 = vunpack.c.l.b16 %v2253
      %v2330 = vunpack.c.h.b16 %v2253
      %v2331 = vunpack.c.l.b16 %v2254
      %v2332 = vunpack.c.h.b16 %v2254
      %v2333 = vunpack.c.l.b16 %v2255
      %v2334 = vunpack.c.h.b16 %v2255
      %v2335 = vunpack.c.l.b16 %v2256
      %v2336 = vunpack.c.h.b16 %v2256
      %v2337 = vunpack.c.l.b16 %v2257
      %v2338 = vunpack.c.h.b16 %v2257
      %v2339 = vunpack.c.l.b16 %v2258
      %v2340 = vunpack.c.h.b16 %v2258
      %v2341 = vunpack.c.l.b16 %v2259
      %v2342 = vunpack.c.h.b16 %v2259
      %v2343 = vunpack.c.l.b16 %v2260
      %v2344 = vunpack.c.h.b16 %v2260
      %v2345 = vunpack.c.l.b16 %v2261
      %v2346 = vunpack.c.h.b16 %v2261
      %v2347 = vunpack.c.l.b16 %v2262
      %v2348 = vunpack.c.h.b16 %v2262
      %v2349 = vunpack.c.l.b16 %v2263
      %v2350 = vunpack.c.h.b16 %v2263
      %v2351 = vunpack.c.l.b16 %v2264
      %v2352 = vunpack.c.h.b16 %v2264
      %v2353 = vunpack.c.l.b16 %v2265
      %v2354 = vunpack.c.h.b16 %v2265
      %v2355 = vunpack.c.l.b16 %v2266
      %v2356 = vunpack.c.h.b16 %v2266
      %v2357 = vunpack.c.l.b16 %v2267
      %v2358 = vunpack.c.h.b16 %v2267
      %v2359 = vunpack.c.l.b16 %v2268
      %v2360 = vunpack.c.h.b16 %v2268
      %v2361 = vunpack.c.l.b16 %v2269
      %v2362 = vunpack.c.h.b16 %v2269
      %v2363 = vunpack.c.l.b16 %v2270
      %v2364 = vunpack.c.h.b16 %v2270
      %v2365 = vunpack.c.l.b16 %v2271
      %v2366 = vunpack.c.h.b16 %v2271
      %v2367 = vunpack.c.l.b16 %v2272
      %v2368 = vunpack.c.h.b16 %v2272
      %v2369 = vunpack.c.l.b16 %v2273
      %v2370 = vunpack.c.h.b16 %v2273
      %v2371 = vunpack.c.l.b16 %v2274
      %v2372 = vunpack.c.h.b16 %v2274
      %v2373 = vunpack.c.l.b16 %v2275
      %v2374 = vunpack.c.h.b16 %v2275
      %v2375 = vunpack.c.l.b16 %v2276
      %v2376 = vunpack.c.h.b16 %v2276
      %v2377 = vunpack.c.l.b16 %v2277
      %v2378 = vunpack.c.h.b16 %v2277
      %v2379 = vunpack.c.l.b16 %v2278
      %v2380 = vunpack.c.h.b16 %v2278
      %v2381 = vunpack.c.l.b16 %v2279
      %v2382 = vunpack.c.h.b16 %v2279
      %v2383 = vunpack.c.l.b16 %v2280
      %v2384 = vunpack.c.h.b16 %v2280
      %v2385 = vunpack.c.l.b16 %v2281
      %v2386 = vunpack.c.h.b16 %v2281
      %v2387 = vunpack.c.l.b16 %v2282
      %v2388 = vunpack.c.h.b16 %v2282
      %v2389 = vpack.c.b16 %v2329, %v2325
      %v2390 = vpack.c.b16 %v2330, %v2326
      %v2391 = vpack.c.b16 %v2331, %v2327
      %v2392 = vpack.c.b16 %v2332, %v2328
      %v2393 = vpack.c.b16 %v2337, %v2333
      %v2394 = vpack.c.b16 %v2338, %v2334
      %v2395 = vpack.c.b16 %v2339, %v2335
      %v2396 = vpack.c.b16 %v2340, %v2336
      %v2397 = vpack.c.b16 %v2345, %v2341
      %v2398 = vpack.c.b16 %v2346, %v2342
      %v2399 = vpack.c.b16 %v2347, %v2343
      %v2400 = vpack.c.b16 %v2348, %v2344
      %v2401 = vpack.c.b16 %v2353, %v2349
      %v2402 = vpack.c.b16 %v2354, %v2350
      %v2403 = vpack.c.b16 %v2355, %v2351
      %v2404 = vpack.c.b16 %v2356, %v2352
      %v2405 = vpack.c.b16 %v2361, %v2357
      %v2406 = vpack.c.b16 %v2362, %v2358
      %v2407 = vpack.c.b16 %v2363, %v2359
      %v2408 = vpack.c.b16 %v2364, %v2360
      %v2409 = vpack.c.b16 %v2369, %v2365
      %v2410 = vpack.c.b16 %v2370, %v2366
      %v2411 = vpack.c.b16 %v2371, %v2367
      %v2412 = vpack.c.b16 %v2372, %v2368
      %v2413 = vpack.c.b16 %v2377, %v2373
      %v2414 = vpack.c.b16 %v2378, %v2374
      %v2415 = vpack.c.b16 %v2379, %v2375
      %v2416 = vpack.c.b16 %v2380, %v2376
      %v2417 = vpack.c.b16 %v2385, %v2381
      %v2418 = vpack.c.b16 %v2386, %v2382
      %v2419 = vpack.c.b16 %v2387, %v2383
      %v2420 = vpack.c.b16 %v2388, %v2384
      %2453 = vmatpush.bf16.msra.mxu0 %v2417
      %2454 = vmatpush.bf16.msra.mxu0 %v2413
      %2455 = vmatpush.bf16.msra.mxu0 %v2409
      %2456 = vmatpush.bf16.msra.mxu0 %v2405
      %2457 = vmatpush.bf16.msra.mxu0 %v2401
      %2458 = vmatpush.bf16.msra.mxu0 %v2397
      %2459 = vmatpush.bf16.msra.mxu0 %v2393
      %2460 = vmatpush.bf16.msra.mxu0 %v2389
      %2461 = vmatmul.bf16.gmra.mxu0 %v2249
      %v2462 = vpop.f32.mrf.mxu0
      %v2463 = vadd.f32 %v2285, %v2462
      %v2464 = vpop.f32.mrf.mxu0
      %v2465 = vadd.f32 %v2285, %v2464
      %2466 = vmatmul.bf16.gmra.mxu0 %v2250
      %v2467 = vpop.f32.mrf.mxu0
      %v2468 = vadd.f32 %v2285, %v2467
      %v2469 = vpop.f32.mrf.mxu0
      %v2470 = vadd.f32 %v2285, %v2469
      %2471 = vdwg.mxu0
      %2472 = vmatpush.bf16.msra.mxu0 %v2418
      %2473 = vmatpush.bf16.msra.mxu0 %v2414
      %2474 = vmatpush.bf16.msra.mxu0 %v2410
      %2475 = vmatpush.bf16.msra.mxu0 %v2406
      %2476 = vmatpush.bf16.msra.mxu0 %v2402
      %2477 = vmatpush.bf16.msra.mxu0 %v2398
      %2478 = vmatpush.bf16.msra.mxu0 %v2394
      %2479 = vmatpush.bf16.msra.mxu0 %v2390
      %2480 = vmatmul.bf16.gmra.mxu0 %v2249
      %v2481 = vpop.f32.mrf.mxu0
      %v2482 = vadd.f32 %v2286, %v2481
      %v2483 = vpop.f32.mrf.mxu0
      %v2484 = vadd.f32 %v2286, %v2483
      %2485 = vmatmul.bf16.gmra.mxu0 %v2250
      %v2486 = vpop.f32.mrf.mxu0
      %v2487 = vadd.f32 %v2286, %v2486
      %v2488 = vpop.f32.mrf.mxu0
      %v2489 = vadd.f32 %v2286, %v2488
      %2490 = vdwg.mxu0
      %2491 = vmatpush.bf16.msra.mxu0 %v2419
      %2492 = vmatpush.bf16.msra.mxu0 %v2415
      %2493 = vmatpush.bf16.msra.mxu0 %v2411
      %2494 = vmatpush.bf16.msra.mxu0 %v2407
      %2495 = vmatpush.bf16.msra.mxu0 %v2403
      %2496 = vmatpush.bf16.msra.mxu0 %v2399
      %2497 = vmatpush.bf16.msra.mxu0 %v2395
      %2498 = vmatpush.bf16.msra.mxu0 %v2391
      %2499 = vmatmul.bf16.gmra.mxu0 %v2249
      %v2500 = vpop.f32.mrf.mxu0
      %v2501 = vadd.f32 %v2287, %v2500
      %v2502 = vpop.f32.mrf.mxu0
      %v2503 = vadd.f32 %v2287, %v2502
      %2504 = vmatmul.bf16.gmra.mxu0 %v2250
      %v2505 = vpop.f32.mrf.mxu0
      %v2506 = vadd.f32 %v2287, %v2505
      %v2507 = vpop.f32.mrf.mxu0
      %v2508 = vadd.f32 %v2287, %v2507
      %2509 = vdwg.mxu0
      %2510 = vmatpush.bf16.msra.mxu0 %v2420
      %2511 = vmatpush.bf16.msra.mxu0 %v2416
      %2512 = vmatpush.bf16.msra.mxu0 %v2412
      %2513 = vmatpush.bf16.msra.mxu0 %v2408
      %2514 = vmatpush.bf16.msra.mxu0 %v2404
      %2515 = vmatpush.bf16.msra.mxu0 %v2400
      %2516 = vmatpush.bf16.msra.mxu0 %v2396
      %2517 = vmatpush.bf16.msra.mxu0 %v2392
      %2518 = vmatmul.bf16.gmra.mxu0 %v2249
      %v2519 = vpop.f32.mrf.mxu0
      %v2520 = vadd.f32 %v2288, %v2519
      %v2521 = vpop.f32.mrf.mxu0
      %v2522 = vadd.f32 %v2288, %v2521
      %2523 = vmatmul.bf16.gmra.mxu0 %v2250
      %v2524 = vpop.f32.mrf.mxu0
      %v2525 = vadd.f32 %v2288, %v2524
      %v2526 = vpop.f32.mrf.mxu0
      %v2527 = vadd.f32 %v2288, %v2526
      %2528 = vdwg.mxu0
      %2529 = vst [vmem:[#allocation4] sm:$0xff] %v2463
      %2530 = vst [vmem:[#allocation4 + $0x8] sm:$0xff] %v2482
      %2531 = vst [vmem:[#allocation4 + $0x10] sm:$0xff] %v2501
      %2532 = vst [vmem:[#allocation4 + $0x18] sm:$0xff] %v2520
      %2533 = vst [vmem:[#allocation4 + $0x20] sm:$0xff] %v2465
      %2534 = vst [vmem:[#allocation4 + $0x28] sm:$0xff] %v2484
      %2535 = vst [vmem:[#allocation4 + $0x30] sm:$0xff] %v2503
      %2536 = vst [vmem:[#allocation4 + $0x38] sm:$0xff] %v2522
      %2537 = vst [vmem:[#allocation4 + $0x40] sm:$0xff] %v2468
      %2538 = vst [vmem:[#allocation4 + $0x48] sm:$0xff] %v2487
      %2539 = vst [vmem:[#allocation4 + $0x50] sm:$0xff] %v2506
      %2540 = vst [vmem:[#allocation4 + $0x58] sm:$0xff] %v2525
      %2541 = vst [vmem:[#allocation4 + $0x60] sm:$0xff] %v2470
      %2542 = vst [vmem:[#allocation4 + $0x68] sm:$0xff] %v2489
      %2543 = vst [vmem:[#allocation4 + $0x70] sm:$0xff] %v2508
      %2544 = vst [vmem:[#allocation4 + $0x78] sm:$0xff] %v2527
      %v2545 = vld [vmem:[#allocation4] sm:$0xff]
      %v2546 = vld [vmem:[#allocation4 + $0x8] sm:$0xff]
      %v2547 = vld [vmem:[#allocation4 + $0x10] sm:$0xff]
      %v2548 = vld [vmem:[#allocation4 + $0x18] sm:$0xff]
      %v2549 = vld [vmem:[%s4] sm:$0xff]
      %v2550 = vld [vmem:[%s4 + $0x8] sm:$0xff]
      %v2551 = vld [vmem:[%s4 + $0x10] sm:$0xff]
      %v2552 = vld [vmem:[%s4 + $0x18] sm:$0xff]
      %v2553 = vld [vmem:[%s4 + $0x20] sm:$0xff]
      %v2554 = vld [vmem:[%s4 + $0x28] sm:$0xff]
      %v2555 = vld [vmem:[%s4 + $0x30] sm:$0xff]
      %v2556 = vld [vmem:[%s4 + $0x38] sm:$0xff]
      %v2557 = vld [vmem:[%s4 + $0x40] sm:$0xff]
      %v2558 = vld [vmem:[%s4 + $0x48] sm:$0xff]
      %v2559 = vld [vmem:[%s4 + $0x50] sm:$0xff]
      %v2560 = vld [vmem:[%s4 + $0x58] sm:$0xff]
      %v2561 = vld [vmem:[%s4 + $0x60] sm:$0xff]
      %v2562 = vld [vmem:[%s4 + $0x68] sm:$0xff]
      %v2563 = vld [vmem:[%s4 + $0x70] sm:$0xff]
      %v2564 = vld [vmem:[%s4 + $0x78] sm:$0xff]
      %v2565 = vld [vmem:[%s4 + $0x80] sm:$0xff]
      %v2566 = vld [vmem:[%s4 + $0x88] sm:$0xff]
      %v2567 = vld [vmem:[%s4 + $0x90] sm:$0xff]
      %v2568 = vld [vmem:[%s4 + $0x98] sm:$0xff]
      %v2569 = vld [vmem:[%s4 + $0xa0] sm:$0xff]
      %v2570 = vld [vmem:[%s4 + $0xa8] sm:$0xff]
      %v2571 = vld [vmem:[%s4 + $0xb0] sm:$0xff]
      %v2572 = vld [vmem:[%s4 + $0xb8] sm:$0xff]
      %v2573 = vld [vmem:[%s4 + $0xc0] sm:$0xff]
      %v2574 = vld [vmem:[%s4 + $0xc8] sm:$0xff]
      %v2575 = vld [vmem:[%s4 + $0xd0] sm:$0xff]
      %v2576 = vld [vmem:[%s4 + $0xd8] sm:$0xff]
      %v2577 = vld [vmem:[%s4 + $0xe0] sm:$0xff]
      %v2578 = vld [vmem:[%s4 + $0xe8] sm:$0xff]
      %v2579 = vld [vmem:[%s4 + $0xf0] sm:$0xff]
      %v2580 = vld [vmem:[%s4 + $0xf8] sm:$0xff]
      %v2613 = vunpack.c.l.b16 %v2549
      %v2614 = vunpack.c.h.b16 %v2549
      %v2615 = vunpack.c.l.b16 %v2550
      %v2616 = vunpack.c.h.b16 %v2550
      %v2617 = vunpack.c.l.b16 %v2551
      %v2618 = vunpack.c.h.b16 %v2551
      %v2619 = vunpack.c.l.b16 %v2552
      %v2620 = vunpack.c.h.b16 %v2552
      %v2621 = vunpack.c.l.b16 %v2553
      %v2622 = vunpack.c.h.b16 %v2553
      %v2623 = vunpack.c.l.b16 %v2554
      %v2624 = vunpack.c.h.b16 %v2554
      %v2625 = vunpack.c.l.b16 %v2555
      %v2626 = vunpack.c.h.b16 %v2555
      %v2627 = vunpack.c.l.b16 %v2556
      %v2628 = vunpack.c.h.b16 %v2556
      %v2629 = vunpack.c.l.b16 %v2557
      %v2630 = vunpack.c.h.b16 %v2557
      %v2631 = vunpack.c.l.b16 %v2558
      %v2632 = vunpack.c.h.b16 %v2558
      %v2633 = vunpack.c.l.b16 %v2559
      %v2634 = vunpack.c.h.b16 %v2559
      %v2635 = vunpack.c.l.b16 %v2560
      %v2636 = vunpack.c.h.b16 %v2560
      %v2637 = vunpack.c.l.b16 %v2561
      %v2638 = vunpack.c.h.b16 %v2561
      %v2639 = vunpack.c.l.b16 %v2562
      %v2640 = vunpack.c.h.b16 %v2562
      %v2641 = vunpack.c.l.b16 %v2563
      %v2642 = vunpack.c.h.b16 %v2563
      %v2643 = vunpack.c.l.b16 %v2564
      %v2644 = vunpack.c.h.b16 %v2564
      %v2645 = vunpack.c.l.b16 %v2565
      %v2646 = vunpack.c.h.b16 %v2565
      %v2647 = vunpack.c.l.b16 %v2566
      %v2648 = vunpack.c.h.b16 %v2566
      %v2649 = vunpack.c.l.b16 %v2567
      %v2650 = vunpack.c.h.b16 %v2567
      %v2651 = vunpack.c.l.b16 %v2568
      %v2652 = vunpack.c.h.b16 %v2568
      %v2653 = vunpack.c.l.b16 %v2569
      %v2654 = vunpack.c.h.b16 %v2569
      %v2655 = vunpack.c.l.b16 %v2570
      %v2656 = vunpack.c.h.b16 %v2570
      %v2657 = vunpack.c.l.b16 %v2571
      %v2658 = vunpack.c.h.b16 %v2571
      %v2659 = vunpack.c.l.b16 %v2572
      %v2660 = vunpack.c.h.b16 %v2572
      %v2661 = vunpack.c.l.b16 %v2573
      %v2662 = vunpack.c.h.b16 %v2573
      %v2663 = vunpack.c.l.b16 %v2574
      %v2664 = vunpack.c.h.b16 %v2574
      %v2665 = vunpack.c.l.b16 %v2575
      %v2666 = vunpack.c.h.b16 %v2575
      %v2667 = vunpack.c.l.b16 %v2576
      %v2668 = vunpack.c.h.b16 %v2576
      %v2669 = vunpack.c.l.b16 %v2577
      %v2670 = vunpack.c.h.b16 %v2577
      %v2671 = vunpack.c.l.b16 %v2578
      %v2672 = vunpack.c.h.b16 %v2578
      %v2673 = vunpack.c.l.b16 %v2579
      %v2674 = vunpack.c.h.b16 %v2579
      %v2675 = vunpack.c.l.b16 %v2580
      %v2676 = vunpack.c.h.b16 %v2580
      %v2677 = vpack.c.b16 %v2617, %v2613
      %v2678 = vpack.c.b16 %v2618, %v2614
      %v2679 = vpack.c.b16 %v2619, %v2615
      %v2680 = vpack.c.b16 %v2620, %v2616
      %v2681 = vpack.c.b16 %v2625, %v2621
      %v2682 = vpack.c.b16 %v2626, %v2622
      %v2683 = vpack.c.b16 %v2627, %v2623
      %v2684 = vpack.c.b16 %v2628, %v2624
      %v2685 = vpack.c.b16 %v2633, %v2629
      %v2686 = vpack.c.b16 %v2634, %v2630
      %v2687 = vpack.c.b16 %v2635, %v2631
      %v2688 = vpack.c.b16 %v2636, %v2632
      %v2689 = vpack.c.b16 %v2641, %v2637
      %v2690 = vpack.c.b16 %v2642, %v2638
      %v2691 = vpack.c.b16 %v2643, %v2639
      %v2692 = vpack.c.b16 %v2644, %v2640
      %v2693 = vpack.c.b16 %v2649, %v2645
      %v2694 = vpack.c.b16 %v2650, %v2646
      %v2695 = vpack.c.b16 %v2651, %v2647
      %v2696 = vpack.c.b16 %v2652, %v2648
      %v2697 = vpack.c.b16 %v2657, %v2653
      %v2698 = vpack.c.b16 %v2658, %v2654
      %v2699 = vpack.c.b16 %v2659, %v2655
      %v2700 = vpack.c.b16 %v2660, %v2656
      %v2701 = vpack.c.b16 %v2665, %v2661
      %v2702 = vpack.c.b16 %v2666, %v2662
      %v2703 = vpack.c.b16 %v2667, %v2663
      %v2704 = vpack.c.b16 %v2668, %v2664
      %v2705 = vpack.c.b16 %v2673, %v2669
      %v2706 = vpack.c.b16 %v2674, %v2670
      %v2707 = vpack.c.b16 %v2675, %v2671
      %v2708 = vpack.c.b16 %v2676, %v2672
      %2741 = vmatpush.bf16.msra.mxu0 %v2705
      %2742 = vmatpush.bf16.msra.mxu0 %v2701
      %2743 = vmatpush.bf16.msra.mxu0 %v2697
      %2744 = vmatpush.bf16.msra.mxu0 %v2693
      %2745 = vmatpush.bf16.msra.mxu0 %v2689
      %2746 = vmatpush.bf16.msra.mxu0 %v2685
      %2747 = vmatpush.bf16.msra.mxu0 %v2681
      %2748 = vmatpush.bf16.msra.mxu0 %v2677
      %2749 = vmatmul.bf16.gmra.mxu0 %v2027
      %v2750 = vpop.f32.mrf.mxu0
      %v2751 = vadd.f32 0.0, %v2750
      %v2752 = vpop.f32.mrf.mxu0
      %2753 = vdwg.mxu0
      %2754 = vmatpush.bf16.msra.mxu0 %v2706
      %2755 = vmatpush.bf16.msra.mxu0 %v2702
      %2756 = vmatpush.bf16.msra.mxu0 %v2698
      %2757 = vmatpush.bf16.msra.mxu0 %v2694
      %2758 = vmatpush.bf16.msra.mxu0 %v2690
      %2759 = vmatpush.bf16.msra.mxu0 %v2686
      %2760 = vmatpush.bf16.msra.mxu0 %v2682
      %2761 = vmatpush.bf16.msra.mxu0 %v2678
      %2762 = vmatmul.bf16.gmra.mxu0 %v2027
      %v2763 = vpop.f32.mrf.mxu0
      %v2764 = vadd.f32 0.0, %v2763
      %v2765 = vpop.f32.mrf.mxu0
      %2766 = vdwg.mxu0
      %2767 = vmatpush.bf16.msra.mxu0 %v2707
      %2768 = vmatpush.bf16.msra.mxu0 %v2703
      %2769 = vmatpush.bf16.msra.mxu0 %v2699
      %2770 = vmatpush.bf16.msra.mxu0 %v2695
      %2771 = vmatpush.bf16.msra.mxu0 %v2691
      %2772 = vmatpush.bf16.msra.mxu0 %v2687
      %2773 = vmatpush.bf16.msra.mxu0 %v2683
      %2774 = vmatpush.bf16.msra.mxu0 %v2679
      %2775 = vmatmul.bf16.gmra.mxu0 %v2027
      %v2776 = vpop.f32.mrf.mxu0
      %v2777 = vadd.f32 0.0, %v2776
      %v2778 = vpop.f32.mrf.mxu0
      %2779 = vdwg.mxu0
      %2780 = vmatpush.bf16.msra.mxu0 %v2708
      %2781 = vmatpush.bf16.msra.mxu0 %v2704
      %2782 = vmatpush.bf16.msra.mxu0 %v2700
      %2783 = vmatpush.bf16.msra.mxu0 %v2696
      %2784 = vmatpush.bf16.msra.mxu0 %v2692
      %2785 = vmatpush.bf16.msra.mxu0 %v2688
      %2786 = vmatpush.bf16.msra.mxu0 %v2684
      %2787 = vmatpush.bf16.msra.mxu0 %v2680
      %2788 = vmatmul.bf16.gmra.mxu0 %v2027
      %v2789 = vpop.f32.mrf.mxu0
      %v2790 = vadd.f32 0.0, %v2789
      %v2791 = vpop.f32.mrf.mxu0
      %2792 = vdwg.mxu0
      %v2793 = vadd.f32 %v2545, %v2751
      %v2794 = vadd.f32 %v2546, %v2764
      %v2795 = vadd.f32 %v2547, %v2777
      %v2796 = vadd.f32 %v2548, %v2790
      %v2797 = vxor.u32 %v2793, 2147483648
      %v2798 = vxor.u32 %v2794, 2147483648
      %v2799 = vxor.u32 %v2795, 2147483648
      %v2800 = vmul.f32 %v2797, 1.442695
      %v2801 = vpow.pop %v2800
      %v2802 = vmul.f32 %v2798, 1.442695
      %v2803 = vpow.pop %v2802
      %v2804 = vmul.f32 %v2799, 1.442695
      %v2805 = vpow.pop %v2804
      %v2806 = vadd.f32 %v2801, 1.0
      %v2807 = vadd.f32 %v2803, 1.0
      %v2808 = vadd.f32 %v2805, 1.0
      %v2809 = vrcp.pop %v2806
      %v2810 = vmul.f32 %v2806, %v2809
      %v2811 = vsub.f32 1.0, %v2810
      %v2812 = vmul.f32 %v2809, %v2811
      %v2813 = vadd.f32 %v2809, %v2812
      %vm2814 = vweird.f32 %v2806
      %vm2815 = vweird.f32 %v2809
      %vm2816 = vmor %vm2814, %vm2815
      %v2817 = vsel %vm2816, %v2809, %v2813
      %v2818 = vand.u32 2147483647, %v2806
      %vm2819 = vcmp.eq.f32.partialorder %v2818, 8.507059e+37
      %v2820 = vand.u32 %v2806, 2147483648
      %v2821 = vor.u32 1.1754944e-38, %v2820
      %v2822 = vsel %vm2819, %v2821, %v2817
      %v2823 = vmul.f32 1.0, %v2822
      %v2824 = vrcp.pop %v2807
      %v2825 = vmul.f32 %v2807, %v2824
      %v2826 = vsub.f32 1.0, %v2825
      %v2827 = vmul.f32 %v2824, %v2826
      %v2828 = vadd.f32 %v2824, %v2827
      %vm2829 = vweird.f32 %v2807
      %vm2830 = vweird.f32 %v2824
      %vm2831 = vmor %vm2829, %vm2830
      %v2832 = vsel %vm2831, %v2824, %v2828
      %v2833 = vand.u32 2147483647, %v2807
      %vm2834 = vcmp.eq.f32.partialorder %v2833, 8.507059e+37
      %v2835 = vand.u32 %v2807, 2147483648
      %v2836 = vor.u32 1.1754944e-38, %v2835
      %v2837 = vsel %vm2834, %v2836, %v2832
      %v2838 = vmul.f32 1.0, %v2837
      %v2839 = vrcp.pop %v2808
      %v2840 = vmul.f32 %v2808, %v2839
      %v2841 = vsub.f32 1.0, %v2840
      %v2842 = vmul.f32 %v2839, %v2841
      %v2843 = vadd.f32 %v2839, %v2842
      %vm2844 = vweird.f32 %v2808
      %vm2845 = vweird.f32 %v2839
      %vm2846 = vmor %vm2844, %vm2845
      %v2847 = vsel %vm2846, %v2839, %v2843
      %v2848 = vand.u32 2147483647, %v2808
      %vm2849 = vcmp.eq.f32.partialorder %v2848, 8.507059e+37
      %v2850 = vand.u32 %v2808, 2147483648
      %v2851 = vor.u32 1.1754944e-38, %v2850
      %v2852 = vsel %vm2849, %v2851, %v2847
      %v2853 = vmul.f32 1.0, %v2852
      %v2854 = vtanh.pop %v2796
      %v2855 = vmul.f32 %v2838, %v2024
      %v2856 = vmul.f32 %v2823, %v2854
      %v2857 = vadd.f32 %v2855, %v2856
      %v2858 = vtanh.pop %v2857
      %v2859 = vmul.f32 %v2853, %v2858
      %v2860 = vpack.c.bf16 %v2859, %v2859
      %2861 = vst [vmem:[#allocation5] sm:$0xf] %v2860
      %v2862 = vld [vmem:[%s1073] sm:$0xff]
      %v2863 = vld [vmem:[%s1073 + $0x8] sm:$0xff]
      %v2864 = vld [vmem:[%s1073 + $0x10] sm:$0xff]
      %v2865 = vld [vmem:[%s1073 + $0x18] sm:$0xff]
      %v2866 = vld [vmem:[%s4] sm:$0xff]
      %v2867 = vld [vmem:[%s4 + $0x8] sm:$0xff]
      %v2868 = vld [vmem:[%s4 + $0x10] sm:$0xff]
      %v2869 = vld [vmem:[%s4 + $0x18] sm:$0xff]
      %v2870 = vld [vmem:[%s4 + $0x20] sm:$0xff]
      %v2871 = vld [vmem:[%s4 + $0x28] sm:$0xff]
      %v2872 = vld [vmem:[%s4 + $0x30] sm:$0xff]
      %v2873 = vld [vmem:[%s4 + $0x38] sm:$0xff]
      %v2874 = vld [vmem:[%s4 + $0x40] sm:$0xff]
      %v2875 = vld [vmem:[%s4 + $0x48] sm:$0xff]
      %v2876 = vld [vmem:[%s4 + $0x50] sm:$0xff]
      %v2877 = vld [vmem:[%s4 + $0x58] sm:$0xff]
      %v2878 = vld [vmem:[%s4 + $0x60] sm:$0xff]
      %v2879 = vld [vmem:[%s4 + $0x68] sm:$0xff]
      %v2880 = vld [vmem:[%s4 + $0x70] sm:$0xff]
      %v2881 = vld [vmem:[%s4 + $0x78] sm:$0xff]
      %v2882 = vld [vmem:[%s4 + $0x80] sm:$0xff]
      %v2883 = vld [vmem:[%s4 + $0x88] sm:$0xff]
      %v2884 = vld [vmem:[%s4 + $0x90] sm:$0xff]
      %v2885 = vld [vmem:[%s4 + $0x98] sm:$0xff]
      %v2886 = vld [vmem:[%s4 + $0xa0] sm:$0xff]
      %v2887 = vld [vmem:[%s4 + $0xa8] sm:$0xff]
      %v2888 = vld [vmem:[%s4 + $0xb0] sm:$0xff]
      %v2889 = vld [vmem:[%s4 + $0xb8] sm:$0xff]
      %v2890 = vld [vmem:[%s4 + $0xc0] sm:$0xff]
      %v2891 = vld [vmem:[%s4 + $0xc8] sm:$0xff]
      %v2892 = vld [vmem:[%s4 + $0xd0] sm:$0xff]
      %v2893 = vld [vmem:[%s4 + $0xd8] sm:$0xff]
      %v2894 = vld [vmem:[%s4 + $0xe0] sm:$0xff]
      %v2895 = vld [vmem:[%s4 + $0xe8] sm:$0xff]
      %v2896 = vld [vmem:[%s4 + $0xf0] sm:$0xff]
      %v2897 = vld [vmem:[%s4 + $0xf8] sm:$0xff]
      %v2930 = vunpack.c.l.b16 %v2866
      %v2931 = vunpack.c.h.b16 %v2866
      %v2932 = vunpack.c.l.b16 %v2867
      %v2933 = vunpack.c.h.b16 %v2867
      %v2934 = vunpack.c.l.b16 %v2868
      %v2935 = vunpack.c.h.b16 %v2868
      %v2936 = vunpack.c.l.b16 %v2869
      %v2937 = vunpack.c.h.b16 %v2869
      %v2938 = vunpack.c.l.b16 %v2870
      %v2939 = vunpack.c.h.b16 %v2870
      %v2940 = vunpack.c.l.b16 %v2871
      %v2941 = vunpack.c.h.b16 %v2871
      %v2942 = vunpack.c.l.b16 %v2872
      %v2943 = vunpack.c.h.b16 %v2872
      %v2944 = vunpack.c.l.b16 %v2873
      %v2945 = vunpack.c.h.b16 %v2873
      %v2946 = vunpack.c.l.b16 %v2874
      %v2947 = vunpack.c.h.b16 %v2874
      %v2948 = vunpack.c.l.b16 %v2875
      %v2949 = vunpack.c.h.b16 %v2875
      %v2950 = vunpack.c.l.b16 %v2876
      %v2951 = vunpack.c.h.b16 %v2876
      %v2952 = vunpack.c.l.b16 %v2877
      %v2953 = vunpack.c.h.b16 %v2877
      %v2954 = vunpack.c.l.b16 %v2878
      %v2955 = vunpack.c.h.b16 %v2878
      %v2956 = vunpack.c.l.b16 %v2879
      %v2957 = vunpack.c.h.b16 %v2879
      %v2958 = vunpack.c.l.b16 %v2880
      %v2959 = vunpack.c.h.b16 %v2880
      %v2960 = vunpack.c.l.b16 %v2881
      %v2961 = vunpack.c.h.b16 %v2881
      %v2962 = vunpack.c.l.b16 %v2882
      %v2963 = vunpack.c.h.b16 %v2882
      %v2964 = vunpack.c.l.b16 %v2883
      %v2965 = vunpack.c.h.b16 %v2883
      %v2966 = vunpack.c.l.b16 %v2884
      %v2967 = vunpack.c.h.b16 %v2884
      %v2968 = vunpack.c.l.b16 %v2885
      %v2969 = vunpack.c.h.b16 %v2885
      %v2970 = vunpack.c.l.b16 %v2886
      %v2971 = vunpack.c.h.b16 %v2886
      %v2972 = vunpack.c.l.b16 %v2887
      %v2973 = vunpack.c.h.b16 %v2887
      %v2974 = vunpack.c.l.b16 %v2888
      %v2975 = vunpack.c.h.b16 %v2888
      %v2976 = vunpack.c.l.b16 %v2889
      %v2977 = vunpack.c.h.b16 %v2889
      %v2978 = vunpack.c.l.b16 %v2890
      %v2979 = vunpack.c.h.b16 %v2890
      %v2980 = vunpack.c.l.b16 %v2891
      %v2981 = vunpack.c.h.b16 %v2891
      %v2982 = vunpack.c.l.b16 %v2892
      %v2983 = vunpack.c.h.b16 %v2892
      %v2984 = vunpack.c.l.b16 %v2893
      %v2985 = vunpack.c.h.b16 %v2893
      %v2986 = vunpack.c.l.b16 %v2894
      %v2987 = vunpack.c.h.b16 %v2894
      %v2988 = vunpack.c.l.b16 %v2895
      %v2989 = vunpack.c.h.b16 %v2895
      %v2990 = vunpack.c.l.b16 %v2896
      %v2991 = vunpack.c.h.b16 %v2896
      %v2992 = vunpack.c.l.b16 %v2897
      %v2993 = vunpack.c.h.b16 %v2897
      %v2994 = vpack.c.b16 %v2934, %v2930
      %v2995 = vpack.c.b16 %v2935, %v2931
      %v2996 = vpack.c.b16 %v2936, %v2932
      %v2997 = vpack.c.b16 %v2937, %v2933
      %v2998 = vpack.c.b16 %v2942, %v2938
      %v2999 = vpack.c.b16 %v2943, %v2939
      %v3000 = vpack.c.b16 %v2944, %v2940
      %v3001 = vpack.c.b16 %v2945, %v2941
      %v3002 = vpack.c.b16 %v2950, %v2946
      %v3003 = vpack.c.b16 %v2951, %v2947
      %v3004 = vpack.c.b16 %v2952, %v2948
      %v3005 = vpack.c.b16 %v2953, %v2949
      %v3006 = vpack.c.b16 %v2958, %v2954
      %v3007 = vpack.c.b16 %v2959, %v2955
      %v3008 = vpack.c.b16 %v2960, %v2956
      %v3009 = vpack.c.b16 %v2961, %v2957
      %v3010 = vpack.c.b16 %v2966, %v2962
      %v3011 = vpack.c.b16 %v2967, %v2963
      %v3012 = vpack.c.b16 %v2968, %v2964
      %v3013 = vpack.c.b16 %v2969, %v2965
      %v3014 = vpack.c.b16 %v2974, %v2970
      %v3015 = vpack.c.b16 %v2975, %v2971
      %v3016 = vpack.c.b16 %v2976, %v2972
      %v3017 = vpack.c.b16 %v2977, %v2973
      %v3018 = vpack.c.b16 %v2982, %v2978
      %v3019 = vpack.c.b16 %v2983, %v2979
      %v3020 = vpack.c.b16 %v2984, %v2980
      %v3021 = vpack.c.b16 %v2985, %v2981
      %v3022 = vpack.c.b16 %v2990, %v2986
      %v3023 = vpack.c.b16 %v2991, %v2987
      %v3024 = vpack.c.b16 %v2992, %v2988
      %v3025 = vpack.c.b16 %v2993, %v2989
      %3058 = vmatpush.bf16.msra.mxu0 %v3022
      %3059 = vmatpush.bf16.msra.mxu0 %v3018
      %3060 = vmatpush.bf16.msra.mxu0 %v3014
      %3061 = vmatpush.bf16.msra.mxu0 %v3010
      %3062 = vmatpush.bf16.msra.mxu0 %v3006
      %3063 = vmatpush.bf16.msra.mxu0 %v3002
      %3064 = vmatpush.bf16.msra.mxu0 %v2998
      %3065 = vmatpush.bf16.msra.mxu0 %v2994
      %3066 = vmatmul.bf16.gmra.mxu0 %v2860
      %v3067 = vpop.f32.mrf.mxu0
      %v3068 = vadd.f32 0.0, %v3067
      %v3069 = vpop.f32.mrf.mxu0
      %3070 = vdwg.mxu0
      %3071 = vmatpush.bf16.msra.mxu0 %v3023
      %3072 = vmatpush.bf16.msra.mxu0 %v3019
      %3073 = vmatpush.bf16.msra.mxu0 %v3015
      %3074 = vmatpush.bf16.msra.mxu0 %v3011
      %3075 = vmatpush.bf16.msra.mxu0 %v3007
      %3076 = vmatpush.bf16.msra.mxu0 %v3003
      %3077 = vmatpush.bf16.msra.mxu0 %v2999
      %3078 = vmatpush.bf16.msra.mxu0 %v2995
      %3079 = vmatmul.bf16.gmra.mxu0 %v2860
      %v3080 = vpop.f32.mrf.mxu0
      %v3081 = vadd.f32 0.0, %v3080
      %v3082 = vpop.f32.mrf.mxu0
      %3083 = vdwg.mxu0
      %3084 = vmatpush.bf16.msra.mxu0 %v3024
      %3085 = vmatpush.bf16.msra.mxu0 %v3020
      %3086 = vmatpush.bf16.msra.mxu0 %v3016
      %3087 = vmatpush.bf16.msra.mxu0 %v3012
      %3088 = vmatpush.bf16.msra.mxu0 %v3008
      %3089 = vmatpush.bf16.msra.mxu0 %v3004
      %3090 = vmatpush.bf16.msra.mxu0 %v3000
      %3091 = vmatpush.bf16.msra.mxu0 %v2996
      %3092 = vmatmul.bf16.gmra.mxu0 %v2860
      %v3093 = vpop.f32.mrf.mxu0
      %v3094 = vadd.f32 0.0, %v3093
      %v3095 = vpop.f32.mrf.mxu0
      %3096 = vdwg.mxu0
      %3097 = vmatpush.bf16.msra.mxu0 %v3025
      %3098 = vmatpush.bf16.msra.mxu0 %v3021
      %3099 = vmatpush.bf16.msra.mxu0 %v3017
      %3100 = vmatpush.bf16.msra.mxu0 %v3013
      %3101 = vmatpush.bf16.msra.mxu0 %v3009
      %3102 = vmatpush.bf16.msra.mxu0 %v3005
      %3103 = vmatpush.bf16.msra.mxu0 %v3001
      %3104 = vmatpush.bf16.msra.mxu0 %v2997
      %3105 = vmatmul.bf16.gmra.mxu0 %v2860
      %v3106 = vpop.f32.mrf.mxu0
      %v3107 = vadd.f32 0.0, %v3106
      %v3108 = vpop.f32.mrf.mxu0
      %3109 = vdwg.mxu0
      %v3110 = vadd.f32 %v2862, %v3068
      %v3111 = vadd.f32 %v2863, %v3081
      %v3112 = vadd.f32 %v2864, %v3094
      %v3113 = vadd.f32 %v2865, %v3107
      %v3114 = vxor.u32 %v3110, 2147483648
      %v3115 = vxor.u32 %v3111, 2147483648
      %v3116 = vxor.u32 %v3112, 2147483648
      %v3117 = vmul.f32 %v3114, 1.442695
      %v3118 = vpow.pop %v3117
      %v3119 = vmul.f32 %v3115, 1.442695
      %v3120 = vpow.pop %v3119
      %v3121 = vmul.f32 %v3116, 1.442695
      %v3122 = vpow.pop %v3121
      %v3123 = vadd.f32 %v3118, 1.0
      %v3124 = vadd.f32 %v3120, 1.0
      %v3125 = vadd.f32 %v3122, 1.0
      %v3126 = vrcp.pop %v3123
      %v3127 = vmul.f32 %v3123, %v3126
      %v3128 = vsub.f32 1.0, %v3127
      %v3129 = vmul.f32 %v3126, %v3128
      %v3130 = vadd.f32 %v3126, %v3129
      %vm3131 = vweird.f32 %v3123
      %vm3132 = vweird.f32 %v3126
      %vm3133 = vmor %vm3131, %vm3132
      %v3134 = vsel %vm3133, %v3126, %v3130
      %v3135 = vand.u32 2147483647, %v3123
      %vm3136 = vcmp.eq.f32.partialorder %v3135, 8.507059e+37
      %v3137 = vand.u32 %v3123, 2147483648
      %v3138 = vor.u32 1.1754944e-38, %v3137
      %v3139 = vsel %vm3136, %v3138, %v3134
      %v3140 = vmul.f32 1.0, %v3139
      %v3141 = vrcp.pop %v3124
      %v3142 = vmul.f32 %v3124, %v3141
      %v3143 = vsub.f32 1.0, %v3142
      %v3144 = vmul.f32 %v3141, %v3143
      %v3145 = vadd.f32 %v3141, %v3144
      %vm3146 = vweird.f32 %v3124
      %vm3147 = vweird.f32 %v3141
      %vm3148 = vmor %vm3146, %vm3147
      %v3149 = vsel %vm3148, %v3141, %v3145
      %v3150 = vand.u32 2147483647, %v3124
      %vm3151 = vcmp.eq.f32.partialorder %v3150, 8.507059e+37
      %v3152 = vand.u32 %v3124, 2147483648
      %v3153 = vor.u32 1.1754944e-38, %v3152
      %v3154 = vsel %vm3151, %v3153, %v3149
      %v3155 = vmul.f32 1.0, %v3154
      %v3156 = vrcp.pop %v3125
      %v3157 = vmul.f32 %v3125, %v3156
      %v3158 = vsub.f32 1.0, %v3157
      %v3159 = vmul.f32 %v3156, %v3158
      %v3160 = vadd.f32 %v3156, %v3159
      %vm3161 = vweird.f32 %v3125
      %vm3162 = vweird.f32 %v3156
      %vm3163 = vmor %vm3161, %vm3162
      %v3164 = vsel %vm3163, %v3156, %v3160
      %v3165 = vand.u32 2147483647, %v3125
      %vm3166 = vcmp.eq.f32.partialorder %v3165, 8.507059e+37
      %v3167 = vand.u32 %v3125, 2147483648
      %v3168 = vor.u32 1.1754944e-38, %v3167
      %v3169 = vsel %vm3166, %v3168, %v3164
      %v3170 = vmul.f32 1.0, %v3169
      %v3171 = vtanh.pop %v3113
      %v3172 = vmul.f32 %v3155, %v2857
      %v3173 = vmul.f32 %v3140, %v3171
      %v3174 = vadd.f32 %v3172, %v3173
      %v3175 = vtanh.pop %v3174
      %v3176 = vmul.f32 %v3170, %v3175
      %v3177 = vpack.c.bf16 %v3176, %v3176
      %3178 = vst [vmem:[%s1390] sm:$0xf] %v3177
      %v3179 = vld [vmem:[%s1392] sm:$0xff]
      %v3180 = vld [vmem:[%s1392 + $0x8] sm:$0xff]
      %v3181 = vld [vmem:[%s1392 + $0x10] sm:$0xff]
      %v3182 = vld [vmem:[%s1392 + $0x18] sm:$0xff]
      %v3183 = vld [vmem:[%s4] sm:$0xff]
      %v3184 = vld [vmem:[%s4 + $0x8] sm:$0xff]
      %v3185 = vld [vmem:[%s4 + $0x10] sm:$0xff]
      %v3186 = vld [vmem:[%s4 + $0x18] sm:$0xff]
      %v3187 = vld [vmem:[%s4 + $0x20] sm:$0xff]
      %v3188 = vld [vmem:[%s4 + $0x28] sm:$0xff]
      %v3189 = vld [vmem:[%s4 + $0x30] sm:$0xff]
      %v3190 = vld [vmem:[%s4 + $0x38] sm:$0xff]
      %v3191 = vld [vmem:[%s4 + $0x40] sm:$0xff]
      %v3192 = vld [vmem:[%s4 + $0x48] sm:$0xff]
      %v3193 = vld [vmem:[%s4 + $0x50] sm:$0xff]
      %v3194 = vld [vmem:[%s4 + $0x58] sm:$0xff]
      %v3195 = vld [vmem:[%s4 + $0x60] sm:$0xff]
      %v3196 = vld [vmem:[%s4 + $0x68] sm:$0xff]
      %v3197 = vld [vmem:[%s4 + $0x70] sm:$0xff]
      %v3198 = vld [vmem:[%s4 + $0x78] sm:$0xff]
      %v3199 = vld [vmem:[%s4 + $0x80] sm:$0xff]
      %v3200 = vld [vmem:[%s4 + $0x88] sm:$0xff]
      %v3201 = vld [vmem:[%s4 + $0x90] sm:$0xff]
      %v3202 = vld [vmem:[%s4 + $0x98] sm:$0xff]
      %v3203 = vld [vmem:[%s4 + $0xa0] sm:$0xff]
      %v3204 = vld [vmem:[%s4 + $0xa8] sm:$0xff]
      %v3205 = vld [vmem:[%s4 + $0xb0] sm:$0xff]
      %v3206 = vld [vmem:[%s4 + $0xb8] sm:$0xff]
      %v3207 = vld [vmem:[%s4 + $0xc0] sm:$0xff]
      %v3208 = vld [vmem:[%s4 + $0xc8] sm:$0xff]
      %v3209 = vld [vmem:[%s4 + $0xd0] sm:$0xff]
      %v3210 = vld [vmem:[%s4 + $0xd8] sm:$0xff]
      %v3211 = vld [vmem:[%s4 + $0xe0] sm:$0xff]
      %v3212 = vld [vmem:[%s4 + $0xe8] sm:$0xff]
      %v3213 = vld [vmem:[%s4 + $0xf0] sm:$0xff]
      %v3214 = vld [vmem:[%s4 + $0xf8] sm:$0xff]
      %v3247 = vunpack.c.l.b16 %v3183
      %v3248 = vunpack.c.h.b16 %v3183
      %v3249 = vunpack.c.l.b16 %v3184
      %v3250 = vunpack.c.h.b16 %v3184
      %v3251 = vunpack.c.l.b16 %v3185
      %v3252 = vunpack.c.h.b16 %v3185
      %v3253 = vunpack.c.l.b16 %v3186
      %v3254 = vunpack.c.h.b16 %v3186
      %v3255 = vunpack.c.l.b16 %v3187
      %v3256 = vunpack.c.h.b16 %v3187
      %v3257 = vunpack.c.l.b16 %v3188
      %v3258 = vunpack.c.h.b16 %v3188
      %v3259 = vunpack.c.l.b16 %v3189
      %v3260 = vunpack.c.h.b16 %v3189
      %v3261 = vunpack.c.l.b16 %v3190
      %v3262 = vunpack.c.h.b16 %v3190
      %v3263 = vunpack.c.l.b16 %v3191
      %v3264 = vunpack.c.h.b16 %v3191
      %v3265 = vunpack.c.l.b16 %v3192
      %v3266 = vunpack.c.h.b16 %v3192
      %v3267 = vunpack.c.l.b16 %v3193
      %v3268 = vunpack.c.h.b16 %v3193
      %v3269 = vunpack.c.l.b16 %v3194
      %v3270 = vunpack.c.h.b16 %v3194
      %v3271 = vunpack.c.l.b16 %v3195
      %v3272 = vunpack.c.h.b16 %v3195
      %v3273 = vunpack.c.l.b16 %v3196
      %v3274 = vunpack.c.h.b16 %v3196
      %v3275 = vunpack.c.l.b16 %v3197
      %v3276 = vunpack.c.h.b16 %v3197
      %v3277 = vunpack.c.l.b16 %v3198
      %v3278 = vunpack.c.h.b16 %v3198
      %v3279 = vunpack.c.l.b16 %v3199
      %v3280 = vunpack.c.h.b16 %v3199
      %v3281 = vunpack.c.l.b16 %v3200
      %v3282 = vunpack.c.h.b16 %v3200
      %v3283 = vunpack.c.l.b16 %v3201
      %v3284 = vunpack.c.h.b16 %v3201
      %v3285 = vunpack.c.l.b16 %v3202
      %v3286 = vunpack.c.h.b16 %v3202
      %v3287 = vunpack.c.l.b16 %v3203
      %v3288 = vunpack.c.h.b16 %v3203
      %v3289 = vunpack.c.l.b16 %v3204
      %v3290 = vunpack.c.h.b16 %v3204
      %v3291 = vunpack.c.l.b16 %v3205
      %v3292 = vunpack.c.h.b16 %v3205
      %v3293 = vunpack.c.l.b16 %v3206
      %v3294 = vunpack.c.h.b16 %v3206
      %v3295 = vunpack.c.l.b16 %v3207
      %v3296 = vunpack.c.h.b16 %v3207
      %v3297 = vunpack.c.l.b16 %v3208
      %v3298 = vunpack.c.h.b16 %v3208
      %v3299 = vunpack.c.l.b16 %v3209
      %v3300 = vunpack.c.h.b16 %v3209
      %v3301 = vunpack.c.l.b16 %v3210
      %v3302 = vunpack.c.h.b16 %v3210
      %v3303 = vunpack.c.l.b16 %v3211
      %v3304 = vunpack.c.h.b16 %v3211
      %v3305 = vunpack.c.l.b16 %v3212
      %v3306 = vunpack.c.h.b16 %v3212
      %v3307 = vunpack.c.l.b16 %v3213
      %v3308 = vunpack.c.h.b16 %v3213
      %v3309 = vunpack.c.l.b16 %v3214
      %v3310 = vunpack.c.h.b16 %v3214
      %v3311 = vpack.c.b16 %v3251, %v3247
      %v3312 = vpack.c.b16 %v3252, %v3248
      %v3313 = vpack.c.b16 %v3253, %v3249
      %v3314 = vpack.c.b16 %v3254, %v3250
      %v3315 = vpack.c.b16 %v3259, %v3255
      %v3316 = vpack.c.b16 %v3260, %v3256
      %v3317 = vpack.c.b16 %v3261, %v3257
      %v3318 = vpack.c.b16 %v3262, %v3258
      %v3319 = vpack.c.b16 %v3267, %v3263
      %v3320 = vpack.c.b16 %v3268, %v3264
      %v3321 = vpack.c.b16 %v3269, %v3265
      %v3322 = vpack.c.b16 %v3270, %v3266
      %v3323 = vpack.c.b16 %v3275, %v3271
      %v3324 = vpack.c.b16 %v3276, %v3272
      %v3325 = vpack.c.b16 %v3277, %v3273
      %v3326 = vpack.c.b16 %v3278, %v3274
      %v3327 = vpack.c.b16 %v3283, %v3279
      %v3328 = vpack.c.b16 %v3284, %v3280
      %v3329 = vpack.c.b16 %v3285, %v3281
      %v3330 = vpack.c.b16 %v3286, %v3282
      %v3331 = vpack.c.b16 %v3291, %v3287
      %v3332 = vpack.c.b16 %v3292, %v3288
      %v3333 = vpack.c.b16 %v3293, %v3289
      %v3334 = vpack.c.b16 %v3294, %v3290
      %v3335 = vpack.c.b16 %v3299, %v3295
      %v3336 = vpack.c.b16 %v3300, %v3296
      %v3337 = vpack.c.b16 %v3301, %v3297
      %v3338 = vpack.c.b16 %v3302, %v3298
      %v3339 = vpack.c.b16 %v3307, %v3303
      %v3340 = vpack.c.b16 %v3308, %v3304
      %v3341 = vpack.c.b16 %v3309, %v3305
      %v3342 = vpack.c.b16 %v3310, %v3306
      %3375 = vmatpush.bf16.msra.mxu0 %v3339
      %3376 = vmatpush.bf16.msra.mxu0 %v3335
      %3377 = vmatpush.bf16.msra.mxu0 %v3331
      %3378 = vmatpush.bf16.msra.mxu0 %v3327
      %3379 = vmatpush.bf16.msra.mxu0 %v3323
      %3380 = vmatpush.bf16.msra.mxu0 %v3319
      %3381 = vmatpush.bf16.msra.mxu0 %v3315
      %3382 = vmatpush.bf16.msra.mxu0 %v3311
      %3383 = vmatmul.bf16.gmra.mxu0 %v3177
      %v3384 = vpop.f32.mrf.mxu0
      %v3385 = vadd.f32 0.0, %v3384
      %v3386 = vpop.f32.mrf.mxu0
      %3387 = vdwg.mxu0
      %3388 = vmatpush.bf16.msra.mxu0 %v3340
      %3389 = vmatpush.bf16.msra.mxu0 %v3336
      %3390 = vmatpush.bf16.msra.mxu0 %v3332
      %3391 = vmatpush.bf16.msra.mxu0 %v3328
      %3392 = vmatpush.bf16.msra.mxu0 %v3324
      %3393 = vmatpush.bf16.msra.mxu0 %v3320
      %3394 = vmatpush.bf16.msra.mxu0 %v3316
      %3395 = vmatpush.bf16.msra.mxu0 %v3312
      %3396 = vmatmul.bf16.gmra.mxu0 %v3177
      %v3397 = vpop.f32.mrf.mxu0
      %v3398 = vadd.f32 0.0, %v3397
      %v3399 = vpop.f32.mrf.mxu0
      %3400 = vdwg.mxu0
      %3401 = vmatpush.bf16.msra.mxu0 %v3341
      %3402 = vmatpush.bf16.msra.mxu0 %v3337
      %3403 = vmatpush.bf16.msra.mxu0 %v3333
      %3404 = vmatpush.bf16.msra.mxu0 %v3329
      %3405 = vmatpush.bf16.msra.mxu0 %v3325
      %3406 = vmatpush.bf16.msra.mxu0 %v3321
      %3407 = vmatpush.bf16.msra.mxu0 %v3317
      %3408 = vmatpush.bf16.msra.mxu0 %v3313
      %3409 = vmatmul.bf16.gmra.mxu0 %v3177
      %v3410 = vpop.f32.mrf.mxu0
      %v3411 = vadd.f32 0.0, %v3410
      %v3412 = vpop.f32.mrf.mxu0
      %3413 = vdwg.mxu0
      %3414 = vmatpush.bf16.msra.mxu0 %v3342
      %3415 = vmatpush.bf16.msra.mxu0 %v3338
      %3416 = vmatpush.bf16.msra.mxu0 %v3334
      %3417 = vmatpush.bf16.msra.mxu0 %v3330
      %3418 = vmatpush.bf16.msra.mxu0 %v3326
      %3419 = vmatpush.bf16.msra.mxu0 %v3322
      %3420 = vmatpush.bf16.msra.mxu0 %v3318
      %3421 = vmatpush.bf16.msra.mxu0 %v3314
      %3422 = vmatmul.bf16.gmra.mxu0 %v3177
      %v3423 = vpop.f32.mrf.mxu0
      %v3424 = vadd.f32 0.0, %v3423
      %v3425 = vpop.f32.mrf.mxu0
      %3426 = vdwg.mxu0
      %v3427 = vadd.f32 %v3179, %v3385
      %v3428 = vadd.f32 %v3180, %v3398
      %v3429 = vadd.f32 %v3181, %v3411
      %v3430 = vadd.f32 %v3182, %v3424
      %v3431 = vxor.u32 %v3427, 2147483648
      %v3432 = vxor.u32 %v3428, 2147483648
      %v3433 = vxor.u32 %v3429, 2147483648
      %v3434 = vmul.f32 %v3431, 1.442695
      %v3435 = vpow.pop %v3434
      %v3436 = vmul.f32 %v3432, 1.442695
      %v3437 = vpow.pop %v3436
      %v3438 = vmul.f32 %v3433, 1.442695
      %v3439 = vpow.pop %v3438
      %v3440 = vadd.f32 %v3435, 1.0
      %v3441 = vadd.f32 %v3437, 1.0
      %v3442 = vadd.f32 %v3439, 1.0
      %v3443 = vrcp.pop %v3440
      %v3444 = vmul.f32 %v3440, %v3443
      %v3445 = vsub.f32 1.0, %v3444
      %v3446 = vmul.f32 %v3443, %v3445
      %v3447 = vadd.f32 %v3443, %v3446
      %vm3448 = vweird.f32 %v3440
      %vm3449 = vweird.f32 %v3443
      %vm3450 = vmor %vm3448, %vm3449
      %v3451 = vsel %vm3450, %v3443, %v3447
      %v3452 = vand.u32 2147483647, %v3440
      %vm3453 = vcmp.eq.f32.partialorder %v3452, 8.507059e+37
      %v3454 = vand.u32 %v3440, 2147483648
      %v3455 = vor.u32 1.1754944e-38, %v3454
      %v3456 = vsel %vm3453, %v3455, %v3451
      %v3457 = vmul.f32 1.0, %v3456
      %v3458 = vrcp.pop %v3441
      %v3459 = vmul.f32 %v3441, %v3458
      %v3460 = vsub.f32 1.0, %v3459
      %v3461 = vmul.f32 %v3458, %v3460
      %v3462 = vadd.f32 %v3458, %v3461
      %vm3463 = vweird.f32 %v3441
      %vm3464 = vweird.f32 %v3458
      %vm3465 = vmor %vm3463, %vm3464
      %v3466 = vsel %vm3465, %v3458, %v3462
      %v3467 = vand.u32 2147483647, %v3441
      %vm3468 = vcmp.eq.f32.partialorder %v3467, 8.507059e+37
      %v3469 = vand.u32 %v3441, 2147483648
      %v3470 = vor.u32 1.1754944e-38, %v3469
      %v3471 = vsel %vm3468, %v3470, %v3466
      %v3472 = vmul.f32 1.0, %v3471
      %v3473 = vrcp.pop %v3442
      %v3474 = vmul.f32 %v3442, %v3473
      %v3475 = vsub.f32 1.0, %v3474
      %v3476 = vmul.f32 %v3473, %v3475
      %v3477 = vadd.f32 %v3473, %v3476
      %vm3478 = vweird.f32 %v3442
      %vm3479 = vweird.f32 %v3473
      %vm3480 = vmor %vm3478, %vm3479
      %v3481 = vsel %vm3480, %v3473, %v3477
      %v3482 = vand.u32 2147483647, %v3442
      %vm3483 = vcmp.eq.f32.partialorder %v3482, 8.507059e+37
      %v3484 = vand.u32 %v3442, 2147483648
      %v3485 = vor.u32 1.1754944e-38, %v3484
      %v3486 = vsel %vm3483, %v3485, %v3481
      %v3487 = vmul.f32 1.0, %v3486
      %v3488 = vtanh.pop %v3430
      %v3489 = vmul.f32 %v3472, %v3174
      %v3490 = vmul.f32 %v3457, %v3488
      %v3491 = vadd.f32 %v3489, %v3490
      %v3492 = vtanh.pop %v3491
      %v3493 = vmul.f32 %v3487, %v3492
      %v3494 = vpack.c.bf16 %v3493, %v3493
      %3495 = vst [vmem:[%s1709] sm:$0xf] %v3494
      %v3496 = vld [vmem:[%s1711] sm:$0xff]
      %v3497 = vld [vmem:[%s1711 + $0x8] sm:$0xff]
      %v3498 = vld [vmem:[%s1711 + $0x10] sm:$0xff]
      %v3499 = vld [vmem:[%s1711 + $0x18] sm:$0xff]
      %v3500 = vld [vmem:[%s4] sm:$0xff]
      %v3501 = vld [vmem:[%s4 + $0x8] sm:$0xff]
      %v3502 = vld [vmem:[%s4 + $0x10] sm:$0xff]
      %v3503 = vld [vmem:[%s4 + $0x18] sm:$0xff]
      %v3504 = vld [vmem:[%s4 + $0x20] sm:$0xff]
      %v3505 = vld [vmem:[%s4 + $0x28] sm:$0xff]
      %v3506 = vld [vmem:[%s4 + $0x30] sm:$0xff]
      %v3507 = vld [vmem:[%s4 + $0x38] sm:$0xff]
      %v3508 = vld [vmem:[%s4 + $0x40] sm:$0xff]
      %v3509 = vld [vmem:[%s4 + $0x48] sm:$0xff]
      %v3510 = vld [vmem:[%s4 + $0x50] sm:$0xff]
      %v3511 = vld [vmem:[%s4 + $0x58] sm:$0xff]
      %v3512 = vld [vmem:[%s4 + $0x60] sm:$0xff]
      %v3513 = vld [vmem:[%s4 + $0x68] sm:$0xff]
      %v3514 = vld [vmem:[%s4 + $0x70] sm:$0xff]
      %v3515 = vld [vmem:[%s4 + $0x78] sm:$0xff]
      %v3516 = vld [vmem:[%s4 + $0x80] sm:$0xff]
      %v3517 = vld [vmem:[%s4 + $0x88] sm:$0xff]
      %v3518 = vld [vmem:[%s4 + $0x90] sm:$0xff]
      %v3519 = vld [vmem:[%s4 + $0x98] sm:$0xff]
      %v3520 = vld [vmem:[%s4 + $0xa0] sm:$0xff]
      %v3521 = vld [vmem:[%s4 + $0xa8] sm:$0xff]
      %v3522 = vld [vmem:[%s4 + $0xb0] sm:$0xff]
      %v3523 = vld [vmem:[%s4 + $0xb8] sm:$0xff]
      %v3524 = vld [vmem:[%s4 + $0xc0] sm:$0xff]
      %v3525 = vld [vmem:[%s4 + $0xc8] sm:$0xff]
      %v3526 = vld [vmem:[%s4 + $0xd0] sm:$0xff]
      %v3527 = vld [vmem:[%s4 + $0xd8] sm:$0xff]
      %v3528 = vld [vmem:[%s4 + $0xe0] sm:$0xff]
      %v3529 = vld [vmem:[%s4 + $0xe8] sm:$0xff]
      %v3530 = vld [vmem:[%s4 + $0xf0] sm:$0xff]
      %v3531 = vld [vmem:[%s4 + $0xf8] sm:$0xff]
      %v3564 = vunpack.c.l.b16 %v3500
      %v3565 = vunpack.c.h.b16 %v3500
      %v3566 = vunpack.c.l.b16 %v3501
      %v3567 = vunpack.c.h.b16 %v3501
      %v3568 = vunpack.c.l.b16 %v3502
      %v3569 = vunpack.c.h.b16 %v3502
      %v3570 = vunpack.c.l.b16 %v3503
      %v3571 = vunpack.c.h.b16 %v3503
      %v3572 = vunpack.c.l.b16 %v3504
      %v3573 = vunpack.c.h.b16 %v3504
      %v3574 = vunpack.c.l.b16 %v3505
      %v3575 = vunpack.c.h.b16 %v3505
      %v3576 = vunpack.c.l.b16 %v3506
      %v3577 = vunpack.c.h.b16 %v3506
      %v3578 = vunpack.c.l.b16 %v3507
      %v3579 = vunpack.c.h.b16 %v3507
      %v3580 = vunpack.c.l.b16 %v3508
      %v3581 = vunpack.c.h.b16 %v3508
      %v3582 = vunpack.c.l.b16 %v3509
      %v3583 = vunpack.c.h.b16 %v3509
      %v3584 = vunpack.c.l.b16 %v3510
      %v3585 = vunpack.c.h.b16 %v3510
      %v3586 = vunpack.c.l.b16 %v3511
      %v3587 = vunpack.c.h.b16 %v3511
      %v3588 = vunpack.c.l.b16 %v3512
      %v3589 = vunpack.c.h.b16 %v3512
      %v3590 = vunpack.c.l.b16 %v3513
      %v3591 = vunpack.c.h.b16 %v3513
      %v3592 = vunpack.c.l.b16 %v3514
      %v3593 = vunpack.c.h.b16 %v3514
      %v3594 = vunpack.c.l.b16 %v3515
      %v3595 = vunpack.c.h.b16 %v3515
      %v3596 = vunpack.c.l.b16 %v3516
      %v3597 = vunpack.c.h.b16 %v3516
      %v3598 = vunpack.c.l.b16 %v3517
      %v3599 = vunpack.c.h.b16 %v3517
      %v3600 = vunpack.c.l.b16 %v3518
      %v3601 = vunpack.c.h.b16 %v3518
      %v3602 = vunpack.c.l.b16 %v3519
      %v3603 = vunpack.c.h.b16 %v3519
      %v3604 = vunpack.c.l.b16 %v3520
      %v3605 = vunpack.c.h.b16 %v3520
      %v3606 = vunpack.c.l.b16 %v3521
      %v3607 = vunpack.c.h.b16 %v3521
      %v3608 = vunpack.c.l.b16 %v3522
      %v3609 = vunpack.c.h.b16 %v3522
      %v3610 = vunpack.c.l.b16 %v3523
      %v3611 = vunpack.c.h.b16 %v3523
      %v3612 = vunpack.c.l.b16 %v3524
      %v3613 = vunpack.c.h.b16 %v3524
      %v3614 = vunpack.c.l.b16 %v3525
      %v3615 = vunpack.c.h.b16 %v3525
      %v3616 = vunpack.c.l.b16 %v3526
      %v3617 = vunpack.c.h.b16 %v3526
      %v3618 = vunpack.c.l.b16 %v3527
      %v3619 = vunpack.c.h.b16 %v3527
      %v3620 = vunpack.c.l.b16 %v3528
      %v3621 = vunpack.c.h.b16 %v3528
      %v3622 = vunpack.c.l.b16 %v3529
      %v3623 = vunpack.c.h.b16 %v3529
      %v3624 = vunpack.c.l.b16 %v3530
      %v3625 = vunpack.c.h.b16 %v3530
      %v3626 = vunpack.c.l.b16 %v3531
      %v3627 = vunpack.c.h.b16 %v3531
      %v3628 = vpack.c.b16 %v3568, %v3564
      %v3629 = vpack.c.b16 %v3569, %v3565
      %v3630 = vpack.c.b16 %v3570, %v3566
      %v3631 = vpack.c.b16 %v3571, %v3567
      %v3632 = vpack.c.b16 %v3576, %v3572
      %v3633 = vpack.c.b16 %v3577, %v3573
      %v3634 = vpack.c.b16 %v3578, %v3574
      %v3635 = vpack.c.b16 %v3579, %v3575
      %v3636 = vpack.c.b16 %v3584, %v3580
      %v3637 = vpack.c.b16 %v3585, %v3581
      %v3638 = vpack.c.b16 %v3586, %v3582
      %v3639 = vpack.c.b16 %v3587, %v3583
      %v3640 = vpack.c.b16 %v3592, %v3588
      %v3641 = vpack.c.b16 %v3593, %v3589
      %v3642 = vpack.c.b16 %v3594, %v3590
      %v3643 = vpack.c.b16 %v3595, %v3591
      %v3644 = vpack.c.b16 %v3600, %v3596
      %v3645 = vpack.c.b16 %v3601, %v3597
      %v3646 = vpack.c.b16 %v3602, %v3598
      %v3647 = vpack.c.b16 %v3603, %v3599
      %v3648 = vpack.c.b16 %v3608, %v3604
      %v3649 = vpack.c.b16 %v3609, %v3605
      %v3650 = vpack.c.b16 %v3610, %v3606
      %v3651 = vpack.c.b16 %v3611, %v3607
      %v3652 = vpack.c.b16 %v3616, %v3612
      %v3653 = vpack.c.b16 %v3617, %v3613
      %v3654 = vpack.c.b16 %v3618, %v3614
      %v3655 = vpack.c.b16 %v3619, %v3615
      %v3656 = vpack.c.b16 %v3624, %v3620
      %v3657 = vpack.c.b16 %v3625, %v3621
      %v3658 = vpack.c.b16 %v3626, %v3622
      %v3659 = vpack.c.b16 %v3627, %v3623
      %3692 = vmatpush.bf16.msra.mxu0 %v3656
      %3693 = vmatpush.bf16.msra.mxu0 %v3652
      %3694 = vmatpush.bf16.msra.mxu0 %v3648
      %3695 = vmatpush.bf16.msra.mxu0 %v3644
      %3696 = vmatpush.bf16.msra.mxu0 %v3640
      %3697 = vmatpush.bf16.msra.mxu0 %v3636
      %3698 = vmatpush.bf16.msra.mxu0 %v3632
      %3699 = vmatpush.bf16.msra.mxu0 %v3628
      %3700 = vmatmul.bf16.gmra.mxu0 %v3494
      %v3701 = vpop.f32.mrf.mxu0
      %v3702 = vadd.f32 0.0, %v3701
      %v3703 = vpop.f32.mrf.mxu0
      %3704 = vdwg.mxu0
      %3705 = vmatpush.bf16.msra.mxu0 %v3657
      %3706 = vmatpush.bf16.msra.mxu0 %v3653
      %3707 = vmatpush.bf16.msra.mxu0 %v3649
      %3708 = vmatpush.bf16.msra.mxu0 %v3645
      %3709 = vmatpush.bf16.msra.mxu0 %v3641
      %3710 = vmatpush.bf16.msra.mxu0 %v3637
      %3711 = vmatpush.bf16.msra.mxu0 %v3633
      %3712 = vmatpush.bf16.msra.mxu0 %v3629
      %3713 = vmatmul.bf16.gmra.mxu0 %v3494
      %v3714 = vpop.f32.mrf.mxu0
      %v3715 = vadd.f32 0.0, %v3714
      %v3716 = vpop.f32.mrf.mxu0
      %3717 = vdwg.mxu0
      %3718 = vmatpush.bf16.msra.mxu0 %v3658
      %3719 = vmatpush.bf16.msra.mxu0 %v3654
      %3720 = vmatpush.bf16.msra.mxu0 %v3650
      %3721 = vmatpush.bf16.msra.mxu0 %v3646
      %3722 = vmatpush.bf16.msra.mxu0 %v3642
      %3723 = vmatpush.bf16.msra.mxu0 %v3638
      %3724 = vmatpush.bf16.msra.mxu0 %v3634
      %3725 = vmatpush.bf16.msra.mxu0 %v3630
      %3726 = vmatmul.bf16.gmra.mxu0 %v3494
      %v3727 = vpop.f32.mrf.mxu0
      %v3728 = vadd.f32 0.0, %v3727
      %v3729 = vpop.f32.mrf.mxu0
      %3730 = vdwg.mxu0
      %3731 = vmatpush.bf16.msra.mxu0 %v3659
      %3732 = vmatpush.bf16.msra.mxu0 %v3655
      %3733 = vmatpush.bf16.msra.mxu0 %v3651
      %3734 = vmatpush.bf16.msra.mxu0 %v3647
      %3735 = vmatpush.bf16.msra.mxu0 %v3643
      %3736 = vmatpush.bf16.msra.mxu0 %v3639
      %3737 = vmatpush.bf16.msra.mxu0 %v3635
      %3738 = vmatpush.bf16.msra.mxu0 %v3631
      %3739 = vmatmul.bf16.gmra.mxu0 %v3494
      %v3740 = vpop.f32.mrf.mxu0
      %v3741 = vadd.f32 0.0, %v3740
      %v3742 = vpop.f32.mrf.mxu0
      %3743 = vdwg.mxu0
      %v3744 = vadd.f32 %v3496, %v3702
      %v3745 = vadd.f32 %v3497, %v3715
      %v3746 = vadd.f32 %v3498, %v3728
      %v3747 = vadd.f32 %v3499, %v3741
      %v3748 = vxor.u32 %v3744, 2147483648
      %v3749 = vxor.u32 %v3745, 2147483648
      %v3750 = vxor.u32 %v3746, 2147483648
      %v3751 = vmul.f32 %v3748, 1.442695
      %v3752 = vpow.pop %v3751
      %v3753 = vmul.f32 %v3749, 1.442695
      %v3754 = vpow.pop %v3753
      %v3755 = vmul.f32 %v3750, 1.442695
      %v3756 = vpow.pop %v3755
      %v3757 = vadd.f32 %v3752, 1.0
      %v3758 = vadd.f32 %v3754, 1.0
      %v3759 = vadd.f32 %v3756, 1.0
      %v3760 = vrcp.pop %v3757
      %v3761 = vmul.f32 %v3757, %v3760
      %v3762 = vsub.f32 1.0, %v3761
      %v3763 = vmul.f32 %v3760, %v3762
      %v3764 = vadd.f32 %v3760, %v3763
      %vm3765 = vweird.f32 %v3757
      %vm3766 = vweird.f32 %v3760
      %vm3767 = vmor %vm3765, %vm3766
      %v3768 = vsel %vm3767, %v3760, %v3764
      %v3769 = vand.u32 2147483647, %v3757
      %vm3770 = vcmp.eq.f32.partialorder %v3769, 8.507059e+37
      %v3771 = vand.u32 %v3757, 2147483648
      %v3772 = vor.u32 1.1754944e-38, %v3771
      %v3773 = vsel %vm3770, %v3772, %v3768
      %v3774 = vmul.f32 1.0, %v3773
      %v3775 = vrcp.pop %v3758
      %v3776 = vmul.f32 %v3758, %v3775
      %v3777 = vsub.f32 1.0, %v3776
      %v3778 = vmul.f32 %v3775, %v3777
      %v3779 = vadd.f32 %v3775, %v3778
      %vm3780 = vweird.f32 %v3758
      %vm3781 = vweird.f32 %v3775
      %vm3782 = vmor %vm3780, %vm3781
      %v3783 = vsel %vm3782, %v3775, %v3779
      %v3784 = vand.u32 2147483647, %v3758
      %vm3785 = vcmp.eq.f32.partialorder %v3784, 8.507059e+37
      %v3786 = vand.u32 %v3758, 2147483648
      %v3787 = vor.u32 1.1754944e-38, %v3786
      %v3788 = vsel %vm3785, %v3787, %v3783
      %v3789 = vmul.f32 1.0, %v3788
      %v3790 = vrcp.pop %v3759
      %v3791 = vmul.f32 %v3759, %v3790
      %v3792 = vsub.f32 1.0, %v3791
      %v3793 = vmul.f32 %v3790, %v3792
      %v3794 = vadd.f32 %v3790, %v3793
      %vm3795 = vweird.f32 %v3759
      %vm3796 = vweird.f32 %v3790
      %vm3797 = vmor %vm3795, %vm3796
      %v3798 = vsel %vm3797, %v3790, %v3794
      %v3799 = vand.u32 2147483647, %v3759
      %vm3800 = vcmp.eq.f32.partialorder %v3799, 8.507059e+37
      %v3801 = vand.u32 %v3759, 2147483648
      %v3802 = vor.u32 1.1754944e-38, %v3801
      %v3803 = vsel %vm3800, %v3802, %v3798
      %v3804 = vmul.f32 1.0, %v3803
      %v3805 = vtanh.pop %v3747
      %v3806 = vmul.f32 %v3789, %v3491
      %v3807 = vmul.f32 %v3774, %v3805
      %v3808 = vadd.f32 %v3806, %v3807
      %v3809 = vtanh.pop %v3808
      %v3810 = vmul.f32 %v3804, %v3809
      %v3811 = vpack.c.bf16 %v3810, %v3810
      %3812 = vst [vmem:[%s2028] sm:$0xf] %v3811
      %v3813 = vld [vmem:[#allocation5] sm:$0xf]
      %v3814 = vld [vmem:[#allocation5 + $0x4] sm:$0xf]
      %v3815 = vld [vmem:[#allocation5 + $0x8] sm:$0xf]
      %v3816 = vld [vmem:[#allocation5 + $0xc] sm:$0xf]
      %v3817 = vld [vmem:[%s6] sm:$0xf]
      %v3818 = vld [vmem:[%s6 + $0x4] sm:$0xf]
      %v3819 = vld [vmem:[%s6 + $0x8] sm:$0xf]
      %v3820 = vld [vmem:[%s6 + $0xc] sm:$0xf]
      %v3821 = vld [vmem:[%s6 + $0x10] sm:$0xf]
      %v3822 = vld [vmem:[%s6 + $0x14] sm:$0xf]
      %v3823 = vld [vmem:[%s6 + $0x18] sm:$0xf]
      %v3824 = vld [vmem:[%s6 + $0x1c] sm:$0xf]
      %v3825 = vld [vmem:[%s6 + $0x20] sm:$0xf]
      %v3826 = vld [vmem:[%s6 + $0x24] sm:$0xf]
      %v3827 = vld [vmem:[%s6 + $0x28] sm:$0xf]
      %v3828 = vld [vmem:[%s6 + $0x2c] sm:$0xf]
      %v3829 = vld [vmem:[%s6 + $0x30] sm:$0xf]
      %v3830 = vld [vmem:[%s6 + $0x34] sm:$0xf]
      %v3831 = vld [vmem:[%s6 + $0x38] sm:$0xf]
      %v3832 = vld [vmem:[%s6 + $0x3c] sm:$0xf]
      %v3833 = vld [vmem:[%s7] sm:$0x1]
      %v3835 = vperm.slane %v3833, 0
      %v3841 = vunpack.c.l.b16 %v3813
      %v3842 = vunpack.c.l.b16 %v3814
      %v3843 = vunpack.c.l.b16 %v3815
      %v3844 = vunpack.c.l.b16 %v3816
      %v3845 = vpack.c.b16 %v3842, %v3841
      %v3846 = vpack.c.b16 %v3844, %v3843
      %v3865 = vunpack.c.l.b16 %v3817
      %v3866 = vunpack.c.l.b16 %v3818
      %v3867 = vunpack.c.l.b16 %v3819
      %v3868 = vunpack.c.l.b16 %v3820
      %v3869 = vunpack.c.l.b16 %v3821
      %v3870 = vunpack.c.l.b16 %v3822
      %v3871 = vunpack.c.l.b16 %v3823
      %v3872 = vunpack.c.l.b16 %v3824
      %v3873 = vunpack.c.l.b16 %v3825
      %v3874 = vunpack.c.l.b16 %v3826
      %v3875 = vunpack.c.l.b16 %v3827
      %v3876 = vunpack.c.l.b16 %v3828
      %v3877 = vunpack.c.l.b16 %v3829
      %v3878 = vunpack.c.l.b16 %v3830
      %v3879 = vunpack.c.l.b16 %v3831
      %v3880 = vunpack.c.l.b16 %v3832
      %v3881 = vpack.c.b16 %v3866, %v3865
      %v3882 = vpack.c.b16 %v3868, %v3867
      %v3883 = vpack.c.b16 %v3870, %v3869
      %v3884 = vpack.c.b16 %v3872, %v3871
      %v3885 = vpack.c.b16 %v3874, %v3873
      %v3886 = vpack.c.b16 %v3876, %v3875
      %v3887 = vpack.c.b16 %v3878, %v3877
      %v3888 = vpack.c.b16 %v3880, %v3879
      %3897 = vmatpush.bf16.msra.mxu0 %v3888
      %3898 = vmatpush.bf16.msra.mxu0 %v3887
      %3899 = vmatpush.bf16.msra.mxu0 %v3886
      %3900 = vmatpush.bf16.msra.mxu0 %v3885
      %3901 = vmatpush.bf16.msra.mxu0 %v3884
      %3902 = vmatpush.bf16.msra.mxu0 %v3883
      %3903 = vmatpush.bf16.msra.mxu0 %v3882
      %3904 = vmatpush.bf16.msra.mxu0 %v3881
      %3905 = vmatmul.bf16.gmra.mxu0 %v3845
      %v3906 = vpop.f32.mrf.mxu0
      %v3907 = vadd.f32 %v3835, %v3906
      %v3908 = vpop.f32.mrf.mxu0
      %v3909 = vadd.f32 %v3835, %v3908
      %3910 = vmatmul.bf16.gmra.mxu0 %v3846
      %v3911 = vpop.f32.mrf.mxu0
      %v3912 = vadd.f32 %v3835, %v3911
      %v3913 = vpop.f32.mrf.mxu0
      %v3914 = vadd.f32 %v3835, %v3913
      %3915 = vdwg.mxu0
      %s3916 = scalar_lea.vmem %s338, 32
      %3917 = vst [vmem:[%s3916] sm:$0xff] %v3907
      %3918 = vst [vmem:[%s3916 + $0x8] sm:$0xff] %v3909
      %3919 = vst [vmem:[%s3916 + $0x10] sm:$0xff] %v3912
      %3920 = vst [vmem:[%s3916 + $0x18] sm:$0xff] %v3914
      %3921 = vst [vmem:[#allocation2] sm:$0xff] %v3810
      %3922 = vst [vmem:[#allocation3] sm:$0xff] %v3808
      %s3923 = smul.u32 8, %s24
      %p3924 = scmp.lt.s32.totalorder %s3923, 15
      %s3925 = scalar_select %p3924, %s3923, 15
      %p3926 = scmp.lt.s32.totalorder %s23, 0
      %s3927 = scalar_select %p3926, %s23, 0
      %s3928 = sadd.s32 %s3927, %s3925
      %s3929 = smul.addr %s3928, 8
      %s3930 = scalar_lea.vmem %s8, %s3929
      // Predicated region
      $region57: #{cudnn_lstm_model_inv_forward.2} parent=51 // pred_check
        %p3931 = pneg %p226
      $region58: #{cudnn_lstm_model_inv_forward.2} parent=51 // pred_check_branch
        %3933 = sbr.rel (%p3931) target = $region60
      $region59: #{cudnn_lstm_model_inv_forward.2} parent=51 // pred_region
        %s3934 = smul.u32 8, %s24
      $region60: #{cudnn_lstm_model_inv_forward.2} parent=51 // pred_fallthru
        _
    $region52: #{cudnn_lstm_model_inv_forward.2} parent=5 // pred_fallthru
      _
    %p3935 = scmp.le.s32.totalorder 2, %s14
    // Predicated region
    $region61: #{cudnn_lstm_model_inv_forward.2} parent=5 // pred_check
      %p3936 = pneg %p3935
    $region62: #{cudnn_lstm_model_inv_forward.2} parent=5 // pred_check_branch
      %3938 = sbr.rel (%p3936) target = $region64
    $region63: #{cudnn_lstm_model_inv_forward.2} parent=5 // pred_region
      %s3939 = ssub.s32 %s14, 2
      // Predicated region
      $region65: #{cudnn_lstm_model_inv_forward.2} parent=63 // pred_check
        %p3940 = pneg %p232
      $region66: #{cudnn_lstm_model_inv_forward.2} parent=63 // pred_check_branch
        %3942 = sbr.rel (%p3940) target = $region68
      $region67: #{cudnn_lstm_model_inv_forward.2} parent=63 // pred_region
        %s3943 = smul.u32 8, %s26
        %p3944 = scmp.lt.s32.totalorder %s3943, 15
        %s3945 = scalar_select %p3944, %s3943, 15
        %p3946 = scmp.lt.s32.totalorder %s25, 0
        %s3947 = scalar_select %p3946, %s25, 0
        %s3948 = sadd.s32 %s3947, %s3945
        %s3949 = smul.addr %s3948, 8
        %s3950 = scalar_lea.vmem %s8, %s3949
      $region68: #{cudnn_lstm_model_inv_forward.2} parent=63 // pred_fallthru
        _
    $region64: #{cudnn_lstm_model_inv_forward.2} parent=5 // pred_fallthru
      _
  $region6: #{cudnn_lstm_model_inv_forward.2} parent=0 // loop_footer
    %s18 = sadd.s32 1, %s14
  $region7: #{cudnn_lstm_model_inv_forward.2} parent=0 // loop_footer_branch
    %13 = sbr.rel target = $region3
  $region8: #{cudnn_lstm_model_inv_forward.2} parent=0 // loop_exit
    _

// kernel: cudnn_lstm_model_inv_forward.3
$region0: #{cudnn_lstm_model_inv_forward.3}
  #allocation0 [shape = 'u32[]', space=smem, size = 0x4, offset = 0x4, fixed_abs, tag = 'smem constant byte address 0x4 - core index']
  #allocation1 [shape = 'u32[72,128]{1,0:T(1,128)}', space=vmem, size = 0x9000, scoped, tag = 'internal scratch']
  #allocation2 [shape = 'f32[8,128]{1,0:T(8,128)}', space=vmem, size = 0x1000, scoped, tag = 'scratch operand']
  #allocation3 [shape = 'f32[8,128]{1,0:T(8,128)}', space=vmem, size = 0x1000, scoped, tag = 'scratch operand']
  #allocation4 [shape = 'f32[4,8,512]{2,1,0:T(8,128)}', space=vmem, size = 0x10000, scoped, tag = 'scratch operand']
  #allocation5 [shape = 'bf16[4,8,128]{2,1,0:T(8,128)(2,1)}', space=vmem, size = 0x2000, scoped, tag = 'scratch operand']
  %s0 = inlined_call_operand.vmem [shape: bf16[16,8,128], index: 0, kind: input, shape index: {}]
  %s1 = inlined_call_operand.vmem [shape: bf16[16,8,128], index: 1, kind: input, shape index: {}]
  %s2 = inlined_call_operand.vmem [shape: bf16[128,128], index: 2, kind: input, shape index: {}]
  %s3 = inlined_call_operand.vmem [shape: bf16[128,128], index: 3, kind: input, shape index: {}]
  %s4 = inlined_call_operand.vmem [shape: f32[1,128], index: 4, kind: input, shape index: {}]
  %s5 = inlined_call_operand.vmem [shape: bf16[128,512], index: 5, kind: input, shape index: {}]
  %s6 = inlined_call_operand.vmem [shape: bf16[128,512], index: 6, kind: input, shape index: {}]
  %s7 = inlined_call_operand.vmem [shape: f32[1,512], index: 7, kind: input, shape index: {}]
  %s8 = inlined_call_operand.vmem [shape: bf16[128,128], index: 8, kind: input, shape index: {}]
  %s9 = inlined_call_operand.vmem [shape: f32[1,128], index: 9, kind: input, shape index: {}]
  %s10 = inlined_call_operand.vmem [shape: f32[16,8,128], index: 10, kind: output, shape index: {}]
  %s11 = sld [smem:[#allocation0]]
  $region77: #{cudnn_lstm_model_inv_forward.3} parent=0
    _
  %s13 = ssub.s32 1, %s11
  %s14 = scalar_select 0, %s13, %s11
  loop: start=0, step=1, limit=4
  $region2: #{cudnn_lstm_model_inv_forward.3} parent=0 // loop_pre_header
    _
  $region3: #{cudnn_lstm_model_inv_forward.3} parent=0 // loop_header
    %s16 = sphi 0, %s20
    %p17 = scmp.ge.s32.totalorder %s16, 4
    %s23 = sphi 0, %s35
    %s24 = sphi 0, %s31
    %s25 = sphi 0, %s23
    %s26 = sphi 0, %s24
    %s27 = sphi 0, %s25
    %s28 = sphi 0, %s26
    %s40 = sphi 0, %s42
    %s43 = sphi 0, %s40
    %s44 = sphi 0, %s43
    %s60 = sphi 0, %s44
    %s68 = sphi 0, %s70
    %s71 = sphi 0, %s68
    %s72 = sphi 0, %s71
    %s88 = sphi 0, %s72
    %s92 = sphi 0, %s92
    %s94 = sphi 0, %s92
    %s95 = sphi 0, %s94
    %s109 = sphi 0, %s95
    %s113 = sphi 0, %s113
    %s115 = sphi 0, %s113
    %s116 = sphi 0, %s115
    %s130 = sphi 0, %s116
    %s134 = sphi 0, %s134
    %s136 = sphi 0, %s134
    %s137 = sphi 0, %s136
    %s151 = sphi 0, %s137
    %s155 = sphi 0, %s155
    %s157 = sphi 0, %s155
    %s158 = sphi 0, %s157
    %s172 = sphi 0, %s158
    %s176 = sphi 0, %s176
    %s178 = sphi 0, %s176
    %s179 = sphi 0, %s178
    %s193 = sphi 0, %s179
    %s197 = sphi 0, %s197
    %s199 = sphi 0, %s197
    %s200 = sphi 0, %s199
    %s214 = sphi 0, %s200
    %s218 = sphi 0, %s218
    %s220 = sphi 0, %s218
    %s221 = sphi 0, %s220
    %s235 = sphi 0, %s221
    %s239 = sphi 0, %s239
    %s241 = sphi 0, %s239
    %s242 = sphi 0, %s241
    %s256 = sphi 0, %s242
    %s264 = sphi 0, %s266
    %s267 = sphi 0, %s264
    %s268 = sphi 0, %s267
    %s284 = sphi 0, %s268
  $region4: #{cudnn_lstm_model_inv_forward.3} parent=0 // loop_header_branch
    %19 = sbr.rel (%p17) target = $region8
  $region5: #{cudnn_lstm_model_inv_forward.3} parent=0 // loop_body
    %s21 = ssub.s32 %s16, 1
    %s22 = ssub.s32 %s16, 2
    %s29 = sadd.s32 1, %s24
    %p30 = scmp.ge.s32.totalorder %s29, 2
    %s31 = scalar_select %p30, 0, %s29
    %s32 = sadd.s32 1, %s23
    %s33 = scalar_select %p30, %s32, %s23
    %p34 = scmp.ge.s32.totalorder %s33, 1
    %s35 = scalar_select %p34, 0, %s33
    %s36 = ssub.s32 %s24, %s31
    %s37 = ssub.s32 %s23, %s35
    %s38 = sor.u32 %s36, %s37
    %p39 = scmp.eq.s32.totalorder %s38, 0
    %s41 = sadd.s32 %s40, 1
    %s42 = scalar_select %p39, %s40, %s41
    %p45 = pneg %p39
    %p46 = scmp.eq.s32.totalorder %s16, 1
    %p47 = por %p45, %p46
    %p48 = scmp.ne.s32.totalorder %s40, %s43
    %p49 = scmp.eq.s32.totalorder %s16, 0
    %p50 = por %p48, %p49
    %p51 = scmp.ne.s32.totalorder %s40, %s43
    %p52 = scmp.eq.s32.totalorder %s21, 1
    %p53 = por %p51, %p52
    %p54 = scmp.ne.s32.totalorder %s43, %s44
    %p55 = scmp.eq.s32.totalorder %s21, 0
    %p56 = por %p54, %p55
    %p57 = scmp.ne.s32.totalorder %s43, %s44
    %p58 = scmp.eq.s32.totalorder %s22, 1
    %p59 = por %p57, %p58
    %p61 = scmp.ne.s32.totalorder %s44, %s60
    %p62 = scmp.eq.s32.totalorder %s22, 0
    %p63 = por %p61, %p62
    %s64 = ssub.s32 %s24, %s31
    %s65 = ssub.s32 %s23, %s35
    %s66 = sor.u32 %s64, %s65
    %p67 = scmp.eq.s32.totalorder %s66, 0
    %s69 = sadd.s32 %s68, 1
    %s70 = scalar_select %p67, %s68, %s69
    %p73 = pneg %p67
    %p74 = scmp.eq.s32.totalorder %s16, 1
    %p75 = por %p73, %p74
    %p76 = scmp.ne.s32.totalorder %s68, %s71
    %p77 = scmp.eq.s32.totalorder %s16, 0
    %p78 = por %p76, %p77
    %p79 = scmp.ne.s32.totalorder %s68, %s71
    %p80 = scmp.eq.s32.totalorder %s21, 1
    %p81 = por %p79, %p80
    %p82 = scmp.ne.s32.totalorder %s71, %s72
    %p83 = scmp.eq.s32.totalorder %s21, 0
    %p84 = por %p82, %p83
    %p85 = scmp.ne.s32.totalorder %s71, %s72
    %p86 = scmp.eq.s32.totalorder %s22, 1
    %p87 = por %p85, %p86
    %p89 = scmp.ne.s32.totalorder %s72, %s88
    %p90 = scmp.eq.s32.totalorder %s22, 0
    %p91 = por %p89, %p90
    %s93 = sadd.s32 %s92, 1
    %p96 = scmp.eq.s32.totalorder %s16, 1
    %p97 = scmp.ne.s32.totalorder %s92, %s94
    %p98 = scmp.eq.s32.totalorder %s16, 0
    %p99 = por %p97, %p98
    %p100 = scmp.ne.s32.totalorder %s92, %s94
    %p101 = scmp.eq.s32.totalorder %s21, 1
    %p102 = por %p100, %p101
    %p103 = scmp.ne.s32.totalorder %s94, %s95
    %p104 = scmp.eq.s32.totalorder %s21, 0
    %p105 = por %p103, %p104
    %p106 = scmp.ne.s32.totalorder %s94, %s95
    %p107 = scmp.eq.s32.totalorder %s22, 1
    %p108 = por %p106, %p107
    %p110 = scmp.ne.s32.totalorder %s95, %s109
    %p111 = scmp.eq.s32.totalorder %s22, 0
    %p112 = por %p110, %p111
    %s114 = sadd.s32 %s113, 1
    %p117 = scmp.eq.s32.totalorder %s16, 1
    %p118 = scmp.ne.s32.totalorder %s113, %s115
    %p119 = scmp.eq.s32.totalorder %s16, 0
    %p120 = por %p118, %p119
    %p121 = scmp.ne.s32.totalorder %s113, %s115
    %p122 = scmp.eq.s32.totalorder %s21, 1
    %p123 = por %p121, %p122
    %p124 = scmp.ne.s32.totalorder %s115, %s116
    %p125 = scmp.eq.s32.totalorder %s21, 0
    %p126 = por %p124, %p125
    %p127 = scmp.ne.s32.totalorder %s115, %s116
    %p128 = scmp.eq.s32.totalorder %s22, 1
    %p129 = por %p127, %p128
    %p131 = scmp.ne.s32.totalorder %s116, %s130
    %p132 = scmp.eq.s32.totalorder %s22, 0
    %p133 = por %p131, %p132
    %s135 = sadd.s32 %s134, 1
    %p138 = scmp.eq.s32.totalorder %s16, 1
    %p139 = scmp.ne.s32.totalorder %s134, %s136
    %p140 = scmp.eq.s32.totalorder %s16, 0
    %p141 = por %p139, %p140
    %p142 = scmp.ne.s32.totalorder %s134, %s136
    %p143 = scmp.eq.s32.totalorder %s21, 1
    %p144 = por %p142, %p143
    %p145 = scmp.ne.s32.totalorder %s136, %s137
    %p146 = scmp.eq.s32.totalorder %s21, 0
    %p147 = por %p145, %p146
    %p148 = scmp.ne.s32.totalorder %s136, %s137
    %p149 = scmp.eq.s32.totalorder %s22, 1
    %p150 = por %p148, %p149
    %p152 = scmp.ne.s32.totalorder %s137, %s151
    %p153 = scmp.eq.s32.totalorder %s22, 0
    %p154 = por %p152, %p153
    %s156 = sadd.s32 %s155, 1
    %p159 = scmp.eq.s32.totalorder %s16, 1
    %p160 = scmp.ne.s32.totalorder %s155, %s157
    %p161 = scmp.eq.s32.totalorder %s16, 0
    %p162 = por %p160, %p161
    %p163 = scmp.ne.s32.totalorder %s155, %s157
    %p164 = scmp.eq.s32.totalorder %s21, 1
    %p165 = por %p163, %p164
    %p166 = scmp.ne.s32.totalorder %s157, %s158
    %p167 = scmp.eq.s32.totalorder %s21, 0
    %p168 = por %p166, %p167
    %p169 = scmp.ne.s32.totalorder %s157, %s158
    %p170 = scmp.eq.s32.totalorder %s22, 1
    %p171 = por %p169, %p170
    %p173 = scmp.ne.s32.totalorder %s158, %s172
    %p174 = scmp.eq.s32.totalorder %s22, 0
    %p175 = por %p173, %p174
    %s177 = sadd.s32 %s176, 1
    %p180 = scmp.eq.s32.totalorder %s16, 1
    %p181 = scmp.ne.s32.totalorder %s176, %s178
    %p182 = scmp.eq.s32.totalorder %s16, 0
    %p183 = por %p181, %p182
    %p184 = scmp.ne.s32.totalorder %s176, %s178
    %p185 = scmp.eq.s32.totalorder %s21, 1
    %p186 = por %p184, %p185
    %p187 = scmp.ne.s32.totalorder %s178, %s179
    %p188 = scmp.eq.s32.totalorder %s21, 0
    %p189 = por %p187, %p188
    %p190 = scmp.ne.s32.totalorder %s178, %s179
    %p191 = scmp.eq.s32.totalorder %s22, 1
    %p192 = por %p190, %p191
    %p194 = scmp.ne.s32.totalorder %s179, %s193
    %p195 = scmp.eq.s32.totalorder %s22, 0
    %p196 = por %p194, %p195
    %s198 = sadd.s32 %s197, 1
    %p201 = scmp.eq.s32.totalorder %s16, 1
    %p202 = scmp.ne.s32.totalorder %s197, %s199
    %p203 = scmp.eq.s32.totalorder %s16, 0
    %p204 = por %p202, %p203
    %p205 = scmp.ne.s32.totalorder %s197, %s199
    %p206 = scmp.eq.s32.totalorder %s21, 1
    %p207 = por %p205, %p206
    %p208 = scmp.ne.s32.totalorder %s199, %s200
    %p209 = scmp.eq.s32.totalorder %s21, 0
    %p210 = por %p208, %p209
    %p211 = scmp.ne.s32.totalorder %s199, %s200
    %p212 = scmp.eq.s32.totalorder %s22, 1
    %p213 = por %p211, %p212
    %p215 = scmp.ne.s32.totalorder %s200, %s214
    %p216 = scmp.eq.s32.totalorder %s22, 0
    %p217 = por %p215, %p216
    %s219 = sadd.s32 %s218, 1
    %p222 = scmp.eq.s32.totalorder %s16, 1
    %p223 = scmp.ne.s32.totalorder %s218, %s220
    %p224 = scmp.eq.s32.totalorder %s16, 0
    %p225 = por %p223, %p224
    %p226 = scmp.ne.s32.totalorder %s218, %s220
    %p227 = scmp.eq.s32.totalorder %s21, 1
    %p228 = por %p226, %p227
    %p229 = scmp.ne.s32.totalorder %s220, %s221
    %p230 = scmp.eq.s32.totalorder %s21, 0
    %p231 = por %p229, %p230
    %p232 = scmp.ne.s32.totalorder %s220, %s221
    %p233 = scmp.eq.s32.totalorder %s22, 1
    %p234 = por %p232, %p233
    %p236 = scmp.ne.s32.totalorder %s221, %s235
    %p237 = scmp.eq.s32.totalorder %s22, 0
    %p238 = por %p236, %p237
    %s240 = sadd.s32 %s239, 1
    %p243 = scmp.eq.s32.totalorder %s16, 1
    %p244 = scmp.ne.s32.totalorder %s239, %s241
    %p245 = scmp.eq.s32.totalorder %s16, 0
    %p246 = por %p244, %p245
    %p247 = scmp.ne.s32.totalorder %s239, %s241
    %p248 = scmp.eq.s32.totalorder %s21, 1
    %p249 = por %p247, %p248
    %p250 = scmp.ne.s32.totalorder %s241, %s242
    %p251 = scmp.eq.s32.totalorder %s21, 0
    %p252 = por %p250, %p251
    %p253 = scmp.ne.s32.totalorder %s241, %s242
    %p254 = scmp.eq.s32.totalorder %s22, 1
    %p255 = por %p253, %p254
    %p257 = scmp.ne.s32.totalorder %s242, %s256
    %p258 = scmp.eq.s32.totalorder %s22, 0
    %p259 = por %p257, %p258
    %s260 = ssub.s32 %s24, %s31
    %s261 = ssub.s32 %s23, %s35
    %s262 = sor.u32 %s260, %s261
    %p263 = scmp.eq.s32.totalorder %s262, 0
    %s265 = sadd.s32 %s264, 1
    %s266 = scalar_select %p263, %s264, %s265
    %p269 = pneg %p263
    %p270 = scmp.eq.s32.totalorder %s16, 1
    %p271 = por %p269, %p270
    %p272 = scmp.ne.s32.totalorder %s264, %s267
    %p273 = scmp.eq.s32.totalorder %s16, 0
    %p274 = por %p272, %p273
    %p275 = scmp.ne.s32.totalorder %s264, %s267
    %p276 = scmp.eq.s32.totalorder %s21, 1
    %p277 = por %p275, %p276
    %p278 = scmp.ne.s32.totalorder %s267, %s268
    %p279 = scmp.eq.s32.totalorder %s21, 0
    %p280 = por %p278, %p279
    %p281 = scmp.ne.s32.totalorder %s267, %s268
    %p282 = scmp.eq.s32.totalorder %s22, 1
    %p283 = por %p281, %p282
    %p285 = scmp.ne.s32.totalorder %s268, %s284
    %p286 = scmp.eq.s32.totalorder %s22, 0
    %p287 = por %p285, %p286
    %p288 = scmp.le.s32.totalorder 1, %s16
    %p289 = scmp.lt.s32.totalorder %s16, 3
    %p290 = pnand %p288, %p289
    %p291 = pneg %p290
    // Predicated region
    $region9: #{cudnn_lstm_model_inv_forward.3} parent=5 // pred_check
      _
    $region10: #{cudnn_lstm_model_inv_forward.3} parent=5 // pred_check_branch
      %293 = sbr.rel (%p290) target = $region12
    $region11: #{cudnn_lstm_model_inv_forward.3} parent=5 // pred_region
      %s294 = ssub.s32 %s16, 1
      // Predicated region
      $region13: #{cudnn_lstm_model_inv_forward.3} parent=11 // pred_check
        %p295 = pneg %p105
      $region14: #{cudnn_lstm_model_inv_forward.3} parent=11 // pred_check_branch
        %297 = sbr.rel (%p295) target = $region16
      $region15: #{cudnn_lstm_model_inv_forward.3} parent=11 // pred_region
        _
      $region16: #{cudnn_lstm_model_inv_forward.3} parent=11 // pred_fallthru
        _
      // Predicated region
      $region17: #{cudnn_lstm_model_inv_forward.3} parent=11 // pred_check
        %p298 = pneg %p126
      $region18: #{cudnn_lstm_model_inv_forward.3} parent=11 // pred_check_branch
        %300 = sbr.rel (%p298) target = $region20
      $region19: #{cudnn_lstm_model_inv_forward.3} parent=11 // pred_region
        _
      $region20: #{cudnn_lstm_model_inv_forward.3} parent=11 // pred_fallthru
        _
      // Predicated region
      $region21: #{cudnn_lstm_model_inv_forward.3} parent=11 // pred_check
        %p301 = pneg %p147
      $region22: #{cudnn_lstm_model_inv_forward.3} parent=11 // pred_check_branch
        %303 = sbr.rel (%p301) target = $region24
      $region23: #{cudnn_lstm_model_inv_forward.3} parent=11 // pred_region
        _
      $region24: #{cudnn_lstm_model_inv_forward.3} parent=11 // pred_fallthru
        _
      // Predicated region
      $region25: #{cudnn_lstm_model_inv_forward.3} parent=11 // pred_check
        %p304 = pneg %p168
      $region26: #{cudnn_lstm_model_inv_forward.3} parent=11 // pred_check_branch
        %306 = sbr.rel (%p304) target = $region28
      $region27: #{cudnn_lstm_model_inv_forward.3} parent=11 // pred_region
        _
      $region28: #{cudnn_lstm_model_inv_forward.3} parent=11 // pred_fallthru
        _
      // Predicated region
      $region29: #{cudnn_lstm_model_inv_forward.3} parent=11 // pred_check
        %p307 = pneg %p189
      $region30: #{cudnn_lstm_model_inv_forward.3} parent=11 // pred_check_branch
        %309 = sbr.rel (%p307) target = $region32
      $region31: #{cudnn_lstm_model_inv_forward.3} parent=11 // pred_region
        _
      $region32: #{cudnn_lstm_model_inv_forward.3} parent=11 // pred_fallthru
        _
      // Predicated region
      $region33: #{cudnn_lstm_model_inv_forward.3} parent=11 // pred_check
        %p310 = pneg %p210
      $region34: #{cudnn_lstm_model_inv_forward.3} parent=11 // pred_check_branch
        %312 = sbr.rel (%p310) target = $region36
      $region35: #{cudnn_lstm_model_inv_forward.3} parent=11 // pred_region
        _
      $region36: #{cudnn_lstm_model_inv_forward.3} parent=11 // pred_fallthru
        _
      // Predicated region
      $region37: #{cudnn_lstm_model_inv_forward.3} parent=11 // pred_check
        %p313 = pneg %p231
      $region38: #{cudnn_lstm_model_inv_forward.3} parent=11 // pred_check_branch
        %315 = sbr.rel (%p313) target = $region40
      $region39: #{cudnn_lstm_model_inv_forward.3} parent=11 // pred_region
        _
      $region40: #{cudnn_lstm_model_inv_forward.3} parent=11 // pred_fallthru
        _
      // Predicated region
      $region41: #{cudnn_lstm_model_inv_forward.3} parent=11 // pred_check
        %p316 = pneg %p252
      $region42: #{cudnn_lstm_model_inv_forward.3} parent=11 // pred_check_branch
        %318 = sbr.rel (%p316) target = $region44
      $region43: #{cudnn_lstm_model_inv_forward.3} parent=11 // pred_region
        _
      $region44: #{cudnn_lstm_model_inv_forward.3} parent=11 // pred_fallthru
        _
    $region12: #{cudnn_lstm_model_inv_forward.3} parent=5 // pred_fallthru
      _
    %p319 = scmp.lt.s32.totalorder %s16, 2
    // Predicated region
    $region45: #{cudnn_lstm_model_inv_forward.3} parent=5 // pred_check
      %p320 = pneg %p319
    $region46: #{cudnn_lstm_model_inv_forward.3} parent=5 // pred_check_branch
      %322 = sbr.rel (%p320) target = $region48
    $region47: #{cudnn_lstm_model_inv_forward.3} parent=5 // pred_region
      // Predicated region
      $region49: #{cudnn_lstm_model_inv_forward.3} parent=47 // pred_check
        %p323 = pneg %p50
      $region50: #{cudnn_lstm_model_inv_forward.3} parent=47 // pred_check_branch
        %325 = sbr.rel (%p323) target = $region52
      $region51: #{cudnn_lstm_model_inv_forward.3} parent=47 // pred_region
        %s326 = smul.u32 8, %s24
        %p327 = scmp.lt.s32.totalorder %s326, 15
        %s328 = scalar_select %p327, %s326, 15
        %p329 = scmp.lt.s32.totalorder %s23, 0
        %s330 = scalar_select %p329, %s23, 0
        %s331 = sadd.s32 %s330, %s328
        %s332 = smul.addr %s331, 4
        %s333 = scalar_lea.vmem %s0, %s332
        %s334 = smul.u32 8, %s24
      $region52: #{cudnn_lstm_model_inv_forward.3} parent=47 // pred_fallthru
        _
      // Predicated region
      $region53: #{cudnn_lstm_model_inv_forward.3} parent=47 // pred_check
        %p335 = pneg %p78
      $region54: #{cudnn_lstm_model_inv_forward.3} parent=47 // pred_check_branch
        %337 = sbr.rel (%p335) target = $region56
      $region55: #{cudnn_lstm_model_inv_forward.3} parent=47 // pred_region
        %s338 = smul.u32 8, %s24
        %p339 = scmp.lt.s32.totalorder %s338, 15
        %s340 = scalar_select %p339, %s338, 15
        %p341 = scmp.lt.s32.totalorder %s23, 0
        %s342 = scalar_select %p341, %s23, 0
        %s343 = sadd.s32 %s342, %s340
        %s344 = smul.addr %s343, 4
        %s345 = scalar_lea.vmem %s1, %s344
        %s346 = smul.u32 8, %s24
      $region56: #{cudnn_lstm_model_inv_forward.3} parent=47 // pred_fallthru
        _
    $region48: #{cudnn_lstm_model_inv_forward.3} parent=5 // pred_fallthru
      _
    %p347 = scmp.le.s32.totalorder 1, %s16
    %p348 = scmp.lt.s32.totalorder %s16, 3
    %p349 = pnand %p347, %p348
    %p350 = pneg %p349
    // Predicated region
    $region57: #{cudnn_lstm_model_inv_forward.3} parent=5 // pred_check
      _
    $region58: #{cudnn_lstm_model_inv_forward.3} parent=5 // pred_check_branch
      %352 = sbr.rel (%p349) target = $region60
    $region59: #{cudnn_lstm_model_inv_forward.3} parent=5 // pred_region
      %s353 = ssub.s32 %s16, 1
      %s354 = smul.u32 8, %s26
      %p355 = scmp.lt.s32.totalorder %s354, 15
      %s356 = scalar_select %p355, %s354, 15
      %p357 = scmp.lt.s32.totalorder %s25, 0
      %s358 = scalar_select %p357, %s25, 0
      %s359 = sadd.s32 %s358, %s356
      %s360 = smul.addr %s359, 4
      %s361 = scalar_lea.vmem %s0, %s360
      %p362 = pneg %p56
      %p363 = pneg %p53
      %s364 = smul.u32 8, %s26
      %p365 = scmp.lt.s32.totalorder %s364, 15
      %s366 = scalar_select %p365, %s364, 15
      %p367 = scmp.lt.s32.totalorder %s25, 0
      %s368 = scalar_select %p367, %s25, 0
      %s369 = sadd.s32 %s368, %s366
      %s370 = smul.addr %s369, 4
      %s371 = scalar_lea.vmem %s1, %s370
      %p372 = pneg %p84
      %p373 = pneg %p81
      %p374 = pneg %p105
      %p375 = pneg %p102
      %p376 = pneg %p126
      %p377 = pneg %p123
      %p378 = pneg %p147
      %p379 = pneg %p144
      %p380 = pneg %p168
      %p381 = pneg %p165
      %p382 = pneg %p189
      %p383 = pneg %p186
      %p384 = pneg %p210
      %p385 = pneg %p207
      %p386 = pneg %p231
      %p387 = pneg %p228
      %p388 = pneg %p252
      %p389 = pneg %p249
      %p390 = pneg %p280
      %p391 = pneg %p277
      %s392 = smul.u32 8, %s26
      %p393 = scmp.lt.s32.totalorder %s392, 15
      %s394 = scalar_select %p393, %s392, 15
      %p395 = scmp.lt.s32.totalorder %s25, 0
      %s396 = scalar_select %p395, %s25, 0
      %s397 = sadd.s32 %s396, %s394
      %s398 = smul.addr %s397, 8
      %s399 = scalar_lea.vmem %s10, %s398
      %s400 = smul.u32 8, %s26
      %p401 = scmp.lt.s32.totalorder %s400, 15
      %s402 = scalar_select %p401, %s400, 15
      %p403 = scmp.lt.s32.totalorder %s25, 0
      %s404 = scalar_select %p403, %s25, 0
      %s405 = sadd.s32 %s404, %s402
      %s406 = smul.addr %s405, 4
      %s407 = scalar_lea.vmem %s0, %s406
      %s408 = smul.u32 8, %s26
      %s409 = smul.u32 8, %s26
      %p410 = scmp.lt.s32.totalorder %s409, 15
      %s411 = scalar_select %p410, %s409, 15
      %p412 = scmp.lt.s32.totalorder %s25, 0
      %s413 = scalar_select %p412, %s25, 0
      %s414 = sadd.s32 %s413, %s411
      %s415 = smul.addr %s414, 4
      %s416 = scalar_lea.vmem %s1, %s415
      %s417 = smul.u32 8, %s26
      %s418 = smul.u32 8, %s26
      %p419 = scmp.lt.s32.totalorder %s418, 15
      %s420 = scalar_select %p419, %s418, 15
      %p421 = scmp.lt.s32.totalorder %s25, 0
      %s422 = scalar_select %p421, %s25, 0
      %s423 = sadd.s32 %s422, %s420
      %s424 = smul.addr %s423, 8
      %s425 = scalar_lea.vmem %s10, %s424
      %s426 = smul.u32 8, %s26
      %p427 = scmp.eq.s32.totalorder %s26, 0
      // Predicated region
      $region61: #{cudnn_lstm_model_inv_forward.3} parent=59 // pred_check
        %p428 = pneg %p427
      $region62: #{cudnn_lstm_model_inv_forward.3} parent=59 // pred_check_branch
        %430 = sbr.rel (%p428) target = $region64
      $region63: #{cudnn_lstm_model_inv_forward.3} parent=59 // pred_region
        %431 = vst [vmem:[#allocation2] sm:$0xff] 0.0
        %432 = vst [vmem:[#allocation3] sm:$0xff] 0.0
      $region64: #{cudnn_lstm_model_inv_forward.3} parent=59 // pred_fallthru
        _
      %v433 = vld [vmem:[#allocation2] sm:$0xff]
      %v434 = vld [vmem:[#allocation3] sm:$0xff]
      %v435 = vld [vmem:[%s4] sm:$0x1]
      %v436 = vld [vmem:[%s407] sm:$0xf]
      %v437 = vld [vmem:[%s407 + $0x4] sm:$0xf]
      %v438 = vld [vmem:[%s407 + $0x8] sm:$0xf]
      %v439 = vld [vmem:[%s407 + $0xc] sm:$0xf]
      %v440 = vld [vmem:[%s2] sm:$0xf]
      %v441 = vld [vmem:[%s2 + $0x4] sm:$0xf]
      %v442 = vld [vmem:[%s2 + $0x8] sm:$0xf]
      %v443 = vld [vmem:[%s2 + $0xc] sm:$0xf]
      %v444 = vld [vmem:[%s2 + $0x10] sm:$0xf]
      %v445 = vld [vmem:[%s2 + $0x14] sm:$0xf]
      %v446 = vld [vmem:[%s2 + $0x18] sm:$0xf]
      %v447 = vld [vmem:[%s2 + $0x1c] sm:$0xf]
      %v448 = vld [vmem:[%s2 + $0x20] sm:$0xf]
      %v449 = vld [vmem:[%s2 + $0x24] sm:$0xf]
      %v450 = vld [vmem:[%s2 + $0x28] sm:$0xf]
      %v451 = vld [vmem:[%s2 + $0x2c] sm:$0xf]
      %v452 = vld [vmem:[%s2 + $0x30] sm:$0xf]
      %v453 = vld [vmem:[%s2 + $0x34] sm:$0xf]
      %v454 = vld [vmem:[%s2 + $0x38] sm:$0xf]
      %v455 = vld [vmem:[%s2 + $0x3c] sm:$0xf]
      %v460 = vunpack.c.l.b16 %v436
      %v461 = vunpack.c.l.b16 %v437
      %v462 = vunpack.c.l.b16 %v438
      %v463 = vunpack.c.l.b16 %v439
      %v464 = vpack.c.b16 %v461, %v460
      %v465 = vpack.c.b16 %v463, %v462
      %v484 = vunpack.c.l.b16 %v440
      %v485 = vunpack.c.l.b16 %v441
      %v486 = vunpack.c.l.b16 %v442
      %v487 = vunpack.c.l.b16 %v443
      %v488 = vunpack.c.l.b16 %v444
      %v489 = vunpack.c.l.b16 %v445
      %v490 = vunpack.c.l.b16 %v446
      %v491 = vunpack.c.l.b16 %v447
      %v492 = vunpack.c.l.b16 %v448
      %v493 = vunpack.c.l.b16 %v449
      %v494 = vunpack.c.l.b16 %v450
      %v495 = vunpack.c.l.b16 %v451
      %v496 = vunpack.c.l.b16 %v452
      %v497 = vunpack.c.l.b16 %v453
      %v498 = vunpack.c.l.b16 %v454
      %v499 = vunpack.c.l.b16 %v455
      %v500 = vpack.c.b16 %v485, %v484
      %v501 = vpack.c.b16 %v487, %v486
      %v502 = vpack.c.b16 %v489, %v488
      %v503 = vpack.c.b16 %v491, %v490
      %v504 = vpack.c.b16 %v493, %v492
      %v505 = vpack.c.b16 %v495, %v494
      %v506 = vpack.c.b16 %v497, %v496
      %v507 = vpack.c.b16 %v499, %v498
      %516 = vmatpush.bf16.msra.mxu0 %v507
      %517 = vmatpush.bf16.msra.mxu0 %v506
      %518 = vmatpush.bf16.msra.mxu0 %v505
      %519 = vmatpush.bf16.msra.mxu0 %v504
      %520 = vmatpush.bf16.msra.mxu0 %v503
      %521 = vmatpush.bf16.msra.mxu0 %v502
      %522 = vmatpush.bf16.msra.mxu0 %v501
      %523 = vmatpush.bf16.msra.mxu0 %v500
      %524 = vmatmul.bf16.gmra.mxu0 %v464
      %v525 = vpop.f32.mrf.mxu0
      %v526 = vadd.f32 0.0, %v525
      %v527 = vpop.f32.mrf.mxu0
      %v528 = vadd.f32 0.0, %v527
      %529 = vmatmul.bf16.gmra.mxu0 %v465
      %v530 = vpop.f32.mrf.mxu0
      %v531 = vadd.f32 0.0, %v530
      %v532 = vpop.f32.mrf.mxu0
      %v533 = vadd.f32 0.0, %v532
      %534 = vdwg.mxu0
      %v536 = vperm.slane %v435, 0
      %v538 = vadd.f32 %v536, %v526
      %v539 = vadd.f32 %v536, %v528
      %v540 = vadd.f32 %v536, %v531
      %v541 = vadd.f32 %v536, %v533
      %v542 = vld [vmem:[%s416] sm:$0xf]
      %v543 = vld [vmem:[%s416 + $0x4] sm:$0xf]
      %v544 = vld [vmem:[%s416 + $0x8] sm:$0xf]
      %v545 = vld [vmem:[%s416 + $0xc] sm:$0xf]
      %v546 = vld [vmem:[%s3] sm:$0xf]
      %v547 = vld [vmem:[%s3 + $0x4] sm:$0xf]
      %v548 = vld [vmem:[%s3 + $0x8] sm:$0xf]
      %v549 = vld [vmem:[%s3 + $0xc] sm:$0xf]
      %v550 = vld [vmem:[%s3 + $0x10] sm:$0xf]
      %v551 = vld [vmem:[%s3 + $0x14] sm:$0xf]
      %v552 = vld [vmem:[%s3 + $0x18] sm:$0xf]
      %v553 = vld [vmem:[%s3 + $0x1c] sm:$0xf]
      %v554 = vld [vmem:[%s3 + $0x20] sm:$0xf]
      %v555 = vld [vmem:[%s3 + $0x24] sm:$0xf]
      %v556 = vld [vmem:[%s3 + $0x28] sm:$0xf]
      %v557 = vld [vmem:[%s3 + $0x2c] sm:$0xf]
      %v558 = vld [vmem:[%s3 + $0x30] sm:$0xf]
      %v559 = vld [vmem:[%s3 + $0x34] sm:$0xf]
      %v560 = vld [vmem:[%s3 + $0x38] sm:$0xf]
      %v561 = vld [vmem:[%s3 + $0x3c] sm:$0xf]
      %v566 = vunpack.c.l.b16 %v542
      %v567 = vunpack.c.l.b16 %v543
      %v568 = vunpack.c.l.b16 %v544
      %v569 = vunpack.c.l.b16 %v545
      %v570 = vpack.c.b16 %v567, %v566
      %v571 = vpack.c.b16 %v569, %v568
      %v590 = vunpack.c.l.b16 %v546
      %v591 = vunpack.c.l.b16 %v547
      %v592 = vunpack.c.l.b16 %v548
      %v593 = vunpack.c.l.b16 %v549
      %v594 = vunpack.c.l.b16 %v550
      %v595 = vunpack.c.l.b16 %v551
      %v596 = vunpack.c.l.b16 %v552
      %v597 = vunpack.c.l.b16 %v553
      %v598 = vunpack.c.l.b16 %v554
      %v599 = vunpack.c.l.b16 %v555
      %v600 = vunpack.c.l.b16 %v556
      %v601 = vunpack.c.l.b16 %v557
      %v602 = vunpack.c.l.b16 %v558
      %v603 = vunpack.c.l.b16 %v559
      %v604 = vunpack.c.l.b16 %v560
      %v605 = vunpack.c.l.b16 %v561
      %v606 = vpack.c.b16 %v591, %v590
      %v607 = vpack.c.b16 %v593, %v592
      %v608 = vpack.c.b16 %v595, %v594
      %v609 = vpack.c.b16 %v597, %v596
      %v610 = vpack.c.b16 %v599, %v598
      %v611 = vpack.c.b16 %v601, %v600
      %v612 = vpack.c.b16 %v603, %v602
      %v613 = vpack.c.b16 %v605, %v604
      %622 = vmatpush.bf16.msra.mxu0 %v613
      %623 = vmatpush.bf16.msra.mxu0 %v612
      %624 = vmatpush.bf16.msra.mxu0 %v611
      %625 = vmatpush.bf16.msra.mxu0 %v610
      %626 = vmatpush.bf16.msra.mxu0 %v609
      %627 = vmatpush.bf16.msra.mxu0 %v608
      %628 = vmatpush.bf16.msra.mxu0 %v607
      %629 = vmatpush.bf16.msra.mxu0 %v606
      %630 = vmatmul.bf16.gmra.mxu0 %v570
      %v631 = vpop.f32.mrf.mxu0
      %v632 = vadd.f32 0.0, %v631
      %v633 = vpop.f32.mrf.mxu0
      %v634 = vadd.f32 0.0, %v633
      %635 = vmatmul.bf16.gmra.mxu0 %v571
      %v636 = vpop.f32.mrf.mxu0
      %v637 = vadd.f32 0.0, %v636
      %v638 = vpop.f32.mrf.mxu0
      %v639 = vadd.f32 0.0, %v638
      %640 = vdwg.mxu0
      %v641 = vadd.f32 %v538, %v632
      %v642 = vadd.f32 %v539, %v634
      %v643 = vadd.f32 %v540, %v637
      %v644 = vadd.f32 %v541, %v639
      %v645 = vmax.f32 %v641, 0.0
      %v646 = vmax.f32 %v642, 0.0
      %v647 = vmax.f32 %v643, 0.0
      %v648 = vmax.f32 %v644, 0.0
      %v649 = vpack.c.bf16 %v646, %v645
      %v650 = vpack.c.bf16 %v648, %v647
      %v651 = vld [vmem:[%s5] sm:$0xff]
      %v652 = vld [vmem:[%s5 + $0x8] sm:$0xff]
      %v653 = vld [vmem:[%s5 + $0x10] sm:$0xff]
      %v654 = vld [vmem:[%s5 + $0x18] sm:$0xff]
      %v655 = vld [vmem:[%s5 + $0x20] sm:$0xff]
      %v656 = vld [vmem:[%s5 + $0x28] sm:$0xff]
      %v657 = vld [vmem:[%s5 + $0x30] sm:$0xff]
      %v658 = vld [vmem:[%s5 + $0x38] sm:$0xff]
      %v659 = vld [vmem:[%s5 + $0x40] sm:$0xff]
      %v660 = vld [vmem:[%s5 + $0x48] sm:$0xff]
      %v661 = vld [vmem:[%s5 + $0x50] sm:$0xff]
      %v662 = vld [vmem:[%s5 + $0x58] sm:$0xff]
      %v663 = vld [vmem:[%s5 + $0x60] sm:$0xff]
      %v664 = vld [vmem:[%s5 + $0x68] sm:$0xff]
      %v665 = vld [vmem:[%s5 + $0x70] sm:$0xff]
      %v666 = vld [vmem:[%s5 + $0x78] sm:$0xff]
      %v667 = vld [vmem:[%s5 + $0x80] sm:$0xff]
      %v668 = vld [vmem:[%s5 + $0x88] sm:$0xff]
      %v669 = vld [vmem:[%s5 + $0x90] sm:$0xff]
      %v670 = vld [vmem:[%s5 + $0x98] sm:$0xff]
      %v671 = vld [vmem:[%s5 + $0xa0] sm:$0xff]
      %v672 = vld [vmem:[%s5 + $0xa8] sm:$0xff]
      %v673 = vld [vmem:[%s5 + $0xb0] sm:$0xff]
      %v674 = vld [vmem:[%s5 + $0xb8] sm:$0xff]
      %v675 = vld [vmem:[%s5 + $0xc0] sm:$0xff]
      %v676 = vld [vmem:[%s5 + $0xc8] sm:$0xff]
      %v677 = vld [vmem:[%s5 + $0xd0] sm:$0xff]
      %v678 = vld [vmem:[%s5 + $0xd8] sm:$0xff]
      %v679 = vld [vmem:[%s5 + $0xe0] sm:$0xff]
      %v680 = vld [vmem:[%s5 + $0xe8] sm:$0xff]
      %v681 = vld [vmem:[%s5 + $0xf0] sm:$0xff]
      %v682 = vld [vmem:[%s5 + $0xf8] sm:$0xff]
      %v683 = vld [vmem:[%s7] sm:$0xf]
      %v685 = vperm.slane %v683, 0
      %v686 = vperm.slane %v683, 1
      %v687 = vperm.slane %v683, 2
      %v688 = vperm.slane %v683, 3
      %v725 = vunpack.c.l.b16 %v651
      %v726 = vunpack.c.h.b16 %v651
      %v727 = vunpack.c.l.b16 %v652
      %v728 = vunpack.c.h.b16 %v652
      %v729 = vunpack.c.l.b16 %v653
      %v730 = vunpack.c.h.b16 %v653
      %v731 = vunpack.c.l.b16 %v654
      %v732 = vunpack.c.h.b16 %v654
      %v733 = vunpack.c.l.b16 %v655
      %v734 = vunpack.c.h.b16 %v655
      %v735 = vunpack.c.l.b16 %v656
      %v736 = vunpack.c.h.b16 %v656
      %v737 = vunpack.c.l.b16 %v657
      %v738 = vunpack.c.h.b16 %v657
      %v739 = vunpack.c.l.b16 %v658
      %v740 = vunpack.c.h.b16 %v658
      %v741 = vunpack.c.l.b16 %v659
      %v742 = vunpack.c.h.b16 %v659
      %v743 = vunpack.c.l.b16 %v660
      %v744 = vunpack.c.h.b16 %v660
      %v745 = vunpack.c.l.b16 %v661
      %v746 = vunpack.c.h.b16 %v661
      %v747 = vunpack.c.l.b16 %v662
      %v748 = vunpack.c.h.b16 %v662
      %v749 = vunpack.c.l.b16 %v663
      %v750 = vunpack.c.h.b16 %v663
      %v751 = vunpack.c.l.b16 %v664
      %v752 = vunpack.c.h.b16 %v664
      %v753 = vunpack.c.l.b16 %v665
      %v754 = vunpack.c.h.b16 %v665
      %v755 = vunpack.c.l.b16 %v666
      %v756 = vunpack.c.h.b16 %v666
      %v757 = vunpack.c.l.b16 %v667
      %v758 = vunpack.c.h.b16 %v667
      %v759 = vunpack.c.l.b16 %v668
      %v760 = vunpack.c.h.b16 %v668
      %v761 = vunpack.c.l.b16 %v669
      %v762 = vunpack.c.h.b16 %v669
      %v763 = vunpack.c.l.b16 %v670
      %v764 = vunpack.c.h.b16 %v670
      %v765 = vunpack.c.l.b16 %v671
      %v766 = vunpack.c.h.b16 %v671
      %v767 = vunpack.c.l.b16 %v672
      %v768 = vunpack.c.h.b16 %v672
      %v769 = vunpack.c.l.b16 %v673
      %v770 = vunpack.c.h.b16 %v673
      %v771 = vunpack.c.l.b16 %v674
      %v772 = vunpack.c.h.b16 %v674
      %v773 = vunpack.c.l.b16 %v675
      %v774 = vunpack.c.h.b16 %v675
      %v775 = vunpack.c.l.b16 %v676
      %v776 = vunpack.c.h.b16 %v676
      %v777 = vunpack.c.l.b16 %v677
      %v778 = vunpack.c.h.b16 %v677
      %v779 = vunpack.c.l.b16 %v678
      %v780 = vunpack.c.h.b16 %v678
      %v781 = vunpack.c.l.b16 %v679
      %v782 = vunpack.c.h.b16 %v679
      %v783 = vunpack.c.l.b16 %v680
      %v784 = vunpack.c.h.b16 %v680
      %v785 = vunpack.c.l.b16 %v681
      %v786 = vunpack.c.h.b16 %v681
      %v787 = vunpack.c.l.b16 %v682
      %v788 = vunpack.c.h.b16 %v682
      %v789 = vpack.c.b16 %v729, %v725
      %v790 = vpack.c.b16 %v730, %v726
      %v791 = vpack.c.b16 %v731, %v727
      %v792 = vpack.c.b16 %v732, %v728
      %v793 = vpack.c.b16 %v737, %v733
      %v794 = vpack.c.b16 %v738, %v734
      %v795 = vpack.c.b16 %v739, %v735
      %v796 = vpack.c.b16 %v740, %v736
      %v797 = vpack.c.b16 %v745, %v741
      %v798 = vpack.c.b16 %v746, %v742
      %v799 = vpack.c.b16 %v747, %v743
      %v800 = vpack.c.b16 %v748, %v744
      %v801 = vpack.c.b16 %v753, %v749
      %v802 = vpack.c.b16 %v754, %v750
      %v803 = vpack.c.b16 %v755, %v751
      %v804 = vpack.c.b16 %v756, %v752
      %v805 = vpack.c.b16 %v761, %v757
      %v806 = vpack.c.b16 %v762, %v758
      %v807 = vpack.c.b16 %v763, %v759
      %v808 = vpack.c.b16 %v764, %v760
      %v809 = vpack.c.b16 %v769, %v765
      %v810 = vpack.c.b16 %v770, %v766
      %v811 = vpack.c.b16 %v771, %v767
      %v812 = vpack.c.b16 %v772, %v768
      %v813 = vpack.c.b16 %v777, %v773
      %v814 = vpack.c.b16 %v778, %v774
      %v815 = vpack.c.b16 %v779, %v775
      %v816 = vpack.c.b16 %v780, %v776
      %v817 = vpack.c.b16 %v785, %v781
      %v818 = vpack.c.b16 %v786, %v782
      %v819 = vpack.c.b16 %v787, %v783
      %v820 = vpack.c.b16 %v788, %v784
      %853 = vmatpush.bf16.msra.mxu0 %v817
      %854 = vmatpush.bf16.msra.mxu0 %v813
      %855 = vmatpush.bf16.msra.mxu0 %v809
      %856 = vmatpush.bf16.msra.mxu0 %v805
      %857 = vmatpush.bf16.msra.mxu0 %v801
      %858 = vmatpush.bf16.msra.mxu0 %v797
      %859 = vmatpush.bf16.msra.mxu0 %v793
      %860 = vmatpush.bf16.msra.mxu0 %v789
      %861 = vmatmul.bf16.gmra.mxu0 %v649
      %v862 = vpop.f32.mrf.mxu0
      %v863 = vadd.f32 %v685, %v862
      %v864 = vpop.f32.mrf.mxu0
      %v865 = vadd.f32 %v685, %v864
      %866 = vmatmul.bf16.gmra.mxu0 %v650
      %v867 = vpop.f32.mrf.mxu0
      %v868 = vadd.f32 %v685, %v867
      %v869 = vpop.f32.mrf.mxu0
      %v870 = vadd.f32 %v685, %v869
      %871 = vdwg.mxu0
      %872 = vmatpush.bf16.msra.mxu0 %v818
      %873 = vmatpush.bf16.msra.mxu0 %v814
      %874 = vmatpush.bf16.msra.mxu0 %v810
      %875 = vmatpush.bf16.msra.mxu0 %v806
      %876 = vmatpush.bf16.msra.mxu0 %v802
      %877 = vmatpush.bf16.msra.mxu0 %v798
      %878 = vmatpush.bf16.msra.mxu0 %v794
      %879 = vmatpush.bf16.msra.mxu0 %v790
      %880 = vmatmul.bf16.gmra.mxu0 %v649
      %v881 = vpop.f32.mrf.mxu0
      %v882 = vadd.f32 %v686, %v881
      %v883 = vpop.f32.mrf.mxu0
      %v884 = vadd.f32 %v686, %v883
      %885 = vmatmul.bf16.gmra.mxu0 %v650
      %v886 = vpop.f32.mrf.mxu0
      %v887 = vadd.f32 %v686, %v886
      %v888 = vpop.f32.mrf.mxu0
      %v889 = vadd.f32 %v686, %v888
      %890 = vdwg.mxu0
      %891 = vmatpush.bf16.msra.mxu0 %v819
      %892 = vmatpush.bf16.msra.mxu0 %v815
      %893 = vmatpush.bf16.msra.mxu0 %v811
      %894 = vmatpush.bf16.msra.mxu0 %v807
      %895 = vmatpush.bf16.msra.mxu0 %v803
      %896 = vmatpush.bf16.msra.mxu0 %v799
      %897 = vmatpush.bf16.msra.mxu0 %v795
      %898 = vmatpush.bf16.msra.mxu0 %v791
      %899 = vmatmul.bf16.gmra.mxu0 %v649
      %v900 = vpop.f32.mrf.mxu0
      %v901 = vadd.f32 %v687, %v900
      %v902 = vpop.f32.mrf.mxu0
      %v903 = vadd.f32 %v687, %v902
      %904 = vmatmul.bf16.gmra.mxu0 %v650
      %v905 = vpop.f32.mrf.mxu0
      %v906 = vadd.f32 %v687, %v905
      %v907 = vpop.f32.mrf.mxu0
      %v908 = vadd.f32 %v687, %v907
      %909 = vdwg.mxu0
      %910 = vmatpush.bf16.msra.mxu0 %v820
      %911 = vmatpush.bf16.msra.mxu0 %v816
      %912 = vmatpush.bf16.msra.mxu0 %v812
      %913 = vmatpush.bf16.msra.mxu0 %v808
      %914 = vmatpush.bf16.msra.mxu0 %v804
      %915 = vmatpush.bf16.msra.mxu0 %v800
      %916 = vmatpush.bf16.msra.mxu0 %v796
      %917 = vmatpush.bf16.msra.mxu0 %v792
      %918 = vmatmul.bf16.gmra.mxu0 %v649
      %v919 = vpop.f32.mrf.mxu0
      %v920 = vadd.f32 %v688, %v919
      %v921 = vpop.f32.mrf.mxu0
      %v922 = vadd.f32 %v688, %v921
      %923 = vmatmul.bf16.gmra.mxu0 %v650
      %v924 = vpop.f32.mrf.mxu0
      %v925 = vadd.f32 %v688, %v924
      %v926 = vpop.f32.mrf.mxu0
      %v927 = vadd.f32 %v688, %v926
      %928 = vdwg.mxu0
      %929 = vst [vmem:[#allocation4] sm:$0xff] %v863
      %930 = vst [vmem:[#allocation4 + $0x8] sm:$0xff] %v882
      %931 = vst [vmem:[#allocation4 + $0x10] sm:$0xff] %v901
      %932 = vst [vmem:[#allocation4 + $0x18] sm:$0xff] %v920
      %933 = vst [vmem:[#allocation4 + $0x20] sm:$0xff] %v865
      %934 = vst [vmem:[#allocation4 + $0x28] sm:$0xff] %v884
      %935 = vst [vmem:[#allocation4 + $0x30] sm:$0xff] %v903
      %936 = vst [vmem:[#allocation4 + $0x38] sm:$0xff] %v922
      %937 = vst [vmem:[#allocation4 + $0x40] sm:$0xff] %v868
      %938 = vst [vmem:[#allocation4 + $0x48] sm:$0xff] %v887
      %939 = vst [vmem:[#allocation4 + $0x50] sm:$0xff] %v906
      %940 = vst [vmem:[#allocation4 + $0x58] sm:$0xff] %v925
      %941 = vst [vmem:[#allocation4 + $0x60] sm:$0xff] %v870
      %942 = vst [vmem:[#allocation4 + $0x68] sm:$0xff] %v889
      %943 = vst [vmem:[#allocation4 + $0x70] sm:$0xff] %v908
      %944 = vst [vmem:[#allocation4 + $0x78] sm:$0xff] %v927
      %v945 = vld [vmem:[#allocation4] sm:$0xff]
      %v946 = vld [vmem:[#allocation4 + $0x8] sm:$0xff]
      %v947 = vld [vmem:[#allocation4 + $0x10] sm:$0xff]
      %v948 = vld [vmem:[#allocation4 + $0x18] sm:$0xff]
      %v949 = vpack.c.bf16 %v433, %v433
      %v950 = vld [vmem:[%s6] sm:$0xff]
      %v951 = vld [vmem:[%s6 + $0x8] sm:$0xff]
      %v952 = vld [vmem:[%s6 + $0x10] sm:$0xff]
      %v953 = vld [vmem:[%s6 + $0x18] sm:$0xff]
      %v954 = vld [vmem:[%s6 + $0x20] sm:$0xff]
      %v955 = vld [vmem:[%s6 + $0x28] sm:$0xff]
      %v956 = vld [vmem:[%s6 + $0x30] sm:$0xff]
      %v957 = vld [vmem:[%s6 + $0x38] sm:$0xff]
      %v958 = vld [vmem:[%s6 + $0x40] sm:$0xff]
      %v959 = vld [vmem:[%s6 + $0x48] sm:$0xff]
      %v960 = vld [vmem:[%s6 + $0x50] sm:$0xff]
      %v961 = vld [vmem:[%s6 + $0x58] sm:$0xff]
      %v962 = vld [vmem:[%s6 + $0x60] sm:$0xff]
      %v963 = vld [vmem:[%s6 + $0x68] sm:$0xff]
      %v964 = vld [vmem:[%s6 + $0x70] sm:$0xff]
      %v965 = vld [vmem:[%s6 + $0x78] sm:$0xff]
      %v966 = vld [vmem:[%s6 + $0x80] sm:$0xff]
      %v967 = vld [vmem:[%s6 + $0x88] sm:$0xff]
      %v968 = vld [vmem:[%s6 + $0x90] sm:$0xff]
      %v969 = vld [vmem:[%s6 + $0x98] sm:$0xff]
      %v970 = vld [vmem:[%s6 + $0xa0] sm:$0xff]
      %v971 = vld [vmem:[%s6 + $0xa8] sm:$0xff]
      %v972 = vld [vmem:[%s6 + $0xb0] sm:$0xff]
      %v973 = vld [vmem:[%s6 + $0xb8] sm:$0xff]
      %v974 = vld [vmem:[%s6 + $0xc0] sm:$0xff]
      %v975 = vld [vmem:[%s6 + $0xc8] sm:$0xff]
      %v976 = vld [vmem:[%s6 + $0xd0] sm:$0xff]
      %v977 = vld [vmem:[%s6 + $0xd8] sm:$0xff]
      %v978 = vld [vmem:[%s6 + $0xe0] sm:$0xff]
      %v979 = vld [vmem:[%s6 + $0xe8] sm:$0xff]
      %v980 = vld [vmem:[%s6 + $0xf0] sm:$0xff]
      %v981 = vld [vmem:[%s6 + $0xf8] sm:$0xff]
      %v1014 = vunpack.c.l.b16 %v950
      %v1015 = vunpack.c.h.b16 %v950
      %v1016 = vunpack.c.l.b16 %v951
      %v1017 = vunpack.c.h.b16 %v951
      %v1018 = vunpack.c.l.b16 %v952
      %v1019 = vunpack.c.h.b16 %v952
      %v1020 = vunpack.c.l.b16 %v953
      %v1021 = vunpack.c.h.b16 %v953
      %v1022 = vunpack.c.l.b16 %v954
      %v1023 = vunpack.c.h.b16 %v954
      %v1024 = vunpack.c.l.b16 %v955
      %v1025 = vunpack.c.h.b16 %v955
      %v1026 = vunpack.c.l.b16 %v956
      %v1027 = vunpack.c.h.b16 %v956
      %v1028 = vunpack.c.l.b16 %v957
      %v1029 = vunpack.c.h.b16 %v957
      %v1030 = vunpack.c.l.b16 %v958
      %v1031 = vunpack.c.h.b16 %v958
      %v1032 = vunpack.c.l.b16 %v959
      %v1033 = vunpack.c.h.b16 %v959
      %v1034 = vunpack.c.l.b16 %v960
      %v1035 = vunpack.c.h.b16 %v960
      %v1036 = vunpack.c.l.b16 %v961
      %v1037 = vunpack.c.h.b16 %v961
      %v1038 = vunpack.c.l.b16 %v962
      %v1039 = vunpack.c.h.b16 %v962
      %v1040 = vunpack.c.l.b16 %v963
      %v1041 = vunpack.c.h.b16 %v963
      %v1042 = vunpack.c.l.b16 %v964
      %v1043 = vunpack.c.h.b16 %v964
      %v1044 = vunpack.c.l.b16 %v965
      %v1045 = vunpack.c.h.b16 %v965
      %v1046 = vunpack.c.l.b16 %v966
      %v1047 = vunpack.c.h.b16 %v966
      %v1048 = vunpack.c.l.b16 %v967
      %v1049 = vunpack.c.h.b16 %v967
      %v1050 = vunpack.c.l.b16 %v968
      %v1051 = vunpack.c.h.b16 %v968
      %v1052 = vunpack.c.l.b16 %v969
      %v1053 = vunpack.c.h.b16 %v969
      %v1054 = vunpack.c.l.b16 %v970
      %v1055 = vunpack.c.h.b16 %v970
      %v1056 = vunpack.c.l.b16 %v971
      %v1057 = vunpack.c.h.b16 %v971
      %v1058 = vunpack.c.l.b16 %v972
      %v1059 = vunpack.c.h.b16 %v972
      %v1060 = vunpack.c.l.b16 %v973
      %v1061 = vunpack.c.h.b16 %v973
      %v1062 = vunpack.c.l.b16 %v974
      %v1063 = vunpack.c.h.b16 %v974
      %v1064 = vunpack.c.l.b16 %v975
      %v1065 = vunpack.c.h.b16 %v975
      %v1066 = vunpack.c.l.b16 %v976
      %v1067 = vunpack.c.h.b16 %v976
      %v1068 = vunpack.c.l.b16 %v977
      %v1069 = vunpack.c.h.b16 %v977
      %v1070 = vunpack.c.l.b16 %v978
      %v1071 = vunpack.c.h.b16 %v978
      %v1072 = vunpack.c.l.b16 %v979
      %v1073 = vunpack.c.h.b16 %v979
      %v1074 = vunpack.c.l.b16 %v980
      %v1075 = vunpack.c.h.b16 %v980
      %v1076 = vunpack.c.l.b16 %v981
      %v1077 = vunpack.c.h.b16 %v981
      %v1078 = vpack.c.b16 %v1018, %v1014
      %v1079 = vpack.c.b16 %v1019, %v1015
      %v1080 = vpack.c.b16 %v1020, %v1016
      %v1081 = vpack.c.b16 %v1021, %v1017
      %v1082 = vpack.c.b16 %v1026, %v1022
      %v1083 = vpack.c.b16 %v1027, %v1023
      %v1084 = vpack.c.b16 %v1028, %v1024
      %v1085 = vpack.c.b16 %v1029, %v1025
      %v1086 = vpack.c.b16 %v1034, %v1030
      %v1087 = vpack.c.b16 %v1035, %v1031
      %v1088 = vpack.c.b16 %v1036, %v1032
      %v1089 = vpack.c.b16 %v1037, %v1033
      %v1090 = vpack.c.b16 %v1042, %v1038
      %v1091 = vpack.c.b16 %v1043, %v1039
      %v1092 = vpack.c.b16 %v1044, %v1040
      %v1093 = vpack.c.b16 %v1045, %v1041
      %v1094 = vpack.c.b16 %v1050, %v1046
      %v1095 = vpack.c.b16 %v1051, %v1047
      %v1096 = vpack.c.b16 %v1052, %v1048
      %v1097 = vpack.c.b16 %v1053, %v1049
      %v1098 = vpack.c.b16 %v1058, %v1054
      %v1099 = vpack.c.b16 %v1059, %v1055
      %v1100 = vpack.c.b16 %v1060, %v1056
      %v1101 = vpack.c.b16 %v1061, %v1057
      %v1102 = vpack.c.b16 %v1066, %v1062
      %v1103 = vpack.c.b16 %v1067, %v1063
      %v1104 = vpack.c.b16 %v1068, %v1064
      %v1105 = vpack.c.b16 %v1069, %v1065
      %v1106 = vpack.c.b16 %v1074, %v1070
      %v1107 = vpack.c.b16 %v1075, %v1071
      %v1108 = vpack.c.b16 %v1076, %v1072
      %v1109 = vpack.c.b16 %v1077, %v1073
      %1142 = vmatpush.bf16.msra.mxu0 %v1106
      %1143 = vmatpush.bf16.msra.mxu0 %v1102
      %1144 = vmatpush.bf16.msra.mxu0 %v1098
      %1145 = vmatpush.bf16.msra.mxu0 %v1094
      %1146 = vmatpush.bf16.msra.mxu0 %v1090
      %1147 = vmatpush.bf16.msra.mxu0 %v1086
      %1148 = vmatpush.bf16.msra.mxu0 %v1082
      %1149 = vmatpush.bf16.msra.mxu0 %v1078
      %1150 = vmatmul.bf16.gmra.mxu0 %v949
      %v1151 = vpop.f32.mrf.mxu0
      %v1152 = vadd.f32 0.0, %v1151
      %v1153 = vpop.f32.mrf.mxu0
      %1154 = vdwg.mxu0
      %1155 = vmatpush.bf16.msra.mxu0 %v1107
      %1156 = vmatpush.bf16.msra.mxu0 %v1103
      %1157 = vmatpush.bf16.msra.mxu0 %v1099
      %1158 = vmatpush.bf16.msra.mxu0 %v1095
      %1159 = vmatpush.bf16.msra.mxu0 %v1091
      %1160 = vmatpush.bf16.msra.mxu0 %v1087
      %1161 = vmatpush.bf16.msra.mxu0 %v1083
      %1162 = vmatpush.bf16.msra.mxu0 %v1079
      %1163 = vmatmul.bf16.gmra.mxu0 %v949
      %v1164 = vpop.f32.mrf.mxu0
      %v1165 = vadd.f32 0.0, %v1164
      %v1166 = vpop.f32.mrf.mxu0
      %1167 = vdwg.mxu0
      %1168 = vmatpush.bf16.msra.mxu0 %v1108
      %1169 = vmatpush.bf16.msra.mxu0 %v1104
      %1170 = vmatpush.bf16.msra.mxu0 %v1100
      %1171 = vmatpush.bf16.msra.mxu0 %v1096
      %1172 = vmatpush.bf16.msra.mxu0 %v1092
      %1173 = vmatpush.bf16.msra.mxu0 %v1088
      %1174 = vmatpush.bf16.msra.mxu0 %v1084
      %1175 = vmatpush.bf16.msra.mxu0 %v1080
      %1176 = vmatmul.bf16.gmra.mxu0 %v949
      %v1177 = vpop.f32.mrf.mxu0
      %v1178 = vadd.f32 0.0, %v1177
      %v1179 = vpop.f32.mrf.mxu0
      %1180 = vdwg.mxu0
      %1181 = vmatpush.bf16.msra.mxu0 %v1109
      %1182 = vmatpush.bf16.msra.mxu0 %v1105
      %1183 = vmatpush.bf16.msra.mxu0 %v1101
      %1184 = vmatpush.bf16.msra.mxu0 %v1097
      %1185 = vmatpush.bf16.msra.mxu0 %v1093
      %1186 = vmatpush.bf16.msra.mxu0 %v1089
      %1187 = vmatpush.bf16.msra.mxu0 %v1085
      %1188 = vmatpush.bf16.msra.mxu0 %v1081
      %1189 = vmatmul.bf16.gmra.mxu0 %v949
      %v1190 = vpop.f32.mrf.mxu0
      %v1191 = vadd.f32 0.0, %v1190
      %v1192 = vpop.f32.mrf.mxu0
      %1193 = vdwg.mxu0
      %v1194 = vadd.f32 %v945, %v1152
      %v1195 = vadd.f32 %v946, %v1165
      %v1196 = vadd.f32 %v947, %v1178
      %v1197 = vadd.f32 %v948, %v1191
      %v1198 = vxor.u32 %v1194, 2147483648
      %v1199 = vxor.u32 %v1195, 2147483648
      %v1200 = vxor.u32 %v1196, 2147483648
      %v1201 = vmul.f32 %v1198, 1.442695
      %v1202 = vpow.pop %v1201
      %v1203 = vmul.f32 %v1199, 1.442695
      %v1204 = vpow.pop %v1203
      %v1205 = vmul.f32 %v1200, 1.442695
      %v1206 = vpow.pop %v1205
      %v1207 = vadd.f32 %v1202, 1.0
      %v1208 = vadd.f32 %v1204, 1.0
      %v1209 = vadd.f32 %v1206, 1.0
      %v1210 = vrcp.pop %v1207
      %v1211 = vmul.f32 %v1207, %v1210
      %v1212 = vsub.f32 1.0, %v1211
      %v1213 = vmul.f32 %v1210, %v1212
      %v1214 = vadd.f32 %v1210, %v1213
      %vm1215 = vweird.f32 %v1207
      %vm1216 = vweird.f32 %v1210
      %vm1217 = vmor %vm1215, %vm1216
      %v1218 = vsel %vm1217, %v1210, %v1214
      %v1219 = vand.u32 2147483647, %v1207
      %vm1220 = vcmp.eq.f32.partialorder %v1219, 8.507059e+37
      %v1221 = vand.u32 %v1207, 2147483648
      %v1222 = vor.u32 1.1754944e-38, %v1221
      %v1223 = vsel %vm1220, %v1222, %v1218
      %v1224 = vmul.f32 1.0, %v1223
      %v1225 = vrcp.pop %v1208
      %v1226 = vmul.f32 %v1208, %v1225
      %v1227 = vsub.f32 1.0, %v1226
      %v1228 = vmul.f32 %v1225, %v1227
      %v1229 = vadd.f32 %v1225, %v1228
      %vm1230 = vweird.f32 %v1208
      %vm1231 = vweird.f32 %v1225
      %vm1232 = vmor %vm1230, %vm1231
      %v1233 = vsel %vm1232, %v1225, %v1229
      %v1234 = vand.u32 2147483647, %v1208
      %vm1235 = vcmp.eq.f32.partialorder %v1234, 8.507059e+37
      %v1236 = vand.u32 %v1208, 2147483648
      %v1237 = vor.u32 1.1754944e-38, %v1236
      %v1238 = vsel %vm1235, %v1237, %v1233
      %v1239 = vmul.f32 1.0, %v1238
      %v1240 = vrcp.pop %v1209
      %v1241 = vmul.f32 %v1209, %v1240
      %v1242 = vsub.f32 1.0, %v1241
      %v1243 = vmul.f32 %v1240, %v1242
      %v1244 = vadd.f32 %v1240, %v1243
      %vm1245 = vweird.f32 %v1209
      %vm1246 = vweird.f32 %v1240
      %vm1247 = vmor %vm1245, %vm1246
      %v1248 = vsel %vm1247, %v1240, %v1244
      %v1249 = vand.u32 2147483647, %v1209
      %vm1250 = vcmp.eq.f32.partialorder %v1249, 8.507059e+37
      %v1251 = vand.u32 %v1209, 2147483648
      %v1252 = vor.u32 1.1754944e-38, %v1251
      %v1253 = vsel %vm1250, %v1252, %v1248
      %v1254 = vmul.f32 1.0, %v1253
      %v1255 = vtanh.pop %v1197
      %v1256 = vmul.f32 %v1239, %v434
      %v1257 = vmul.f32 %v1224, %v1255
      %v1258 = vadd.f32 %v1256, %v1257
      %v1259 = vtanh.pop %v1258
      %v1260 = vmul.f32 %v1254, %v1259
      %v1261 = vpack.c.bf16 %v1260, %v1260
      %1262 = vst [vmem:[#allocation5] sm:$0xf] %v1261
      %s1263 = scalar_lea.vmem [#allocation4], 32
      %v1264 = vld [vmem:[%s1263] sm:$0xff]
      %v1265 = vld [vmem:[%s1263 + $0x8] sm:$0xff]
      %v1266 = vld [vmem:[%s1263 + $0x10] sm:$0xff]
      %v1267 = vld [vmem:[%s1263 + $0x18] sm:$0xff]
      %v1268 = vld [vmem:[%s6] sm:$0xff]
      %v1269 = vld [vmem:[%s6 + $0x8] sm:$0xff]
      %v1270 = vld [vmem:[%s6 + $0x10] sm:$0xff]
      %v1271 = vld [vmem:[%s6 + $0x18] sm:$0xff]
      %v1272 = vld [vmem:[%s6 + $0x20] sm:$0xff]
      %v1273 = vld [vmem:[%s6 + $0x28] sm:$0xff]
      %v1274 = vld [vmem:[%s6 + $0x30] sm:$0xff]
      %v1275 = vld [vmem:[%s6 + $0x38] sm:$0xff]
      %v1276 = vld [vmem:[%s6 + $0x40] sm:$0xff]
      %v1277 = vld [vmem:[%s6 + $0x48] sm:$0xff]
      %v1278 = vld [vmem:[%s6 + $0x50] sm:$0xff]
      %v1279 = vld [vmem:[%s6 + $0x58] sm:$0xff]
      %v1280 = vld [vmem:[%s6 + $0x60] sm:$0xff]
      %v1281 = vld [vmem:[%s6 + $0x68] sm:$0xff]
      %v1282 = vld [vmem:[%s6 + $0x70] sm:$0xff]
      %v1283 = vld [vmem:[%s6 + $0x78] sm:$0xff]
      %v1284 = vld [vmem:[%s6 + $0x80] sm:$0xff]
      %v1285 = vld [vmem:[%s6 + $0x88] sm:$0xff]
      %v1286 = vld [vmem:[%s6 + $0x90] sm:$0xff]
      %v1287 = vld [vmem:[%s6 + $0x98] sm:$0xff]
      %v1288 = vld [vmem:[%s6 + $0xa0] sm:$0xff]
      %v1289 = vld [vmem:[%s6 + $0xa8] sm:$0xff]
      %v1290 = vld [vmem:[%s6 + $0xb0] sm:$0xff]
      %v1291 = vld [vmem:[%s6 + $0xb8] sm:$0xff]
      %v1292 = vld [vmem:[%s6 + $0xc0] sm:$0xff]
      %v1293 = vld [vmem:[%s6 + $0xc8] sm:$0xff]
      %v1294 = vld [vmem:[%s6 + $0xd0] sm:$0xff]
      %v1295 = vld [vmem:[%s6 + $0xd8] sm:$0xff]
      %v1296 = vld [vmem:[%s6 + $0xe0] sm:$0xff]
      %v1297 = vld [vmem:[%s6 + $0xe8] sm:$0xff]
      %v1298 = vld [vmem:[%s6 + $0xf0] sm:$0xff]
      %v1299 = vld [vmem:[%s6 + $0xf8] sm:$0xff]
      %v1332 = vunpack.c.l.b16 %v1268
      %v1333 = vunpack.c.h.b16 %v1268
      %v1334 = vunpack.c.l.b16 %v1269
      %v1335 = vunpack.c.h.b16 %v1269
      %v1336 = vunpack.c.l.b16 %v1270
      %v1337 = vunpack.c.h.b16 %v1270
      %v1338 = vunpack.c.l.b16 %v1271
      %v1339 = vunpack.c.h.b16 %v1271
      %v1340 = vunpack.c.l.b16 %v1272
      %v1341 = vunpack.c.h.b16 %v1272
      %v1342 = vunpack.c.l.b16 %v1273
      %v1343 = vunpack.c.h.b16 %v1273
      %v1344 = vunpack.c.l.b16 %v1274
      %v1345 = vunpack.c.h.b16 %v1274
      %v1346 = vunpack.c.l.b16 %v1275
      %v1347 = vunpack.c.h.b16 %v1275
      %v1348 = vunpack.c.l.b16 %v1276
      %v1349 = vunpack.c.h.b16 %v1276
      %v1350 = vunpack.c.l.b16 %v1277
      %v1351 = vunpack.c.h.b16 %v1277
      %v1352 = vunpack.c.l.b16 %v1278
      %v1353 = vunpack.c.h.b16 %v1278
      %v1354 = vunpack.c.l.b16 %v1279
      %v1355 = vunpack.c.h.b16 %v1279
      %v1356 = vunpack.c.l.b16 %v1280
      %v1357 = vunpack.c.h.b16 %v1280
      %v1358 = vunpack.c.l.b16 %v1281
      %v1359 = vunpack.c.h.b16 %v1281
      %v1360 = vunpack.c.l.b16 %v1282
      %v1361 = vunpack.c.h.b16 %v1282
      %v1362 = vunpack.c.l.b16 %v1283
      %v1363 = vunpack.c.h.b16 %v1283
      %v1364 = vunpack.c.l.b16 %v1284
      %v1365 = vunpack.c.h.b16 %v1284
      %v1366 = vunpack.c.l.b16 %v1285
      %v1367 = vunpack.c.h.b16 %v1285
      %v1368 = vunpack.c.l.b16 %v1286
      %v1369 = vunpack.c.h.b16 %v1286
      %v1370 = vunpack.c.l.b16 %v1287
      %v1371 = vunpack.c.h.b16 %v1287
      %v1372 = vunpack.c.l.b16 %v1288
      %v1373 = vunpack.c.h.b16 %v1288
      %v1374 = vunpack.c.l.b16 %v1289
      %v1375 = vunpack.c.h.b16 %v1289
      %v1376 = vunpack.c.l.b16 %v1290
      %v1377 = vunpack.c.h.b16 %v1290
      %v1378 = vunpack.c.l.b16 %v1291
      %v1379 = vunpack.c.h.b16 %v1291
      %v1380 = vunpack.c.l.b16 %v1292
      %v1381 = vunpack.c.h.b16 %v1292
      %v1382 = vunpack.c.l.b16 %v1293
      %v1383 = vunpack.c.h.b16 %v1293
      %v1384 = vunpack.c.l.b16 %v1294
      %v1385 = vunpack.c.h.b16 %v1294
      %v1386 = vunpack.c.l.b16 %v1295
      %v1387 = vunpack.c.h.b16 %v1295
      %v1388 = vunpack.c.l.b16 %v1296
      %v1389 = vunpack.c.h.b16 %v1296
      %v1390 = vunpack.c.l.b16 %v1297
      %v1391 = vunpack.c.h.b16 %v1297
      %v1392 = vunpack.c.l.b16 %v1298
      %v1393 = vunpack.c.h.b16 %v1298
      %v1394 = vunpack.c.l.b16 %v1299
      %v1395 = vunpack.c.h.b16 %v1299
      %v1396 = vpack.c.b16 %v1336, %v1332
      %v1397 = vpack.c.b16 %v1337, %v1333
      %v1398 = vpack.c.b16 %v1338, %v1334
      %v1399 = vpack.c.b16 %v1339, %v1335
      %v1400 = vpack.c.b16 %v1344, %v1340
      %v1401 = vpack.c.b16 %v1345, %v1341
      %v1402 = vpack.c.b16 %v1346, %v1342
      %v1403 = vpack.c.b16 %v1347, %v1343
      %v1404 = vpack.c.b16 %v1352, %v1348
      %v1405 = vpack.c.b16 %v1353, %v1349
      %v1406 = vpack.c.b16 %v1354, %v1350
      %v1407 = vpack.c.b16 %v1355, %v1351
      %v1408 = vpack.c.b16 %v1360, %v1356
      %v1409 = vpack.c.b16 %v1361, %v1357
      %v1410 = vpack.c.b16 %v1362, %v1358
      %v1411 = vpack.c.b16 %v1363, %v1359
      %v1412 = vpack.c.b16 %v1368, %v1364
      %v1413 = vpack.c.b16 %v1369, %v1365
      %v1414 = vpack.c.b16 %v1370, %v1366
      %v1415 = vpack.c.b16 %v1371, %v1367
      %v1416 = vpack.c.b16 %v1376, %v1372
      %v1417 = vpack.c.b16 %v1377, %v1373
      %v1418 = vpack.c.b16 %v1378, %v1374
      %v1419 = vpack.c.b16 %v1379, %v1375
      %v1420 = vpack.c.b16 %v1384, %v1380
      %v1421 = vpack.c.b16 %v1385, %v1381
      %v1422 = vpack.c.b16 %v1386, %v1382
      %v1423 = vpack.c.b16 %v1387, %v1383
      %v1424 = vpack.c.b16 %v1392, %v1388
      %v1425 = vpack.c.b16 %v1393, %v1389
      %v1426 = vpack.c.b16 %v1394, %v1390
      %v1427 = vpack.c.b16 %v1395, %v1391
      %1460 = vmatpush.bf16.msra.mxu0 %v1424
      %1461 = vmatpush.bf16.msra.mxu0 %v1420
      %1462 = vmatpush.bf16.msra.mxu0 %v1416
      %1463 = vmatpush.bf16.msra.mxu0 %v1412
      %1464 = vmatpush.bf16.msra.mxu0 %v1408
      %1465 = vmatpush.bf16.msra.mxu0 %v1404
      %1466 = vmatpush.bf16.msra.mxu0 %v1400
      %1467 = vmatpush.bf16.msra.mxu0 %v1396
      %1468 = vmatmul.bf16.gmra.mxu0 %v1261
      %v1469 = vpop.f32.mrf.mxu0
      %v1470 = vadd.f32 0.0, %v1469
      %v1471 = vpop.f32.mrf.mxu0
      %1472 = vdwg.mxu0
      %1473 = vmatpush.bf16.msra.mxu0 %v1425
      %1474 = vmatpush.bf16.msra.mxu0 %v1421
      %1475 = vmatpush.bf16.msra.mxu0 %v1417
      %1476 = vmatpush.bf16.msra.mxu0 %v1413
      %1477 = vmatpush.bf16.msra.mxu0 %v1409
      %1478 = vmatpush.bf16.msra.mxu0 %v1405
      %1479 = vmatpush.bf16.msra.mxu0 %v1401
      %1480 = vmatpush.bf16.msra.mxu0 %v1397
      %1481 = vmatmul.bf16.gmra.mxu0 %v1261
      %v1482 = vpop.f32.mrf.mxu0
      %v1483 = vadd.f32 0.0, %v1482
      %v1484 = vpop.f32.mrf.mxu0
      %1485 = vdwg.mxu0
      %1486 = vmatpush.bf16.msra.mxu0 %v1426
      %1487 = vmatpush.bf16.msra.mxu0 %v1422
      %1488 = vmatpush.bf16.msra.mxu0 %v1418
      %1489 = vmatpush.bf16.msra.mxu0 %v1414
      %1490 = vmatpush.bf16.msra.mxu0 %v1410
      %1491 = vmatpush.bf16.msra.mxu0 %v1406
      %1492 = vmatpush.bf16.msra.mxu0 %v1402
      %1493 = vmatpush.bf16.msra.mxu0 %v1398
      %1494 = vmatmul.bf16.gmra.mxu0 %v1261
      %v1495 = vpop.f32.mrf.mxu0
      %v1496 = vadd.f32 0.0, %v1495
      %v1497 = vpop.f32.mrf.mxu0
      %1498 = vdwg.mxu0
      %1499 = vmatpush.bf16.msra.mxu0 %v1427
      %1500 = vmatpush.bf16.msra.mxu0 %v1423
      %1501 = vmatpush.bf16.msra.mxu0 %v1419
      %1502 = vmatpush.bf16.msra.mxu0 %v1415
      %1503 = vmatpush.bf16.msra.mxu0 %v1411
      %1504 = vmatpush.bf16.msra.mxu0 %v1407
      %1505 = vmatpush.bf16.msra.mxu0 %v1403
      %1506 = vmatpush.bf16.msra.mxu0 %v1399
      %1507 = vmatmul.bf16.gmra.mxu0 %v1261
      %v1508 = vpop.f32.mrf.mxu0
      %v1509 = vadd.f32 0.0, %v1508
      %v1510 = vpop.f32.mrf.mxu0
      %1511 = vdwg.mxu0
      %v1512 = vadd.f32 %v1264, %v1470
      %v1513 = vadd.f32 %v1265, %v1483
      %v1514 = vadd.f32 %v1266, %v1496
      %v1515 = vadd.f32 %v1267, %v1509
      %v1516 = vxor.u32 %v1512, 2147483648
      %v1517 = vxor.u32 %v1513, 2147483648
      %v1518 = vxor.u32 %v1514, 2147483648
      %v1519 = vmul.f32 %v1516, 1.442695
      %v1520 = vpow.pop %v1519
      %v1521 = vmul.f32 %v1517, 1.442695
      %v1522 = vpow.pop %v1521
      %v1523 = vmul.f32 %v1518, 1.442695
      %v1524 = vpow.pop %v1523
      %v1525 = vadd.f32 %v1520, 1.0
      %v1526 = vadd.f32 %v1522, 1.0
      %v1527 = vadd.f32 %v1524, 1.0
      %v1528 = vrcp.pop %v1525
      %v1529 = vmul.f32 %v1525, %v1528
      %v1530 = vsub.f32 1.0, %v1529
      %v1531 = vmul.f32 %v1528, %v1530
      %v1532 = vadd.f32 %v1528, %v1531
      %vm1533 = vweird.f32 %v1525
      %vm1534 = vweird.f32 %v1528
      %vm1535 = vmor %vm1533, %vm1534
      %v1536 = vsel %vm1535, %v1528, %v1532
      %v1537 = vand.u32 2147483647, %v1525
      %vm1538 = vcmp.eq.f32.partialorder %v1537, 8.507059e+37
      %v1539 = vand.u32 %v1525, 2147483648
      %v1540 = vor.u32 1.1754944e-38, %v1539
      %v1541 = vsel %vm1538, %v1540, %v1536
      %v1542 = vmul.f32 1.0, %v1541
      %v1543 = vrcp.pop %v1526
      %v1544 = vmul.f32 %v1526, %v1543
      %v1545 = vsub.f32 1.0, %v1544
      %v1546 = vmul.f32 %v1543, %v1545
      %v1547 = vadd.f32 %v1543, %v1546
      %vm1548 = vweird.f32 %v1526
      %vm1549 = vweird.f32 %v1543
      %vm1550 = vmor %vm1548, %vm1549
      %v1551 = vsel %vm1550, %v1543, %v1547
      %v1552 = vand.u32 2147483647, %v1526
      %vm1553 = vcmp.eq.f32.partialorder %v1552, 8.507059e+37
      %v1554 = vand.u32 %v1526, 2147483648
      %v1555 = vor.u32 1.1754944e-38, %v1554
      %v1556 = vsel %vm1553, %v1555, %v1551
      %v1557 = vmul.f32 1.0, %v1556
      %v1558 = vrcp.pop %v1527
      %v1559 = vmul.f32 %v1527, %v1558
      %v1560 = vsub.f32 1.0, %v1559
      %v1561 = vmul.f32 %v1558, %v1560
      %v1562 = vadd.f32 %v1558, %v1561
      %vm1563 = vweird.f32 %v1527
      %vm1564 = vweird.f32 %v1558
      %vm1565 = vmor %vm1563, %vm1564
      %v1566 = vsel %vm1565, %v1558, %v1562
      %v1567 = vand.u32 2147483647, %v1527
      %vm1568 = vcmp.eq.f32.partialorder %v1567, 8.507059e+37
      %v1569 = vand.u32 %v1527, 2147483648
      %v1570 = vor.u32 1.1754944e-38, %v1569
      %v1571 = vsel %vm1568, %v1570, %v1566
      %v1572 = vmul.f32 1.0, %v1571
      %v1573 = vtanh.pop %v1515
      %v1574 = vmul.f32 %v1557, %v1258
      %v1575 = vmul.f32 %v1542, %v1573
      %v1576 = vadd.f32 %v1574, %v1575
      %v1577 = vtanh.pop %v1576
      %v1578 = vmul.f32 %v1572, %v1577
      %v1579 = vpack.c.bf16 %v1578, %v1578
      %s1580 = scalar_lea.vmem [#allocation5], 4
      %1581 = vst [vmem:[%s1580] sm:$0xf] %v1579
      %s1582 = scalar_lea.vmem [#allocation4], 64
      %v1583 = vld [vmem:[%s1582] sm:$0xff]
      %v1584 = vld [vmem:[%s1582 + $0x8] sm:$0xff]
      %v1585 = vld [vmem:[%s1582 + $0x10] sm:$0xff]
      %v1586 = vld [vmem:[%s1582 + $0x18] sm:$0xff]
      %v1587 = vld [vmem:[%s6] sm:$0xff]
      %v1588 = vld [vmem:[%s6 + $0x8] sm:$0xff]
      %v1589 = vld [vmem:[%s6 + $0x10] sm:$0xff]
      %v1590 = vld [vmem:[%s6 + $0x18] sm:$0xff]
      %v1591 = vld [vmem:[%s6 + $0x20] sm:$0xff]
      %v1592 = vld [vmem:[%s6 + $0x28] sm:$0xff]
      %v1593 = vld [vmem:[%s6 + $0x30] sm:$0xff]
      %v1594 = vld [vmem:[%s6 + $0x38] sm:$0xff]
      %v1595 = vld [vmem:[%s6 + $0x40] sm:$0xff]
      %v1596 = vld [vmem:[%s6 + $0x48] sm:$0xff]
      %v1597 = vld [vmem:[%s6 + $0x50] sm:$0xff]
      %v1598 = vld [vmem:[%s6 + $0x58] sm:$0xff]
      %v1599 = vld [vmem:[%s6 + $0x60] sm:$0xff]
      %v1600 = vld [vmem:[%s6 + $0x68] sm:$0xff]
      %v1601 = vld [vmem:[%s6 + $0x70] sm:$0xff]
      %v1602 = vld [vmem:[%s6 + $0x78] sm:$0xff]
      %v1603 = vld [vmem:[%s6 + $0x80] sm:$0xff]
      %v1604 = vld [vmem:[%s6 + $0x88] sm:$0xff]
      %v1605 = vld [vmem:[%s6 + $0x90] sm:$0xff]
      %v1606 = vld [vmem:[%s6 + $0x98] sm:$0xff]
      %v1607 = vld [vmem:[%s6 + $0xa0] sm:$0xff]
      %v1608 = vld [vmem:[%s6 + $0xa8] sm:$0xff]
      %v1609 = vld [vmem:[%s6 + $0xb0] sm:$0xff]
      %v1610 = vld [vmem:[%s6 + $0xb8] sm:$0xff]
      %v1611 = vld [vmem:[%s6 + $0xc0] sm:$0xff]
      %v1612 = vld [vmem:[%s6 + $0xc8] sm:$0xff]
      %v1613 = vld [vmem:[%s6 + $0xd0] sm:$0xff]
      %v1614 = vld [vmem:[%s6 + $0xd8] sm:$0xff]
      %v1615 = vld [vmem:[%s6 + $0xe0] sm:$0xff]
      %v1616 = vld [vmem:[%s6 + $0xe8] sm:$0xff]
      %v1617 = vld [vmem:[%s6 + $0xf0] sm:$0xff]
      %v1618 = vld [vmem:[%s6 + $0xf8] sm:$0xff]
      %v1651 = vunpack.c.l.b16 %v1587
      %v1652 = vunpack.c.h.b16 %v1587
      %v1653 = vunpack.c.l.b16 %v1588
      %v1654 = vunpack.c.h.b16 %v1588
      %v1655 = vunpack.c.l.b16 %v1589
      %v1656 = vunpack.c.h.b16 %v1589
      %v1657 = vunpack.c.l.b16 %v1590
      %v1658 = vunpack.c.h.b16 %v1590
      %v1659 = vunpack.c.l.b16 %v1591
      %v1660 = vunpack.c.h.b16 %v1591
      %v1661 = vunpack.c.l.b16 %v1592
      %v1662 = vunpack.c.h.b16 %v1592
      %v1663 = vunpack.c.l.b16 %v1593
      %v1664 = vunpack.c.h.b16 %v1593
      %v1665 = vunpack.c.l.b16 %v1594
      %v1666 = vunpack.c.h.b16 %v1594
      %v1667 = vunpack.c.l.b16 %v1595
      %v1668 = vunpack.c.h.b16 %v1595
      %v1669 = vunpack.c.l.b16 %v1596
      %v1670 = vunpack.c.h.b16 %v1596
      %v1671 = vunpack.c.l.b16 %v1597
      %v1672 = vunpack.c.h.b16 %v1597
      %v1673 = vunpack.c.l.b16 %v1598
      %v1674 = vunpack.c.h.b16 %v1598
      %v1675 = vunpack.c.l.b16 %v1599
      %v1676 = vunpack.c.h.b16 %v1599
      %v1677 = vunpack.c.l.b16 %v1600
      %v1678 = vunpack.c.h.b16 %v1600
      %v1679 = vunpack.c.l.b16 %v1601
      %v1680 = vunpack.c.h.b16 %v1601
      %v1681 = vunpack.c.l.b16 %v1602
      %v1682 = vunpack.c.h.b16 %v1602
      %v1683 = vunpack.c.l.b16 %v1603
      %v1684 = vunpack.c.h.b16 %v1603
      %v1685 = vunpack.c.l.b16 %v1604
      %v1686 = vunpack.c.h.b16 %v1604
      %v1687 = vunpack.c.l.b16 %v1605
      %v1688 = vunpack.c.h.b16 %v1605
      %v1689 = vunpack.c.l.b16 %v1606
      %v1690 = vunpack.c.h.b16 %v1606
      %v1691 = vunpack.c.l.b16 %v1607
      %v1692 = vunpack.c.h.b16 %v1607
      %v1693 = vunpack.c.l.b16 %v1608
      %v1694 = vunpack.c.h.b16 %v1608
      %v1695 = vunpack.c.l.b16 %v1609
      %v1696 = vunpack.c.h.b16 %v1609
      %v1697 = vunpack.c.l.b16 %v1610
      %v1698 = vunpack.c.h.b16 %v1610
      %v1699 = vunpack.c.l.b16 %v1611
      %v1700 = vunpack.c.h.b16 %v1611
      %v1701 = vunpack.c.l.b16 %v1612
      %v1702 = vunpack.c.h.b16 %v1612
      %v1703 = vunpack.c.l.b16 %v1613
      %v1704 = vunpack.c.h.b16 %v1613
      %v1705 = vunpack.c.l.b16 %v1614
      %v1706 = vunpack.c.h.b16 %v1614
      %v1707 = vunpack.c.l.b16 %v1615
      %v1708 = vunpack.c.h.b16 %v1615
      %v1709 = vunpack.c.l.b16 %v1616
      %v1710 = vunpack.c.h.b16 %v1616
      %v1711 = vunpack.c.l.b16 %v1617
      %v1712 = vunpack.c.h.b16 %v1617
      %v1713 = vunpack.c.l.b16 %v1618
      %v1714 = vunpack.c.h.b16 %v1618
      %v1715 = vpack.c.b16 %v1655, %v1651
      %v1716 = vpack.c.b16 %v1656, %v1652
      %v1717 = vpack.c.b16 %v1657, %v1653
      %v1718 = vpack.c.b16 %v1658, %v1654
      %v1719 = vpack.c.b16 %v1663, %v1659
      %v1720 = vpack.c.b16 %v1664, %v1660
      %v1721 = vpack.c.b16 %v1665, %v1661
      %v1722 = vpack.c.b16 %v1666, %v1662
      %v1723 = vpack.c.b16 %v1671, %v1667
      %v1724 = vpack.c.b16 %v1672, %v1668
      %v1725 = vpack.c.b16 %v1673, %v1669
      %v1726 = vpack.c.b16 %v1674, %v1670
      %v1727 = vpack.c.b16 %v1679, %v1675
      %v1728 = vpack.c.b16 %v1680, %v1676
      %v1729 = vpack.c.b16 %v1681, %v1677
      %v1730 = vpack.c.b16 %v1682, %v1678
      %v1731 = vpack.c.b16 %v1687, %v1683
      %v1732 = vpack.c.b16 %v1688, %v1684
      %v1733 = vpack.c.b16 %v1689, %v1685
      %v1734 = vpack.c.b16 %v1690, %v1686
      %v1735 = vpack.c.b16 %v1695, %v1691
      %v1736 = vpack.c.b16 %v1696, %v1692
      %v1737 = vpack.c.b16 %v1697, %v1693
      %v1738 = vpack.c.b16 %v1698, %v1694
      %v1739 = vpack.c.b16 %v1703, %v1699
      %v1740 = vpack.c.b16 %v1704, %v1700
      %v1741 = vpack.c.b16 %v1705, %v1701
      %v1742 = vpack.c.b16 %v1706, %v1702
      %v1743 = vpack.c.b16 %v1711, %v1707
      %v1744 = vpack.c.b16 %v1712, %v1708
      %v1745 = vpack.c.b16 %v1713, %v1709
      %v1746 = vpack.c.b16 %v1714, %v1710
      %1779 = vmatpush.bf16.msra.mxu0 %v1743
      %1780 = vmatpush.bf16.msra.mxu0 %v1739
      %1781 = vmatpush.bf16.msra.mxu0 %v1735
      %1782 = vmatpush.bf16.msra.mxu0 %v1731
      %1783 = vmatpush.bf16.msra.mxu0 %v1727
      %1784 = vmatpush.bf16.msra.mxu0 %v1723
      %1785 = vmatpush.bf16.msra.mxu0 %v1719
      %1786 = vmatpush.bf16.msra.mxu0 %v1715
      %1787 = vmatmul.bf16.gmra.mxu0 %v1579
      %v1788 = vpop.f32.mrf.mxu0
      %v1789 = vadd.f32 0.0, %v1788
      %v1790 = vpop.f32.mrf.mxu0
      %1791 = vdwg.mxu0
      %1792 = vmatpush.bf16.msra.mxu0 %v1744
      %1793 = vmatpush.bf16.msra.mxu0 %v1740
      %1794 = vmatpush.bf16.msra.mxu0 %v1736
      %1795 = vmatpush.bf16.msra.mxu0 %v1732
      %1796 = vmatpush.bf16.msra.mxu0 %v1728
      %1797 = vmatpush.bf16.msra.mxu0 %v1724
      %1798 = vmatpush.bf16.msra.mxu0 %v1720
      %1799 = vmatpush.bf16.msra.mxu0 %v1716
      %1800 = vmatmul.bf16.gmra.mxu0 %v1579
      %v1801 = vpop.f32.mrf.mxu0
      %v1802 = vadd.f32 0.0, %v1801
      %v1803 = vpop.f32.mrf.mxu0
      %1804 = vdwg.mxu0
      %1805 = vmatpush.bf16.msra.mxu0 %v1745
      %1806 = vmatpush.bf16.msra.mxu0 %v1741
      %1807 = vmatpush.bf16.msra.mxu0 %v1737
      %1808 = vmatpush.bf16.msra.mxu0 %v1733
      %1809 = vmatpush.bf16.msra.mxu0 %v1729
      %1810 = vmatpush.bf16.msra.mxu0 %v1725
      %1811 = vmatpush.bf16.msra.mxu0 %v1721
      %1812 = vmatpush.bf16.msra.mxu0 %v1717
      %1813 = vmatmul.bf16.gmra.mxu0 %v1579
      %v1814 = vpop.f32.mrf.mxu0
      %v1815 = vadd.f32 0.0, %v1814
      %v1816 = vpop.f32.mrf.mxu0
      %1817 = vdwg.mxu0
      %1818 = vmatpush.bf16.msra.mxu0 %v1746
      %1819 = vmatpush.bf16.msra.mxu0 %v1742
      %1820 = vmatpush.bf16.msra.mxu0 %v1738
      %1821 = vmatpush.bf16.msra.mxu0 %v1734
      %1822 = vmatpush.bf16.msra.mxu0 %v1730
      %1823 = vmatpush.bf16.msra.mxu0 %v1726
      %1824 = vmatpush.bf16.msra.mxu0 %v1722
      %1825 = vmatpush.bf16.msra.mxu0 %v1718
      %1826 = vmatmul.bf16.gmra.mxu0 %v1579
      %v1827 = vpop.f32.mrf.mxu0
      %v1828 = vadd.f32 0.0, %v1827
      %v1829 = vpop.f32.mrf.mxu0
      %1830 = vdwg.mxu0
      %v1831 = vadd.f32 %v1583, %v1789
      %v1832 = vadd.f32 %v1584, %v1802
      %v1833 = vadd.f32 %v1585, %v1815
      %v1834 = vadd.f32 %v1586, %v1828
      %v1835 = vxor.u32 %v1831, 2147483648
      %v1836 = vxor.u32 %v1832, 2147483648
      %v1837 = vxor.u32 %v1833, 2147483648
      %v1838 = vmul.f32 %v1835, 1.442695
      %v1839 = vpow.pop %v1838
      %v1840 = vmul.f32 %v1836, 1.442695
      %v1841 = vpow.pop %v1840
      %v1842 = vmul.f32 %v1837, 1.442695
      %v1843 = vpow.pop %v1842
      %v1844 = vadd.f32 %v1839, 1.0
      %v1845 = vadd.f32 %v1841, 1.0
      %v1846 = vadd.f32 %v1843, 1.0
      %v1847 = vrcp.pop %v1844
      %v1848 = vmul.f32 %v1844, %v1847
      %v1849 = vsub.f32 1.0, %v1848
      %v1850 = vmul.f32 %v1847, %v1849
      %v1851 = vadd.f32 %v1847, %v1850
      %vm1852 = vweird.f32 %v1844
      %vm1853 = vweird.f32 %v1847
      %vm1854 = vmor %vm1852, %vm1853
      %v1855 = vsel %vm1854, %v1847, %v1851
      %v1856 = vand.u32 2147483647, %v1844
      %vm1857 = vcmp.eq.f32.partialorder %v1856, 8.507059e+37
      %v1858 = vand.u32 %v1844, 2147483648
      %v1859 = vor.u32 1.1754944e-38, %v1858
      %v1860 = vsel %vm1857, %v1859, %v1855
      %v1861 = vmul.f32 1.0, %v1860
      %v1862 = vrcp.pop %v1845
      %v1863 = vmul.f32 %v1845, %v1862
      %v1864 = vsub.f32 1.0, %v1863
      %v1865 = vmul.f32 %v1862, %v1864
      %v1866 = vadd.f32 %v1862, %v1865
      %vm1867 = vweird.f32 %v1845
      %vm1868 = vweird.f32 %v1862
      %vm1869 = vmor %vm1867, %vm1868
      %v1870 = vsel %vm1869, %v1862, %v1866
      %v1871 = vand.u32 2147483647, %v1845
      %vm1872 = vcmp.eq.f32.partialorder %v1871, 8.507059e+37
      %v1873 = vand.u32 %v1845, 2147483648
      %v1874 = vor.u32 1.1754944e-38, %v1873
      %v1875 = vsel %vm1872, %v1874, %v1870
      %v1876 = vmul.f32 1.0, %v1875
      %v1877 = vrcp.pop %v1846
      %v1878 = vmul.f32 %v1846, %v1877
      %v1879 = vsub.f32 1.0, %v1878
      %v1880 = vmul.f32 %v1877, %v1879
      %v1881 = vadd.f32 %v1877, %v1880
      %vm1882 = vweird.f32 %v1846
      %vm1883 = vweird.f32 %v1877
      %vm1884 = vmor %vm1882, %vm1883
      %v1885 = vsel %vm1884, %v1877, %v1881
      %v1886 = vand.u32 2147483647, %v1846
      %vm1887 = vcmp.eq.f32.partialorder %v1886, 8.507059e+37
      %v1888 = vand.u32 %v1846, 2147483648
      %v1889 = vor.u32 1.1754944e-38, %v1888
      %v1890 = vsel %vm1887, %v1889, %v1885
      %v1891 = vmul.f32 1.0, %v1890
      %v1892 = vtanh.pop %v1834
      %v1893 = vmul.f32 %v1876, %v1576
      %v1894 = vmul.f32 %v1861, %v1892
      %v1895 = vadd.f32 %v1893, %v1894
      %v1896 = vtanh.pop %v1895
      %v1897 = vmul.f32 %v1891, %v1896
      %v1898 = vpack.c.bf16 %v1897, %v1897
      %s1899 = scalar_lea.vmem [#allocation5], 8
      %1900 = vst [vmem:[%s1899] sm:$0xf] %v1898
      %s1901 = scalar_lea.vmem [#allocation4], 96
      %v1902 = vld [vmem:[%s1901] sm:$0xff]
      %v1903 = vld [vmem:[%s1901 + $0x8] sm:$0xff]
      %v1904 = vld [vmem:[%s1901 + $0x10] sm:$0xff]
      %v1905 = vld [vmem:[%s1901 + $0x18] sm:$0xff]
      %v1906 = vld [vmem:[%s6] sm:$0xff]
      %v1907 = vld [vmem:[%s6 + $0x8] sm:$0xff]
      %v1908 = vld [vmem:[%s6 + $0x10] sm:$0xff]
      %v1909 = vld [vmem:[%s6 + $0x18] sm:$0xff]
      %v1910 = vld [vmem:[%s6 + $0x20] sm:$0xff]
      %v1911 = vld [vmem:[%s6 + $0x28] sm:$0xff]
      %v1912 = vld [vmem:[%s6 + $0x30] sm:$0xff]
      %v1913 = vld [vmem:[%s6 + $0x38] sm:$0xff]
      %v1914 = vld [vmem:[%s6 + $0x40] sm:$0xff]
      %v1915 = vld [vmem:[%s6 + $0x48] sm:$0xff]
      %v1916 = vld [vmem:[%s6 + $0x50] sm:$0xff]
      %v1917 = vld [vmem:[%s6 + $0x58] sm:$0xff]
      %v1918 = vld [vmem:[%s6 + $0x60] sm:$0xff]
      %v1919 = vld [vmem:[%s6 + $0x68] sm:$0xff]
      %v1920 = vld [vmem:[%s6 + $0x70] sm:$0xff]
      %v1921 = vld [vmem:[%s6 + $0x78] sm:$0xff]
      %v1922 = vld [vmem:[%s6 + $0x80] sm:$0xff]
      %v1923 = vld [vmem:[%s6 + $0x88] sm:$0xff]
      %v1924 = vld [vmem:[%s6 + $0x90] sm:$0xff]
      %v1925 = vld [vmem:[%s6 + $0x98] sm:$0xff]
      %v1926 = vld [vmem:[%s6 + $0xa0] sm:$0xff]
      %v1927 = vld [vmem:[%s6 + $0xa8] sm:$0xff]
      %v1928 = vld [vmem:[%s6 + $0xb0] sm:$0xff]
      %v1929 = vld [vmem:[%s6 + $0xb8] sm:$0xff]
      %v1930 = vld [vmem:[%s6 + $0xc0] sm:$0xff]
      %v1931 = vld [vmem:[%s6 + $0xc8] sm:$0xff]
      %v1932 = vld [vmem:[%s6 + $0xd0] sm:$0xff]
      %v1933 = vld [vmem:[%s6 + $0xd8] sm:$0xff]
      %v1934 = vld [vmem:[%s6 + $0xe0] sm:$0xff]
      %v1935 = vld [vmem:[%s6 + $0xe8] sm:$0xff]
      %v1936 = vld [vmem:[%s6 + $0xf0] sm:$0xff]
      %v1937 = vld [vmem:[%s6 + $0xf8] sm:$0xff]
      %v1970 = vunpack.c.l.b16 %v1906
      %v1971 = vunpack.c.h.b16 %v1906
      %v1972 = vunpack.c.l.b16 %v1907
      %v1973 = vunpack.c.h.b16 %v1907
      %v1974 = vunpack.c.l.b16 %v1908
      %v1975 = vunpack.c.h.b16 %v1908
      %v1976 = vunpack.c.l.b16 %v1909
      %v1977 = vunpack.c.h.b16 %v1909
      %v1978 = vunpack.c.l.b16 %v1910
      %v1979 = vunpack.c.h.b16 %v1910
      %v1980 = vunpack.c.l.b16 %v1911
      %v1981 = vunpack.c.h.b16 %v1911
      %v1982 = vunpack.c.l.b16 %v1912
      %v1983 = vunpack.c.h.b16 %v1912
      %v1984 = vunpack.c.l.b16 %v1913
      %v1985 = vunpack.c.h.b16 %v1913
      %v1986 = vunpack.c.l.b16 %v1914
      %v1987 = vunpack.c.h.b16 %v1914
      %v1988 = vunpack.c.l.b16 %v1915
      %v1989 = vunpack.c.h.b16 %v1915
      %v1990 = vunpack.c.l.b16 %v1916
      %v1991 = vunpack.c.h.b16 %v1916
      %v1992 = vunpack.c.l.b16 %v1917
      %v1993 = vunpack.c.h.b16 %v1917
      %v1994 = vunpack.c.l.b16 %v1918
      %v1995 = vunpack.c.h.b16 %v1918
      %v1996 = vunpack.c.l.b16 %v1919
      %v1997 = vunpack.c.h.b16 %v1919
      %v1998 = vunpack.c.l.b16 %v1920
      %v1999 = vunpack.c.h.b16 %v1920
      %v2000 = vunpack.c.l.b16 %v1921
      %v2001 = vunpack.c.h.b16 %v1921
      %v2002 = vunpack.c.l.b16 %v1922
      %v2003 = vunpack.c.h.b16 %v1922
      %v2004 = vunpack.c.l.b16 %v1923
      %v2005 = vunpack.c.h.b16 %v1923
      %v2006 = vunpack.c.l.b16 %v1924
      %v2007 = vunpack.c.h.b16 %v1924
      %v2008 = vunpack.c.l.b16 %v1925
      %v2009 = vunpack.c.h.b16 %v1925
      %v2010 = vunpack.c.l.b16 %v1926
      %v2011 = vunpack.c.h.b16 %v1926
      %v2012 = vunpack.c.l.b16 %v1927
      %v2013 = vunpack.c.h.b16 %v1927
      %v2014 = vunpack.c.l.b16 %v1928
      %v2015 = vunpack.c.h.b16 %v1928
      %v2016 = vunpack.c.l.b16 %v1929
      %v2017 = vunpack.c.h.b16 %v1929
      %v2018 = vunpack.c.l.b16 %v1930
      %v2019 = vunpack.c.h.b16 %v1930
      %v2020 = vunpack.c.l.b16 %v1931
      %v2021 = vunpack.c.h.b16 %v1931
      %v2022 = vunpack.c.l.b16 %v1932
      %v2023 = vunpack.c.h.b16 %v1932
      %v2024 = vunpack.c.l.b16 %v1933
      %v2025 = vunpack.c.h.b16 %v1933
      %v2026 = vunpack.c.l.b16 %v1934
      %v2027 = vunpack.c.h.b16 %v1934
      %v2028 = vunpack.c.l.b16 %v1935
      %v2029 = vunpack.c.h.b16 %v1935
      %v2030 = vunpack.c.l.b16 %v1936
      %v2031 = vunpack.c.h.b16 %v1936
      %v2032 = vunpack.c.l.b16 %v1937
      %v2033 = vunpack.c.h.b16 %v1937
      %v2034 = vpack.c.b16 %v1974, %v1970
      %v2035 = vpack.c.b16 %v1975, %v1971
      %v2036 = vpack.c.b16 %v1976, %v1972
      %v2037 = vpack.c.b16 %v1977, %v1973
      %v2038 = vpack.c.b16 %v1982, %v1978
      %v2039 = vpack.c.b16 %v1983, %v1979
      %v2040 = vpack.c.b16 %v1984, %v1980
      %v2041 = vpack.c.b16 %v1985, %v1981
      %v2042 = vpack.c.b16 %v1990, %v1986
      %v2043 = vpack.c.b16 %v1991, %v1987
      %v2044 = vpack.c.b16 %v1992, %v1988
      %v2045 = vpack.c.b16 %v1993, %v1989
      %v2046 = vpack.c.b16 %v1998, %v1994
      %v2047 = vpack.c.b16 %v1999, %v1995
      %v2048 = vpack.c.b16 %v2000, %v1996
      %v2049 = vpack.c.b16 %v2001, %v1997
      %v2050 = vpack.c.b16 %v2006, %v2002
      %v2051 = vpack.c.b16 %v2007, %v2003
      %v2052 = vpack.c.b16 %v2008, %v2004
      %v2053 = vpack.c.b16 %v2009, %v2005
      %v2054 = vpack.c.b16 %v2014, %v2010
      %v2055 = vpack.c.b16 %v2015, %v2011
      %v2056 = vpack.c.b16 %v2016, %v2012
      %v2057 = vpack.c.b16 %v2017, %v2013
      %v2058 = vpack.c.b16 %v2022, %v2018
      %v2059 = vpack.c.b16 %v2023, %v2019
      %v2060 = vpack.c.b16 %v2024, %v2020
      %v2061 = vpack.c.b16 %v2025, %v2021
      %v2062 = vpack.c.b16 %v2030, %v2026
      %v2063 = vpack.c.b16 %v2031, %v2027
      %v2064 = vpack.c.b16 %v2032, %v2028
      %v2065 = vpack.c.b16 %v2033, %v2029
      %2098 = vmatpush.bf16.msra.mxu0 %v2062
      %2099 = vmatpush.bf16.msra.mxu0 %v2058
      %2100 = vmatpush.bf16.msra.mxu0 %v2054
      %2101 = vmatpush.bf16.msra.mxu0 %v2050
      %2102 = vmatpush.bf16.msra.mxu0 %v2046
      %2103 = vmatpush.bf16.msra.mxu0 %v2042
      %2104 = vmatpush.bf16.msra.mxu0 %v2038
      %2105 = vmatpush.bf16.msra.mxu0 %v2034
      %2106 = vmatmul.bf16.gmra.mxu0 %v1898
      %v2107 = vpop.f32.mrf.mxu0
      %v2108 = vadd.f32 0.0, %v2107
      %v2109 = vpop.f32.mrf.mxu0
      %2110 = vdwg.mxu0
      %2111 = vmatpush.bf16.msra.mxu0 %v2063
      %2112 = vmatpush.bf16.msra.mxu0 %v2059
      %2113 = vmatpush.bf16.msra.mxu0 %v2055
      %2114 = vmatpush.bf16.msra.mxu0 %v2051
      %2115 = vmatpush.bf16.msra.mxu0 %v2047
      %2116 = vmatpush.bf16.msra.mxu0 %v2043
      %2117 = vmatpush.bf16.msra.mxu0 %v2039
      %2118 = vmatpush.bf16.msra.mxu0 %v2035
      %2119 = vmatmul.bf16.gmra.mxu0 %v1898
      %v2120 = vpop.f32.mrf.mxu0
      %v2121 = vadd.f32 0.0, %v2120
      %v2122 = vpop.f32.mrf.mxu0
      %2123 = vdwg.mxu0
      %2124 = vmatpush.bf16.msra.mxu0 %v2064
      %2125 = vmatpush.bf16.msra.mxu0 %v2060
      %2126 = vmatpush.bf16.msra.mxu0 %v2056
      %2127 = vmatpush.bf16.msra.mxu0 %v2052
      %2128 = vmatpush.bf16.msra.mxu0 %v2048
      %2129 = vmatpush.bf16.msra.mxu0 %v2044
      %2130 = vmatpush.bf16.msra.mxu0 %v2040
      %2131 = vmatpush.bf16.msra.mxu0 %v2036
      %2132 = vmatmul.bf16.gmra.mxu0 %v1898
      %v2133 = vpop.f32.mrf.mxu0
      %v2134 = vadd.f32 0.0, %v2133
      %v2135 = vpop.f32.mrf.mxu0
      %2136 = vdwg.mxu0
      %2137 = vmatpush.bf16.msra.mxu0 %v2065
      %2138 = vmatpush.bf16.msra.mxu0 %v2061
      %2139 = vmatpush.bf16.msra.mxu0 %v2057
      %2140 = vmatpush.bf16.msra.mxu0 %v2053
      %2141 = vmatpush.bf16.msra.mxu0 %v2049
      %2142 = vmatpush.bf16.msra.mxu0 %v2045
      %2143 = vmatpush.bf16.msra.mxu0 %v2041
      %2144 = vmatpush.bf16.msra.mxu0 %v2037
      %2145 = vmatmul.bf16.gmra.mxu0 %v1898
      %v2146 = vpop.f32.mrf.mxu0
      %v2147 = vadd.f32 0.0, %v2146
      %v2148 = vpop.f32.mrf.mxu0
      %2149 = vdwg.mxu0
      %v2150 = vadd.f32 %v1902, %v2108
      %v2151 = vadd.f32 %v1903, %v2121
      %v2152 = vadd.f32 %v1904, %v2134
      %v2153 = vadd.f32 %v1905, %v2147
      %v2154 = vxor.u32 %v2150, 2147483648
      %v2155 = vxor.u32 %v2151, 2147483648
      %v2156 = vxor.u32 %v2152, 2147483648
      %v2157 = vmul.f32 %v2154, 1.442695
      %v2158 = vpow.pop %v2157
      %v2159 = vmul.f32 %v2155, 1.442695
      %v2160 = vpow.pop %v2159
      %v2161 = vmul.f32 %v2156, 1.442695
      %v2162 = vpow.pop %v2161
      %v2163 = vadd.f32 %v2158, 1.0
      %v2164 = vadd.f32 %v2160, 1.0
      %v2165 = vadd.f32 %v2162, 1.0
      %v2166 = vrcp.pop %v2163
      %v2167 = vmul.f32 %v2163, %v2166
      %v2168 = vsub.f32 1.0, %v2167
      %v2169 = vmul.f32 %v2166, %v2168
      %v2170 = vadd.f32 %v2166, %v2169
      %vm2171 = vweird.f32 %v2163
      %vm2172 = vweird.f32 %v2166
      %vm2173 = vmor %vm2171, %vm2172
      %v2174 = vsel %vm2173, %v2166, %v2170
      %v2175 = vand.u32 2147483647, %v2163
      %vm2176 = vcmp.eq.f32.partialorder %v2175, 8.507059e+37
      %v2177 = vand.u32 %v2163, 2147483648
      %v2178 = vor.u32 1.1754944e-38, %v2177
      %v2179 = vsel %vm2176, %v2178, %v2174
      %v2180 = vmul.f32 1.0, %v2179
      %v2181 = vrcp.pop %v2164
      %v2182 = vmul.f32 %v2164, %v2181
      %v2183 = vsub.f32 1.0, %v2182
      %v2184 = vmul.f32 %v2181, %v2183
      %v2185 = vadd.f32 %v2181, %v2184
      %vm2186 = vweird.f32 %v2164
      %vm2187 = vweird.f32 %v2181
      %vm2188 = vmor %vm2186, %vm2187
      %v2189 = vsel %vm2188, %v2181, %v2185
      %v2190 = vand.u32 2147483647, %v2164
      %vm2191 = vcmp.eq.f32.partialorder %v2190, 8.507059e+37
      %v2192 = vand.u32 %v2164, 2147483648
      %v2193 = vor.u32 1.1754944e-38, %v2192
      %v2194 = vsel %vm2191, %v2193, %v2189
      %v2195 = vmul.f32 1.0, %v2194
      %v2196 = vrcp.pop %v2165
      %v2197 = vmul.f32 %v2165, %v2196
      %v2198 = vsub.f32 1.0, %v2197
      %v2199 = vmul.f32 %v2196, %v2198
      %v2200 = vadd.f32 %v2196, %v2199
      %vm2201 = vweird.f32 %v2165
      %vm2202 = vweird.f32 %v2196
      %vm2203 = vmor %vm2201, %vm2202
      %v2204 = vsel %vm2203, %v2196, %v2200
      %v2205 = vand.u32 2147483647, %v2165
      %vm2206 = vcmp.eq.f32.partialorder %v2205, 8.507059e+37
      %v2207 = vand.u32 %v2165, 2147483648
      %v2208 = vor.u32 1.1754944e-38, %v2207
      %v2209 = vsel %vm2206, %v2208, %v2204
      %v2210 = vmul.f32 1.0, %v2209
      %v2211 = vtanh.pop %v2153
      %v2212 = vmul.f32 %v2195, %v1895
      %v2213 = vmul.f32 %v2180, %v2211
      %v2214 = vadd.f32 %v2212, %v2213
      %v2215 = vtanh.pop %v2214
      %v2216 = vmul.f32 %v2210, %v2215
      %v2217 = vpack.c.bf16 %v2216, %v2216
      %s2218 = scalar_lea.vmem [#allocation5], 12
      %2219 = vst [vmem:[%s2218] sm:$0xf] %v2217
      %v2220 = vld [vmem:[#allocation5] sm:$0xf]
      %v2221 = vld [vmem:[#allocation5 + $0x4] sm:$0xf]
      %v2222 = vld [vmem:[#allocation5 + $0x8] sm:$0xf]
      %v2223 = vld [vmem:[#allocation5 + $0xc] sm:$0xf]
      %v2224 = vld [vmem:[%s8] sm:$0xf]
      %v2225 = vld [vmem:[%s8 + $0x4] sm:$0xf]
      %v2226 = vld [vmem:[%s8 + $0x8] sm:$0xf]
      %v2227 = vld [vmem:[%s8 + $0xc] sm:$0xf]
      %v2228 = vld [vmem:[%s8 + $0x10] sm:$0xf]
      %v2229 = vld [vmem:[%s8 + $0x14] sm:$0xf]
      %v2230 = vld [vmem:[%s8 + $0x18] sm:$0xf]
      %v2231 = vld [vmem:[%s8 + $0x1c] sm:$0xf]
      %v2232 = vld [vmem:[%s8 + $0x20] sm:$0xf]
      %v2233 = vld [vmem:[%s8 + $0x24] sm:$0xf]
      %v2234 = vld [vmem:[%s8 + $0x28] sm:$0xf]
      %v2235 = vld [vmem:[%s8 + $0x2c] sm:$0xf]
      %v2236 = vld [vmem:[%s8 + $0x30] sm:$0xf]
      %v2237 = vld [vmem:[%s8 + $0x34] sm:$0xf]
      %v2238 = vld [vmem:[%s8 + $0x38] sm:$0xf]
      %v2239 = vld [vmem:[%s8 + $0x3c] sm:$0xf]
      %v2240 = vld [vmem:[%s9] sm:$0x1]
      %v2242 = vperm.slane %v2240, 0
      %v2248 = vunpack.c.l.b16 %v2220
      %v2249 = vunpack.c.l.b16 %v2221
      %v2250 = vunpack.c.l.b16 %v2222
      %v2251 = vunpack.c.l.b16 %v2223
      %v2252 = vpack.c.b16 %v2249, %v2248
      %v2253 = vpack.c.b16 %v2251, %v2250
      %v2272 = vunpack.c.l.b16 %v2224
      %v2273 = vunpack.c.l.b16 %v2225
      %v2274 = vunpack.c.l.b16 %v2226
      %v2275 = vunpack.c.l.b16 %v2227
      %v2276 = vunpack.c.l.b16 %v2228
      %v2277 = vunpack.c.l.b16 %v2229
      %v2278 = vunpack.c.l.b16 %v2230
      %v2279 = vunpack.c.l.b16 %v2231
      %v2280 = vunpack.c.l.b16 %v2232
      %v2281 = vunpack.c.l.b16 %v2233
      %v2282 = vunpack.c.l.b16 %v2234
      %v2283 = vunpack.c.l.b16 %v2235
      %v2284 = vunpack.c.l.b16 %v2236
      %v2285 = vunpack.c.l.b16 %v2237
      %v2286 = vunpack.c.l.b16 %v2238
      %v2287 = vunpack.c.l.b16 %v2239
      %v2288 = vpack.c.b16 %v2273, %v2272
      %v2289 = vpack.c.b16 %v2275, %v2274
      %v2290 = vpack.c.b16 %v2277, %v2276
      %v2291 = vpack.c.b16 %v2279, %v2278
      %v2292 = vpack.c.b16 %v2281, %v2280
      %v2293 = vpack.c.b16 %v2283, %v2282
      %v2294 = vpack.c.b16 %v2285, %v2284
      %v2295 = vpack.c.b16 %v2287, %v2286
      %2304 = vmatpush.bf16.msra.mxu0 %v2295
      %2305 = vmatpush.bf16.msra.mxu0 %v2294
      %2306 = vmatpush.bf16.msra.mxu0 %v2293
      %2307 = vmatpush.bf16.msra.mxu0 %v2292
      %2308 = vmatpush.bf16.msra.mxu0 %v2291
      %2309 = vmatpush.bf16.msra.mxu0 %v2290
      %2310 = vmatpush.bf16.msra.mxu0 %v2289
      %2311 = vmatpush.bf16.msra.mxu0 %v2288
      %2312 = vmatmul.bf16.gmra.mxu0 %v2252
      %v2313 = vpop.f32.mrf.mxu0
      %v2314 = vadd.f32 %v2242, %v2313
      %v2315 = vpop.f32.mrf.mxu0
      %v2316 = vadd.f32 %v2242, %v2315
      %2317 = vmatmul.bf16.gmra.mxu0 %v2253
      %v2318 = vpop.f32.mrf.mxu0
      %v2319 = vadd.f32 %v2242, %v2318
      %v2320 = vpop.f32.mrf.mxu0
      %v2321 = vadd.f32 %v2242, %v2320
      %2322 = vdwg.mxu0
      %2323 = vst [vmem:[%s425] sm:$0xff] %v2314
      %2324 = vst [vmem:[%s425 + $0x8] sm:$0xff] %v2316
      %2325 = vst [vmem:[%s425 + $0x10] sm:$0xff] %v2319
      %2326 = vst [vmem:[%s425 + $0x18] sm:$0xff] %v2321
      %v2327 = vld [vmem:[%s4] sm:$0x1]
      %s2328 = scalar_lea.vmem %s407, 16
      %v2329 = vld [vmem:[%s2328] sm:$0xf]
      %v2330 = vld [vmem:[%s2328 + $0x4] sm:$0xf]
      %v2331 = vld [vmem:[%s2328 + $0x8] sm:$0xf]
      %v2332 = vld [vmem:[%s2328 + $0xc] sm:$0xf]
      %v2333 = vld [vmem:[%s2] sm:$0xf]
      %v2334 = vld [vmem:[%s2 + $0x4] sm:$0xf]
      %v2335 = vld [vmem:[%s2 + $0x8] sm:$0xf]
      %v2336 = vld [vmem:[%s2 + $0xc] sm:$0xf]
      %v2337 = vld [vmem:[%s2 + $0x10] sm:$0xf]
      %v2338 = vld [vmem:[%s2 + $0x14] sm:$0xf]
      %v2339 = vld [vmem:[%s2 + $0x18] sm:$0xf]
      %v2340 = vld [vmem:[%s2 + $0x1c] sm:$0xf]
      %v2341 = vld [vmem:[%s2 + $0x20] sm:$0xf]
      %v2342 = vld [vmem:[%s2 + $0x24] sm:$0xf]
      %v2343 = vld [vmem:[%s2 + $0x28] sm:$0xf]
      %v2344 = vld [vmem:[%s2 + $0x2c] sm:$0xf]
      %v2345 = vld [vmem:[%s2 + $0x30] sm:$0xf]
      %v2346 = vld [vmem:[%s2 + $0x34] sm:$0xf]
      %v2347 = vld [vmem:[%s2 + $0x38] sm:$0xf]
      %v2348 = vld [vmem:[%s2 + $0x3c] sm:$0xf]
      %v2353 = vunpack.c.l.b16 %v2329
      %v2354 = vunpack.c.l.b16 %v2330
      %v2355 = vunpack.c.l.b16 %v2331
      %v2356 = vunpack.c.l.b16 %v2332
      %v2357 = vpack.c.b16 %v2354, %v2353
      %v2358 = vpack.c.b16 %v2356, %v2355
      %v2377 = vunpack.c.l.b16 %v2333
      %v2378 = vunpack.c.l.b16 %v2334
      %v2379 = vunpack.c.l.b16 %v2335
      %v2380 = vunpack.c.l.b16 %v2336
      %v2381 = vunpack.c.l.b16 %v2337
      %v2382 = vunpack.c.l.b16 %v2338
      %v2383 = vunpack.c.l.b16 %v2339
      %v2384 = vunpack.c.l.b16 %v2340
      %v2385 = vunpack.c.l.b16 %v2341
      %v2386 = vunpack.c.l.b16 %v2342
      %v2387 = vunpack.c.l.b16 %v2343
      %v2388 = vunpack.c.l.b16 %v2344
      %v2389 = vunpack.c.l.b16 %v2345
      %v2390 = vunpack.c.l.b16 %v2346
      %v2391 = vunpack.c.l.b16 %v2347
      %v2392 = vunpack.c.l.b16 %v2348
      %v2393 = vpack.c.b16 %v2378, %v2377
      %v2394 = vpack.c.b16 %v2380, %v2379
      %v2395 = vpack.c.b16 %v2382, %v2381
      %v2396 = vpack.c.b16 %v2384, %v2383
      %v2397 = vpack.c.b16 %v2386, %v2385
      %v2398 = vpack.c.b16 %v2388, %v2387
      %v2399 = vpack.c.b16 %v2390, %v2389
      %v2400 = vpack.c.b16 %v2392, %v2391
      %2409 = vmatpush.bf16.msra.mxu0 %v2400
      %2410 = vmatpush.bf16.msra.mxu0 %v2399
      %2411 = vmatpush.bf16.msra.mxu0 %v2398
      %2412 = vmatpush.bf16.msra.mxu0 %v2397
      %2413 = vmatpush.bf16.msra.mxu0 %v2396
      %2414 = vmatpush.bf16.msra.mxu0 %v2395
      %2415 = vmatpush.bf16.msra.mxu0 %v2394
      %2416 = vmatpush.bf16.msra.mxu0 %v2393
      %2417 = vmatmul.bf16.gmra.mxu0 %v2357
      %v2418 = vpop.f32.mrf.mxu0
      %v2419 = vadd.f32 0.0, %v2418
      %v2420 = vpop.f32.mrf.mxu0
      %v2421 = vadd.f32 0.0, %v2420
      %2422 = vmatmul.bf16.gmra.mxu0 %v2358
      %v2423 = vpop.f32.mrf.mxu0
      %v2424 = vadd.f32 0.0, %v2423
      %v2425 = vpop.f32.mrf.mxu0
      %v2426 = vadd.f32 0.0, %v2425
      %2427 = vdwg.mxu0
      %v2429 = vperm.slane %v2327, 0
      %v2431 = vadd.f32 %v2429, %v2419
      %v2432 = vadd.f32 %v2429, %v2421
      %v2433 = vadd.f32 %v2429, %v2424
      %v2434 = vadd.f32 %v2429, %v2426
      %s2435 = scalar_lea.vmem %s416, 16
      %v2436 = vld [vmem:[%s2435] sm:$0xf]
      %v2437 = vld [vmem:[%s2435 + $0x4] sm:$0xf]
      %v2438 = vld [vmem:[%s2435 + $0x8] sm:$0xf]
      %v2439 = vld [vmem:[%s2435 + $0xc] sm:$0xf]
      %v2440 = vld [vmem:[%s3] sm:$0xf]
      %v2441 = vld [vmem:[%s3 + $0x4] sm:$0xf]
      %v2442 = vld [vmem:[%s3 + $0x8] sm:$0xf]
      %v2443 = vld [vmem:[%s3 + $0xc] sm:$0xf]
      %v2444 = vld [vmem:[%s3 + $0x10] sm:$0xf]
      %v2445 = vld [vmem:[%s3 + $0x14] sm:$0xf]
      %v2446 = vld [vmem:[%s3 + $0x18] sm:$0xf]
      %v2447 = vld [vmem:[%s3 + $0x1c] sm:$0xf]
      %v2448 = vld [vmem:[%s3 + $0x20] sm:$0xf]
      %v2449 = vld [vmem:[%s3 + $0x24] sm:$0xf]
      %v2450 = vld [vmem:[%s3 + $0x28] sm:$0xf]
      %v2451 = vld [vmem:[%s3 + $0x2c] sm:$0xf]
      %v2452 = vld [vmem:[%s3 + $0x30] sm:$0xf]
      %v2453 = vld [vmem:[%s3 + $0x34] sm:$0xf]
      %v2454 = vld [vmem:[%s3 + $0x38] sm:$0xf]
      %v2455 = vld [vmem:[%s3 + $0x3c] sm:$0xf]
      %v2460 = vunpack.c.l.b16 %v2436
      %v2461 = vunpack.c.l.b16 %v2437
      %v2462 = vunpack.c.l.b16 %v2438
      %v2463 = vunpack.c.l.b16 %v2439
      %v2464 = vpack.c.b16 %v2461, %v2460
      %v2465 = vpack.c.b16 %v2463, %v2462
      %v2484 = vunpack.c.l.b16 %v2440
      %v2485 = vunpack.c.l.b16 %v2441
      %v2486 = vunpack.c.l.b16 %v2442
      %v2487 = vunpack.c.l.b16 %v2443
      %v2488 = vunpack.c.l.b16 %v2444
      %v2489 = vunpack.c.l.b16 %v2445
      %v2490 = vunpack.c.l.b16 %v2446
      %v2491 = vunpack.c.l.b16 %v2447
      %v2492 = vunpack.c.l.b16 %v2448
      %v2493 = vunpack.c.l.b16 %v2449
      %v2494 = vunpack.c.l.b16 %v2450
      %v2495 = vunpack.c.l.b16 %v2451
      %v2496 = vunpack.c.l.b16 %v2452
      %v2497 = vunpack.c.l.b16 %v2453
      %v2498 = vunpack.c.l.b16 %v2454
      %v2499 = vunpack.c.l.b16 %v2455
      %v2500 = vpack.c.b16 %v2485, %v2484
      %v2501 = vpack.c.b16 %v2487, %v2486
      %v2502 = vpack.c.b16 %v2489, %v2488
      %v2503 = vpack.c.b16 %v2491, %v2490
      %v2504 = vpack.c.b16 %v2493, %v2492
      %v2505 = vpack.c.b16 %v2495, %v2494
      %v2506 = vpack.c.b16 %v2497, %v2496
      %v2507 = vpack.c.b16 %v2499, %v2498
      %2516 = vmatpush.bf16.msra.mxu0 %v2507
      %2517 = vmatpush.bf16.msra.mxu0 %v2506
      %2518 = vmatpush.bf16.msra.mxu0 %v2505
      %2519 = vmatpush.bf16.msra.mxu0 %v2504
      %2520 = vmatpush.bf16.msra.mxu0 %v2503
      %2521 = vmatpush.bf16.msra.mxu0 %v2502
      %2522 = vmatpush.bf16.msra.mxu0 %v2501
      %2523 = vmatpush.bf16.msra.mxu0 %v2500
      %2524 = vmatmul.bf16.gmra.mxu0 %v2464
      %v2525 = vpop.f32.mrf.mxu0
      %v2526 = vadd.f32 0.0, %v2525
      %v2527 = vpop.f32.mrf.mxu0
      %v2528 = vadd.f32 0.0, %v2527
      %2529 = vmatmul.bf16.gmra.mxu0 %v2465
      %v2530 = vpop.f32.mrf.mxu0
      %v2531 = vadd.f32 0.0, %v2530
      %v2532 = vpop.f32.mrf.mxu0
      %v2533 = vadd.f32 0.0, %v2532
      %2534 = vdwg.mxu0
      %v2535 = vadd.f32 %v2431, %v2526
      %v2536 = vadd.f32 %v2432, %v2528
      %v2537 = vadd.f32 %v2433, %v2531
      %v2538 = vadd.f32 %v2434, %v2533
      %v2539 = vmax.f32 %v2535, 0.0
      %v2540 = vmax.f32 %v2536, 0.0
      %v2541 = vmax.f32 %v2537, 0.0
      %v2542 = vmax.f32 %v2538, 0.0
      %v2543 = vpack.c.bf16 %v2540, %v2539
      %v2544 = vpack.c.bf16 %v2542, %v2541
      %v2545 = vld [vmem:[%s5] sm:$0xff]
      %v2546 = vld [vmem:[%s5 + $0x8] sm:$0xff]
      %v2547 = vld [vmem:[%s5 + $0x10] sm:$0xff]
      %v2548 = vld [vmem:[%s5 + $0x18] sm:$0xff]
      %v2549 = vld [vmem:[%s5 + $0x20] sm:$0xff]
      %v2550 = vld [vmem:[%s5 + $0x28] sm:$0xff]
      %v2551 = vld [vmem:[%s5 + $0x30] sm:$0xff]
      %v2552 = vld [vmem:[%s5 + $0x38] sm:$0xff]
      %v2553 = vld [vmem:[%s5 + $0x40] sm:$0xff]
      %v2554 = vld [vmem:[%s5 + $0x48] sm:$0xff]
      %v2555 = vld [vmem:[%s5 + $0x50] sm:$0xff]
      %v2556 = vld [vmem:[%s5 + $0x58] sm:$0xff]
      %v2557 = vld [vmem:[%s5 + $0x60] sm:$0xff]
      %v2558 = vld [vmem:[%s5 + $0x68] sm:$0xff]
      %v2559 = vld [vmem:[%s5 + $0x70] sm:$0xff]
      %v2560 = vld [vmem:[%s5 + $0x78] sm:$0xff]
      %v2561 = vld [vmem:[%s5 + $0x80] sm:$0xff]
      %v2562 = vld [vmem:[%s5 + $0x88] sm:$0xff]
      %v2563 = vld [vmem:[%s5 + $0x90] sm:$0xff]
      %v2564 = vld [vmem:[%s5 + $0x98] sm:$0xff]
      %v2565 = vld [vmem:[%s5 + $0xa0] sm:$0xff]
      %v2566 = vld [vmem:[%s5 + $0xa8] sm:$0xff]
      %v2567 = vld [vmem:[%s5 + $0xb0] sm:$0xff]
      %v2568 = vld [vmem:[%s5 + $0xb8] sm:$0xff]
      %v2569 = vld [vmem:[%s5 + $0xc0] sm:$0xff]
      %v2570 = vld [vmem:[%s5 + $0xc8] sm:$0xff]
      %v2571 = vld [vmem:[%s5 + $0xd0] sm:$0xff]
      %v2572 = vld [vmem:[%s5 + $0xd8] sm:$0xff]
      %v2573 = vld [vmem:[%s5 + $0xe0] sm:$0xff]
      %v2574 = vld [vmem:[%s5 + $0xe8] sm:$0xff]
      %v2575 = vld [vmem:[%s5 + $0xf0] sm:$0xff]
      %v2576 = vld [vmem:[%s5 + $0xf8] sm:$0xff]
      %v2577 = vld [vmem:[%s7] sm:$0xf]
      %v2579 = vperm.slane %v2577, 0
      %v2580 = vperm.slane %v2577, 1
      %v2581 = vperm.slane %v2577, 2
      %v2582 = vperm.slane %v2577, 3
      %v2619 = vunpack.c.l.b16 %v2545
      %v2620 = vunpack.c.h.b16 %v2545
      %v2621 = vunpack.c.l.b16 %v2546
      %v2622 = vunpack.c.h.b16 %v2546
      %v2623 = vunpack.c.l.b16 %v2547
      %v2624 = vunpack.c.h.b16 %v2547
      %v2625 = vunpack.c.l.b16 %v2548
      %v2626 = vunpack.c.h.b16 %v2548
      %v2627 = vunpack.c.l.b16 %v2549
      %v2628 = vunpack.c.h.b16 %v2549
      %v2629 = vunpack.c.l.b16 %v2550
      %v2630 = vunpack.c.h.b16 %v2550
      %v2631 = vunpack.c.l.b16 %v2551
      %v2632 = vunpack.c.h.b16 %v2551
      %v2633 = vunpack.c.l.b16 %v2552
      %v2634 = vunpack.c.h.b16 %v2552
      %v2635 = vunpack.c.l.b16 %v2553
      %v2636 = vunpack.c.h.b16 %v2553
      %v2637 = vunpack.c.l.b16 %v2554
      %v2638 = vunpack.c.h.b16 %v2554
      %v2639 = vunpack.c.l.b16 %v2555
      %v2640 = vunpack.c.h.b16 %v2555
      %v2641 = vunpack.c.l.b16 %v2556
      %v2642 = vunpack.c.h.b16 %v2556
      %v2643 = vunpack.c.l.b16 %v2557
      %v2644 = vunpack.c.h.b16 %v2557
      %v2645 = vunpack.c.l.b16 %v2558
      %v2646 = vunpack.c.h.b16 %v2558
      %v2647 = vunpack.c.l.b16 %v2559
      %v2648 = vunpack.c.h.b16 %v2559
      %v2649 = vunpack.c.l.b16 %v2560
      %v2650 = vunpack.c.h.b16 %v2560
      %v2651 = vunpack.c.l.b16 %v2561
      %v2652 = vunpack.c.h.b16 %v2561
      %v2653 = vunpack.c.l.b16 %v2562
      %v2654 = vunpack.c.h.b16 %v2562
      %v2655 = vunpack.c.l.b16 %v2563
      %v2656 = vunpack.c.h.b16 %v2563
      %v2657 = vunpack.c.l.b16 %v2564
      %v2658 = vunpack.c.h.b16 %v2564
      %v2659 = vunpack.c.l.b16 %v2565
      %v2660 = vunpack.c.h.b16 %v2565
      %v2661 = vunpack.c.l.b16 %v2566
      %v2662 = vunpack.c.h.b16 %v2566
      %v2663 = vunpack.c.l.b16 %v2567
      %v2664 = vunpack.c.h.b16 %v2567
      %v2665 = vunpack.c.l.b16 %v2568
      %v2666 = vunpack.c.h.b16 %v2568
      %v2667 = vunpack.c.l.b16 %v2569
      %v2668 = vunpack.c.h.b16 %v2569
      %v2669 = vunpack.c.l.b16 %v2570
      %v2670 = vunpack.c.h.b16 %v2570
      %v2671 = vunpack.c.l.b16 %v2571
      %v2672 = vunpack.c.h.b16 %v2571
      %v2673 = vunpack.c.l.b16 %v2572
      %v2674 = vunpack.c.h.b16 %v2572
      %v2675 = vunpack.c.l.b16 %v2573
      %v2676 = vunpack.c.h.b16 %v2573
      %v2677 = vunpack.c.l.b16 %v2574
      %v2678 = vunpack.c.h.b16 %v2574
      %v2679 = vunpack.c.l.b16 %v2575
      %v2680 = vunpack.c.h.b16 %v2575
      %v2681 = vunpack.c.l.b16 %v2576
      %v2682 = vunpack.c.h.b16 %v2576
      %v2683 = vpack.c.b16 %v2623, %v2619
      %v2684 = vpack.c.b16 %v2624, %v2620
      %v2685 = vpack.c.b16 %v2625, %v2621
      %v2686 = vpack.c.b16 %v2626, %v2622
      %v2687 = vpack.c.b16 %v2631, %v2627
      %v2688 = vpack.c.b16 %v2632, %v2628
      %v2689 = vpack.c.b16 %v2633, %v2629
      %v2690 = vpack.c.b16 %v2634, %v2630
      %v2691 = vpack.c.b16 %v2639, %v2635
      %v2692 = vpack.c.b16 %v2640, %v2636
      %v2693 = vpack.c.b16 %v2641, %v2637
      %v2694 = vpack.c.b16 %v2642, %v2638
      %v2695 = vpack.c.b16 %v2647, %v2643
      %v2696 = vpack.c.b16 %v2648, %v2644
      %v2697 = vpack.c.b16 %v2649, %v2645
      %v2698 = vpack.c.b16 %v2650, %v2646
      %v2699 = vpack.c.b16 %v2655, %v2651
      %v2700 = vpack.c.b16 %v2656, %v2652
      %v2701 = vpack.c.b16 %v2657, %v2653
      %v2702 = vpack.c.b16 %v2658, %v2654
      %v2703 = vpack.c.b16 %v2663, %v2659
      %v2704 = vpack.c.b16 %v2664, %v2660
      %v2705 = vpack.c.b16 %v2665, %v2661
      %v2706 = vpack.c.b16 %v2666, %v2662
      %v2707 = vpack.c.b16 %v2671, %v2667
      %v2708 = vpack.c.b16 %v2672, %v2668
      %v2709 = vpack.c.b16 %v2673, %v2669
      %v2710 = vpack.c.b16 %v2674, %v2670
      %v2711 = vpack.c.b16 %v2679, %v2675
      %v2712 = vpack.c.b16 %v2680, %v2676
      %v2713 = vpack.c.b16 %v2681, %v2677
      %v2714 = vpack.c.b16 %v2682, %v2678
      %2747 = vmatpush.bf16.msra.mxu0 %v2711
      %2748 = vmatpush.bf16.msra.mxu0 %v2707
      %2749 = vmatpush.bf16.msra.mxu0 %v2703
      %2750 = vmatpush.bf16.msra.mxu0 %v2699
      %2751 = vmatpush.bf16.msra.mxu0 %v2695
      %2752 = vmatpush.bf16.msra.mxu0 %v2691
      %2753 = vmatpush.bf16.msra.mxu0 %v2687
      %2754 = vmatpush.bf16.msra.mxu0 %v2683
      %2755 = vmatmul.bf16.gmra.mxu0 %v2543
      %v2756 = vpop.f32.mrf.mxu0
      %v2757 = vadd.f32 %v2579, %v2756
      %v2758 = vpop.f32.mrf.mxu0
      %v2759 = vadd.f32 %v2579, %v2758
      %2760 = vmatmul.bf16.gmra.mxu0 %v2544
      %v2761 = vpop.f32.mrf.mxu0
      %v2762 = vadd.f32 %v2579, %v2761
      %v2763 = vpop.f32.mrf.mxu0
      %v2764 = vadd.f32 %v2579, %v2763
      %2765 = vdwg.mxu0
      %2766 = vmatpush.bf16.msra.mxu0 %v2712
      %2767 = vmatpush.bf16.msra.mxu0 %v2708
      %2768 = vmatpush.bf16.msra.mxu0 %v2704
      %2769 = vmatpush.bf16.msra.mxu0 %v2700
      %2770 = vmatpush.bf16.msra.mxu0 %v2696
      %2771 = vmatpush.bf16.msra.mxu0 %v2692
      %2772 = vmatpush.bf16.msra.mxu0 %v2688
      %2773 = vmatpush.bf16.msra.mxu0 %v2684
      %2774 = vmatmul.bf16.gmra.mxu0 %v2543
      %v2775 = vpop.f32.mrf.mxu0
      %v2776 = vadd.f32 %v2580, %v2775
      %v2777 = vpop.f32.mrf.mxu0
      %v2778 = vadd.f32 %v2580, %v2777
      %2779 = vmatmul.bf16.gmra.mxu0 %v2544
      %v2780 = vpop.f32.mrf.mxu0
      %v2781 = vadd.f32 %v2580, %v2780
      %v2782 = vpop.f32.mrf.mxu0
      %v2783 = vadd.f32 %v2580, %v2782
      %2784 = vdwg.mxu0
      %2785 = vmatpush.bf16.msra.mxu0 %v2713
      %2786 = vmatpush.bf16.msra.mxu0 %v2709
      %2787 = vmatpush.bf16.msra.mxu0 %v2705
      %2788 = vmatpush.bf16.msra.mxu0 %v2701
      %2789 = vmatpush.bf16.msra.mxu0 %v2697
      %2790 = vmatpush.bf16.msra.mxu0 %v2693
      %2791 = vmatpush.bf16.msra.mxu0 %v2689
      %2792 = vmatpush.bf16.msra.mxu0 %v2685
      %2793 = vmatmul.bf16.gmra.mxu0 %v2543
      %v2794 = vpop.f32.mrf.mxu0
      %v2795 = vadd.f32 %v2581, %v2794
      %v2796 = vpop.f32.mrf.mxu0
      %v2797 = vadd.f32 %v2581, %v2796
      %2798 = vmatmul.bf16.gmra.mxu0 %v2544
      %v2799 = vpop.f32.mrf.mxu0
      %v2800 = vadd.f32 %v2581, %v2799
      %v2801 = vpop.f32.mrf.mxu0
      %v2802 = vadd.f32 %v2581, %v2801
      %2803 = vdwg.mxu0
      %2804 = vmatpush.bf16.msra.mxu0 %v2714
      %2805 = vmatpush.bf16.msra.mxu0 %v2710
      %2806 = vmatpush.bf16.msra.mxu0 %v2706
      %2807 = vmatpush.bf16.msra.mxu0 %v2702
      %2808 = vmatpush.bf16.msra.mxu0 %v2698
      %2809 = vmatpush.bf16.msra.mxu0 %v2694
      %2810 = vmatpush.bf16.msra.mxu0 %v2690
      %2811 = vmatpush.bf16.msra.mxu0 %v2686
      %2812 = vmatmul.bf16.gmra.mxu0 %v2543
      %v2813 = vpop.f32.mrf.mxu0
      %v2814 = vadd.f32 %v2582, %v2813
      %v2815 = vpop.f32.mrf.mxu0
      %v2816 = vadd.f32 %v2582, %v2815
      %2817 = vmatmul.bf16.gmra.mxu0 %v2544
      %v2818 = vpop.f32.mrf.mxu0
      %v2819 = vadd.f32 %v2582, %v2818
      %v2820 = vpop.f32.mrf.mxu0
      %v2821 = vadd.f32 %v2582, %v2820
      %2822 = vdwg.mxu0
      %2823 = vst [vmem:[#allocation4] sm:$0xff] %v2757
      %2824 = vst [vmem:[#allocation4 + $0x8] sm:$0xff] %v2776
      %2825 = vst [vmem:[#allocation4 + $0x10] sm:$0xff] %v2795
      %2826 = vst [vmem:[#allocation4 + $0x18] sm:$0xff] %v2814
      %2827 = vst [vmem:[#allocation4 + $0x20] sm:$0xff] %v2759
      %2828 = vst [vmem:[#allocation4 + $0x28] sm:$0xff] %v2778
      %2829 = vst [vmem:[#allocation4 + $0x30] sm:$0xff] %v2797
      %2830 = vst [vmem:[#allocation4 + $0x38] sm:$0xff] %v2816
      %2831 = vst [vmem:[#allocation4 + $0x40] sm:$0xff] %v2762
      %2832 = vst [vmem:[#allocation4 + $0x48] sm:$0xff] %v2781
      %2833 = vst [vmem:[#allocation4 + $0x50] sm:$0xff] %v2800
      %2834 = vst [vmem:[#allocation4 + $0x58] sm:$0xff] %v2819
      %2835 = vst [vmem:[#allocation4 + $0x60] sm:$0xff] %v2764
      %2836 = vst [vmem:[#allocation4 + $0x68] sm:$0xff] %v2783
      %2837 = vst [vmem:[#allocation4 + $0x70] sm:$0xff] %v2802
      %2838 = vst [vmem:[#allocation4 + $0x78] sm:$0xff] %v2821
      %v2839 = vld [vmem:[#allocation4] sm:$0xff]
      %v2840 = vld [vmem:[#allocation4 + $0x8] sm:$0xff]
      %v2841 = vld [vmem:[#allocation4 + $0x10] sm:$0xff]
      %v2842 = vld [vmem:[#allocation4 + $0x18] sm:$0xff]
      %v2843 = vld [vmem:[%s6] sm:$0xff]
      %v2844 = vld [vmem:[%s6 + $0x8] sm:$0xff]
      %v2845 = vld [vmem:[%s6 + $0x10] sm:$0xff]
      %v2846 = vld [vmem:[%s6 + $0x18] sm:$0xff]
      %v2847 = vld [vmem:[%s6 + $0x20] sm:$0xff]
      %v2848 = vld [vmem:[%s6 + $0x28] sm:$0xff]
      %v2849 = vld [vmem:[%s6 + $0x30] sm:$0xff]
      %v2850 = vld [vmem:[%s6 + $0x38] sm:$0xff]
      %v2851 = vld [vmem:[%s6 + $0x40] sm:$0xff]
      %v2852 = vld [vmem:[%s6 + $0x48] sm:$0xff]
      %v2853 = vld [vmem:[%s6 + $0x50] sm:$0xff]
      %v2854 = vld [vmem:[%s6 + $0x58] sm:$0xff]
      %v2855 = vld [vmem:[%s6 + $0x60] sm:$0xff]
      %v2856 = vld [vmem:[%s6 + $0x68] sm:$0xff]
      %v2857 = vld [vmem:[%s6 + $0x70] sm:$0xff]
      %v2858 = vld [vmem:[%s6 + $0x78] sm:$0xff]
      %v2859 = vld [vmem:[%s6 + $0x80] sm:$0xff]
      %v2860 = vld [vmem:[%s6 + $0x88] sm:$0xff]
      %v2861 = vld [vmem:[%s6 + $0x90] sm:$0xff]
      %v2862 = vld [vmem:[%s6 + $0x98] sm:$0xff]
      %v2863 = vld [vmem:[%s6 + $0xa0] sm:$0xff]
      %v2864 = vld [vmem:[%s6 + $0xa8] sm:$0xff]
      %v2865 = vld [vmem:[%s6 + $0xb0] sm:$0xff]
      %v2866 = vld [vmem:[%s6 + $0xb8] sm:$0xff]
      %v2867 = vld [vmem:[%s6 + $0xc0] sm:$0xff]
      %v2868 = vld [vmem:[%s6 + $0xc8] sm:$0xff]
      %v2869 = vld [vmem:[%s6 + $0xd0] sm:$0xff]
      %v2870 = vld [vmem:[%s6 + $0xd8] sm:$0xff]
      %v2871 = vld [vmem:[%s6 + $0xe0] sm:$0xff]
      %v2872 = vld [vmem:[%s6 + $0xe8] sm:$0xff]
      %v2873 = vld [vmem:[%s6 + $0xf0] sm:$0xff]
      %v2874 = vld [vmem:[%s6 + $0xf8] sm:$0xff]
      %v2907 = vunpack.c.l.b16 %v2843
      %v2908 = vunpack.c.h.b16 %v2843
      %v2909 = vunpack.c.l.b16 %v2844
      %v2910 = vunpack.c.h.b16 %v2844
      %v2911 = vunpack.c.l.b16 %v2845
      %v2912 = vunpack.c.h.b16 %v2845
      %v2913 = vunpack.c.l.b16 %v2846
      %v2914 = vunpack.c.h.b16 %v2846
      %v2915 = vunpack.c.l.b16 %v2847
      %v2916 = vunpack.c.h.b16 %v2847
      %v2917 = vunpack.c.l.b16 %v2848
      %v2918 = vunpack.c.h.b16 %v2848
      %v2919 = vunpack.c.l.b16 %v2849
      %v2920 = vunpack.c.h.b16 %v2849
      %v2921 = vunpack.c.l.b16 %v2850
      %v2922 = vunpack.c.h.b16 %v2850
      %v2923 = vunpack.c.l.b16 %v2851
      %v2924 = vunpack.c.h.b16 %v2851
      %v2925 = vunpack.c.l.b16 %v2852
      %v2926 = vunpack.c.h.b16 %v2852
      %v2927 = vunpack.c.l.b16 %v2853
      %v2928 = vunpack.c.h.b16 %v2853
      %v2929 = vunpack.c.l.b16 %v2854
      %v2930 = vunpack.c.h.b16 %v2854
      %v2931 = vunpack.c.l.b16 %v2855
      %v2932 = vunpack.c.h.b16 %v2855
      %v2933 = vunpack.c.l.b16 %v2856
      %v2934 = vunpack.c.h.b16 %v2856
      %v2935 = vunpack.c.l.b16 %v2857
      %v2936 = vunpack.c.h.b16 %v2857
      %v2937 = vunpack.c.l.b16 %v2858
      %v2938 = vunpack.c.h.b16 %v2858
      %v2939 = vunpack.c.l.b16 %v2859
      %v2940 = vunpack.c.h.b16 %v2859
      %v2941 = vunpack.c.l.b16 %v2860
      %v2942 = vunpack.c.h.b16 %v2860
      %v2943 = vunpack.c.l.b16 %v2861
      %v2944 = vunpack.c.h.b16 %v2861
      %v2945 = vunpack.c.l.b16 %v2862
      %v2946 = vunpack.c.h.b16 %v2862
      %v2947 = vunpack.c.l.b16 %v2863
      %v2948 = vunpack.c.h.b16 %v2863
      %v2949 = vunpack.c.l.b16 %v2864
      %v2950 = vunpack.c.h.b16 %v2864
      %v2951 = vunpack.c.l.b16 %v2865
      %v2952 = vunpack.c.h.b16 %v2865
      %v2953 = vunpack.c.l.b16 %v2866
      %v2954 = vunpack.c.h.b16 %v2866
      %v2955 = vunpack.c.l.b16 %v2867
      %v2956 = vunpack.c.h.b16 %v2867
      %v2957 = vunpack.c.l.b16 %v2868
      %v2958 = vunpack.c.h.b16 %v2868
      %v2959 = vunpack.c.l.b16 %v2869
      %v2960 = vunpack.c.h.b16 %v2869
      %v2961 = vunpack.c.l.b16 %v2870
      %v2962 = vunpack.c.h.b16 %v2870
      %v2963 = vunpack.c.l.b16 %v2871
      %v2964 = vunpack.c.h.b16 %v2871
      %v2965 = vunpack.c.l.b16 %v2872
      %v2966 = vunpack.c.h.b16 %v2872
      %v2967 = vunpack.c.l.b16 %v2873
      %v2968 = vunpack.c.h.b16 %v2873
      %v2969 = vunpack.c.l.b16 %v2874
      %v2970 = vunpack.c.h.b16 %v2874
      %v2971 = vpack.c.b16 %v2911, %v2907
      %v2972 = vpack.c.b16 %v2912, %v2908
      %v2973 = vpack.c.b16 %v2913, %v2909
      %v2974 = vpack.c.b16 %v2914, %v2910
      %v2975 = vpack.c.b16 %v2919, %v2915
      %v2976 = vpack.c.b16 %v2920, %v2916
      %v2977 = vpack.c.b16 %v2921, %v2917
      %v2978 = vpack.c.b16 %v2922, %v2918
      %v2979 = vpack.c.b16 %v2927, %v2923
      %v2980 = vpack.c.b16 %v2928, %v2924
      %v2981 = vpack.c.b16 %v2929, %v2925
      %v2982 = vpack.c.b16 %v2930, %v2926
      %v2983 = vpack.c.b16 %v2935, %v2931
      %v2984 = vpack.c.b16 %v2936, %v2932
      %v2985 = vpack.c.b16 %v2937, %v2933
      %v2986 = vpack.c.b16 %v2938, %v2934
      %v2987 = vpack.c.b16 %v2943, %v2939
      %v2988 = vpack.c.b16 %v2944, %v2940
      %v2989 = vpack.c.b16 %v2945, %v2941
      %v2990 = vpack.c.b16 %v2946, %v2942
      %v2991 = vpack.c.b16 %v2951, %v2947
      %v2992 = vpack.c.b16 %v2952, %v2948
      %v2993 = vpack.c.b16 %v2953, %v2949
      %v2994 = vpack.c.b16 %v2954, %v2950
      %v2995 = vpack.c.b16 %v2959, %v2955
      %v2996 = vpack.c.b16 %v2960, %v2956
      %v2997 = vpack.c.b16 %v2961, %v2957
      %v2998 = vpack.c.b16 %v2962, %v2958
      %v2999 = vpack.c.b16 %v2967, %v2963
      %v3000 = vpack.c.b16 %v2968, %v2964
      %v3001 = vpack.c.b16 %v2969, %v2965
      %v3002 = vpack.c.b16 %v2970, %v2966
      %3035 = vmatpush.bf16.msra.mxu0 %v2999
      %3036 = vmatpush.bf16.msra.mxu0 %v2995
      %3037 = vmatpush.bf16.msra.mxu0 %v2991
      %3038 = vmatpush.bf16.msra.mxu0 %v2987
      %3039 = vmatpush.bf16.msra.mxu0 %v2983
      %3040 = vmatpush.bf16.msra.mxu0 %v2979
      %3041 = vmatpush.bf16.msra.mxu0 %v2975
      %3042 = vmatpush.bf16.msra.mxu0 %v2971
      %3043 = vmatmul.bf16.gmra.mxu0 %v2217
      %v3044 = vpop.f32.mrf.mxu0
      %v3045 = vadd.f32 0.0, %v3044
      %v3046 = vpop.f32.mrf.mxu0
      %3047 = vdwg.mxu0
      %3048 = vmatpush.bf16.msra.mxu0 %v3000
      %3049 = vmatpush.bf16.msra.mxu0 %v2996
      %3050 = vmatpush.bf16.msra.mxu0 %v2992
      %3051 = vmatpush.bf16.msra.mxu0 %v2988
      %3052 = vmatpush.bf16.msra.mxu0 %v2984
      %3053 = vmatpush.bf16.msra.mxu0 %v2980
      %3054 = vmatpush.bf16.msra.mxu0 %v2976
      %3055 = vmatpush.bf16.msra.mxu0 %v2972
      %3056 = vmatmul.bf16.gmra.mxu0 %v2217
      %v3057 = vpop.f32.mrf.mxu0
      %v3058 = vadd.f32 0.0, %v3057
      %v3059 = vpop.f32.mrf.mxu0
      %3060 = vdwg.mxu0
      %3061 = vmatpush.bf16.msra.mxu0 %v3001
      %3062 = vmatpush.bf16.msra.mxu0 %v2997
      %3063 = vmatpush.bf16.msra.mxu0 %v2993
      %3064 = vmatpush.bf16.msra.mxu0 %v2989
      %3065 = vmatpush.bf16.msra.mxu0 %v2985
      %3066 = vmatpush.bf16.msra.mxu0 %v2981
      %3067 = vmatpush.bf16.msra.mxu0 %v2977
      %3068 = vmatpush.bf16.msra.mxu0 %v2973
      %3069 = vmatmul.bf16.gmra.mxu0 %v2217
      %v3070 = vpop.f32.mrf.mxu0
      %v3071 = vadd.f32 0.0, %v3070
      %v3072 = vpop.f32.mrf.mxu0
      %3073 = vdwg.mxu0
      %3074 = vmatpush.bf16.msra.mxu0 %v3002
      %3075 = vmatpush.bf16.msra.mxu0 %v2998
      %3076 = vmatpush.bf16.msra.mxu0 %v2994
      %3077 = vmatpush.bf16.msra.mxu0 %v2990
      %3078 = vmatpush.bf16.msra.mxu0 %v2986
      %3079 = vmatpush.bf16.msra.mxu0 %v2982
      %3080 = vmatpush.bf16.msra.mxu0 %v2978
      %3081 = vmatpush.bf16.msra.mxu0 %v2974
      %3082 = vmatmul.bf16.gmra.mxu0 %v2217
      %v3083 = vpop.f32.mrf.mxu0
      %v3084 = vadd.f32 0.0, %v3083
      %v3085 = vpop.f32.mrf.mxu0
      %3086 = vdwg.mxu0
      %v3087 = vadd.f32 %v2839, %v3045
      %v3088 = vadd.f32 %v2840, %v3058
      %v3089 = vadd.f32 %v2841, %v3071
      %v3090 = vadd.f32 %v2842, %v3084
      %v3091 = vxor.u32 %v3087, 2147483648
      %v3092 = vxor.u32 %v3088, 2147483648
      %v3093 = vxor.u32 %v3089, 2147483648
      %v3094 = vmul.f32 %v3091, 1.442695
      %v3095 = vpow.pop %v3094
      %v3096 = vmul.f32 %v3092, 1.442695
      %v3097 = vpow.pop %v3096
      %v3098 = vmul.f32 %v3093, 1.442695
      %v3099 = vpow.pop %v3098
      %v3100 = vadd.f32 %v3095, 1.0
      %v3101 = vadd.f32 %v3097, 1.0
      %v3102 = vadd.f32 %v3099, 1.0
      %v3103 = vrcp.pop %v3100
      %v3104 = vmul.f32 %v3100, %v3103
      %v3105 = vsub.f32 1.0, %v3104
      %v3106 = vmul.f32 %v3103, %v3105
      %v3107 = vadd.f32 %v3103, %v3106
      %vm3108 = vweird.f32 %v3100
      %vm3109 = vweird.f32 %v3103
      %vm3110 = vmor %vm3108, %vm3109
      %v3111 = vsel %vm3110, %v3103, %v3107
      %v3112 = vand.u32 2147483647, %v3100
      %vm3113 = vcmp.eq.f32.partialorder %v3112, 8.507059e+37
      %v3114 = vand.u32 %v3100, 2147483648
      %v3115 = vor.u32 1.1754944e-38, %v3114
      %v3116 = vsel %vm3113, %v3115, %v3111
      %v3117 = vmul.f32 1.0, %v3116
      %v3118 = vrcp.pop %v3101
      %v3119 = vmul.f32 %v3101, %v3118
      %v3120 = vsub.f32 1.0, %v3119
      %v3121 = vmul.f32 %v3118, %v3120
      %v3122 = vadd.f32 %v3118, %v3121
      %vm3123 = vweird.f32 %v3101
      %vm3124 = vweird.f32 %v3118
      %vm3125 = vmor %vm3123, %vm3124
      %v3126 = vsel %vm3125, %v3118, %v3122
      %v3127 = vand.u32 2147483647, %v3101
      %vm3128 = vcmp.eq.f32.partialorder %v3127, 8.507059e+37
      %v3129 = vand.u32 %v3101, 2147483648
      %v3130 = vor.u32 1.1754944e-38, %v3129
      %v3131 = vsel %vm3128, %v3130, %v3126
      %v3132 = vmul.f32 1.0, %v3131
      %v3133 = vrcp.pop %v3102
      %v3134 = vmul.f32 %v3102, %v3133
      %v3135 = vsub.f32 1.0, %v3134
      %v3136 = vmul.f32 %v3133, %v3135
      %v3137 = vadd.f32 %v3133, %v3136
      %vm3138 = vweird.f32 %v3102
      %vm3139 = vweird.f32 %v3133
      %vm3140 = vmor %vm3138, %vm3139
      %v3141 = vsel %vm3140, %v3133, %v3137
      %v3142 = vand.u32 2147483647, %v3102
      %vm3143 = vcmp.eq.f32.partialorder %v3142, 8.507059e+37
      %v3144 = vand.u32 %v3102, 2147483648
      %v3145 = vor.u32 1.1754944e-38, %v3144
      %v3146 = vsel %vm3143, %v3145, %v3141
      %v3147 = vmul.f32 1.0, %v3146
      %v3148 = vtanh.pop %v3090
      %v3149 = vmul.f32 %v3132, %v2214
      %v3150 = vmul.f32 %v3117, %v3148
      %v3151 = vadd.f32 %v3149, %v3150
      %v3152 = vtanh.pop %v3151
      %v3153 = vmul.f32 %v3147, %v3152
      %v3154 = vpack.c.bf16 %v3153, %v3153
      %3155 = vst [vmem:[#allocation5] sm:$0xf] %v3154
      %v3156 = vld [vmem:[%s1263] sm:$0xff]
      %v3157 = vld [vmem:[%s1263 + $0x8] sm:$0xff]
      %v3158 = vld [vmem:[%s1263 + $0x10] sm:$0xff]
      %v3159 = vld [vmem:[%s1263 + $0x18] sm:$0xff]
      %v3160 = vld [vmem:[%s6] sm:$0xff]
      %v3161 = vld [vmem:[%s6 + $0x8] sm:$0xff]
      %v3162 = vld [vmem:[%s6 + $0x10] sm:$0xff]
      %v3163 = vld [vmem:[%s6 + $0x18] sm:$0xff]
      %v3164 = vld [vmem:[%s6 + $0x20] sm:$0xff]
      %v3165 = vld [vmem:[%s6 + $0x28] sm:$0xff]
      %v3166 = vld [vmem:[%s6 + $0x30] sm:$0xff]
      %v3167 = vld [vmem:[%s6 + $0x38] sm:$0xff]
      %v3168 = vld [vmem:[%s6 + $0x40] sm:$0xff]
      %v3169 = vld [vmem:[%s6 + $0x48] sm:$0xff]
      %v3170 = vld [vmem:[%s6 + $0x50] sm:$0xff]
      %v3171 = vld [vmem:[%s6 + $0x58] sm:$0xff]
      %v3172 = vld [vmem:[%s6 + $0x60] sm:$0xff]
      %v3173 = vld [vmem:[%s6 + $0x68] sm:$0xff]
      %v3174 = vld [vmem:[%s6 + $0x70] sm:$0xff]
      %v3175 = vld [vmem:[%s6 + $0x78] sm:$0xff]
      %v3176 = vld [vmem:[%s6 + $0x80] sm:$0xff]
      %v3177 = vld [vmem:[%s6 + $0x88] sm:$0xff]
      %v3178 = vld [vmem:[%s6 + $0x90] sm:$0xff]
      %v3179 = vld [vmem:[%s6 + $0x98] sm:$0xff]
      %v3180 = vld [vmem:[%s6 + $0xa0] sm:$0xff]
      %v3181 = vld [vmem:[%s6 + $0xa8] sm:$0xff]
      %v3182 = vld [vmem:[%s6 + $0xb0] sm:$0xff]
      %v3183 = vld [vmem:[%s6 + $0xb8] sm:$0xff]
      %v3184 = vld [vmem:[%s6 + $0xc0] sm:$0xff]
      %v3185 = vld [vmem:[%s6 + $0xc8] sm:$0xff]
      %v3186 = vld [vmem:[%s6 + $0xd0] sm:$0xff]
      %v3187 = vld [vmem:[%s6 + $0xd8] sm:$0xff]
      %v3188 = vld [vmem:[%s6 + $0xe0] sm:$0xff]
      %v3189 = vld [vmem:[%s6 + $0xe8] sm:$0xff]
      %v3190 = vld [vmem:[%s6 + $0xf0] sm:$0xff]
      %v3191 = vld [vmem:[%s6 + $0xf8] sm:$0xff]
      %v3224 = vunpack.c.l.b16 %v3160
      %v3225 = vunpack.c.h.b16 %v3160
      %v3226 = vunpack.c.l.b16 %v3161
      %v3227 = vunpack.c.h.b16 %v3161
      %v3228 = vunpack.c.l.b16 %v3162
      %v3229 = vunpack.c.h.b16 %v3162
      %v3230 = vunpack.c.l.b16 %v3163
      %v3231 = vunpack.c.h.b16 %v3163
      %v3232 = vunpack.c.l.b16 %v3164
      %v3233 = vunpack.c.h.b16 %v3164
      %v3234 = vunpack.c.l.b16 %v3165
      %v3235 = vunpack.c.h.b16 %v3165
      %v3236 = vunpack.c.l.b16 %v3166
      %v3237 = vunpack.c.h.b16 %v3166
      %v3238 = vunpack.c.l.b16 %v3167
      %v3239 = vunpack.c.h.b16 %v3167
      %v3240 = vunpack.c.l.b16 %v3168
      %v3241 = vunpack.c.h.b16 %v3168
      %v3242 = vunpack.c.l.b16 %v3169
      %v3243 = vunpack.c.h.b16 %v3169
      %v3244 = vunpack.c.l.b16 %v3170
      %v3245 = vunpack.c.h.b16 %v3170
      %v3246 = vunpack.c.l.b16 %v3171
      %v3247 = vunpack.c.h.b16 %v3171
      %v3248 = vunpack.c.l.b16 %v3172
      %v3249 = vunpack.c.h.b16 %v3172
      %v3250 = vunpack.c.l.b16 %v3173
      %v3251 = vunpack.c.h.b16 %v3173
      %v3252 = vunpack.c.l.b16 %v3174
      %v3253 = vunpack.c.h.b16 %v3174
      %v3254 = vunpack.c.l.b16 %v3175
      %v3255 = vunpack.c.h.b16 %v3175
      %v3256 = vunpack.c.l.b16 %v3176
      %v3257 = vunpack.c.h.b16 %v3176
      %v3258 = vunpack.c.l.b16 %v3177
      %v3259 = vunpack.c.h.b16 %v3177
      %v3260 = vunpack.c.l.b16 %v3178
      %v3261 = vunpack.c.h.b16 %v3178
      %v3262 = vunpack.c.l.b16 %v3179
      %v3263 = vunpack.c.h.b16 %v3179
      %v3264 = vunpack.c.l.b16 %v3180
      %v3265 = vunpack.c.h.b16 %v3180
      %v3266 = vunpack.c.l.b16 %v3181
      %v3267 = vunpack.c.h.b16 %v3181
      %v3268 = vunpack.c.l.b16 %v3182
      %v3269 = vunpack.c.h.b16 %v3182
      %v3270 = vunpack.c.l.b16 %v3183
      %v3271 = vunpack.c.h.b16 %v3183
      %v3272 = vunpack.c.l.b16 %v3184
      %v3273 = vunpack.c.h.b16 %v3184
      %v3274 = vunpack.c.l.b16 %v3185
      %v3275 = vunpack.c.h.b16 %v3185
      %v3276 = vunpack.c.l.b16 %v3186
      %v3277 = vunpack.c.h.b16 %v3186
      %v3278 = vunpack.c.l.b16 %v3187
      %v3279 = vunpack.c.h.b16 %v3187
      %v3280 = vunpack.c.l.b16 %v3188
      %v3281 = vunpack.c.h.b16 %v3188
      %v3282 = vunpack.c.l.b16 %v3189
      %v3283 = vunpack.c.h.b16 %v3189
      %v3284 = vunpack.c.l.b16 %v3190
      %v3285 = vunpack.c.h.b16 %v3190
      %v3286 = vunpack.c.l.b16 %v3191
      %v3287 = vunpack.c.h.b16 %v3191
      %v3288 = vpack.c.b16 %v3228, %v3224
      %v3289 = vpack.c.b16 %v3229, %v3225
      %v3290 = vpack.c.b16 %v3230, %v3226
      %v3291 = vpack.c.b16 %v3231, %v3227
      %v3292 = vpack.c.b16 %v3236, %v3232
      %v3293 = vpack.c.b16 %v3237, %v3233
      %v3294 = vpack.c.b16 %v3238, %v3234
      %v3295 = vpack.c.b16 %v3239, %v3235
      %v3296 = vpack.c.b16 %v3244, %v3240
      %v3297 = vpack.c.b16 %v3245, %v3241
      %v3298 = vpack.c.b16 %v3246, %v3242
      %v3299 = vpack.c.b16 %v3247, %v3243
      %v3300 = vpack.c.b16 %v3252, %v3248
      %v3301 = vpack.c.b16 %v3253, %v3249
      %v3302 = vpack.c.b16 %v3254, %v3250
      %v3303 = vpack.c.b16 %v3255, %v3251
      %v3304 = vpack.c.b16 %v3260, %v3256
      %v3305 = vpack.c.b16 %v3261, %v3257
      %v3306 = vpack.c.b16 %v3262, %v3258
      %v3307 = vpack.c.b16 %v3263, %v3259
      %v3308 = vpack.c.b16 %v3268, %v3264
      %v3309 = vpack.c.b16 %v3269, %v3265
      %v3310 = vpack.c.b16 %v3270, %v3266
      %v3311 = vpack.c.b16 %v3271, %v3267
      %v3312 = vpack.c.b16 %v3276, %v3272
      %v3313 = vpack.c.b16 %v3277, %v3273
      %v3314 = vpack.c.b16 %v3278, %v3274
      %v3315 = vpack.c.b16 %v3279, %v3275
      %v3316 = vpack.c.b16 %v3284, %v3280
      %v3317 = vpack.c.b16 %v3285, %v3281
      %v3318 = vpack.c.b16 %v3286, %v3282
      %v3319 = vpack.c.b16 %v3287, %v3283
      %3352 = vmatpush.bf16.msra.mxu0 %v3316
      %3353 = vmatpush.bf16.msra.mxu0 %v3312
      %3354 = vmatpush.bf16.msra.mxu0 %v3308
      %3355 = vmatpush.bf16.msra.mxu0 %v3304
      %3356 = vmatpush.bf16.msra.mxu0 %v3300
      %3357 = vmatpush.bf16.msra.mxu0 %v3296
      %3358 = vmatpush.bf16.msra.mxu0 %v3292
      %3359 = vmatpush.bf16.msra.mxu0 %v3288
      %3360 = vmatmul.bf16.gmra.mxu0 %v3154
      %v3361 = vpop.f32.mrf.mxu0
      %v3362 = vadd.f32 0.0, %v3361
      %v3363 = vpop.f32.mrf.mxu0
      %3364 = vdwg.mxu0
      %3365 = vmatpush.bf16.msra.mxu0 %v3317
      %3366 = vmatpush.bf16.msra.mxu0 %v3313
      %3367 = vmatpush.bf16.msra.mxu0 %v3309
      %3368 = vmatpush.bf16.msra.mxu0 %v3305
      %3369 = vmatpush.bf16.msra.mxu0 %v3301
      %3370 = vmatpush.bf16.msra.mxu0 %v3297
      %3371 = vmatpush.bf16.msra.mxu0 %v3293
      %3372 = vmatpush.bf16.msra.mxu0 %v3289
      %3373 = vmatmul.bf16.gmra.mxu0 %v3154
      %v3374 = vpop.f32.mrf.mxu0
      %v3375 = vadd.f32 0.0, %v3374
      %v3376 = vpop.f32.mrf.mxu0
      %3377 = vdwg.mxu0
      %3378 = vmatpush.bf16.msra.mxu0 %v3318
      %3379 = vmatpush.bf16.msra.mxu0 %v3314
      %3380 = vmatpush.bf16.msra.mxu0 %v3310
      %3381 = vmatpush.bf16.msra.mxu0 %v3306
      %3382 = vmatpush.bf16.msra.mxu0 %v3302
      %3383 = vmatpush.bf16.msra.mxu0 %v3298
      %3384 = vmatpush.bf16.msra.mxu0 %v3294
      %3385 = vmatpush.bf16.msra.mxu0 %v3290
      %3386 = vmatmul.bf16.gmra.mxu0 %v3154
      %v3387 = vpop.f32.mrf.mxu0
      %v3388 = vadd.f32 0.0, %v3387
      %v3389 = vpop.f32.mrf.mxu0
      %3390 = vdwg.mxu0
      %3391 = vmatpush.bf16.msra.mxu0 %v3319
      %3392 = vmatpush.bf16.msra.mxu0 %v3315
      %3393 = vmatpush.bf16.msra.mxu0 %v3311
      %3394 = vmatpush.bf16.msra.mxu0 %v3307
      %3395 = vmatpush.bf16.msra.mxu0 %v3303
      %3396 = vmatpush.bf16.msra.mxu0 %v3299
      %3397 = vmatpush.bf16.msra.mxu0 %v3295
      %3398 = vmatpush.bf16.msra.mxu0 %v3291
      %3399 = vmatmul.bf16.gmra.mxu0 %v3154
      %v3400 = vpop.f32.mrf.mxu0
      %v3401 = vadd.f32 0.0, %v3400
      %v3402 = vpop.f32.mrf.mxu0
      %3403 = vdwg.mxu0
      %v3404 = vadd.f32 %v3156, %v3362
      %v3405 = vadd.f32 %v3157, %v3375
      %v3406 = vadd.f32 %v3158, %v3388
      %v3407 = vadd.f32 %v3159, %v3401
      %v3408 = vxor.u32 %v3404, 2147483648
      %v3409 = vxor.u32 %v3405, 2147483648
      %v3410 = vxor.u32 %v3406, 2147483648
      %v3411 = vmul.f32 %v3408, 1.442695
      %v3412 = vpow.pop %v3411
      %v3413 = vmul.f32 %v3409, 1.442695
      %v3414 = vpow.pop %v3413
      %v3415 = vmul.f32 %v3410, 1.442695
      %v3416 = vpow.pop %v3415
      %v3417 = vadd.f32 %v3412, 1.0
      %v3418 = vadd.f32 %v3414, 1.0
      %v3419 = vadd.f32 %v3416, 1.0
      %v3420 = vrcp.pop %v3417
      %v3421 = vmul.f32 %v3417, %v3420
      %v3422 = vsub.f32 1.0, %v3421
      %v3423 = vmul.f32 %v3420, %v3422
      %v3424 = vadd.f32 %v3420, %v3423
      %vm3425 = vweird.f32 %v3417
      %vm3426 = vweird.f32 %v3420
      %vm3427 = vmor %vm3425, %vm3426
      %v3428 = vsel %vm3427, %v3420, %v3424
      %v3429 = vand.u32 2147483647, %v3417
      %vm3430 = vcmp.eq.f32.partialorder %v3429, 8.507059e+37
      %v3431 = vand.u32 %v3417, 2147483648
      %v3432 = vor.u32 1.1754944e-38, %v3431
      %v3433 = vsel %vm3430, %v3432, %v3428
      %v3434 = vmul.f32 1.0, %v3433
      %v3435 = vrcp.pop %v3418
      %v3436 = vmul.f32 %v3418, %v3435
      %v3437 = vsub.f32 1.0, %v3436
      %v3438 = vmul.f32 %v3435, %v3437
      %v3439 = vadd.f32 %v3435, %v3438
      %vm3440 = vweird.f32 %v3418
      %vm3441 = vweird.f32 %v3435
      %vm3442 = vmor %vm3440, %vm3441
      %v3443 = vsel %vm3442, %v3435, %v3439
      %v3444 = vand.u32 2147483647, %v3418
      %vm3445 = vcmp.eq.f32.partialorder %v3444, 8.507059e+37
      %v3446 = vand.u32 %v3418, 2147483648
      %v3447 = vor.u32 1.1754944e-38, %v3446
      %v3448 = vsel %vm3445, %v3447, %v3443
      %v3449 = vmul.f32 1.0, %v3448
      %v3450 = vrcp.pop %v3419
      %v3451 = vmul.f32 %v3419, %v3450
      %v3452 = vsub.f32 1.0, %v3451
      %v3453 = vmul.f32 %v3450, %v3452
      %v3454 = vadd.f32 %v3450, %v3453
      %vm3455 = vweird.f32 %v3419
      %vm3456 = vweird.f32 %v3450
      %vm3457 = vmor %vm3455, %vm3456
      %v3458 = vsel %vm3457, %v3450, %v3454
      %v3459 = vand.u32 2147483647, %v3419
      %vm3460 = vcmp.eq.f32.partialorder %v3459, 8.507059e+37
      %v3461 = vand.u32 %v3419, 2147483648
      %v3462 = vor.u32 1.1754944e-38, %v3461
      %v3463 = vsel %vm3460, %v3462, %v3458
      %v3464 = vmul.f32 1.0, %v3463
      %v3465 = vtanh.pop %v3407
      %v3466 = vmul.f32 %v3449, %v3151
      %v3467 = vmul.f32 %v3434, %v3465
      %v3468 = vadd.f32 %v3466, %v3467
      %v3469 = vtanh.pop %v3468
      %v3470 = vmul.f32 %v3464, %v3469
      %v3471 = vpack.c.bf16 %v3470, %v3470
      %3472 = vst [vmem:[%s1580] sm:$0xf] %v3471
      %v3473 = vld [vmem:[%s1582] sm:$0xff]
      %v3474 = vld [vmem:[%s1582 + $0x8] sm:$0xff]
      %v3475 = vld [vmem:[%s1582 + $0x10] sm:$0xff]
      %v3476 = vld [vmem:[%s1582 + $0x18] sm:$0xff]
      %v3477 = vld [vmem:[%s6] sm:$0xff]
      %v3478 = vld [vmem:[%s6 + $0x8] sm:$0xff]
      %v3479 = vld [vmem:[%s6 + $0x10] sm:$0xff]
      %v3480 = vld [vmem:[%s6 + $0x18] sm:$0xff]
      %v3481 = vld [vmem:[%s6 + $0x20] sm:$0xff]
      %v3482 = vld [vmem:[%s6 + $0x28] sm:$0xff]
      %v3483 = vld [vmem:[%s6 + $0x30] sm:$0xff]
      %v3484 = vld [vmem:[%s6 + $0x38] sm:$0xff]
      %v3485 = vld [vmem:[%s6 + $0x40] sm:$0xff]
      %v3486 = vld [vmem:[%s6 + $0x48] sm:$0xff]
      %v3487 = vld [vmem:[%s6 + $0x50] sm:$0xff]
      %v3488 = vld [vmem:[%s6 + $0x58] sm:$0xff]
      %v3489 = vld [vmem:[%s6 + $0x60] sm:$0xff]
      %v3490 = vld [vmem:[%s6 + $0x68] sm:$0xff]
      %v3491 = vld [vmem:[%s6 + $0x70] sm:$0xff]
      %v3492 = vld [vmem:[%s6 + $0x78] sm:$0xff]
      %v3493 = vld [vmem:[%s6 + $0x80] sm:$0xff]
      %v3494 = vld [vmem:[%s6 + $0x88] sm:$0xff]
      %v3495 = vld [vmem:[%s6 + $0x90] sm:$0xff]
      %v3496 = vld [vmem:[%s6 + $0x98] sm:$0xff]
      %v3497 = vld [vmem:[%s6 + $0xa0] sm:$0xff]
      %v3498 = vld [vmem:[%s6 + $0xa8] sm:$0xff]
      %v3499 = vld [vmem:[%s6 + $0xb0] sm:$0xff]
      %v3500 = vld [vmem:[%s6 + $0xb8] sm:$0xff]
      %v3501 = vld [vmem:[%s6 + $0xc0] sm:$0xff]
      %v3502 = vld [vmem:[%s6 + $0xc8] sm:$0xff]
      %v3503 = vld [vmem:[%s6 + $0xd0] sm:$0xff]
      %v3504 = vld [vmem:[%s6 + $0xd8] sm:$0xff]
      %v3505 = vld [vmem:[%s6 + $0xe0] sm:$0xff]
      %v3506 = vld [vmem:[%s6 + $0xe8] sm:$0xff]
      %v3507 = vld [vmem:[%s6 + $0xf0] sm:$0xff]
      %v3508 = vld [vmem:[%s6 + $0xf8] sm:$0xff]
      %v3541 = vunpack.c.l.b16 %v3477
      %v3542 = vunpack.c.h.b16 %v3477
      %v3543 = vunpack.c.l.b16 %v3478
      %v3544 = vunpack.c.h.b16 %v3478
      %v3545 = vunpack.c.l.b16 %v3479
      %v3546 = vunpack.c.h.b16 %v3479
      %v3547 = vunpack.c.l.b16 %v3480
      %v3548 = vunpack.c.h.b16 %v3480
      %v3549 = vunpack.c.l.b16 %v3481
      %v3550 = vunpack.c.h.b16 %v3481
      %v3551 = vunpack.c.l.b16 %v3482
      %v3552 = vunpack.c.h.b16 %v3482
      %v3553 = vunpack.c.l.b16 %v3483
      %v3554 = vunpack.c.h.b16 %v3483
      %v3555 = vunpack.c.l.b16 %v3484
      %v3556 = vunpack.c.h.b16 %v3484
      %v3557 = vunpack.c.l.b16 %v3485
      %v3558 = vunpack.c.h.b16 %v3485
      %v3559 = vunpack.c.l.b16 %v3486
      %v3560 = vunpack.c.h.b16 %v3486
      %v3561 = vunpack.c.l.b16 %v3487
      %v3562 = vunpack.c.h.b16 %v3487
      %v3563 = vunpack.c.l.b16 %v3488
      %v3564 = vunpack.c.h.b16 %v3488
      %v3565 = vunpack.c.l.b16 %v3489
      %v3566 = vunpack.c.h.b16 %v3489
      %v3567 = vunpack.c.l.b16 %v3490
      %v3568 = vunpack.c.h.b16 %v3490
      %v3569 = vunpack.c.l.b16 %v3491
      %v3570 = vunpack.c.h.b16 %v3491
      %v3571 = vunpack.c.l.b16 %v3492
      %v3572 = vunpack.c.h.b16 %v3492
      %v3573 = vunpack.c.l.b16 %v3493
      %v3574 = vunpack.c.h.b16 %v3493
      %v3575 = vunpack.c.l.b16 %v3494
      %v3576 = vunpack.c.h.b16 %v3494
      %v3577 = vunpack.c.l.b16 %v3495
      %v3578 = vunpack.c.h.b16 %v3495
      %v3579 = vunpack.c.l.b16 %v3496
      %v3580 = vunpack.c.h.b16 %v3496
      %v3581 = vunpack.c.l.b16 %v3497
      %v3582 = vunpack.c.h.b16 %v3497
      %v3583 = vunpack.c.l.b16 %v3498
      %v3584 = vunpack.c.h.b16 %v3498
      %v3585 = vunpack.c.l.b16 %v3499
      %v3586 = vunpack.c.h.b16 %v3499
      %v3587 = vunpack.c.l.b16 %v3500
      %v3588 = vunpack.c.h.b16 %v3500
      %v3589 = vunpack.c.l.b16 %v3501
      %v3590 = vunpack.c.h.b16 %v3501
      %v3591 = vunpack.c.l.b16 %v3502
      %v3592 = vunpack.c.h.b16 %v3502
      %v3593 = vunpack.c.l.b16 %v3503
      %v3594 = vunpack.c.h.b16 %v3503
      %v3595 = vunpack.c.l.b16 %v3504
      %v3596 = vunpack.c.h.b16 %v3504
      %v3597 = vunpack.c.l.b16 %v3505
      %v3598 = vunpack.c.h.b16 %v3505
      %v3599 = vunpack.c.l.b16 %v3506
      %v3600 = vunpack.c.h.b16 %v3506
      %v3601 = vunpack.c.l.b16 %v3507
      %v3602 = vunpack.c.h.b16 %v3507
      %v3603 = vunpack.c.l.b16 %v3508
      %v3604 = vunpack.c.h.b16 %v3508
      %v3605 = vpack.c.b16 %v3545, %v3541
      %v3606 = vpack.c.b16 %v3546, %v3542
      %v3607 = vpack.c.b16 %v3547, %v3543
      %v3608 = vpack.c.b16 %v3548, %v3544
      %v3609 = vpack.c.b16 %v3553, %v3549
      %v3610 = vpack.c.b16 %v3554, %v3550
      %v3611 = vpack.c.b16 %v3555, %v3551
      %v3612 = vpack.c.b16 %v3556, %v3552
      %v3613 = vpack.c.b16 %v3561, %v3557
      %v3614 = vpack.c.b16 %v3562, %v3558
      %v3615 = vpack.c.b16 %v3563, %v3559
      %v3616 = vpack.c.b16 %v3564, %v3560
      %v3617 = vpack.c.b16 %v3569, %v3565
      %v3618 = vpack.c.b16 %v3570, %v3566
      %v3619 = vpack.c.b16 %v3571, %v3567
      %v3620 = vpack.c.b16 %v3572, %v3568
      %v3621 = vpack.c.b16 %v3577, %v3573
      %v3622 = vpack.c.b16 %v3578, %v3574
      %v3623 = vpack.c.b16 %v3579, %v3575
      %v3624 = vpack.c.b16 %v3580, %v3576
      %v3625 = vpack.c.b16 %v3585, %v3581
      %v3626 = vpack.c.b16 %v3586, %v3582
      %v3627 = vpack.c.b16 %v3587, %v3583
      %v3628 = vpack.c.b16 %v3588, %v3584
      %v3629 = vpack.c.b16 %v3593, %v3589
      %v3630 = vpack.c.b16 %v3594, %v3590
      %v3631 = vpack.c.b16 %v3595, %v3591
      %v3632 = vpack.c.b16 %v3596, %v3592
      %v3633 = vpack.c.b16 %v3601, %v3597
      %v3634 = vpack.c.b16 %v3602, %v3598
      %v3635 = vpack.c.b16 %v3603, %v3599
      %v3636 = vpack.c.b16 %v3604, %v3600
      %3669 = vmatpush.bf16.msra.mxu0 %v3633
      %3670 = vmatpush.bf16.msra.mxu0 %v3629
      %3671 = vmatpush.bf16.msra.mxu0 %v3625
      %3672 = vmatpush.bf16.msra.mxu0 %v3621
      %3673 = vmatpush.bf16.msra.mxu0 %v3617
      %3674 = vmatpush.bf16.msra.mxu0 %v3613
      %3675 = vmatpush.bf16.msra.mxu0 %v3609
      %3676 = vmatpush.bf16.msra.mxu0 %v3605
      %3677 = vmatmul.bf16.gmra.mxu0 %v3471
      %v3678 = vpop.f32.mrf.mxu0
      %v3679 = vadd.f32 0.0, %v3678
      %v3680 = vpop.f32.mrf.mxu0
      %3681 = vdwg.mxu0
      %3682 = vmatpush.bf16.msra.mxu0 %v3634
      %3683 = vmatpush.bf16.msra.mxu0 %v3630
      %3684 = vmatpush.bf16.msra.mxu0 %v3626
      %3685 = vmatpush.bf16.msra.mxu0 %v3622
      %3686 = vmatpush.bf16.msra.mxu0 %v3618
      %3687 = vmatpush.bf16.msra.mxu0 %v3614
      %3688 = vmatpush.bf16.msra.mxu0 %v3610
      %3689 = vmatpush.bf16.msra.mxu0 %v3606
      %3690 = vmatmul.bf16.gmra.mxu0 %v3471
      %v3691 = vpop.f32.mrf.mxu0
      %v3692 = vadd.f32 0.0, %v3691
      %v3693 = vpop.f32.mrf.mxu0
      %3694 = vdwg.mxu0
      %3695 = vmatpush.bf16.msra.mxu0 %v3635
      %3696 = vmatpush.bf16.msra.mxu0 %v3631
      %3697 = vmatpush.bf16.msra.mxu0 %v3627
      %3698 = vmatpush.bf16.msra.mxu0 %v3623
      %3699 = vmatpush.bf16.msra.mxu0 %v3619
      %3700 = vmatpush.bf16.msra.mxu0 %v3615
      %3701 = vmatpush.bf16.msra.mxu0 %v3611
      %3702 = vmatpush.bf16.msra.mxu0 %v3607
      %3703 = vmatmul.bf16.gmra.mxu0 %v3471
      %v3704 = vpop.f32.mrf.mxu0
      %v3705 = vadd.f32 0.0, %v3704
      %v3706 = vpop.f32.mrf.mxu0
      %3707 = vdwg.mxu0
      %3708 = vmatpush.bf16.msra.mxu0 %v3636
      %3709 = vmatpush.bf16.msra.mxu0 %v3632
      %3710 = vmatpush.bf16.msra.mxu0 %v3628
      %3711 = vmatpush.bf16.msra.mxu0 %v3624
      %3712 = vmatpush.bf16.msra.mxu0 %v3620
      %3713 = vmatpush.bf16.msra.mxu0 %v3616
      %3714 = vmatpush.bf16.msra.mxu0 %v3612
      %3715 = vmatpush.bf16.msra.mxu0 %v3608
      %3716 = vmatmul.bf16.gmra.mxu0 %v3471
      %v3717 = vpop.f32.mrf.mxu0
      %v3718 = vadd.f32 0.0, %v3717
      %v3719 = vpop.f32.mrf.mxu0
      %3720 = vdwg.mxu0
      %v3721 = vadd.f32 %v3473, %v3679
      %v3722 = vadd.f32 %v3474, %v3692
      %v3723 = vadd.f32 %v3475, %v3705
      %v3724 = vadd.f32 %v3476, %v3718
      %v3725 = vxor.u32 %v3721, 2147483648
      %v3726 = vxor.u32 %v3722, 2147483648
      %v3727 = vxor.u32 %v3723, 2147483648
      %v3728 = vmul.f32 %v3725, 1.442695
      %v3729 = vpow.pop %v3728
      %v3730 = vmul.f32 %v3726, 1.442695
      %v3731 = vpow.pop %v3730
      %v3732 = vmul.f32 %v3727, 1.442695
      %v3733 = vpow.pop %v3732
      %v3734 = vadd.f32 %v3729, 1.0
      %v3735 = vadd.f32 %v3731, 1.0
      %v3736 = vadd.f32 %v3733, 1.0
      %v3737 = vrcp.pop %v3734
      %v3738 = vmul.f32 %v3734, %v3737
      %v3739 = vsub.f32 1.0, %v3738
      %v3740 = vmul.f32 %v3737, %v3739
      %v3741 = vadd.f32 %v3737, %v3740
      %vm3742 = vweird.f32 %v3734
      %vm3743 = vweird.f32 %v3737
      %vm3744 = vmor %vm3742, %vm3743
      %v3745 = vsel %vm3744, %v3737, %v3741
      %v3746 = vand.u32 2147483647, %v3734
      %vm3747 = vcmp.eq.f32.partialorder %v3746, 8.507059e+37
      %v3748 = vand.u32 %v3734, 2147483648
      %v3749 = vor.u32 1.1754944e-38, %v3748
      %v3750 = vsel %vm3747, %v3749, %v3745
      %v3751 = vmul.f32 1.0, %v3750
      %v3752 = vrcp.pop %v3735
      %v3753 = vmul.f32 %v3735, %v3752
      %v3754 = vsub.f32 1.0, %v3753
      %v3755 = vmul.f32 %v3752, %v3754
      %v3756 = vadd.f32 %v3752, %v3755
      %vm3757 = vweird.f32 %v3735
      %vm3758 = vweird.f32 %v3752
      %vm3759 = vmor %vm3757, %vm3758
      %v3760 = vsel %vm3759, %v3752, %v3756
      %v3761 = vand.u32 2147483647, %v3735
      %vm3762 = vcmp.eq.f32.partialorder %v3761, 8.507059e+37
      %v3763 = vand.u32 %v3735, 2147483648
      %v3764 = vor.u32 1.1754944e-38, %v3763
      %v3765 = vsel %vm3762, %v3764, %v3760
      %v3766 = vmul.f32 1.0, %v3765
      %v3767 = vrcp.pop %v3736
      %v3768 = vmul.f32 %v3736, %v3767
      %v3769 = vsub.f32 1.0, %v3768
      %v3770 = vmul.f32 %v3767, %v3769
      %v3771 = vadd.f32 %v3767, %v3770
      %vm3772 = vweird.f32 %v3736
      %vm3773 = vweird.f32 %v3767
      %vm3774 = vmor %vm3772, %vm3773
      %v3775 = vsel %vm3774, %v3767, %v3771
      %v3776 = vand.u32 2147483647, %v3736
      %vm3777 = vcmp.eq.f32.partialorder %v3776, 8.507059e+37
      %v3778 = vand.u32 %v3736, 2147483648
      %v3779 = vor.u32 1.1754944e-38, %v3778
      %v3780 = vsel %vm3777, %v3779, %v3775
      %v3781 = vmul.f32 1.0, %v3780
      %v3782 = vtanh.pop %v3724
      %v3783 = vmul.f32 %v3766, %v3468
      %v3784 = vmul.f32 %v3751, %v3782
      %v3785 = vadd.f32 %v3783, %v3784
      %v3786 = vtanh.pop %v3785
      %v3787 = vmul.f32 %v3781, %v3786
      %v3788 = vpack.c.bf16 %v3787, %v3787
      %3789 = vst [vmem:[%s1899] sm:$0xf] %v3788
      %v3790 = vld [vmem:[%s1901] sm:$0xff]
      %v3791 = vld [vmem:[%s1901 + $0x8] sm:$0xff]
      %v3792 = vld [vmem:[%s1901 + $0x10] sm:$0xff]
      %v3793 = vld [vmem:[%s1901 + $0x18] sm:$0xff]
      %v3794 = vld [vmem:[%s6] sm:$0xff]
      %v3795 = vld [vmem:[%s6 + $0x8] sm:$0xff]
      %v3796 = vld [vmem:[%s6 + $0x10] sm:$0xff]
      %v3797 = vld [vmem:[%s6 + $0x18] sm:$0xff]
      %v3798 = vld [vmem:[%s6 + $0x20] sm:$0xff]
      %v3799 = vld [vmem:[%s6 + $0x28] sm:$0xff]
      %v3800 = vld [vmem:[%s6 + $0x30] sm:$0xff]
      %v3801 = vld [vmem:[%s6 + $0x38] sm:$0xff]
      %v3802 = vld [vmem:[%s6 + $0x40] sm:$0xff]
      %v3803 = vld [vmem:[%s6 + $0x48] sm:$0xff]
      %v3804 = vld [vmem:[%s6 + $0x50] sm:$0xff]
      %v3805 = vld [vmem:[%s6 + $0x58] sm:$0xff]
      %v3806 = vld [vmem:[%s6 + $0x60] sm:$0xff]
      %v3807 = vld [vmem:[%s6 + $0x68] sm:$0xff]
      %v3808 = vld [vmem:[%s6 + $0x70] sm:$0xff]
      %v3809 = vld [vmem:[%s6 + $0x78] sm:$0xff]
      %v3810 = vld [vmem:[%s6 + $0x80] sm:$0xff]
      %v3811 = vld [vmem:[%s6 + $0x88] sm:$0xff]
      %v3812 = vld [vmem:[%s6 + $0x90] sm:$0xff]
      %v3813 = vld [vmem:[%s6 + $0x98] sm:$0xff]
      %v3814 = vld [vmem:[%s6 + $0xa0] sm:$0xff]
      %v3815 = vld [vmem:[%s6 + $0xa8] sm:$0xff]
      %v3816 = vld [vmem:[%s6 + $0xb0] sm:$0xff]
      %v3817 = vld [vmem:[%s6 + $0xb8] sm:$0xff]
      %v3818 = vld [vmem:[%s6 + $0xc0] sm:$0xff]
      %v3819 = vld [vmem:[%s6 + $0xc8] sm:$0xff]
      %v3820 = vld [vmem:[%s6 + $0xd0] sm:$0xff]
      %v3821 = vld [vmem:[%s6 + $0xd8] sm:$0xff]
      %v3822 = vld [vmem:[%s6 + $0xe0] sm:$0xff]
      %v3823 = vld [vmem:[%s6 + $0xe8] sm:$0xff]
      %v3824 = vld [vmem:[%s6 + $0xf0] sm:$0xff]
      %v3825 = vld [vmem:[%s6 + $0xf8] sm:$0xff]
      %v3858 = vunpack.c.l.b16 %v3794
      %v3859 = vunpack.c.h.b16 %v3794
      %v3860 = vunpack.c.l.b16 %v3795
      %v3861 = vunpack.c.h.b16 %v3795
      %v3862 = vunpack.c.l.b16 %v3796
      %v3863 = vunpack.c.h.b16 %v3796
      %v3864 = vunpack.c.l.b16 %v3797
      %v3865 = vunpack.c.h.b16 %v3797
      %v3866 = vunpack.c.l.b16 %v3798
      %v3867 = vunpack.c.h.b16 %v3798
      %v3868 = vunpack.c.l.b16 %v3799
      %v3869 = vunpack.c.h.b16 %v3799
      %v3870 = vunpack.c.l.b16 %v3800
      %v3871 = vunpack.c.h.b16 %v3800
      %v3872 = vunpack.c.l.b16 %v3801
      %v3873 = vunpack.c.h.b16 %v3801
      %v3874 = vunpack.c.l.b16 %v3802
      %v3875 = vunpack.c.h.b16 %v3802
      %v3876 = vunpack.c.l.b16 %v3803
      %v3877 = vunpack.c.h.b16 %v3803
      %v3878 = vunpack.c.l.b16 %v3804
      %v3879 = vunpack.c.h.b16 %v3804
      %v3880 = vunpack.c.l.b16 %v3805
      %v3881 = vunpack.c.h.b16 %v3805
      %v3882 = vunpack.c.l.b16 %v3806
      %v3883 = vunpack.c.h.b16 %v3806
      %v3884 = vunpack.c.l.b16 %v3807
      %v3885 = vunpack.c.h.b16 %v3807
      %v3886 = vunpack.c.l.b16 %v3808
      %v3887 = vunpack.c.h.b16 %v3808
      %v3888 = vunpack.c.l.b16 %v3809
      %v3889 = vunpack.c.h.b16 %v3809
      %v3890 = vunpack.c.l.b16 %v3810
      %v3891 = vunpack.c.h.b16 %v3810
      %v3892 = vunpack.c.l.b16 %v3811
      %v3893 = vunpack.c.h.b16 %v3811
      %v3894 = vunpack.c.l.b16 %v3812
      %v3895 = vunpack.c.h.b16 %v3812
      %v3896 = vunpack.c.l.b16 %v3813
      %v3897 = vunpack.c.h.b16 %v3813
      %v3898 = vunpack.c.l.b16 %v3814
      %v3899 = vunpack.c.h.b16 %v3814
      %v3900 = vunpack.c.l.b16 %v3815
      %v3901 = vunpack.c.h.b16 %v3815
      %v3902 = vunpack.c.l.b16 %v3816
      %v3903 = vunpack.c.h.b16 %v3816
      %v3904 = vunpack.c.l.b16 %v3817
      %v3905 = vunpack.c.h.b16 %v3817
      %v3906 = vunpack.c.l.b16 %v3818
      %v3907 = vunpack.c.h.b16 %v3818
      %v3908 = vunpack.c.l.b16 %v3819
      %v3909 = vunpack.c.h.b16 %v3819
      %v3910 = vunpack.c.l.b16 %v3820
      %v3911 = vunpack.c.h.b16 %v3820
      %v3912 = vunpack.c.l.b16 %v3821
      %v3913 = vunpack.c.h.b16 %v3821
      %v3914 = vunpack.c.l.b16 %v3822
      %v3915 = vunpack.c.h.b16 %v3822
      %v3916 = vunpack.c.l.b16 %v3823
      %v3917 = vunpack.c.h.b16 %v3823
      %v3918 = vunpack.c.l.b16 %v3824
      %v3919 = vunpack.c.h.b16 %v3824
      %v3920 = vunpack.c.l.b16 %v3825
      %v3921 = vunpack.c.h.b16 %v3825
      %v3922 = vpack.c.b16 %v3862, %v3858
      %v3923 = vpack.c.b16 %v3863, %v3859
      %v3924 = vpack.c.b16 %v3864, %v3860
      %v3925 = vpack.c.b16 %v3865, %v3861
      %v3926 = vpack.c.b16 %v3870, %v3866
      %v3927 = vpack.c.b16 %v3871, %v3867
      %v3928 = vpack.c.b16 %v3872, %v3868
      %v3929 = vpack.c.b16 %v3873, %v3869
      %v3930 = vpack.c.b16 %v3878, %v3874
      %v3931 = vpack.c.b16 %v3879, %v3875
      %v3932 = vpack.c.b16 %v3880, %v3876
      %v3933 = vpack.c.b16 %v3881, %v3877
      %v3934 = vpack.c.b16 %v3886, %v3882
      %v3935 = vpack.c.b16 %v3887, %v3883
      %v3936 = vpack.c.b16 %v3888, %v3884
      %v3937 = vpack.c.b16 %v3889, %v3885
      %v3938 = vpack.c.b16 %v3894, %v3890
      %v3939 = vpack.c.b16 %v3895, %v3891
      %v3940 = vpack.c.b16 %v3896, %v3892
      %v3941 = vpack.c.b16 %v3897, %v3893
      %v3942 = vpack.c.b16 %v3902, %v3898
      %v3943 = vpack.c.b16 %v3903, %v3899
      %v3944 = vpack.c.b16 %v3904, %v3900
      %v3945 = vpack.c.b16 %v3905, %v3901
      %v3946 = vpack.c.b16 %v3910, %v3906
      %v3947 = vpack.c.b16 %v3911, %v3907
      %v3948 = vpack.c.b16 %v3912, %v3908
      %v3949 = vpack.c.b16 %v3913, %v3909
      %v3950 = vpack.c.b16 %v3918, %v3914
      %v3951 = vpack.c.b16 %v3919, %v3915
      %v3952 = vpack.c.b16 %v3920, %v3916
      %v3953 = vpack.c.b16 %v3921, %v3917
      %3986 = vmatpush.bf16.msra.mxu0 %v3950
      %3987 = vmatpush.bf16.msra.mxu0 %v3946
      %3988 = vmatpush.bf16.msra.mxu0 %v3942
      %3989 = vmatpush.bf16.msra.mxu0 %v3938
      %3990 = vmatpush.bf16.msra.mxu0 %v3934
      %3991 = vmatpush.bf16.msra.mxu0 %v3930
      %3992 = vmatpush.bf16.msra.mxu0 %v3926
      %3993 = vmatpush.bf16.msra.mxu0 %v3922
      %3994 = vmatmul.bf16.gmra.mxu0 %v3788
      %v3995 = vpop.f32.mrf.mxu0
      %v3996 = vadd.f32 0.0, %v3995
      %v3997 = vpop.f32.mrf.mxu0
      %3998 = vdwg.mxu0
      %3999 = vmatpush.bf16.msra.mxu0 %v3951
      %4000 = vmatpush.bf16.msra.mxu0 %v3947
      %4001 = vmatpush.bf16.msra.mxu0 %v3943
      %4002 = vmatpush.bf16.msra.mxu0 %v3939
      %4003 = vmatpush.bf16.msra.mxu0 %v3935
      %4004 = vmatpush.bf16.msra.mxu0 %v3931
      %4005 = vmatpush.bf16.msra.mxu0 %v3927
      %4006 = vmatpush.bf16.msra.mxu0 %v3923
      %4007 = vmatmul.bf16.gmra.mxu0 %v3788
      %v4008 = vpop.f32.mrf.mxu0
      %v4009 = vadd.f32 0.0, %v4008
      %v4010 = vpop.f32.mrf.mxu0
      %4011 = vdwg.mxu0
      %4012 = vmatpush.bf16.msra.mxu0 %v3952
      %4013 = vmatpush.bf16.msra.mxu0 %v3948
      %4014 = vmatpush.bf16.msra.mxu0 %v3944
      %4015 = vmatpush.bf16.msra.mxu0 %v3940
      %4016 = vmatpush.bf16.msra.mxu0 %v3936
      %4017 = vmatpush.bf16.msra.mxu0 %v3932
      %4018 = vmatpush.bf16.msra.mxu0 %v3928
      %4019 = vmatpush.bf16.msra.mxu0 %v3924
      %4020 = vmatmul.bf16.gmra.mxu0 %v3788
      %v4021 = vpop.f32.mrf.mxu0
      %v4022 = vadd.f32 0.0, %v4021
      %v4023 = vpop.f32.mrf.mxu0
      %4024 = vdwg.mxu0
      %4025 = vmatpush.bf16.msra.mxu0 %v3953
      %4026 = vmatpush.bf16.msra.mxu0 %v3949
      %4027 = vmatpush.bf16.msra.mxu0 %v3945
      %4028 = vmatpush.bf16.msra.mxu0 %v3941
      %4029 = vmatpush.bf16.msra.mxu0 %v3937
      %4030 = vmatpush.bf16.msra.mxu0 %v3933
      %4031 = vmatpush.bf16.msra.mxu0 %v3929
      %4032 = vmatpush.bf16.msra.mxu0 %v3925
      %4033 = vmatmul.bf16.gmra.mxu0 %v3788
      %v4034 = vpop.f32.mrf.mxu0
      %v4035 = vadd.f32 0.0, %v4034
      %v4036 = vpop.f32.mrf.mxu0
      %4037 = vdwg.mxu0
      %v4038 = vadd.f32 %v3790, %v3996
      %v4039 = vadd.f32 %v3791, %v4009
      %v4040 = vadd.f32 %v3792, %v4022
      %v4041 = vadd.f32 %v3793, %v4035
      %v4042 = vxor.u32 %v4038, 2147483648
      %v4043 = vxor.u32 %v4039, 2147483648
      %v4044 = vxor.u32 %v4040, 2147483648
      %v4045 = vmul.f32 %v4042, 1.442695
      %v4046 = vpow.pop %v4045
      %v4047 = vmul.f32 %v4043, 1.442695
      %v4048 = vpow.pop %v4047
      %v4049 = vmul.f32 %v4044, 1.442695
      %v4050 = vpow.pop %v4049
      %v4051 = vadd.f32 %v4046, 1.0
      %v4052 = vadd.f32 %v4048, 1.0
      %v4053 = vadd.f32 %v4050, 1.0
      %v4054 = vrcp.pop %v4051
      %v4055 = vmul.f32 %v4051, %v4054
      %v4056 = vsub.f32 1.0, %v4055
      %v4057 = vmul.f32 %v4054, %v4056
      %v4058 = vadd.f32 %v4054, %v4057
      %vm4059 = vweird.f32 %v4051
      %vm4060 = vweird.f32 %v4054
      %vm4061 = vmor %vm4059, %vm4060
      %v4062 = vsel %vm4061, %v4054, %v4058
      %v4063 = vand.u32 2147483647, %v4051
      %vm4064 = vcmp.eq.f32.partialorder %v4063, 8.507059e+37
      %v4065 = vand.u32 %v4051, 2147483648
      %v4066 = vor.u32 1.1754944e-38, %v4065
      %v4067 = vsel %vm4064, %v4066, %v4062
      %v4068 = vmul.f32 1.0, %v4067
      %v4069 = vrcp.pop %v4052
      %v4070 = vmul.f32 %v4052, %v4069
      %v4071 = vsub.f32 1.0, %v4070
      %v4072 = vmul.f32 %v4069, %v4071
      %v4073 = vadd.f32 %v4069, %v4072
      %vm4074 = vweird.f32 %v4052
      %vm4075 = vweird.f32 %v4069
      %vm4076 = vmor %vm4074, %vm4075
      %v4077 = vsel %vm4076, %v4069, %v4073
      %v4078 = vand.u32 2147483647, %v4052
      %vm4079 = vcmp.eq.f32.partialorder %v4078, 8.507059e+37
      %v4080 = vand.u32 %v4052, 2147483648
      %v4081 = vor.u32 1.1754944e-38, %v4080
      %v4082 = vsel %vm4079, %v4081, %v4077
      %v4083 = vmul.f32 1.0, %v4082
      %v4084 = vrcp.pop %v4053
      %v4085 = vmul.f32 %v4053, %v4084
      %v4086 = vsub.f32 1.0, %v4085
      %v4087 = vmul.f32 %v4084, %v4086
      %v4088 = vadd.f32 %v4084, %v4087
      %vm4089 = vweird.f32 %v4053
      %vm4090 = vweird.f32 %v4084
      %vm4091 = vmor %vm4089, %vm4090
      %v4092 = vsel %vm4091, %v4084, %v4088
      %v4093 = vand.u32 2147483647, %v4053
      %vm4094 = vcmp.eq.f32.partialorder %v4093, 8.507059e+37
      %v4095 = vand.u32 %v4053, 2147483648
      %v4096 = vor.u32 1.1754944e-38, %v4095
      %v4097 = vsel %vm4094, %v4096, %v4092
      %v4098 = vmul.f32 1.0, %v4097
      %v4099 = vtanh.pop %v4041
      %v4100 = vmul.f32 %v4083, %v3785
      %v4101 = vmul.f32 %v4068, %v4099
      %v4102 = vadd.f32 %v4100, %v4101
      %v4103 = vtanh.pop %v4102
      %v4104 = vmul.f32 %v4098, %v4103
      %v4105 = vpack.c.bf16 %v4104, %v4104
      %4106 = vst [vmem:[%s2218] sm:$0xf] %v4105
      %v4107 = vld [vmem:[#allocation5] sm:$0xf]
      %v4108 = vld [vmem:[#allocation5 + $0x4] sm:$0xf]
      %v4109 = vld [vmem:[#allocation5 + $0x8] sm:$0xf]
      %v4110 = vld [vmem:[#allocation5 + $0xc] sm:$0xf]
      %v4111 = vld [vmem:[%s8] sm:$0xf]
      %v4112 = vld [vmem:[%s8 + $0x4] sm:$0xf]
      %v4113 = vld [vmem:[%s8 + $0x8] sm:$0xf]
      %v4114 = vld [vmem:[%s8 + $0xc] sm:$0xf]
      %v4115 = vld [vmem:[%s8 + $0x10] sm:$0xf]
      %v4116 = vld [vmem:[%s8 + $0x14] sm:$0xf]
      %v4117 = vld [vmem:[%s8 + $0x18] sm:$0xf]
      %v4118 = vld [vmem:[%s8 + $0x1c] sm:$0xf]
      %v4119 = vld [vmem:[%s8 + $0x20] sm:$0xf]
      %v4120 = vld [vmem:[%s8 + $0x24] sm:$0xf]
      %v4121 = vld [vmem:[%s8 + $0x28] sm:$0xf]
      %v4122 = vld [vmem:[%s8 + $0x2c] sm:$0xf]
      %v4123 = vld [vmem:[%s8 + $0x30] sm:$0xf]
      %v4124 = vld [vmem:[%s8 + $0x34] sm:$0xf]
      %v4125 = vld [vmem:[%s8 + $0x38] sm:$0xf]
      %v4126 = vld [vmem:[%s8 + $0x3c] sm:$0xf]
      %v4127 = vld [vmem:[%s9] sm:$0x1]
      %v4129 = vperm.slane %v4127, 0
      %v4135 = vunpack.c.l.b16 %v4107
      %v4136 = vunpack.c.l.b16 %v4108
      %v4137 = vunpack.c.l.b16 %v4109
      %v4138 = vunpack.c.l.b16 %v4110
      %v4139 = vpack.c.b16 %v4136, %v4135
      %v4140 = vpack.c.b16 %v4138, %v4137
      %v4159 = vunpack.c.l.b16 %v4111
      %v4160 = vunpack.c.l.b16 %v4112
      %v4161 = vunpack.c.l.b16 %v4113
      %v4162 = vunpack.c.l.b16 %v4114
      %v4163 = vunpack.c.l.b16 %v4115
      %v4164 = vunpack.c.l.b16 %v4116
      %v4165 = vunpack.c.l.b16 %v4117
      %v4166 = vunpack.c.l.b16 %v4118
      %v4167 = vunpack.c.l.b16 %v4119
      %v4168 = vunpack.c.l.b16 %v4120
      %v4169 = vunpack.c.l.b16 %v4121
      %v4170 = vunpack.c.l.b16 %v4122
      %v4171 = vunpack.c.l.b16 %v4123
      %v4172 = vunpack.c.l.b16 %v4124
      %v4173 = vunpack.c.l.b16 %v4125
      %v4174 = vunpack.c.l.b16 %v4126
      %v4175 = vpack.c.b16 %v4160, %v4159
      %v4176 = vpack.c.b16 %v4162, %v4161
      %v4177 = vpack.c.b16 %v4164, %v4163
      %v4178 = vpack.c.b16 %v4166, %v4165
      %v4179 = vpack.c.b16 %v4168, %v4167
      %v4180 = vpack.c.b16 %v4170, %v4169
      %v4181 = vpack.c.b16 %v4172, %v4171
      %v4182 = vpack.c.b16 %v4174, %v4173
      %4191 = vmatpush.bf16.msra.mxu0 %v4182
      %4192 = vmatpush.bf16.msra.mxu0 %v4181
      %4193 = vmatpush.bf16.msra.mxu0 %v4180
      %4194 = vmatpush.bf16.msra.mxu0 %v4179
      %4195 = vmatpush.bf16.msra.mxu0 %v4178
      %4196 = vmatpush.bf16.msra.mxu0 %v4177
      %4197 = vmatpush.bf16.msra.mxu0 %v4176
      %4198 = vmatpush.bf16.msra.mxu0 %v4175
      %4199 = vmatmul.bf16.gmra.mxu0 %v4139
      %v4200 = vpop.f32.mrf.mxu0
      %v4201 = vadd.f32 %v4129, %v4200
      %v4202 = vpop.f32.mrf.mxu0
      %v4203 = vadd.f32 %v4129, %v4202
      %4204 = vmatmul.bf16.gmra.mxu0 %v4140
      %v4205 = vpop.f32.mrf.mxu0
      %v4206 = vadd.f32 %v4129, %v4205
      %v4207 = vpop.f32.mrf.mxu0
      %v4208 = vadd.f32 %v4129, %v4207
      %4209 = vdwg.mxu0
      %s4210 = scalar_lea.vmem %s425, 32
      %4211 = vst [vmem:[%s4210] sm:$0xff] %v4201
      %4212 = vst [vmem:[%s4210 + $0x8] sm:$0xff] %v4203
      %4213 = vst [vmem:[%s4210 + $0x10] sm:$0xff] %v4206
      %4214 = vst [vmem:[%s4210 + $0x18] sm:$0xff] %v4208
      %4215 = vst [vmem:[#allocation2] sm:$0xff] %v4104
      %4216 = vst [vmem:[#allocation3] sm:$0xff] %v4102
      %s4217 = smul.u32 8, %s26
      %p4218 = scmp.lt.s32.totalorder %s4217, 15
      %s4219 = scalar_select %p4218, %s4217, 15
      %p4220 = scmp.lt.s32.totalorder %s25, 0
      %s4221 = scalar_select %p4220, %s25, 0
      %s4222 = sadd.s32 %s4221, %s4219
      %s4223 = smul.addr %s4222, 8
      %s4224 = scalar_lea.vmem %s10, %s4223
      // Predicated region
      $region65: #{cudnn_lstm_model_inv_forward.3} parent=59 // pred_check
        %p4225 = pneg %p277
      $region66: #{cudnn_lstm_model_inv_forward.3} parent=59 // pred_check_branch
        %4227 = sbr.rel (%p4225) target = $region68
      $region67: #{cudnn_lstm_model_inv_forward.3} parent=59 // pred_region
        %s4228 = smul.u32 8, %s26
      $region68: #{cudnn_lstm_model_inv_forward.3} parent=59 // pred_fallthru
        _
    $region60: #{cudnn_lstm_model_inv_forward.3} parent=5 // pred_fallthru
      _
    %p4229 = scmp.le.s32.totalorder 2, %s16
    // Predicated region
    $region69: #{cudnn_lstm_model_inv_forward.3} parent=5 // pred_check
      %p4230 = pneg %p4229
    $region70: #{cudnn_lstm_model_inv_forward.3} parent=5 // pred_check_branch
      %4232 = sbr.rel (%p4230) target = $region72
    $region71: #{cudnn_lstm_model_inv_forward.3} parent=5 // pred_region
      %s4233 = ssub.s32 %s16, 2
      // Predicated region
      $region73: #{cudnn_lstm_model_inv_forward.3} parent=71 // pred_check
        %p4234 = pneg %p283
      $region74: #{cudnn_lstm_model_inv_forward.3} parent=71 // pred_check_branch
        %4236 = sbr.rel (%p4234) target = $region76
      $region75: #{cudnn_lstm_model_inv_forward.3} parent=71 // pred_region
        %s4237 = smul.u32 8, %s28
        %p4238 = scmp.lt.s32.totalorder %s4237, 15
        %s4239 = scalar_select %p4238, %s4237, 15
        %p4240 = scmp.lt.s32.totalorder %s27, 0
        %s4241 = scalar_select %p4240, %s27, 0
        %s4242 = sadd.s32 %s4241, %s4239
        %s4243 = smul.addr %s4242, 8
        %s4244 = scalar_lea.vmem %s10, %s4243
      $region76: #{cudnn_lstm_model_inv_forward.3} parent=71 // pred_fallthru
        _
    $region72: #{cudnn_lstm_model_inv_forward.3} parent=5 // pred_fallthru
      _
  $region6: #{cudnn_lstm_model_inv_forward.3} parent=0 // loop_footer
    %s20 = sadd.s32 1, %s16
  $region7: #{cudnn_lstm_model_inv_forward.3} parent=0 // loop_footer_branch
    %15 = sbr.rel target = $region3
  $region8: #{cudnn_lstm_model_inv_forward.3} parent=0 // loop_exit
    _

</llo_original>
